<compile_context>
chip_gen: v5e
topology: v5e:2x2
jax: 0.10.0
libtpu: 0.0.40
codegen_flags: <defaults>
</compile_context>

<pallas_src>
import functools

import jax
import jax.numpy as jnp
from jax.experimental import pallas as pl
from jax.experimental.pallas import tpu as pltpu

EPS = 1e-5
DIM_LATENT = 16
TILE_M = 256          # multiple of 16 (bf16 sublane packing)
VMEM_LIMIT = 32 * 1024 * 1024   # explicit, safe on v5e / v6e / v7x


def _round_up(x, m):
    return ((x + m - 1) // m) * m


def _apply_act(y, act):
    if act == "leaky_relu":
        return jnp.where(y > 0.0, y, 0.2 * y)     # nn.LeakyReLU(0.2)
    if act == "relu":
        return jnp.maximum(y, 0.0)
    if act == "sigmoid":
        return jax.nn.sigmoid(y)
    return y


# ----------------------------------------------------------------------------
# Pallas kernel 1: fused  Y = act( X @ W + shift )   (BN scale pre-folded into W)
# ----------------------------------------------------------------------------
def _matmul_shift_act_kernel(x_ref, w_ref, shift_ref, o_ref, *, act):
    y = jnp.dot(x_ref[...], w_ref[...], preferred_element_type=jnp.float32)
    y = y + shift_ref[...]
    y = _apply_act(y, act)
    o_ref[...] = y.astype(o_ref.dtype)


def fused_matmul(x, w, shift, n_out, act="none", out_dtype=jnp.bfloat16):
    """x: (M, K) float; w: (K, Np) bf16, Np % 128 == 0, BN scale folded in;
    shift: (1, Np) f32.  Returns (M, n_out) in out_dtype."""
    M, K = x.shape
    Kw, Np = w.shape
    assert K == Kw and Np % 128 == 0
    x = x.astype(jnp.bfloat16)

    tile_m = min(TILE_M, _round_up(M, 16))
    Mp = _round_up(M, tile_m)
    if Mp != M:
        x = jnp.pad(x, ((0, Mp - M), (0, 0)))

    out = pl.pallas_call(
        functools.partial(_matmul_shift_act_kernel, act=act),
        out_shape=jax.ShapeDtypeStruct((Mp, Np), out_dtype),
        grid=(Mp // tile_m,),
        in_specs=[
            pl.BlockSpec((tile_m, K), lambda i: (i, 0)),
            pl.BlockSpec((K, Np), lambda i: (0, 0)),
            pl.BlockSpec((1, Np), lambda i: (0, 0)),
        ],
        out_specs=pl.BlockSpec((tile_m, Np), lambda i: (i, 0)),
        compiler_params=pltpu.CompilerParams(
            dimension_semantics=("parallel",),
            vmem_limit_bytes=VMEM_LIMIT,
        ),
    )(x, w, shift)
    return out[:M, :n_out]


# ----------------------------------------------------------------------------
# Pallas kernel 2: fused FC chain
#   z = leaky( flat @ W1 + t1 )        (encoder Linear + BN1d + LeakyReLU)
#   h = relu ( z    @ W2 + t2 )        (decoder Linear + BN1d + ReLU)
# ----------------------------------------------------------------------------
def _fc_fused_kernel(x_ref, w1_ref, t1_ref, w2_ref, t2_ref, z_ref, h_ref):
    z = jnp.dot(x_ref[...], w1_ref[...], preferred_element_type=jnp.float32)
    z = z + t1_ref[...]
    z = jnp.where(z > 0.0, z, 0.2 * z)
    z_ref[...] = z.astype(z_ref.dtype)
    h = jnp.dot(z.astype(jnp.bfloat16), w2_ref[...],
                preferred_element_type=jnp.float32)
    h = jnp.maximum(h + t2_ref[...], 0.0)
    h_ref[...] = h.astype(h_ref.dtype)


def fc_fused(flat, w1, t1, w2, t2):
    M = flat.shape[0]
    Mp = _round_up(M, 8)
    x = flat.astype(jnp.bfloat16)
    if Mp != M:
        x = jnp.pad(x, ((0, Mp - M), (0, 0)))
    z, h = pl.pallas_call(
        _fc_fused_kernel,
        out_shape=(jax.ShapeDtypeStruct((Mp, w1.shape[1]), jnp.float32),
                   jax.ShapeDtypeStruct((Mp, w2.shape[1]), jnp.bfloat16)),
    )(x, w1, t1, w2, t2)
    return z[:M], h[:M]


# ----------------------------------------------------------------------------
# JAX glue: im2col (forward convs), exact convT assembly, parameter prep
# ----------------------------------------------------------------------------
def im2col(x, kh, kw, stride, pad):
    """x: (B, H, W, C) -> (B*OH*OW, kh*kw*C)."""
    if pad:
        x = jnp.pad(x, ((0, 0), (pad, pad), (pad, pad), (0, 0)))
    B, H, W, C = x.shape
    oh = (H - kh) // stride + 1
    ow = (W - kw) // stride + 1
    cols = []
    for i in range(kh):
        for j in range(kw):
            cols.append(x[:, i:i + (oh - 1) * stride + 1:stride,
                             j:j + (ow - 1) * stride + 1:stride, :])
    patches = jnp.stack(cols, axis=3)                 # (B, oh, ow, kh*kw, C)
    return patches.reshape(B * oh * ow, kh * kw * C), (B, oh, ow)


def conv2d(x, wm, shift, cout, kh, kw, stride, pad, act):
    cols, (B, oh, ow) = im2col(x, kh, kw, stride, pad)
    y = fused_matmul(cols, wm, shift, n_out=cout, act=act, out_dtype=jnp.bfloat16)
    return y.reshape(B, oh, ow, cout)


def _dilate2d(t, s):
    if s == 1:
        return t
    B, H, W, C = t.shape
    t = t.reshape(B, H, 1, W, 1, C)
    t = jnp.pad(t, ((0, 0), (0, 0), (0, s - 1), (0, 0), (0, s - 1), (0, 0)))
    t = t.reshape(B, H * s, W * s, C)
    return t[:, :(H - 1) * s + 1, :(W - 1) * s + 1, :]


def conv_transpose2d(x, wm, shift_c, cout, kh, kw, stride, pad, act):
    """Exact ConvTranspose2d: per-tap matmul (no zero-dilated im2col), then a cheap
    spatial dilate/pad/sum assembly + BN shift + activation."""
    B, H, W, C = x.shape
    n_valid = cout * kh * kw
    T = fused_matmul(x.reshape(B * H * W, C), wm,
                     jnp.zeros((1, wm.shape[1]), jnp.float32),
                     n_out=n_valid, act="none", out_dtype=jnp.float32)
    T = T.reshape(B, H, W, cout, kh, kw)

    Hf = (H - 1) * stride + kh
    Wf = (W - 1) * stride + kw
    y_full = jnp.zeros((B, Hf, Wf, cout), jnp.float32)
    for ki in range(kh):
        for kj in range(kw):
            t = _dilate2d(T[:, :, :, :, ki, kj], stride)
            t = jnp.pad(t, ((0, 0), (ki, kh - 1 - ki), (kj, kw - 1 - kj), (0, 0)))
            y_full = y_full + t

    oh = (H - 1) * stride - 2 * pad + kh
    ow = (W - 1) * stride - 2 * pad + kw
    y = y_full[:, pad:pad + oh, pad:pad + ow, :] + shift_c[None, None, None, :]
    return _apply_act(y, act)


def bn_fold(bn, bias=None):
    scale = bn["gamma"] / jnp.sqrt(bn["var"] + EPS)
    b = bias if bias is not None else 0.0
    shift = bn["beta"] + (b - bn["mean"]) * scale
    return scale, shift


def _pad_n(w, shift, n):
    """Pad output dim to a multiple of 128 (lane-dense stores). Weight -> bf16."""
    K = w.shape[0]
    npad = _round_up(n, 128)
    wp = jnp.zeros((K, npad), jnp.float32).at[:, :n].set(w)
    sp = jnp.zeros((1, npad), jnp.float32).at[:, :n].set(jnp.reshape(shift, (1, n)))
    return wp.astype(jnp.bfloat16), sp


def prep_conv(w_oihw, scale, shift):
    cout, cin, kh, kw = w_oihw.shape
    wm = jnp.transpose(w_oihw, (2, 3, 1, 0)).reshape(kh * kw * cin, cout)
    wm = wm * scale[None, :]
    return _pad_n(wm, shift, cout)


def prep_convt(w_iohw, scale):
    cin, cout, kh, kw = w_iohw.shape
    wm = (w_iohw * scale[None, :, None, None]).reshape(cin, cout * kh * kw)
    wp, _ = _pad_n(wm, jnp.zeros((cout * kh * kw,), jnp.float32), cout * kh * kw)
    return wp


def prepare_params(p):
    """One-time, outside jit: transposes, BN folding, N-padding, dtype casts."""
    q = {}
    q["c1_w"], q["c1_s"] = prep_conv(p["e_w1"], jnp.ones((16,), jnp.float32), p["e_b1"])
    s, t = bn_fold(p["e_bn2"], p["e_b2"]); q["c2_w"], q["c2_s"] = prep_conv(p["e_w2"], s, t)
    s, t = bn_fold(p["e_bn3"], p["e_b3"]); q["c3_w"], q["c3_s"] = prep_conv(p["e_w3"], s, t)
    s, t = bn_fold(p["e_bn4"], p["e_b4"]); q["c4_w"], q["c4_s"] = prep_conv(p["e_w4"], s, t)
    s, t = bn_fold(p["e_bn5"], p["e_b5"]); q["c5_w"], q["c5_s"] = prep_conv(p["e_w5"], s, t)

    # encoder Linear: fold the NCHW flatten (c*4 + h*2 + w) into a row permutation
    # of the weight so the forward pass can flatten NHWC directly (no transpose).
    s, t = bn_fold(p["e_bnl"], p["e_bl"])
    wl = p["e_wl"].T                                    # (1024 in NCHW order, 16)
    wl = wl.reshape(256, 2, 2, DIM_LATENT)              # (c, h, w, n)
    wl = jnp.transpose(wl, (1, 2, 0, 3)).reshape(1024, DIM_LATENT)
    wl = wl * s[None, :]
    q["fc1_w"], q["fc1_s"] = _pad_n(wl, t, DIM_LATENT)  # (1024, 128), (1, 128)

    # decoder fc: pad K 16 -> 128 (zero rows aligned with the padded latent columns)
    s, t = bn_fold(p["d_bnfc"], p["d_bfc"])
    w2 = p["d_wfc"].T * s[None, :]                      # (16, 512)
    q["fc2_w"] = jnp.zeros((128, 512), jnp.float32).at[:DIM_LATENT, :].set(w2).astype(jnp.bfloat16)
    q["fc2_s"] = jnp.reshape(t, (1, 512)).astype(jnp.float32)

    s, t = bn_fold(p["d_bn1"]); q["t1_w"] = prep_convt(p["d_w1"], s); q["t1_s"] = t
    s, t = bn_fold(p["d_bn2"]); q["t2_w"] = prep_convt(p["d_w2"], s); q["t2_s"] = t
    s, t = bn_fold(p["d_bn3"]); q["t3_w"] = prep_convt(p["d_w3"], s); q["t3_s"] = t
    q["t4_w"] = prep_convt(p["d_w4"], jnp.ones((1,), jnp.float32))
    q["t4_s"] = jnp.zeros((1,), jnp.float32)
    return q


# ----------------------------------------------------------------------------
# Deterministic synthetic parameters (shapes follow the PyTorch __init__)
# ----------------------------------------------------------------------------
def init_params(key):
    keys = iter(jax.random.split(key, 64))

    def w(shape, s=0.1):
        return (s * jax.random.normal(next(keys), shape)).astype(jnp.float32)

    def bn(n):
        return dict(
            gamma=(1.0 + 0.1 * jax.random.normal(next(keys), (n,))).astype(jnp.float32),
            beta=(0.1 * jax.random.normal(next(keys), (n,))).astype(jnp.float32),
            mean=(0.05 * jax.random.normal(next(keys), (n,))).astype(jnp.float32),
            var=(0.5 + jax.random.uniform(next(keys), (n,))).astype(jnp.float32),
        )

    p = {}
    cm = 16
    p["e_w1"], p["e_b1"] = w((cm, 1, 4, 4)), w((cm,), 0.05)
    p["e_w2"], p["e_b2"], p["e_bn2"] = w((2 * cm, cm, 4, 4)), w((2 * cm,), 0.05), bn(2 * cm)
    p["e_w3"], p["e_b3"], p["e_bn3"] = w((4 * cm, 2 * cm, 4, 4)), w((4 * cm,), 0.05), bn(4 * cm)
    p["e_w4"], p["e_b4"], p["e_bn4"] = w((8 * cm, 4 * cm, 4, 4)), w((8 * cm,), 0.05), bn(8 * cm)
    p["e_w5"], p["e_b5"], p["e_bn5"] = w((16 * cm, 8 * cm, 3, 3)), w((16 * cm,), 0.05), bn(16 * cm)
    p["e_wl"], p["e_bl"], p["e_bnl"] = w((DIM_LATENT, 1024), 0.05), w((DIM_LATENT,), 0.05), bn(DIM_LATENT)
    p["d_wfc"], p["d_bfc"], p["d_bnfc"] = w((512, DIM_LATENT)), w((512,), 0.05), bn(512)
    p["d_w1"], p["d_bn1"] = w((512, 4 * cm, 4, 4), 0.05), bn(4 * cm)
    p["d_w2"], p["d_bn2"] = w((4 * cm, 2 * cm, 3, 3)), bn(2 * cm)
    p["d_w3"], p["d_bn3"] = w((2 * cm, cm, 4, 4)), bn(cm)
    p["d_w4"] = w((cm, 1, 4, 4))
    return p


# ----------------------------------------------------------------------------
# Forward pass:  x -> encoder (CNN_Encoder semantics) -> z -> decoder -> recon
# ----------------------------------------------------------------------------
def ae_forward(q, x):
    B = x.shape[0]
    h = x.reshape(B, 28, 28, 1).astype(jnp.bfloat16)   # NCHW (B,1,28,28) == NHWC (C=1)

    # ---------------- encoder ----------------
    h = conv2d(h, q["c1_w"], q["c1_s"], 16, 4, 4, 1, 1, "leaky_relu")   # (B,27,27,16)
    h = conv2d(h, q["c2_w"], q["c2_s"], 32, 4, 4, 2, 1, "leaky_relu")   # (B,13,13,32)
    h = conv2d(h, q["c3_w"], q["c3_s"], 64, 4, 4, 2, 1, "leaky_relu")   # (B,6,6,64)
    h = conv2d(h, q["c4_w"], q["c4_s"], 128, 4, 4, 2, 1, "leaky_relu")  # (B,3,3,128)
    h = conv2d(h, q["c5_w"], q["c5_s"], 256, 3, 3, 2, 1, "leaky_relu")  # (B,2,2,256)
    flat = h.reshape(B, 1024)   # NHWC flatten; NCHW permutation is baked into fc1_w

    zp, hf = fc_fused(flat, q["fc1_w"], q["fc1_s"], q["fc2_w"], q["fc2_s"])
    z = zp[:, :DIM_LATENT]      # CNN_Encoder output (B, 16)

    # ---------------- decoder ----------------
    h = hf.reshape(B, 1, 1, 512)
    h = conv_transpose2d(h, q["t1_w"], q["t1_s"], 64, 4, 4, 1, 0, "relu")      # (B,4,4,64)
    h = conv_transpose2d(h, q["t2_w"], q["t2_s"], 32, 3, 3, 2, 1, "relu")      # (B,7,7,32)
    h = conv_transpose2d(h, q["t3_w"], q["t3_s"], 16, 4, 4, 2, 1, "relu")      # (B,14,14,16)
    h = conv_transpose2d(h, q["t4_w"], q["t4_s"], 1, 4, 4, 2, 1, "sigmoid")    # (B,28,28,1)
    recon = h.reshape(B, 784)   # C=1: NHWC flatten == NCHW flatten
    return recon, z


if __name__ == "__main__":
    key = jax.random.PRNGKey(0)
    pkey, xkey = jax.random.split(key)
    raw = init_params(pkey)
    params = prepare_params(raw)          # constant folding done once, outside jit
    x = jax.random.uniform(xkey, (2, 1, 28, 28), dtype=jnp.float32)

    fwd = jax.jit(ae_forward)
    recon, z = fwd(params, x)
    recon = jax.block_until_ready(recon)
    z = jax.block_until_ready(z)

    assert recon.shape == (2, 784), recon.shape
    assert z.shape == (2, DIM_LATENT), z.shape
    assert bool(jnp.all(jnp.isfinite(recon))) and bool(jnp.all(jnp.isfinite(z)))
    assert bool(jnp.all((recon >= 0.0) & (recon <= 1.0)))   # sigmoid output range
    print("KERNEL_OK")
</pallas_src>

<mosaic_0001>
module attributes {stable_mosaic.version = 11 : i64} {
  func.func @_matmul_shift_act_kernel(%arg0: i32, %arg1: memref<256x16xbf16, #tpu.memory_space<vmem>>, %arg2: memref<16x128xbf16, #tpu.memory_space<vmem>>, %arg3: memref<1x128xf32, #tpu.memory_space<vmem>>, %arg4: memref<256x128xbf16, #tpu.memory_space<vmem>>) attributes {dimension_semantics = [#tpu.dimension_semantics<parallel>], iteration_bounds = array<i64: 6>, scalar_prefetch = 0 : i64, scratch_operands = 0 : i64, tpu.core_type = #tpu.core_type<tc>, window_params = [{transform_indices = @transform_0, window_bounds = array<i64: 256, 16>}, {pipeline_mode = #tpu.pipeline_mode<synchronous>, transform_indices = @transform_1, window_bounds = array<i64: 16, 128>}, {pipeline_mode = #tpu.pipeline_mode<synchronous>, transform_indices = @transform_2, window_bounds = array<i64: 1, 128>}, {transform_indices = @transform_3, window_bounds = array<i64: 256, 128>}]} {
    %c0 = arith.constant 0 : index
    %c0_0 = arith.constant 0 : index
    %0 = vector.load %arg1[%c0, %c0_0] : memref<256x16xbf16, #tpu.memory_space<vmem>>, vector<256x16xbf16>
    %c0_1 = arith.constant 0 : index
    %c0_2 = arith.constant 0 : index
    %1 = vector.load %arg2[%c0_1, %c0_2] : memref<16x128xbf16, #tpu.memory_space<vmem>>, vector<16x128xbf16>
    %cst = arith.constant dense<0.000000e+00> : vector<256x128xf32>
    %2 = tpu.matmul %0, %1, %cst {dimension_numbers = #tpu.dot_dimension_numbers<[1], [0], [0], [1], [0, 0, 1, 1], [], []>} : vector<256x16xbf16>, vector<16x128xbf16>, vector<256x128xf32> -> vector<256x128xf32>
    %c0_3 = arith.constant 0 : index
    %c0_4 = arith.constant 0 : index
    %3 = vector.load %arg3[%c0_3, %c0_4] : memref<1x128xf32, #tpu.memory_space<vmem>>, vector<1x128xf32>
    %4 = vector.broadcast %3 : vector<1x128xf32> to vector<256x128xf32>
    %5 = arith.addf %2, %4 : vector<256x128xf32>
    %cst_5 = arith.constant 0.000000e+00 : f32
    %6 = vector.broadcast %cst_5 : f32 to vector<256x128xf32>
    %7 = arith.cmpf ogt, %5, %6 : vector<256x128xf32>
    %cst_6 = arith.constant 2.000000e-01 : f32
    %8 = vector.broadcast %cst_6 : f32 to vector<256x128xf32>
    %9 = arith.mulf %8, %5 : vector<256x128xf32>
    %10 = arith.select %7, %5, %9 : vector<256x128xi1>, vector<256x128xf32>
    %11 = arith.truncf %10 : vector<256x128xf32> to vector<256x128xbf16>
    %c0_7 = arith.constant 0 : index
    %c0_8 = arith.constant 0 : index
    %12 = vector.load %arg4[%c0_7, %c0_8] : memref<256x128xbf16, #tpu.memory_space<vmem>>, vector<256x128xbf16>
    tpu.vector_store %arg4[%c0_7, %c0_8], %11 {strides = array<i32>} : memref<256x128xbf16, #tpu.memory_space<vmem>>, vector<256x128xbf16>,
    return
  }
  func.func @transform_0(%arg0: i32) -> (i32, i32) {
    %c0_i32 = arith.constant 0 : i32
    %c0_i32_0 = arith.constant 0 : i32
    return %arg0, %c0_i32 : i32, i32
  }
  func.func @transform_1(%arg0: i32) -> (i32, i32) {
    %c0_i32 = arith.constant 0 : i32
    %c0_i32_0 = arith.constant 0 : i32
    %c0_i32_1 = arith.constant 0 : i32
    return %c0_i32, %c0_i32_0 : i32, i32
  }
  func.func @transform_2(%arg0: i32) -> (i32, i32) {
    %c0_i32 = arith.constant 0 : i32
    %c0_i32_0 = arith.constant 0 : i32
    %c0_i32_1 = arith.constant 0 : i32
    return %c0_i32, %c0_i32_0 : i32, i32
  }
  func.func @transform_3(%arg0: i32) -> (i32, i32) {
    %c0_i32 = arith.constant 0 : i32
    %c0_i32_0 = arith.constant 0 : i32
    return %arg0, %c0_i32 : i32, i32
  }
}

module attributes {stable_mosaic.version = 11 : i64} {
  func.func @_matmul_shift_act_kernel(%arg0: i32, %arg1: memref<256x256xbf16, #tpu.memory_space<vmem>>, %arg2: memref<256x128xbf16, #tpu.memory_space<vmem>>, %arg3: memref<1x128xf32, #tpu.memory_space<vmem>>, %arg4: memref<256x128xbf16, #tpu.memory_space<vmem>>) attributes {dimension_semantics = [#tpu.dimension_semantics<parallel>], iteration_bounds = array<i64: 2>, scalar_prefetch = 0 : i64, scratch_operands = 0 : i64, tpu.core_type = #tpu.core_type<tc>, window_params = [{transform_indices = @transform_0, window_bounds = array<i64: 256, 256>}, {pipeline_mode = #tpu.pipeline_mode<synchronous>, transform_indices = @transform_1, window_bounds = array<i64: 256, 128>}, {pipeline_mode = #tpu.pipeline_mode<synchronous>, transform_indices = @transform_2, window_bounds = array<i64: 1, 128>}, {transform_indices = @transform_3, window_bounds = array<i64: 256, 128>}]} {
    %c0 = arith.constant 0 : index
    %c0_0 = arith.constant 0 : index
    %0 = vector.load %arg1[%c0, %c0_0] : memref<256x256xbf16, #tpu.memory_space<vmem>>, vector<256x256xbf16>
    %c0_1 = arith.constant 0 : index
    %c0_2 = arith.constant 0 : index
    %1 = vector.load %arg2[%c0_1, %c0_2] : memref<256x128xbf16, #tpu.memory_space<vmem>>, vector<256x128xbf16>
    %cst = arith.constant dense<0.000000e+00> : vector<256x128xf32>
    %2 = tpu.matmul %0, %1, %cst {dimension_numbers = #tpu.dot_dimension_numbers<[1], [0], [0], [1], [0, 0, 1, 1], [], []>} : vector<256x256xbf16>, vector<256x128xbf16>, vector<256x128xf32> -> vector<256x128xf32>
    %c0_3 = arith.constant 0 : index
    %c0_4 = arith.constant 0 : index
    %3 = vector.load %arg3[%c0_3, %c0_4] : memref<1x128xf32, #tpu.memory_space<vmem>>, vector<1x128xf32>
    %4 = vector.broadcast %3 : vector<1x128xf32> to vector<256x128xf32>
    %5 = arith.addf %2, %4 : vector<256x128xf32>
    %cst_5 = arith.constant 0.000000e+00 : f32
    %6 = vector.broadcast %cst_5 : f32 to vector<256x128xf32>
    %7 = arith.cmpf ogt, %5, %6 : vector<256x128xf32>
    %cst_6 = arith.constant 2.000000e-01 : f32
    %8 = vector.broadcast %cst_6 : f32 to vector<256x128xf32>
    %9 = arith.mulf %8, %5 : vector<256x128xf32>
    %10 = arith.select %7, %5, %9 : vector<256x128xi1>, vector<256x128xf32>
    %11 = arith.truncf %10 : vector<256x128xf32> to vector<256x128xbf16>
    %c0_7 = arith.constant 0 : index
    %c0_8 = arith.constant 0 : index
    %12 = vector.load %arg4[%c0_7, %c0_8] : memref<256x128xbf16, #tpu.memory_space<vmem>>, vector<256x128xbf16>
    tpu.vector_store %arg4[%c0_7, %c0_8], %11 {strides = array<i32>} : memref<256x128xbf16, #tpu.memory_space<vmem>>, vector<256x128xbf16>,
    return
  }
  func.func @transform_0(%arg0: i32) -> (i32, i32) {
    %c0_i32 = arith.constant 0 : i32
    %c0_i32_0 = arith.constant 0 : i32
    return %arg0, %c0_i32 : i32, i32
  }
  func.func @transform_1(%arg0: i32) -> (i32, i32) {
    %c0_i32 = arith.constant 0 : i32
    %c0_i32_0 = arith.constant 0 : i32
    %c0_i32_1 = arith.constant 0 : i32
    return %c0_i32, %c0_i32_0 : i32, i32
  }
  func.func @transform_2(%arg0: i32) -> (i32, i32) {
    %c0_i32 = arith.constant 0 : i32
    %c0_i32_0 = arith.constant 0 : i32
    %c0_i32_1 = arith.constant 0 : i32
    return %c0_i32, %c0_i32_0 : i32, i32
  }
  func.func @transform_3(%arg0: i32) -> (i32, i32) {
    %c0_i32 = arith.constant 0 : i32
    %c0_i32_0 = arith.constant 0 : i32
    return %arg0, %c0_i32 : i32, i32
  }
}

module attributes {stable_mosaic.version = 11 : i64} {
  func.func @_matmul_shift_act_kernel(%arg0: i32, %arg1: memref<80x512xbf16, #tpu.memory_space<vmem>>, %arg2: memref<512x128xbf16, #tpu.memory_space<vmem>>, %arg3: memref<1x128xf32, #tpu.memory_space<vmem>>, %arg4: memref<80x128xbf16, #tpu.memory_space<vmem>>) attributes {dimension_semantics = [#tpu.dimension_semantics<parallel>], iteration_bounds = array<i64: 1>, scalar_prefetch = 0 : i64, scratch_operands = 0 : i64, tpu.core_type = #tpu.core_type<tc>, window_params = [{transform_indices = @transform_0, window_bounds = array<i64: 80, 512>}, {pipeline_mode = #tpu.pipeline_mode<synchronous>, transform_indices = @transform_1, window_bounds = array<i64: 512, 128>}, {pipeline_mode = #tpu.pipeline_mode<synchronous>, transform_indices = @transform_2, window_bounds = array<i64: 1, 128>}, {transform_indices = @transform_3, window_bounds = array<i64: 80, 128>}]} {
    %c0 = arith.constant 0 : index
    %c0_0 = arith.constant 0 : index
    %0 = vector.load %arg1[%c0, %c0_0] : memref<80x512xbf16, #tpu.memory_space<vmem>>, vector<80x512xbf16>
    %c0_1 = arith.constant 0 : index
    %c0_2 = arith.constant 0 : index
    %1 = vector.load %arg2[%c0_1, %c0_2] : memref<512x128xbf16, #tpu.memory_space<vmem>>, vector<512x128xbf16>
    %cst = arith.constant dense<0.000000e+00> : vector<80x128xf32>
    %2 = tpu.matmul %0, %1, %cst {dimension_numbers = #tpu.dot_dimension_numbers<[1], [0], [0], [1], [0, 0, 1, 1], [], []>} : vector<80x512xbf16>, vector<512x128xbf16>, vector<80x128xf32> -> vector<80x128xf32>
    %c0_3 = arith.constant 0 : index
    %c0_4 = arith.constant 0 : index
    %3 = vector.load %arg3[%c0_3, %c0_4] : memref<1x128xf32, #tpu.memory_space<vmem>>, vector<1x128xf32>
    %4 = vector.broadcast %3 : vector<1x128xf32> to vector<80x128xf32>
    %5 = arith.addf %2, %4 : vector<80x128xf32>
    %cst_5 = arith.constant 0.000000e+00 : f32
    %6 = vector.broadcast %cst_5 : f32 to vector<80x128xf32>
    %7 = arith.cmpf ogt, %5, %6 : vector<80x128xf32>
    %cst_6 = arith.constant 2.000000e-01 : f32
    %8 = vector.broadcast %cst_6 : f32 to vector<80x128xf32>
    %9 = arith.mulf %8, %5 : vector<80x128xf32>
    %10 = arith.select %7, %5, %9 : vector<80x128xi1>, vector<80x128xf32>
    %11 = arith.truncf %10 : vector<80x128xf32> to vector<80x128xbf16>
    %c0_7 = arith.constant 0 : index
    %c0_8 = arith.constant 0 : index
    %12 = vector.load %arg4[%c0_7, %c0_8] : memref<80x128xbf16, #tpu.memory_space<vmem>>, vector<80x128xbf16>
    tpu.vector_store %arg4[%c0_7, %c0_8], %11 {strides = array<i32>} : memref<80x128xbf16, #tpu.memory_space<vmem>>, vector<80x128xbf16>,
    return
  }
  func.func @transform_0(%arg0: i32) -> (i32, i32) {
    %c0_i32 = arith.constant 0 : i32
    %c0_i32_0 = arith.constant 0 : i32
    return %arg0, %c0_i32 : i32, i32
  }
  func.func @transform_1(%arg0: i32) -> (i32, i32) {
    %c0_i32 = arith.constant 0 : i32
    %c0_i32_0 = arith.constant 0 : i32
    %c0_i32_1 = arith.constant 0 : i32
    return %c0_i32, %c0_i32_0 : i32, i32
  }
  func.func @transform_2(%arg0: i32) -> (i32, i32) {
    %c0_i32 = arith.constant 0 : i32
    %c0_i32_0 = arith.constant 0 : i32
    %c0_i32_1 = arith.constant 0 : i32
    return %c0_i32, %c0_i32_0 : i32, i32
  }
  func.func @transform_3(%arg0: i32) -> (i32, i32) {
    %c0_i32 = arith.constant 0 : i32
    %c0_i32_0 = arith.constant 0 : i32
    return %arg0, %c0_i32 : i32, i32
  }
}

module attributes {stable_mosaic.version = 11 : i64} {
  func.func @_matmul_shift_act_kernel(%arg0: i32, %arg1: memref<32x1024xbf16, #tpu.memory_space<vmem>>, %arg2: memref<1024x128xbf16, #tpu.memory_space<vmem>>, %arg3: memref<1x128xf32, #tpu.memory_space<vmem>>, %arg4: memref<32x128xbf16, #tpu.memory_space<vmem>>) attributes {dimension_semantics = [#tpu.dimension_semantics<parallel>], iteration_bounds = array<i64: 1>, scalar_prefetch = 0 : i64, scratch_operands = 0 : i64, tpu.core_type = #tpu.core_type<tc>, window_params = [{transform_indices = @transform_0, window_bounds = array<i64: 32, 1024>}, {pipeline_mode = #tpu.pipeline_mode<synchronous>, transform_indices = @transform_1, window_bounds = array<i64: 1024, 128>}, {pipeline_mode = #tpu.pipeline_mode<synchronous>, transform_indices = @transform_2, window_bounds = array<i64: 1, 128>}, {transform_indices = @transform_3, window_bounds = array<i64: 32, 128>}]} {
    %c0 = arith.constant 0 : index
    %c0_0 = arith.constant 0 : index
    %0 = vector.load %arg1[%c0, %c0_0] : memref<32x1024xbf16, #tpu.memory_space<vmem>>, vector<32x1024xbf16>
    %c0_1 = arith.constant 0 : index
    %c0_2 = arith.constant 0 : index
    %1 = vector.load %arg2[%c0_1, %c0_2] : memref<1024x128xbf16, #tpu.memory_space<vmem>>, vector<1024x128xbf16>
    %cst = arith.constant dense<0.000000e+00> : vector<32x128xf32>
    %2 = tpu.matmul %0, %1, %cst {dimension_numbers = #tpu.dot_dimension_numbers<[1], [0], [0], [1], [0, 0, 1, 1], [], []>} : vector<32x1024xbf16>, vector<1024x128xbf16>, vector<32x128xf32> -> vector<32x128xf32>
    %c0_3 = arith.constant 0 : index
    %c0_4 = arith.constant 0 : index
    %3 = vector.load %arg3[%c0_3, %c0_4] : memref<1x128xf32, #tpu.memory_space<vmem>>, vector<1x128xf32>
    %4 = vector.broadcast %3 : vector<1x128xf32> to vector<32x128xf32>
    %5 = arith.addf %2, %4 : vector<32x128xf32>
    %cst_5 = arith.constant 0.000000e+00 : f32
    %6 = vector.broadcast %cst_5 : f32 to vector<32x128xf32>
    %7 = arith.cmpf ogt, %5, %6 : vector<32x128xf32>
    %cst_6 = arith.constant 2.000000e-01 : f32
    %8 = vector.broadcast %cst_6 : f32 to vector<32x128xf32>
    %9 = arith.mulf %8, %5 : vector<32x128xf32>
    %10 = arith.select %7, %5, %9 : vector<32x128xi1>, vector<32x128xf32>
    %11 = arith.truncf %10 : vector<32x128xf32> to vector<32x128xbf16>
    %c0_7 = arith.constant 0 : index
    %c0_8 = arith.constant 0 : index
    %12 = vector.load %arg4[%c0_7, %c0_8] : memref<32x128xbf16, #tpu.memory_space<vmem>>, vector<32x128xbf16>
    tpu.vector_store %arg4[%c0_7, %c0_8], %11 {strides = array<i32>} : memref<32x128xbf16, #tpu.memory_space<vmem>>, vector<32x128xbf16>,
    return
  }
  func.func @transform_0(%arg0: i32) -> (i32, i32) {
    %c0_i32 = arith.constant 0 : i32
    %c0_i32_0 = arith.constant 0 : i32
    return %arg0, %c0_i32 : i32, i32
  }
  func.func @transform_1(%arg0: i32) -> (i32, i32) {
    %c0_i32 = arith.constant 0 : i32
    %c0_i32_0 = arith.constant 0 : i32
    %c0_i32_1 = arith.constant 0 : i32
    return %c0_i32, %c0_i32_0 : i32, i32
  }
  func.func @transform_2(%arg0: i32) -> (i32, i32) {
    %c0_i32 = arith.constant 0 : i32
    %c0_i32_0 = arith.constant 0 : i32
    %c0_i32_1 = arith.constant 0 : i32
    return %c0_i32, %c0_i32_0 : i32, i32
  }
  func.func @transform_3(%arg0: i32) -> (i32, i32) {
    %c0_i32 = arith.constant 0 : i32
    %c0_i32_0 = arith.constant 0 : i32
    return %arg0, %c0_i32 : i32, i32
  }
}

module attributes {stable_mosaic.version = 11 : i64} {
  func.func @_matmul_shift_act_kernel(%arg0: i32, %arg1: memref<16x1152xbf16, #tpu.memory_space<vmem>>, %arg2: memref<1152x256xbf16, #tpu.memory_space<vmem>>, %arg3: memref<1x256xf32, #tpu.memory_space<vmem>>, %arg4: memref<16x256xbf16, #tpu.memory_space<vmem>>) attributes {dimension_semantics = [#tpu.dimension_semantics<parallel>], iteration_bounds = array<i64: 1>, scalar_prefetch = 0 : i64, scratch_operands = 0 : i64, tpu.core_type = #tpu.core_type<tc>, window_params = [{transform_indices = @transform_0, window_bounds = array<i64: 16, 1152>}, {pipeline_mode = #tpu.pipeline_mode<synchronous>, transform_indices = @transform_1, window_bounds = array<i64: 1152, 256>}, {pipeline_mode = #tpu.pipeline_mode<synchronous>, transform_indices = @transform_2, window_bounds = array<i64: 1, 256>}, {transform_indices = @transform_3, window_bounds = array<i64: 16, 256>}]} {
    %c0 = arith.constant 0 : index
    %c0_0 = arith.constant 0 : index
    %0 = vector.load %arg1[%c0, %c0_0] : memref<16x1152xbf16, #tpu.memory_space<vmem>>, vector<16x1152xbf16>
    %c0_1 = arith.constant 0 : index
    %c0_2 = arith.constant 0 : index
    %1 = vector.load %arg2[%c0_1, %c0_2] : memref<1152x256xbf16, #tpu.memory_space<vmem>>, vector<1152x256xbf16>
    %cst = arith.constant dense<0.000000e+00> : vector<16x256xf32>
    %2 = tpu.matmul %0, %1, %cst {dimension_numbers = #tpu.dot_dimension_numbers<[1], [0], [0], [1], [0, 0, 1, 1], [], []>} : vector<16x1152xbf16>, vector<1152x256xbf16>, vector<16x256xf32> -> vector<16x256xf32>
    %c0_3 = arith.constant 0 : index
    %c0_4 = arith.constant 0 : index
    %3 = vector.load %arg3[%c0_3, %c0_4] : memref<1x256xf32, #tpu.memory_space<vmem>>, vector<1x256xf32>
    %4 = vector.broadcast %3 : vector<1x256xf32> to vector<16x256xf32>
    %5 = arith.addf %2, %4 : vector<16x256xf32>
    %cst_5 = arith.constant 0.000000e+00 : f32
    %6 = vector.broadcast %cst_5 : f32 to vector<16x256xf32>
    %7 = arith.cmpf ogt, %5, %6 : vector<16x256xf32>
    %cst_6 = arith.constant 2.000000e-01 : f32
    %8 = vector.broadcast %cst_6 : f32 to vector<16x256xf32>
    %9 = arith.mulf %8, %5 : vector<16x256xf32>
    %10 = arith.select %7, %5, %9 : vector<16x256xi1>, vector<16x256xf32>
    %11 = arith.truncf %10 : vector<16x256xf32> to vector<16x256xbf16>
    %c0_7 = arith.constant 0 : index
    %c0_8 = arith.constant 0 : index
    %12 = vector.load %arg4[%c0_7, %c0_8] : memref<16x256xbf16, #tpu.memory_space<vmem>>, vector<16x256xbf16>
    tpu.vector_store %arg4[%c0_7, %c0_8], %11 {strides = array<i32>} : memref<16x256xbf16, #tpu.memory_space<vmem>>, vector<16x256xbf16>,
    return
  }
  func.func @transform_0(%arg0: i32) -> (i32, i32) {
    %c0_i32 = arith.constant 0 : i32
    %c0_i32_0 = arith.constant 0 : i32
    return %arg0, %c0_i32 : i32, i32
  }
  func.func @transform_1(%arg0: i32) -> (i32, i32) {
    %c0_i32 = arith.constant 0 : i32
    %c0_i32_0 = arith.constant 0 : i32
    %c0_i32_1 = arith.constant 0 : i32
    return %c0_i32, %c0_i32_0 : i32, i32
  }
  func.func @transform_2(%arg0: i32) -> (i32, i32) {
    %c0_i32 = arith.constant 0 : i32
    %c0_i32_0 = arith.constant 0 : i32
    %c0_i32_1 = arith.constant 0 : i32
    return %c0_i32, %c0_i32_0 : i32, i32
  }
  func.func @transform_3(%arg0: i32) -> (i32, i32) {
    %c0_i32 = arith.constant 0 : i32
    %c0_i32_0 = arith.constant 0 : i32
    return %arg0, %c0_i32 : i32, i32
  }
}

module attributes {stable_mosaic.version = 11 : i64} {
  func.func @_matmul_shift_act_kernel(%arg0: i32, %arg1: memref<16x512xbf16, #tpu.memory_space<vmem>>, %arg2: memref<512x1024xbf16, #tpu.memory_space<vmem>>, %arg3: memref<1x1024xf32, #tpu.memory_space<vmem>>, %arg4: memref<16x1024xf32, #tpu.memory_space<vmem>>) attributes {dimension_semantics = [#tpu.dimension_semantics<parallel>], iteration_bounds = array<i64: 1>, scalar_prefetch = 0 : i64, scratch_operands = 0 : i64, tpu.core_type = #tpu.core_type<tc>, window_params = [{transform_indices = @transform_0, window_bounds = array<i64: 16, 512>}, {pipeline_mode = #tpu.pipeline_mode<synchronous>, transform_indices = @transform_1, window_bounds = array<i64: 512, 1024>}, {pipeline_mode = #tpu.pipeline_mode<synchronous>, transform_indices = @transform_2, window_bounds = array<i64: 1, 1024>}, {transform_indices = @transform_3, window_bounds = array<i64: 16, 1024>}]} {
    %c0 = arith.constant 0 : index
    %c0_0 = arith.constant 0 : index
    %0 = vector.load %arg1[%c0, %c0_0] : memref<16x512xbf16, #tpu.memory_space<vmem>>, vector<16x512xbf16>
    %c0_1 = arith.constant 0 : index
    %c0_2 = arith.constant 0 : index
    %1 = vector.load %arg2[%c0_1, %c0_2] : memref<512x1024xbf16, #tpu.memory_space<vmem>>, vector<512x1024xbf16>
    %cst = arith.constant dense<0.000000e+00> : vector<16x1024xf32>
    %2 = tpu.matmul %0, %1, %cst {dimension_numbers = #tpu.dot_dimension_numbers<[1], [0], [0], [1], [0, 0, 1, 1], [], []>} : vector<16x512xbf16>, vector<512x1024xbf16>, vector<16x1024xf32> -> vector<16x1024xf32>
    %c0_3 = arith.constant 0 : index
    %c0_4 = arith.constant 0 : index
    %3 = vector.load %arg3[%c0_3, %c0_4] : memref<1x1024xf32, #tpu.memory_space<vmem>>, vector<1x1024xf32>
    %4 = vector.broadcast %3 : vector<1x1024xf32> to vector<16x1024xf32>
    %5 = arith.addf %2, %4 : vector<16x1024xf32>
    %c0_5 = arith.constant 0 : index
    %c0_6 = arith.constant 0 : index
    %6 = vector.load %arg4[%c0_5, %c0_6] : memref<16x1024xf32, #tpu.memory_space<vmem>>, vector<16x1024xf32>
    tpu.vector_store %arg4[%c0_5, %c0_6], %5 {strides = array<i32>} : memref<16x1024xf32, #tpu.memory_space<vmem>>, vector<16x1024xf32>,
    return
  }
  func.func @transform_0(%arg0: i32) -> (i32, i32) {
    %c0_i32 = arith.constant 0 : i32
    %c0_i32_0 = arith.constant 0 : i32
    return %arg0, %c0_i32 : i32, i32
  }
  func.func @transform_1(%arg0: i32) -> (i32, i32) {
    %c0_i32 = arith.constant 0 : i32
    %c0_i32_0 = arith.constant 0 : i32
    %c0_i32_1 = arith.constant 0 : i32
    return %c0_i32, %c0_i32_0 : i32, i32
  }
  func.func @transform_2(%arg0: i32) -> (i32, i32) {
    %c0_i32 = arith.constant 0 : i32
    %c0_i32_0 = arith.constant 0 : i32
    %c0_i32_1 = arith.constant 0 : i32
    return %c0_i32, %c0_i32_0 : i32, i32
  }
  func.func @transform_3(%arg0: i32) -> (i32, i32) {
    %c0_i32 = arith.constant 0 : i32
    %c0_i32_0 = arith.constant 0 : i32
    return %arg0, %c0_i32 : i32, i32
  }
}

module attributes {stable_mosaic.version = 11 : i64} {
  func.func @_fc_fused_kernel(%arg0: memref<8x1024xbf16, #tpu.memory_space<vmem>>, %arg1: memref<1024x128xbf16, #tpu.memory_space<vmem>>, %arg2: memref<1x128xf32, #tpu.memory_space<vmem>>, %arg3: memref<128x512xbf16, #tpu.memory_space<vmem>>, %arg4: memref<1x512xf32, #tpu.memory_space<vmem>>, %arg5: memref<8x128xf32, #tpu.memory_space<vmem>>, %arg6: memref<8x512xbf16, #tpu.memory_space<vmem>>) attributes {dimension_semantics = [], scalar_prefetch = 0 : i64, scratch_operands = 0 : i64, tpu.core_type = #tpu.core_type<tc>} {
    %c0 = arith.constant 0 : index
    %c0_0 = arith.constant 0 : index
    %0 = vector.load %arg0[%c0, %c0_0] : memref<8x1024xbf16, #tpu.memory_space<vmem>>, vector<8x1024xbf16>
    %c0_1 = arith.constant 0 : index
    %c0_2 = arith.constant 0 : index
    %1 = vector.load %arg1[%c0_1, %c0_2] : memref<1024x128xbf16, #tpu.memory_space<vmem>>, vector<1024x128xbf16>
    %cst = arith.constant dense<0.000000e+00> : vector<8x128xf32>
    %2 = tpu.matmul %0, %1, %cst {dimension_numbers = #tpu.dot_dimension_numbers<[1], [0], [0], [1], [0, 0, 1, 1], [], []>} : vector<8x1024xbf16>, vector<1024x128xbf16>, vector<8x128xf32> -> vector<8x128xf32>
    %c0_3 = arith.constant 0 : index
    %c0_4 = arith.constant 0 : index
    %3 = vector.load %arg2[%c0_3, %c0_4] : memref<1x128xf32, #tpu.memory_space<vmem>>, vector<1x128xf32>
    %4 = vector.broadcast %3 : vector<1x128xf32> to vector<8x128xf32>
    %5 = arith.addf %2, %4 : vector<8x128xf32>
    %cst_5 = arith.constant 0.000000e+00 : f32
    %6 = vector.broadcast %cst_5 : f32 to vector<8x128xf32>
    %7 = arith.cmpf ogt, %5, %6 : vector<8x128xf32>
    %cst_6 = arith.constant 2.000000e-01 : f32
    %8 = vector.broadcast %cst_6 : f32 to vector<8x128xf32>
    %9 = arith.mulf %8, %5 : vector<8x128xf32>
    %10 = arith.select %7, %5, %9 : vector<8x128xi1>, vector<8x128xf32>
    %c0_7 = arith.constant 0 : index
    %c0_8 = arith.constant 0 : index
    %11 = vector.load %arg5[%c0_7, %c0_8] : memref<8x128xf32, #tpu.memory_space<vmem>>, vector<8x128xf32>
    tpu.vector_store %arg5[%c0_7, %c0_8], %10 {strides = array<i32>} : memref<8x128xf32, #tpu.memory_space<vmem>>, vector<8x128xf32>,
    %12 = arith.truncf %10 : vector<8x128xf32> to vector<8x128xbf16>
    %c0_9 = arith.constant 0 : index
    %c0_10 = arith.constant 0 : index
    %13 = vector.load %arg3[%c0_9, %c0_10] : memref<128x512xbf16, #tpu.memory_space<vmem>>, vector<128x512xbf16>
    %cst_11 = arith.constant dense<0.000000e+00> : vector<8x512xf32>
    %14 = tpu.matmul %12, %13, %cst_11 {dimension_numbers = #tpu.dot_dimension_numbers<[1], [0], [0], [1], [0, 0, 1, 1], [], []>} : vector<8x128xbf16>, vector<128x512xbf16>, vector<8x512xf32> -> vector<8x512xf32>
    %c0_12 = arith.constant 0 : index
    %c0_13 = arith.constant 0 : index
    %15 = vector.load %arg4[%c0_12, %c0_13] : memref<1x512xf32, #tpu.memory_space<vmem>>, vector<1x512xf32>
    %16 = vector.broadcast %15 : vector<1x512xf32> to vector<8x512xf32>
    %17 = arith.addf %14, %16 : vector<8x512xf32>
    %cst_14 = arith.constant 0.000000e+00 : f32
    %18 = vector.broadcast %cst_14 : f32 to vector<8x512xf32>
    %19 = arith.maximumf %17, %18 : vector<8x512xf32>
    %20 = arith.truncf %19 : vector<8x512xf32> to vector<8x512xbf16>
    %c0_15 = arith.constant 0 : index
    %c0_16 = arith.constant 0 : index
    %21 = vector.load %arg6[%c0_15, %c0_16] : memref<8x512xbf16, #tpu.memory_space<vmem>>, vector<8x512xbf16>
    tpu.vector_store %arg6[%c0_15, %c0_16], %20 {strides = array<i32>} : memref<8x512xbf16, #tpu.memory_space<vmem>>, vector<8x512xbf16>,
    return
  }
}

module attributes {stable_mosaic.version = 11 : i64} {
  func.func @_matmul_shift_act_kernel(%arg0: i32, %arg1: memref<32x64xbf16, #tpu.memory_space<vmem>>, %arg2: memref<64x384xbf16, #tpu.memory_space<vmem>>, %arg3: memref<1x384xf32, #tpu.memory_space<vmem>>, %arg4: memref<32x384xf32, #tpu.memory_space<vmem>>) attributes {dimension_semantics = [#tpu.dimension_semantics<parallel>], iteration_bounds = array<i64: 1>, scalar_prefetch = 0 : i64, scratch_operands = 0 : i64, tpu.core_type = #tpu.core_type<tc>, window_params = [{transform_indices = @transform_0, window_bounds = array<i64: 32, 64>}, {pipeline_mode = #tpu.pipeline_mode<synchronous>, transform_indices = @transform_1, window_bounds = array<i64: 64, 384>}, {pipeline_mode = #tpu.pipeline_mode<synchronous>, transform_indices = @transform_2, window_bounds = array<i64: 1, 384>}, {transform_indices = @transform_3, window_bounds = array<i64: 32, 384>}]} {
    %c0 = arith.constant 0 : index
    %c0_0 = arith.constant 0 : index
    %0 = vector.load %arg1[%c0, %c0_0] : memref<32x64xbf16, #tpu.memory_space<vmem>>, vector<32x64xbf16>
    %c0_1 = arith.constant 0 : index
    %c0_2 = arith.constant 0 : index
    %1 = vector.load %arg2[%c0_1, %c0_2] : memref<64x384xbf16, #tpu.memory_space<vmem>>, vector<64x384xbf16>
    %cst = arith.constant dense<0.000000e+00> : vector<32x384xf32>
    %2 = tpu.matmul %0, %1, %cst {dimension_numbers = #tpu.dot_dimension_numbers<[1], [0], [0], [1], [0, 0, 1, 1], [], []>} : vector<32x64xbf16>, vector<64x384xbf16>, vector<32x384xf32> -> vector<32x384xf32>
    %c0_3 = arith.constant 0 : index
    %c0_4 = arith.constant 0 : index
    %3 = vector.load %arg3[%c0_3, %c0_4] : memref<1x384xf32, #tpu.memory_space<vmem>>, vector<1x384xf32>
    %4 = vector.broadcast %3 : vector<1x384xf32> to vector<32x384xf32>
    %5 = arith.addf %2, %4 : vector<32x384xf32>
    %c0_5 = arith.constant 0 : index
    %c0_6 = arith.constant 0 : index
    %6 = vector.load %arg4[%c0_5, %c0_6] : memref<32x384xf32, #tpu.memory_space<vmem>>, vector<32x384xf32>
    tpu.vector_store %arg4[%c0_5, %c0_6], %5 {strides = array<i32>} : memref<32x384xf32, #tpu.memory_space<vmem>>, vector<32x384xf32>,
    return
  }
  func.func @transform_0(%arg0: i32) -> (i32, i32) {
    %c0_i32 = arith.constant 0 : i32
    %c0_i32_0 = arith.constant 0 : i32
    return %arg0, %c0_i32 : i32, i32
  }
  func.func @transform_1(%arg0: i32) -> (i32, i32) {
    %c0_i32 = arith.constant 0 : i32
    %c0_i32_0 = arith.constant 0 : i32
    %c0_i32_1 = arith.constant 0 : i32
    return %c0_i32, %c0_i32_0 : i32, i32
  }
  func.func @transform_2(%arg0: i32) -> (i32, i32) {
    %c0_i32 = arith.constant 0 : i32
    %c0_i32_0 = arith.constant 0 : i32
    %c0_i32_1 = arith.constant 0 : i32
    return %c0_i32, %c0_i32_0 : i32, i32
  }
  func.func @transform_3(%arg0: i32) -> (i32, i32) {
    %c0_i32 = arith.constant 0 : i32
    %c0_i32_0 = arith.constant 0 : i32
    return %arg0, %c0_i32 : i32, i32
  }
}

module attributes {stable_mosaic.version = 11 : i64} {
  func.func @_matmul_shift_act_kernel(%arg0: i32, %arg1: memref<112x32xbf16, #tpu.memory_space<vmem>>, %arg2: memref<32x256xbf16, #tpu.memory_space<vmem>>, %arg3: memref<1x256xf32, #tpu.memory_space<vmem>>, %arg4: memref<112x256xf32, #tpu.memory_space<vmem>>) attributes {dimension_semantics = [#tpu.dimension_semantics<parallel>], iteration_bounds = array<i64: 1>, scalar_prefetch = 0 : i64, scratch_operands = 0 : i64, tpu.core_type = #tpu.core_type<tc>, window_params = [{transform_indices = @transform_0, window_bounds = array<i64: 112, 32>}, {pipeline_mode = #tpu.pipeline_mode<synchronous>, transform_indices = @transform_1, window_bounds = array<i64: 32, 256>}, {pipeline_mode = #tpu.pipeline_mode<synchronous>, transform_indices = @transform_2, window_bounds = array<i64: 1, 256>}, {transform_indices = @transform_3, window_bounds = array<i64: 112, 256>}]} {
    %c0 = arith.constant 0 : index
    %c0_0 = arith.constant 0 : index
    %0 = vector.load %arg1[%c0, %c0_0] : memref<112x32xbf16, #tpu.memory_space<vmem>>, vector<112x32xbf16>
    %c0_1 = arith.constant 0 : index
    %c0_2 = arith.constant 0 : index
    %1 = vector.load %arg2[%c0_1, %c0_2] : memref<32x256xbf16, #tpu.memory_space<vmem>>, vector<32x256xbf16>
    %cst = arith.constant dense<0.000000e+00> : vector<112x256xf32>
    %2 = tpu.matmul %0, %1, %cst {dimension_numbers = #tpu.dot_dimension_numbers<[1], [0], [0], [1], [0, 0, 1, 1], [], []>} : vector<112x32xbf16>, vector<32x256xbf16>, vector<112x256xf32> -> vector<112x256xf32>
    %c0_3 = arith.constant 0 : index
    %c0_4 = arith.constant 0 : index
    %3 = vector.load %arg3[%c0_3, %c0_4] : memref<1x256xf32, #tpu.memory_space<vmem>>, vector<1x256xf32>
    %4 = vector.broadcast %3 : vector<1x256xf32> to vector<112x256xf32>
    %5 = arith.addf %2, %4 : vector<112x256xf32>
    %c0_5 = arith.constant 0 : index
    %c0_6 = arith.constant 0 : index
    %6 = vector.load %arg4[%c0_5, %c0_6] : memref<112x256xf32, #tpu.memory_space<vmem>>, vector<112x256xf32>
    tpu.vector_store %arg4[%c0_5, %c0_6], %5 {strides = array<i32>} : memref<112x256xf32, #tpu.memory_space<vmem>>, vector<112x256xf32>,
    return
  }
  func.func @transform_0(%arg0: i32) -> (i32, i32) {
    %c0_i32 = arith.constant 0 : i32
    %c0_i32_0 = arith.constant 0 : i32
    return %arg0, %c0_i32 : i32, i32
  }
  func.func @transform_1(%arg0: i32) -> (i32, i32) {
    %c0_i32 = arith.constant 0 : i32
    %c0_i32_0 = arith.constant 0 : i32
    %c0_i32_1 = arith.constant 0 : i32
    return %c0_i32, %c0_i32_0 : i32, i32
  }
  func.func @transform_2(%arg0: i32) -> (i32, i32) {
    %c0_i32 = arith.constant 0 : i32
    %c0_i32_0 = arith.constant 0 : i32
    %c0_i32_1 = arith.constant 0 : i32
    return %c0_i32, %c0_i32_0 : i32, i32
  }
  func.func @transform_3(%arg0: i32) -> (i32, i32) {
    %c0_i32 = arith.constant 0 : i32
    %c0_i32_0 = arith.constant 0 : i32
    return %arg0, %c0_i32 : i32, i32
  }
}

module attributes {stable_mosaic.version = 11 : i64} {
  func.func @_matmul_shift_act_kernel(%arg0: i32, %arg1: memref<256x16xbf16, #tpu.memory_space<vmem>>, %arg2: memref<16x128xbf16, #tpu.memory_space<vmem>>, %arg3: memref<1x128xf32, #tpu.memory_space<vmem>>, %arg4: memref<256x128xf32, #tpu.memory_space<vmem>>) attributes {dimension_semantics = [#tpu.dimension_semantics<parallel>], iteration_bounds = array<i64: 2>, scalar_prefetch = 0 : i64, scratch_operands = 0 : i64, tpu.core_type = #tpu.core_type<tc>, window_params = [{transform_indices = @transform_0, window_bounds = array<i64: 256, 16>}, {pipeline_mode = #tpu.pipeline_mode<synchronous>, transform_indices = @transform_1, window_bounds = array<i64: 16, 128>}, {pipeline_mode = #tpu.pipeline_mode<synchronous>, transform_indices = @transform_2, window_bounds = array<i64: 1, 128>}, {transform_indices = @transform_3, window_bounds = array<i64: 256, 128>}]} {
    %c0 = arith.constant 0 : index
    %c0_0 = arith.constant 0 : index
    %0 = vector.load %arg1[%c0, %c0_0] : memref<256x16xbf16, #tpu.memory_space<vmem>>, vector<256x16xbf16>
    %c0_1 = arith.constant 0 : index
    %c0_2 = arith.constant 0 : index
    %1 = vector.load %arg2[%c0_1, %c0_2] : memref<16x128xbf16, #tpu.memory_space<vmem>>, vector<16x128xbf16>
    %cst = arith.constant dense<0.000000e+00> : vector<256x128xf32>
    %2 = tpu.matmul %0, %1, %cst {dimension_numbers = #tpu.dot_dimension_numbers<[1], [0], [0], [1], [0, 0, 1, 1], [], []>} : vector<256x16xbf16>, vector<16x128xbf16>, vector<256x128xf32> -> vector<256x128xf32>
    %c0_3 = arith.constant 0 : index
    %c0_4 = arith.constant 0 : index
    %3 = vector.load %arg3[%c0_3, %c0_4] : memref<1x128xf32, #tpu.memory_space<vmem>>, vector<1x128xf32>
    %4 = vector.broadcast %3 : vector<1x128xf32> to vector<256x128xf32>
    %5 = arith.addf %2, %4 : vector<256x128xf32>
    %c0_5 = arith.constant 0 : index
    %c0_6 = arith.constant 0 : index
    %6 = vector.load %arg4[%c0_5, %c0_6] : memref<256x128xf32, #tpu.memory_space<vmem>>, vector<256x128xf32>
    tpu.vector_store %arg4[%c0_5, %c0_6], %5 {strides = array<i32>} : memref<256x128xf32, #tpu.memory_space<vmem>>, vector<256x128xf32>,
    return
  }
  func.func @transform_0(%arg0: i32) -> (i32, i32) {
    %c0_i32 = arith.constant 0 : i32
    %c0_i32_0 = arith.constant 0 : i32
    return %arg0, %c0_i32 : i32, i32
  }
  func.func @transform_1(%arg0: i32) -> (i32, i32) {
    %c0_i32 = arith.constant 0 : i32
    %c0_i32_0 = arith.constant 0 : i32
    %c0_i32_1 = arith.constant 0 : i32
    return %c0_i32, %c0_i32_0 : i32, i32
  }
  func.func @transform_2(%arg0: i32) -> (i32, i32) {
    %c0_i32 = arith.constant 0 : i32
    %c0_i32_0 = arith.constant 0 : i32
    %c0_i32_1 = arith.constant 0 : i32
    return %c0_i32, %c0_i32_0 : i32, i32
  }
  func.func @transform_3(%arg0: i32) -> (i32, i32) {
    %c0_i32 = arith.constant 0 : i32
    %c0_i32_0 = arith.constant 0 : i32
    return %arg0, %c0_i32 : i32, i32
  }
}

</mosaic_0001>

<llo_original>
// kernel: ae_forward.10
$region0: #{ae_forward.10}
  #allocation0 [shape = 'u32[]', space=smem, size = 0x4, offset = 0x4, fixed_abs, tag = 'smem constant byte address 0x4 - core index']
  #allocation1 [shape = 'u32[72,128]{1,0:T(1,128)}', space=vmem, size = 0x9000, scoped, tag = 'internal scratch']
  %s0 = inlined_call_operand.vmem [shape: bf16[1536,16], index: 0, kind: input, shape index: {}]
  %s1 = inlined_call_operand.vmem [shape: bf16[16,128], index: 1, kind: input, shape index: {}]
  %s2 = inlined_call_operand.vmem [shape: f32[1,128], index: 2, kind: input, shape index: {}]
  %s3 = inlined_call_operand.vmem [shape: bf16[1536,128], index: 3, kind: output, shape index: {}]
  %s4 = sld [smem:[#allocation0]]
  $region45: #{ae_forward.10} parent=0
    _
  %s6 = ssub.s32 1, %s4
  %s7 = scalar_select 0, %s6, %s4
  loop: start=0, step=1, limit=8
  $region2: #{ae_forward.10} parent=0 // loop_pre_header
    _
  $region3: #{ae_forward.10} parent=0 // loop_header
    %s9 = sphi 0, %s13
    %p10 = scmp.ge.s32.totalorder %s9, 8
    %s19 = sphi 0, %s21
    %s22 = sphi 0, %s19
    %s23 = sphi 0, %s22
    %s39 = sphi 0, %s23
    %s43 = sphi 0, %s43
    %s45 = sphi 0, %s43
    %s46 = sphi 0, %s45
    %s60 = sphi 0, %s46
    %s64 = sphi 0, %s64
    %s66 = sphi 0, %s64
    %s67 = sphi 0, %s66
    %s81 = sphi 0, %s67
    %s87 = sphi 0, %s89
    %s90 = sphi 0, %s87
    %s91 = sphi 0, %s90
    %s107 = sphi 0, %s91
  $region4: #{ae_forward.10} parent=0 // loop_header_branch
    %12 = sbr.rel (%p10) target = $region8
  $region5: #{ae_forward.10} parent=0 // loop_body
    %s14 = ssub.s32 %s9, 1
    %s15 = ssub.s32 %s9, 2
    %s16 = sadd.s32 %s9, 1
    %s17 = ssub.s32 %s9, %s16
    %p18 = scmp.eq.s32.totalorder %s17, 0
    %s20 = sadd.s32 %s19, 1
    %s21 = scalar_select %p18, %s19, %s20
    %p24 = pneg %p18
    %p25 = scmp.eq.s32.totalorder %s9, 5
    %p26 = por %p24, %p25
    %p27 = scmp.ne.s32.totalorder %s19, %s22
    %p28 = scmp.eq.s32.totalorder %s9, 0
    %p29 = por %p27, %p28
    %p30 = scmp.ne.s32.totalorder %s19, %s22
    %p31 = scmp.eq.s32.totalorder %s14, 5
    %p32 = por %p30, %p31
    %p33 = scmp.ne.s32.totalorder %s22, %s23
    %p34 = scmp.eq.s32.totalorder %s14, 0
    %p35 = por %p33, %p34
    %p36 = scmp.ne.s32.totalorder %s22, %s23
    %p37 = scmp.eq.s32.totalorder %s15, 5
    %p38 = por %p36, %p37
    %p40 = scmp.ne.s32.totalorder %s23, %s39
    %p41 = scmp.eq.s32.totalorder %s15, 0
    %p42 = por %p40, %p41
    %s44 = sadd.s32 %s43, 1
    %p47 = scmp.eq.s32.totalorder %s9, 5
    %p48 = scmp.ne.s32.totalorder %s43, %s45
    %p49 = scmp.eq.s32.totalorder %s9, 0
    %p50 = por %p48, %p49
    %p51 = scmp.ne.s32.totalorder %s43, %s45
    %p52 = scmp.eq.s32.totalorder %s14, 5
    %p53 = por %p51, %p52
    %p54 = scmp.ne.s32.totalorder %s45, %s46
    %p55 = scmp.eq.s32.totalorder %s14, 0
    %p56 = por %p54, %p55
    %p57 = scmp.ne.s32.totalorder %s45, %s46
    %p58 = scmp.eq.s32.totalorder %s15, 5
    %p59 = por %p57, %p58
    %p61 = scmp.ne.s32.totalorder %s46, %s60
    %p62 = scmp.eq.s32.totalorder %s15, 0
    %p63 = por %p61, %p62
    %s65 = sadd.s32 %s64, 1
    %p68 = scmp.eq.s32.totalorder %s9, 5
    %p69 = scmp.ne.s32.totalorder %s64, %s66
    %p70 = scmp.eq.s32.totalorder %s9, 0
    %p71 = por %p69, %p70
    %p72 = scmp.ne.s32.totalorder %s64, %s66
    %p73 = scmp.eq.s32.totalorder %s14, 5
    %p74 = por %p72, %p73
    %p75 = scmp.ne.s32.totalorder %s66, %s67
    %p76 = scmp.eq.s32.totalorder %s14, 0
    %p77 = por %p75, %p76
    %p78 = scmp.ne.s32.totalorder %s66, %s67
    %p79 = scmp.eq.s32.totalorder %s15, 5
    %p80 = por %p78, %p79
    %p82 = scmp.ne.s32.totalorder %s67, %s81
    %p83 = scmp.eq.s32.totalorder %s15, 0
    %p84 = por %p82, %p83
    %s85 = ssub.s32 %s9, %s16
    %p86 = scmp.eq.s32.totalorder %s85, 0
    %s88 = sadd.s32 %s87, 1
    %s89 = scalar_select %p86, %s87, %s88
    %p92 = pneg %p86
    %p93 = scmp.eq.s32.totalorder %s9, 5
    %p94 = por %p92, %p93
    %p95 = scmp.ne.s32.totalorder %s87, %s90
    %p96 = scmp.eq.s32.totalorder %s9, 0
    %p97 = por %p95, %p96
    %p98 = scmp.ne.s32.totalorder %s87, %s90
    %p99 = scmp.eq.s32.totalorder %s14, 5
    %p100 = por %p98, %p99
    %p101 = scmp.ne.s32.totalorder %s90, %s91
    %p102 = scmp.eq.s32.totalorder %s14, 0
    %p103 = por %p101, %p102
    %p104 = scmp.ne.s32.totalorder %s90, %s91
    %p105 = scmp.eq.s32.totalorder %s15, 5
    %p106 = por %p104, %p105
    %p108 = scmp.ne.s32.totalorder %s91, %s107
    %p109 = scmp.eq.s32.totalorder %s15, 0
    %p110 = por %p108, %p109
    %p111 = scmp.le.s32.totalorder 1, %s9
    %p112 = scmp.lt.s32.totalorder %s9, 7
    %p113 = pnand %p111, %p112
    %p114 = pneg %p113
    // Predicated region
    $region9: #{ae_forward.10} parent=5 // pred_check
      _
    $region10: #{ae_forward.10} parent=5 // pred_check_branch
      %116 = sbr.rel (%p113) target = $region12
    $region11: #{ae_forward.10} parent=5 // pred_region
      %s117 = ssub.s32 %s9, 1
      // Predicated region
      $region13: #{ae_forward.10} parent=11 // pred_check
        %p118 = pneg %p56
      $region14: #{ae_forward.10} parent=11 // pred_check_branch
        %120 = sbr.rel (%p118) target = $region16
      $region15: #{ae_forward.10} parent=11 // pred_region
        _
      $region16: #{ae_forward.10} parent=11 // pred_fallthru
        _
      // Predicated region
      $region17: #{ae_forward.10} parent=11 // pred_check
        %p121 = pneg %p77
      $region18: #{ae_forward.10} parent=11 // pred_check_branch
        %123 = sbr.rel (%p121) target = $region20
      $region19: #{ae_forward.10} parent=11 // pred_region
        _
      $region20: #{ae_forward.10} parent=11 // pred_fallthru
        _
    $region12: #{ae_forward.10} parent=5 // pred_fallthru
      _
    %p124 = scmp.lt.s32.totalorder %s9, 6
    // Predicated region
    $region21: #{ae_forward.10} parent=5 // pred_check
      %p125 = pneg %p124
    $region22: #{ae_forward.10} parent=5 // pred_check_branch
      %127 = sbr.rel (%p125) target = $region24
    $region23: #{ae_forward.10} parent=5 // pred_region
      // Predicated region
      $region25: #{ae_forward.10} parent=23 // pred_check
        %p128 = pneg %p29
      $region26: #{ae_forward.10} parent=23 // pred_check_branch
        %130 = sbr.rel (%p128) target = $region28
      $region27: #{ae_forward.10} parent=23 // pred_region
        %s131 = smul.u32 32, %s9
        %p132 = scmp.lt.s32.totalorder %s131, 191
        %s133 = scalar_select %p132, %s131, 191
        %s134 = smul.addr %s133, 4
        %s135 = scalar_lea.vmem %s0, %s134
        %s136 = smul.u32 32, %s9
      $region28: #{ae_forward.10} parent=23 // pred_fallthru
        _
    $region24: #{ae_forward.10} parent=5 // pred_fallthru
      _
    %p137 = scmp.le.s32.totalorder 1, %s9
    %p138 = scmp.lt.s32.totalorder %s9, 7
    %p139 = pnand %p137, %p138
    %p140 = pneg %p139
    // Predicated region
    $region29: #{ae_forward.10} parent=5 // pred_check
      _
    $region30: #{ae_forward.10} parent=5 // pred_check_branch
      %142 = sbr.rel (%p139) target = $region32
    $region31: #{ae_forward.10} parent=5 // pred_region
      %s143 = ssub.s32 %s9, 1
      %s144 = smul.u32 32, %s14
      %p145 = scmp.lt.s32.totalorder %s144, 191
      %s146 = scalar_select %p145, %s144, 191
      %s147 = smul.addr %s146, 4
      %s148 = scalar_lea.vmem %s0, %s147
      %p149 = pneg %p35
      %p150 = pneg %p32
      %p151 = pneg %p56
      %p152 = pneg %p53
      %p153 = pneg %p77
      %p154 = pneg %p74
      %p155 = pneg %p103
      %p156 = pneg %p100
      %s157 = smul.u32 32, %s14
      %p158 = scmp.lt.s32.totalorder %s157, 191
      %s159 = scalar_select %p158, %s157, 191
      %s160 = smul.addr %s159, 4
      %s161 = scalar_lea.vmem %s3, %s160
      %s162 = smul.u32 32, %s14
      %p163 = scmp.lt.s32.totalorder %s162, 191
      %s164 = scalar_select %p163, %s162, 191
      %s165 = smul.addr %s164, 4
      %s166 = scalar_lea.vmem %s0, %s165
      %s167 = smul.u32 32, %s14
      %s168 = smul.u32 32, %s14
      %p169 = scmp.lt.s32.totalorder %s168, 191
      %s170 = scalar_select %p169, %s168, 191
      %s171 = smul.addr %s170, 4
      %s172 = scalar_lea.vmem %s3, %s171
      %s173 = smul.u32 32, %s14
      %v175 = vld [vmem:[%s166] sm:$0xf]
      %v176 = vld [vmem:[%s166 + $0x4] sm:$0xf]
      %v177 = vld [vmem:[%s166 + $0x8] sm:$0xf]
      %v178 = vld [vmem:[%s166 + $0xc] sm:$0xf]
      %v179 = vld [vmem:[%s166 + $0x10] sm:$0xf]
      %v180 = vld [vmem:[%s166 + $0x14] sm:$0xf]
      %v181 = vld [vmem:[%s166 + $0x18] sm:$0xf]
      %v182 = vld [vmem:[%s166 + $0x1c] sm:$0xf]
      %v183 = vld [vmem:[%s166 + $0x20] sm:$0xf]
      %v184 = vld [vmem:[%s166 + $0x24] sm:$0xf]
      %v185 = vld [vmem:[%s166 + $0x28] sm:$0xf]
      %v186 = vld [vmem:[%s166 + $0x2c] sm:$0xf]
      %v187 = vld [vmem:[%s166 + $0x30] sm:$0xf]
      %v188 = vld [vmem:[%s166 + $0x34] sm:$0xf]
      %v189 = vld [vmem:[%s166 + $0x38] sm:$0xf]
      %v190 = vld [vmem:[%s166 + $0x3c] sm:$0xf]
      %v191 = vld [vmem:[%s166 + $0x40] sm:$0xf]
      %v192 = vld [vmem:[%s166 + $0x44] sm:$0xf]
      %v193 = vld [vmem:[%s166 + $0x48] sm:$0xf]
      %v194 = vld [vmem:[%s166 + $0x4c] sm:$0xf]
      %v195 = vld [vmem:[%s166 + $0x50] sm:$0xf]
      %v196 = vld [vmem:[%s166 + $0x54] sm:$0xf]
      %v197 = vld [vmem:[%s166 + $0x58] sm:$0xf]
      %v198 = vld [vmem:[%s166 + $0x5c] sm:$0xf]
      %v199 = vld [vmem:[%s166 + $0x60] sm:$0xf]
      %v200 = vld [vmem:[%s166 + $0x64] sm:$0xf]
      %v201 = vld [vmem:[%s166 + $0x68] sm:$0xf]
      %v202 = vld [vmem:[%s166 + $0x6c] sm:$0xf]
      %v203 = vld [vmem:[%s166 + $0x70] sm:$0xf]
      %v204 = vld [vmem:[%s166 + $0x74] sm:$0xf]
      %v205 = vld [vmem:[%s166 + $0x78] sm:$0xf]
      %v206 = vld [vmem:[%s166 + $0x7c] sm:$0xf]
      %v207 = vld [vmem:[%s1] sm:$0xf]
      %v208 = vld [vmem:[%s1 + $0x4] sm:$0xf]
      %v209 = vld [vmem:[%s2] sm:$0x1]
      %v211 = vperm.slane %v209, 0
      %v245 = vunpack.c.l.b16 %v175
      %v246 = vunpack.c.l.b16 %v176
      %v247 = vunpack.c.l.b16 %v177
      %v248 = vunpack.c.l.b16 %v178
      %v249 = vunpack.c.l.b16 %v179
      %v250 = vunpack.c.l.b16 %v180
      %v251 = vunpack.c.l.b16 %v181
      %v252 = vunpack.c.l.b16 %v182
      %v253 = vunpack.c.l.b16 %v183
      %v254 = vunpack.c.l.b16 %v184
      %v255 = vunpack.c.l.b16 %v185
      %v256 = vunpack.c.l.b16 %v186
      %v257 = vunpack.c.l.b16 %v187
      %v258 = vunpack.c.l.b16 %v188
      %v259 = vunpack.c.l.b16 %v189
      %v260 = vunpack.c.l.b16 %v190
      %v261 = vunpack.c.l.b16 %v191
      %v262 = vunpack.c.l.b16 %v192
      %v263 = vunpack.c.l.b16 %v193
      %v264 = vunpack.c.l.b16 %v194
      %v265 = vunpack.c.l.b16 %v195
      %v266 = vunpack.c.l.b16 %v196
      %v267 = vunpack.c.l.b16 %v197
      %v268 = vunpack.c.l.b16 %v198
      %v269 = vunpack.c.l.b16 %v199
      %v270 = vunpack.c.l.b16 %v200
      %v271 = vunpack.c.l.b16 %v201
      %v272 = vunpack.c.l.b16 %v202
      %v273 = vunpack.c.l.b16 %v203
      %v274 = vunpack.c.l.b16 %v204
      %v275 = vunpack.c.l.b16 %v205
      %v276 = vunpack.c.l.b16 %v206
      %v277 = vpack.c.b16 %v246, %v245
      %v278 = vpack.c.b16 %v248, %v247
      %v279 = vpack.c.b16 %v250, %v249
      %v280 = vpack.c.b16 %v252, %v251
      %v281 = vpack.c.b16 %v254, %v253
      %v282 = vpack.c.b16 %v256, %v255
      %v283 = vpack.c.b16 %v258, %v257
      %v284 = vpack.c.b16 %v260, %v259
      %v285 = vpack.c.b16 %v262, %v261
      %v286 = vpack.c.b16 %v264, %v263
      %v287 = vpack.c.b16 %v266, %v265
      %v288 = vpack.c.b16 %v268, %v267
      %v289 = vpack.c.b16 %v270, %v269
      %v290 = vpack.c.b16 %v272, %v271
      %v291 = vpack.c.b16 %v274, %v273
      %v292 = vpack.c.b16 %v276, %v275
      %v295 = vunpack.c.l.b16 %v207
      %v296 = vunpack.c.l.b16 %v208
      %v297 = vpack.c.b16 %v296, %v295
      %vm299 = vcmask 130048
      %v301 = vsel %vm299, %v277, 0
      %v304 = vsel %vm299, %v278, 0
      %v307 = vsel %vm299, %v279, 0
      %v310 = vsel %vm299, %v280, 0
      %v313 = vsel %vm299, %v281, 0
      %v316 = vsel %vm299, %v282, 0
      %v319 = vsel %vm299, %v283, 0
      %v322 = vsel %vm299, %v284, 0
      %v325 = vsel %vm299, %v285, 0
      %v328 = vsel %vm299, %v286, 0
      %v331 = vsel %vm299, %v287, 0
      %v334 = vsel %vm299, %v288, 0
      %v337 = vsel %vm299, %v289, 0
      %v340 = vsel %vm299, %v290, 0
      %v343 = vsel %vm299, %v291, 0
      %v346 = vsel %vm299, %v292, 0
      %348 = vmatpush.bf16.msra.mxu0 0
      %349 = vmatpush.bf16.msra.mxu0 0
      %350 = vmatpush.bf16.msra.mxu0 0
      %351 = vmatpush.bf16.msra.mxu0 0
      %352 = vmatpush.bf16.msra.mxu0 0
      %353 = vmatpush.bf16.msra.mxu0 0
      %354 = vmatpush.bf16.msra.mxu0 0
      %355 = vmatpush.bf16.msra.mxu0 %v297
      %356 = vmatmul.bf16.gmra.mxu0 %v301
      %v357 = vpop.f32.mrf.mxu0
      %v358 = vadd.f32 %v211, %v357
      %v359 = vpop.f32.mrf.mxu0
      %v360 = vadd.f32 %v211, %v359
      %361 = vmatmul.bf16.gmra.mxu0 %v304
      %v362 = vpop.f32.mrf.mxu0
      %v363 = vadd.f32 %v211, %v362
      %v364 = vpop.f32.mrf.mxu0
      %v365 = vadd.f32 %v211, %v364
      %366 = vmatmul.bf16.gmra.mxu0 %v307
      %v367 = vpop.f32.mrf.mxu0
      %v368 = vadd.f32 %v211, %v367
      %v369 = vpop.f32.mrf.mxu0
      %v370 = vadd.f32 %v211, %v369
      %371 = vmatmul.bf16.gmra.mxu0 %v310
      %v372 = vpop.f32.mrf.mxu0
      %v373 = vadd.f32 %v211, %v372
      %v374 = vpop.f32.mrf.mxu0
      %v375 = vadd.f32 %v211, %v374
      %376 = vmatmul.bf16.gmra.mxu0 %v313
      %v377 = vpop.f32.mrf.mxu0
      %v378 = vadd.f32 %v211, %v377
      %v379 = vpop.f32.mrf.mxu0
      %v380 = vadd.f32 %v211, %v379
      %381 = vmatmul.bf16.gmra.mxu0 %v316
      %v382 = vpop.f32.mrf.mxu0
      %v383 = vadd.f32 %v211, %v382
      %v384 = vpop.f32.mrf.mxu0
      %v385 = vadd.f32 %v211, %v384
      %386 = vmatmul.bf16.gmra.mxu0 %v319
      %v387 = vpop.f32.mrf.mxu0
      %v388 = vadd.f32 %v211, %v387
      %v389 = vpop.f32.mrf.mxu0
      %v390 = vadd.f32 %v211, %v389
      %391 = vmatmul.bf16.gmra.mxu0 %v322
      %v392 = vpop.f32.mrf.mxu0
      %v393 = vadd.f32 %v211, %v392
      %v394 = vpop.f32.mrf.mxu0
      %v395 = vadd.f32 %v211, %v394
      %396 = vmatmul.bf16.gmra.mxu0 %v325
      %v397 = vpop.f32.mrf.mxu0
      %v398 = vadd.f32 %v211, %v397
      %v399 = vpop.f32.mrf.mxu0
      %v400 = vadd.f32 %v211, %v399
      %401 = vmatmul.bf16.gmra.mxu0 %v328
      %v402 = vpop.f32.mrf.mxu0
      %v403 = vadd.f32 %v211, %v402
      %v404 = vpop.f32.mrf.mxu0
      %v405 = vadd.f32 %v211, %v404
      %406 = vmatmul.bf16.gmra.mxu0 %v331
      %v407 = vpop.f32.mrf.mxu0
      %v408 = vadd.f32 %v211, %v407
      %v409 = vpop.f32.mrf.mxu0
      %v410 = vadd.f32 %v211, %v409
      %411 = vmatmul.bf16.gmra.mxu0 %v334
      %v412 = vpop.f32.mrf.mxu0
      %v413 = vadd.f32 %v211, %v412
      %v414 = vpop.f32.mrf.mxu0
      %v415 = vadd.f32 %v211, %v414
      %416 = vmatmul.bf16.gmra.mxu0 %v337
      %v417 = vpop.f32.mrf.mxu0
      %v418 = vadd.f32 %v211, %v417
      %v419 = vpop.f32.mrf.mxu0
      %v420 = vadd.f32 %v211, %v419
      %421 = vmatmul.bf16.gmra.mxu0 %v340
      %v422 = vpop.f32.mrf.mxu0
      %v423 = vadd.f32 %v211, %v422
      %v424 = vpop.f32.mrf.mxu0
      %v425 = vadd.f32 %v211, %v424
      %426 = vmatmul.bf16.gmra.mxu0 %v343
      %v427 = vpop.f32.mrf.mxu0
      %v428 = vadd.f32 %v211, %v427
      %v429 = vpop.f32.mrf.mxu0
      %v430 = vadd.f32 %v211, %v429
      %431 = vmatmul.bf16.gmra.mxu0 %v346
      %v432 = vpop.f32.mrf.mxu0
      %v433 = vadd.f32 %v211, %v432
      %v434 = vpop.f32.mrf.mxu0
      %v435 = vadd.f32 %v211, %v434
      %436 = vdwg.mxu0
      %vm437 = vcmp.gt.f32.partialorder %v358, 0.0
      %vm438 = vcmp.gt.f32.partialorder %v360, 0.0
      %vm439 = vcmp.gt.f32.partialorder %v363, 0.0
      %vm440 = vcmp.gt.f32.partialorder %v365, 0.0
      %vm441 = vcmp.gt.f32.partialorder %v368, 0.0
      %vm442 = vcmp.gt.f32.partialorder %v370, 0.0
      %vm443 = vcmp.gt.f32.partialorder %v373, 0.0
      %vm444 = vcmp.gt.f32.partialorder %v375, 0.0
      %vm445 = vcmp.gt.f32.partialorder %v378, 0.0
      %vm446 = vcmp.gt.f32.partialorder %v380, 0.0
      %vm447 = vcmp.gt.f32.partialorder %v383, 0.0
      %vm448 = vcmp.gt.f32.partialorder %v385, 0.0
      %vm449 = vcmp.gt.f32.partialorder %v388, 0.0
      %vm450 = vcmp.gt.f32.partialorder %v390, 0.0
      %vm451 = vcmp.gt.f32.partialorder %v393, 0.0
      %vm452 = vcmp.gt.f32.partialorder %v395, 0.0
      %vm453 = vcmp.gt.f32.partialorder %v398, 0.0
      %vm454 = vcmp.gt.f32.partialorder %v400, 0.0
      %vm455 = vcmp.gt.f32.partialorder %v403, 0.0
      %vm456 = vcmp.gt.f32.partialorder %v405, 0.0
      %vm457 = vcmp.gt.f32.partialorder %v408, 0.0
      %vm458 = vcmp.gt.f32.partialorder %v410, 0.0
      %vm459 = vcmp.gt.f32.partialorder %v413, 0.0
      %vm460 = vcmp.gt.f32.partialorder %v415, 0.0
      %vm461 = vcmp.gt.f32.partialorder %v418, 0.0
      %vm462 = vcmp.gt.f32.partialorder %v420, 0.0
      %vm463 = vcmp.gt.f32.partialorder %v423, 0.0
      %vm464 = vcmp.gt.f32.partialorder %v425, 0.0
      %vm465 = vcmp.gt.f32.partialorder %v428, 0.0
      %vm466 = vcmp.gt.f32.partialorder %v430, 0.0
      %vm467 = vcmp.gt.f32.partialorder %v433, 0.0
      %vm468 = vcmp.gt.f32.partialorder %v435, 0.0
      %v469 = vmul.f32 %v358, 0.2
      %v470 = vmul.f32 %v360, 0.2
      %v471 = vmul.f32 %v363, 0.2
      %v472 = vmul.f32 %v365, 0.2
      %v473 = vmul.f32 %v368, 0.2
      %v474 = vmul.f32 %v370, 0.2
      %v475 = vmul.f32 %v373, 0.2
      %v476 = vmul.f32 %v375, 0.2
      %v477 = vmul.f32 %v378, 0.2
      %v478 = vmul.f32 %v380, 0.2
      %v479 = vmul.f32 %v383, 0.2
      %v480 = vmul.f32 %v385, 0.2
      %v481 = vmul.f32 %v388, 0.2
      %v482 = vmul.f32 %v390, 0.2
      %v483 = vmul.f32 %v393, 0.2
      %v484 = vmul.f32 %v395, 0.2
      %v485 = vmul.f32 %v398, 0.2
      %v486 = vmul.f32 %v400, 0.2
      %v487 = vmul.f32 %v403, 0.2
      %v488 = vmul.f32 %v405, 0.2
      %v489 = vmul.f32 %v408, 0.2
      %v490 = vmul.f32 %v410, 0.2
      %v491 = vmul.f32 %v413, 0.2
      %v492 = vmul.f32 %v415, 0.2
      %v493 = vmul.f32 %v418, 0.2
      %v494 = vmul.f32 %v420, 0.2
      %v495 = vmul.f32 %v423, 0.2
      %v496 = vmul.f32 %v425, 0.2
      %v497 = vmul.f32 %v428, 0.2
      %v498 = vmul.f32 %v430, 0.2
      %v499 = vmul.f32 %v433, 0.2
      %v500 = vmul.f32 %v435, 0.2
      %v501 = vsel %vm437, %v358, %v469
      %v502 = vsel %vm438, %v360, %v470
      %v503 = vsel %vm439, %v363, %v471
      %v504 = vsel %vm440, %v365, %v472
      %v505 = vsel %vm441, %v368, %v473
      %v506 = vsel %vm442, %v370, %v474
      %v507 = vsel %vm443, %v373, %v475
      %v508 = vsel %vm444, %v375, %v476
      %v509 = vsel %vm445, %v378, %v477
      %v510 = vsel %vm446, %v380, %v478
      %v511 = vsel %vm447, %v383, %v479
      %v512 = vsel %vm448, %v385, %v480
      %v513 = vsel %vm449, %v388, %v481
      %v514 = vsel %vm450, %v390, %v482
      %v515 = vsel %vm451, %v393, %v483
      %v516 = vsel %vm452, %v395, %v484
      %v517 = vsel %vm453, %v398, %v485
      %v518 = vsel %vm454, %v400, %v486
      %v519 = vsel %vm455, %v403, %v487
      %v520 = vsel %vm456, %v405, %v488
      %v521 = vsel %vm457, %v408, %v489
      %v522 = vsel %vm458, %v410, %v490
      %v523 = vsel %vm459, %v413, %v491
      %v524 = vsel %vm460, %v415, %v492
      %v525 = vsel %vm461, %v418, %v493
      %v526 = vsel %vm462, %v420, %v494
      %v527 = vsel %vm463, %v423, %v495
      %v528 = vsel %vm464, %v425, %v496
      %v529 = vsel %vm465, %v428, %v497
      %v530 = vsel %vm466, %v430, %v498
      %v531 = vsel %vm467, %v433, %v499
      %v532 = vsel %vm468, %v435, %v500
      %v533 = vpack.c.bf16 %v501, %v501
      %v534 = vpack.c.bf16 %v502, %v502
      %v535 = vpack.c.bf16 %v503, %v503
      %v536 = vpack.c.bf16 %v504, %v504
      %v537 = vpack.c.bf16 %v505, %v505
      %v538 = vpack.c.bf16 %v506, %v506
      %v539 = vpack.c.bf16 %v507, %v507
      %v540 = vpack.c.bf16 %v508, %v508
      %v541 = vpack.c.bf16 %v509, %v509
      %v542 = vpack.c.bf16 %v510, %v510
      %v543 = vpack.c.bf16 %v511, %v511
      %v544 = vpack.c.bf16 %v512, %v512
      %v545 = vpack.c.bf16 %v513, %v513
      %v546 = vpack.c.bf16 %v514, %v514
      %v547 = vpack.c.bf16 %v515, %v515
      %v548 = vpack.c.bf16 %v516, %v516
      %v549 = vpack.c.bf16 %v517, %v517
      %v550 = vpack.c.bf16 %v518, %v518
      %v551 = vpack.c.bf16 %v519, %v519
      %v552 = vpack.c.bf16 %v520, %v520
      %v553 = vpack.c.bf16 %v521, %v521
      %v554 = vpack.c.bf16 %v522, %v522
      %v555 = vpack.c.bf16 %v523, %v523
      %v556 = vpack.c.bf16 %v524, %v524
      %v557 = vpack.c.bf16 %v525, %v525
      %v558 = vpack.c.bf16 %v526, %v526
      %v559 = vpack.c.bf16 %v527, %v527
      %v560 = vpack.c.bf16 %v528, %v528
      %v561 = vpack.c.bf16 %v529, %v529
      %v562 = vpack.c.bf16 %v530, %v530
      %v563 = vpack.c.bf16 %v531, %v531
      %v564 = vpack.c.bf16 %v532, %v532
      %565 = vst [vmem:[%s172] sm:$0xf] %v533
      %566 = vst [vmem:[%s172 + $0x4] sm:$0xf] %v534
      %567 = vst [vmem:[%s172 + $0x8] sm:$0xf] %v535
      %568 = vst [vmem:[%s172 + $0xc] sm:$0xf] %v536
      %569 = vst [vmem:[%s172 + $0x10] sm:$0xf] %v537
      %570 = vst [vmem:[%s172 + $0x14] sm:$0xf] %v538
      %571 = vst [vmem:[%s172 + $0x18] sm:$0xf] %v539
      %572 = vst [vmem:[%s172 + $0x1c] sm:$0xf] %v540
      %573 = vst [vmem:[%s172 + $0x20] sm:$0xf] %v541
      %574 = vst [vmem:[%s172 + $0x24] sm:$0xf] %v542
      %575 = vst [vmem:[%s172 + $0x28] sm:$0xf] %v543
      %576 = vst [vmem:[%s172 + $0x2c] sm:$0xf] %v544
      %577 = vst [vmem:[%s172 + $0x30] sm:$0xf] %v545
      %578 = vst [vmem:[%s172 + $0x34] sm:$0xf] %v546
      %579 = vst [vmem:[%s172 + $0x38] sm:$0xf] %v547
      %580 = vst [vmem:[%s172 + $0x3c] sm:$0xf] %v548
      %581 = vst [vmem:[%s172 + $0x40] sm:$0xf] %v549
      %582 = vst [vmem:[%s172 + $0x44] sm:$0xf] %v550
      %583 = vst [vmem:[%s172 + $0x48] sm:$0xf] %v551
      %584 = vst [vmem:[%s172 + $0x4c] sm:$0xf] %v552
      %585 = vst [vmem:[%s172 + $0x50] sm:$0xf] %v553
      %586 = vst [vmem:[%s172 + $0x54] sm:$0xf] %v554
      %587 = vst [vmem:[%s172 + $0x58] sm:$0xf] %v555
      %588 = vst [vmem:[%s172 + $0x5c] sm:$0xf] %v556
      %589 = vst [vmem:[%s172 + $0x60] sm:$0xf] %v557
      %590 = vst [vmem:[%s172 + $0x64] sm:$0xf] %v558
      %591 = vst [vmem:[%s172 + $0x68] sm:$0xf] %v559
      %592 = vst [vmem:[%s172 + $0x6c] sm:$0xf] %v560
      %593 = vst [vmem:[%s172 + $0x70] sm:$0xf] %v561
      %594 = vst [vmem:[%s172 + $0x74] sm:$0xf] %v562
      %595 = vst [vmem:[%s172 + $0x78] sm:$0xf] %v563
      %596 = vst [vmem:[%s172 + $0x7c] sm:$0xf] %v564
      %s597 = smul.u32 32, %s14
      %p598 = scmp.lt.s32.totalorder %s597, 191
      %s599 = scalar_select %p598, %s597, 191
      %s600 = smul.addr %s599, 4
      %s601 = scalar_lea.vmem %s3, %s600
      // Predicated region
      $region33: #{ae_forward.10} parent=31 // pred_check
        %p602 = pneg %p100
      $region34: #{ae_forward.10} parent=31 // pred_check_branch
        %604 = sbr.rel (%p602) target = $region36
      $region35: #{ae_forward.10} parent=31 // pred_region
        %s605 = smul.u32 32, %s14
      $region36: #{ae_forward.10} parent=31 // pred_fallthru
        _
    $region32: #{ae_forward.10} parent=5 // pred_fallthru
      _
    %p606 = scmp.le.s32.totalorder 2, %s9
    // Predicated region
    $region37: #{ae_forward.10} parent=5 // pred_check
      %p607 = pneg %p606
    $region38: #{ae_forward.10} parent=5 // pred_check_branch
      %609 = sbr.rel (%p607) target = $region40
    $region39: #{ae_forward.10} parent=5 // pred_region
      %s610 = ssub.s32 %s9, 2
      // Predicated region
      $region41: #{ae_forward.10} parent=39 // pred_check
        %p611 = pneg %p106
      $region42: #{ae_forward.10} parent=39 // pred_check_branch
        %613 = sbr.rel (%p611) target = $region44
      $region43: #{ae_forward.10} parent=39 // pred_region
        %s614 = smul.u32 32, %s15
        %p615 = scmp.lt.s32.totalorder %s614, 191
        %s616 = scalar_select %p615, %s614, 191
        %s617 = smul.addr %s616, 4
        %s618 = scalar_lea.vmem %s3, %s617
      $region44: #{ae_forward.10} parent=39 // pred_fallthru
        _
    $region40: #{ae_forward.10} parent=5 // pred_fallthru
      _
  $region6: #{ae_forward.10} parent=0 // loop_footer
    %s13 = sadd.s32 1, %s9
  $region7: #{ae_forward.10} parent=0 // loop_footer_branch
    %8 = sbr.rel target = $region3
  $region8: #{ae_forward.10} parent=0 // loop_exit
    _

// kernel: ae_forward.11
$region0: #{ae_forward.11}
  #allocation0 [shape = 'u32[]', space=smem, size = 0x4, offset = 0x4, fixed_abs, tag = 'smem constant byte address 0x4 - core index']
  #allocation1 [shape = 'u32[72,128]{1,0:T(1,128)}', space=vmem, size = 0x9000, scoped, tag = 'internal scratch']
  %s0 = inlined_call_operand.vmem [shape: bf16[512,256], index: 0, kind: input, shape index: {}]
  %s1 = inlined_call_operand.vmem [shape: bf16[256,128], index: 1, kind: input, shape index: {}]
  %s2 = inlined_call_operand.vmem [shape: f32[1,128], index: 2, kind: input, shape index: {}]
  %s3 = inlined_call_operand.vmem [shape: bf16[512,128], index: 3, kind: output, shape index: {}]
  %s4 = sld [smem:[#allocation0]]
  $region45: #{ae_forward.11} parent=0
    _
  %s6 = ssub.s32 1, %s4
  %s7 = scalar_select 0, %s6, %s4
  loop: start=0, step=1, limit=4
  $region2: #{ae_forward.11} parent=0 // loop_pre_header
    _
  $region3: #{ae_forward.11} parent=0 // loop_header
    %s9 = sphi 0, %s13
    %p10 = scmp.ge.s32.totalorder %s9, 4
    %s19 = sphi 0, %s21
    %s22 = sphi 0, %s19
    %s23 = sphi 0, %s22
    %s39 = sphi 0, %s23
    %s43 = sphi 0, %s43
    %s45 = sphi 0, %s43
    %s46 = sphi 0, %s45
    %s60 = sphi 0, %s46
    %s64 = sphi 0, %s64
    %s66 = sphi 0, %s64
    %s67 = sphi 0, %s66
    %s81 = sphi 0, %s67
    %s87 = sphi 0, %s89
    %s90 = sphi 0, %s87
    %s91 = sphi 0, %s90
    %s107 = sphi 0, %s91
  $region4: #{ae_forward.11} parent=0 // loop_header_branch
    %12 = sbr.rel (%p10) target = $region8
  $region5: #{ae_forward.11} parent=0 // loop_body
    %s14 = ssub.s32 %s9, 1
    %s15 = ssub.s32 %s9, 2
    %s16 = sadd.s32 %s9, 1
    %s17 = ssub.s32 %s9, %s16
    %p18 = scmp.eq.s32.totalorder %s17, 0
    %s20 = sadd.s32 %s19, 1
    %s21 = scalar_select %p18, %s19, %s20
    %p24 = pneg %p18
    %p25 = scmp.eq.s32.totalorder %s9, 1
    %p26 = por %p24, %p25
    %p27 = scmp.ne.s32.totalorder %s19, %s22
    %p28 = scmp.eq.s32.totalorder %s9, 0
    %p29 = por %p27, %p28
    %p30 = scmp.ne.s32.totalorder %s19, %s22
    %p31 = scmp.eq.s32.totalorder %s14, 1
    %p32 = por %p30, %p31
    %p33 = scmp.ne.s32.totalorder %s22, %s23
    %p34 = scmp.eq.s32.totalorder %s14, 0
    %p35 = por %p33, %p34
    %p36 = scmp.ne.s32.totalorder %s22, %s23
    %p37 = scmp.eq.s32.totalorder %s15, 1
    %p38 = por %p36, %p37
    %p40 = scmp.ne.s32.totalorder %s23, %s39
    %p41 = scmp.eq.s32.totalorder %s15, 0
    %p42 = por %p40, %p41
    %s44 = sadd.s32 %s43, 1
    %p47 = scmp.eq.s32.totalorder %s9, 1
    %p48 = scmp.ne.s32.totalorder %s43, %s45
    %p49 = scmp.eq.s32.totalorder %s9, 0
    %p50 = por %p48, %p49
    %p51 = scmp.ne.s32.totalorder %s43, %s45
    %p52 = scmp.eq.s32.totalorder %s14, 1
    %p53 = por %p51, %p52
    %p54 = scmp.ne.s32.totalorder %s45, %s46
    %p55 = scmp.eq.s32.totalorder %s14, 0
    %p56 = por %p54, %p55
    %p57 = scmp.ne.s32.totalorder %s45, %s46
    %p58 = scmp.eq.s32.totalorder %s15, 1
    %p59 = por %p57, %p58
    %p61 = scmp.ne.s32.totalorder %s46, %s60
    %p62 = scmp.eq.s32.totalorder %s15, 0
    %p63 = por %p61, %p62
    %s65 = sadd.s32 %s64, 1
    %p68 = scmp.eq.s32.totalorder %s9, 1
    %p69 = scmp.ne.s32.totalorder %s64, %s66
    %p70 = scmp.eq.s32.totalorder %s9, 0
    %p71 = por %p69, %p70
    %p72 = scmp.ne.s32.totalorder %s64, %s66
    %p73 = scmp.eq.s32.totalorder %s14, 1
    %p74 = por %p72, %p73
    %p75 = scmp.ne.s32.totalorder %s66, %s67
    %p76 = scmp.eq.s32.totalorder %s14, 0
    %p77 = por %p75, %p76
    %p78 = scmp.ne.s32.totalorder %s66, %s67
    %p79 = scmp.eq.s32.totalorder %s15, 1
    %p80 = por %p78, %p79
    %p82 = scmp.ne.s32.totalorder %s67, %s81
    %p83 = scmp.eq.s32.totalorder %s15, 0
    %p84 = por %p82, %p83
    %s85 = ssub.s32 %s9, %s16
    %p86 = scmp.eq.s32.totalorder %s85, 0
    %s88 = sadd.s32 %s87, 1
    %s89 = scalar_select %p86, %s87, %s88
    %p92 = pneg %p86
    %p93 = scmp.eq.s32.totalorder %s9, 1
    %p94 = por %p92, %p93
    %p95 = scmp.ne.s32.totalorder %s87, %s90
    %p96 = scmp.eq.s32.totalorder %s9, 0
    %p97 = por %p95, %p96
    %p98 = scmp.ne.s32.totalorder %s87, %s90
    %p99 = scmp.eq.s32.totalorder %s14, 1
    %p100 = por %p98, %p99
    %p101 = scmp.ne.s32.totalorder %s90, %s91
    %p102 = scmp.eq.s32.totalorder %s14, 0
    %p103 = por %p101, %p102
    %p104 = scmp.ne.s32.totalorder %s90, %s91
    %p105 = scmp.eq.s32.totalorder %s15, 1
    %p106 = por %p104, %p105
    %p108 = scmp.ne.s32.totalorder %s91, %s107
    %p109 = scmp.eq.s32.totalorder %s15, 0
    %p110 = por %p108, %p109
    %p111 = scmp.le.s32.totalorder 1, %s9
    %p112 = scmp.lt.s32.totalorder %s9, 3
    %p113 = pnand %p111, %p112
    %p114 = pneg %p113
    // Predicated region
    $region9: #{ae_forward.11} parent=5 // pred_check
      _
    $region10: #{ae_forward.11} parent=5 // pred_check_branch
      %116 = sbr.rel (%p113) target = $region12
    $region11: #{ae_forward.11} parent=5 // pred_region
      %s117 = ssub.s32 %s9, 1
      // Predicated region
      $region13: #{ae_forward.11} parent=11 // pred_check
        %p118 = pneg %p56
      $region14: #{ae_forward.11} parent=11 // pred_check_branch
        %120 = sbr.rel (%p118) target = $region16
      $region15: #{ae_forward.11} parent=11 // pred_region
        _
      $region16: #{ae_forward.11} parent=11 // pred_fallthru
        _
      // Predicated region
      $region17: #{ae_forward.11} parent=11 // pred_check
        %p121 = pneg %p77
      $region18: #{ae_forward.11} parent=11 // pred_check_branch
        %123 = sbr.rel (%p121) target = $region20
      $region19: #{ae_forward.11} parent=11 // pred_region
        _
      $region20: #{ae_forward.11} parent=11 // pred_fallthru
        _
    $region12: #{ae_forward.11} parent=5 // pred_fallthru
      _
    %p124 = scmp.lt.s32.totalorder %s9, 2
    // Predicated region
    $region21: #{ae_forward.11} parent=5 // pred_check
      %p125 = pneg %p124
    $region22: #{ae_forward.11} parent=5 // pred_check_branch
      %127 = sbr.rel (%p125) target = $region24
    $region23: #{ae_forward.11} parent=5 // pred_region
      // Predicated region
      $region25: #{ae_forward.11} parent=23 // pred_check
        %p128 = pneg %p29
      $region26: #{ae_forward.11} parent=23 // pred_check_branch
        %130 = sbr.rel (%p128) target = $region28
      $region27: #{ae_forward.11} parent=23 // pred_region
        %s131 = smul.u32 32, %s9
        %p132 = scmp.lt.s32.totalorder %s131, 63
        %s133 = scalar_select %p132, %s131, 63
        %s134 = smul.addr %s133, 2
        %s135 = smul.addr %s134, 4
        %s136 = scalar_lea.vmem %s0, %s135
        %s137 = smul.u32 32, %s9
      $region28: #{ae_forward.11} parent=23 // pred_fallthru
        _
    $region24: #{ae_forward.11} parent=5 // pred_fallthru
      _
    %p138 = scmp.le.s32.totalorder 1, %s9
    %p139 = scmp.lt.s32.totalorder %s9, 3
    %p140 = pnand %p138, %p139
    %p141 = pneg %p140
    // Predicated region
    $region29: #{ae_forward.11} parent=5 // pred_check
      _
    $region30: #{ae_forward.11} parent=5 // pred_check_branch
      %143 = sbr.rel (%p140) target = $region32
    $region31: #{ae_forward.11} parent=5 // pred_region
      %s144 = ssub.s32 %s9, 1
      %s145 = smul.u32 32, %s14
      %p146 = scmp.lt.s32.totalorder %s145, 63
      %s147 = scalar_select %p146, %s145, 63
      %s148 = smul.addr %s147, 2
      %s149 = smul.addr %s148, 4
      %s150 = scalar_lea.vmem %s0, %s149
      %p151 = pneg %p35
      %p152 = pneg %p32
      %p153 = pneg %p56
      %p154 = pneg %p53
      %p155 = pneg %p77
      %p156 = pneg %p74
      %p157 = pneg %p103
      %p158 = pneg %p100
      %s159 = smul.u32 32, %s14
      %p160 = scmp.lt.s32.totalorder %s159, 63
      %s161 = scalar_select %p160, %s159, 63
      %s162 = smul.addr %s161, 4
      %s163 = scalar_lea.vmem %s3, %s162
      %s164 = smul.u32 32, %s14
      %p165 = scmp.lt.s32.totalorder %s164, 63
      %s166 = scalar_select %p165, %s164, 63
      %s167 = smul.addr %s166, 2
      %s168 = smul.addr %s167, 4
      %s169 = scalar_lea.vmem %s0, %s168
      %s170 = smul.u32 32, %s14
      %s171 = smul.u32 32, %s14
      %p172 = scmp.lt.s32.totalorder %s171, 63
      %s173 = scalar_select %p172, %s171, 63
      %s174 = smul.addr %s173, 4
      %s175 = scalar_lea.vmem %s3, %s174
      %s176 = smul.u32 32, %s14
      %v177 = vld [vmem:[%s169] sm:$0xff]
      %v178 = vld [vmem:[%s169 + $0x8] sm:$0xff]
      %v179 = vld [vmem:[%s169 + $0x10] sm:$0xff]
      %v180 = vld [vmem:[%s169 + $0x18] sm:$0xff]
      %v181 = vld [vmem:[%s169 + $0x20] sm:$0xff]
      %v182 = vld [vmem:[%s169 + $0x28] sm:$0xff]
      %v183 = vld [vmem:[%s169 + $0x30] sm:$0xff]
      %v184 = vld [vmem:[%s169 + $0x38] sm:$0xff]
      %v185 = vld [vmem:[%s169 + $0x40] sm:$0xff]
      %v186 = vld [vmem:[%s169 + $0x48] sm:$0xff]
      %v187 = vld [vmem:[%s169 + $0x50] sm:$0xff]
      %v188 = vld [vmem:[%s169 + $0x58] sm:$0xff]
      %v189 = vld [vmem:[%s169 + $0x60] sm:$0xff]
      %v190 = vld [vmem:[%s169 + $0x68] sm:$0xff]
      %v191 = vld [vmem:[%s169 + $0x70] sm:$0xff]
      %v192 = vld [vmem:[%s169 + $0x78] sm:$0xff]
      %v193 = vld [vmem:[%s169 + $0x80] sm:$0xff]
      %v194 = vld [vmem:[%s169 + $0x88] sm:$0xff]
      %v195 = vld [vmem:[%s169 + $0x90] sm:$0xff]
      %v196 = vld [vmem:[%s169 + $0x98] sm:$0xff]
      %v197 = vld [vmem:[%s169 + $0xa0] sm:$0xff]
      %v198 = vld [vmem:[%s169 + $0xa8] sm:$0xff]
      %v199 = vld [vmem:[%s169 + $0xb0] sm:$0xff]
      %v200 = vld [vmem:[%s169 + $0xb8] sm:$0xff]
      %v201 = vld [vmem:[%s169 + $0xc0] sm:$0xff]
      %v202 = vld [vmem:[%s169 + $0xc8] sm:$0xff]
      %v203 = vld [vmem:[%s169 + $0xd0] sm:$0xff]
      %v204 = vld [vmem:[%s169 + $0xd8] sm:$0xff]
      %v205 = vld [vmem:[%s169 + $0xe0] sm:$0xff]
      %v206 = vld [vmem:[%s169 + $0xe8] sm:$0xff]
      %v207 = vld [vmem:[%s169 + $0xf0] sm:$0xff]
      %v208 = vld [vmem:[%s169 + $0xf8] sm:$0xff]
      %v209 = vld [vmem:[%s1] sm:$0xf]
      %v210 = vld [vmem:[%s1 + $0x4] sm:$0xf]
      %v211 = vld [vmem:[%s1 + $0x8] sm:$0xf]
      %v212 = vld [vmem:[%s1 + $0xc] sm:$0xf]
      %v213 = vld [vmem:[%s1 + $0x10] sm:$0xf]
      %v214 = vld [vmem:[%s1 + $0x14] sm:$0xf]
      %v215 = vld [vmem:[%s1 + $0x18] sm:$0xf]
      %v216 = vld [vmem:[%s1 + $0x1c] sm:$0xf]
      %v217 = vld [vmem:[%s1 + $0x20] sm:$0xf]
      %v218 = vld [vmem:[%s1 + $0x24] sm:$0xf]
      %v219 = vld [vmem:[%s1 + $0x28] sm:$0xf]
      %v220 = vld [vmem:[%s1 + $0x2c] sm:$0xf]
      %v221 = vld [vmem:[%s1 + $0x30] sm:$0xf]
      %v222 = vld [vmem:[%s1 + $0x34] sm:$0xf]
      %v223 = vld [vmem:[%s1 + $0x38] sm:$0xf]
      %v224 = vld [vmem:[%s1 + $0x3c] sm:$0xf]
      %v225 = vld [vmem:[%s1 + $0x40] sm:$0xf]
      %v226 = vld [vmem:[%s1 + $0x44] sm:$0xf]
      %v227 = vld [vmem:[%s1 + $0x48] sm:$0xf]
      %v228 = vld [vmem:[%s1 + $0x4c] sm:$0xf]
      %v229 = vld [vmem:[%s1 + $0x50] sm:$0xf]
      %v230 = vld [vmem:[%s1 + $0x54] sm:$0xf]
      %v231 = vld [vmem:[%s1 + $0x58] sm:$0xf]
      %v232 = vld [vmem:[%s1 + $0x5c] sm:$0xf]
      %v233 = vld [vmem:[%s1 + $0x60] sm:$0xf]
      %v234 = vld [vmem:[%s1 + $0x64] sm:$0xf]
      %v235 = vld [vmem:[%s1 + $0x68] sm:$0xf]
      %v236 = vld [vmem:[%s1 + $0x6c] sm:$0xf]
      %v237 = vld [vmem:[%s1 + $0x70] sm:$0xf]
      %v238 = vld [vmem:[%s1 + $0x74] sm:$0xf]
      %v239 = vld [vmem:[%s1 + $0x78] sm:$0xf]
      %v240 = vld [vmem:[%s1 + $0x7c] sm:$0xf]
      %v241 = vld [vmem:[%s2] sm:$0x1]
      %v243 = vperm.slane %v241, 0
      %v277 = vunpack.c.l.b16 %v177
      %v278 = vunpack.c.h.b16 %v177
      %v279 = vunpack.c.l.b16 %v178
      %v280 = vunpack.c.h.b16 %v178
      %v281 = vunpack.c.l.b16 %v179
      %v282 = vunpack.c.h.b16 %v179
      %v283 = vunpack.c.l.b16 %v180
      %v284 = vunpack.c.h.b16 %v180
      %v285 = vunpack.c.l.b16 %v181
      %v286 = vunpack.c.h.b16 %v181
      %v287 = vunpack.c.l.b16 %v182
      %v288 = vunpack.c.h.b16 %v182
      %v289 = vunpack.c.l.b16 %v183
      %v290 = vunpack.c.h.b16 %v183
      %v291 = vunpack.c.l.b16 %v184
      %v292 = vunpack.c.h.b16 %v184
      %v293 = vunpack.c.l.b16 %v185
      %v294 = vunpack.c.h.b16 %v185
      %v295 = vunpack.c.l.b16 %v186
      %v296 = vunpack.c.h.b16 %v186
      %v297 = vunpack.c.l.b16 %v187
      %v298 = vunpack.c.h.b16 %v187
      %v299 = vunpack.c.l.b16 %v188
      %v300 = vunpack.c.h.b16 %v188
      %v301 = vunpack.c.l.b16 %v189
      %v302 = vunpack.c.h.b16 %v189
      %v303 = vunpack.c.l.b16 %v190
      %v304 = vunpack.c.h.b16 %v190
      %v305 = vunpack.c.l.b16 %v191
      %v306 = vunpack.c.h.b16 %v191
      %v307 = vunpack.c.l.b16 %v192
      %v308 = vunpack.c.h.b16 %v192
      %v309 = vunpack.c.l.b16 %v193
      %v310 = vunpack.c.h.b16 %v193
      %v311 = vunpack.c.l.b16 %v194
      %v312 = vunpack.c.h.b16 %v194
      %v313 = vunpack.c.l.b16 %v195
      %v314 = vunpack.c.h.b16 %v195
      %v315 = vunpack.c.l.b16 %v196
      %v316 = vunpack.c.h.b16 %v196
      %v317 = vunpack.c.l.b16 %v197
      %v318 = vunpack.c.h.b16 %v197
      %v319 = vunpack.c.l.b16 %v198
      %v320 = vunpack.c.h.b16 %v198
      %v321 = vunpack.c.l.b16 %v199
      %v322 = vunpack.c.h.b16 %v199
      %v323 = vunpack.c.l.b16 %v200
      %v324 = vunpack.c.h.b16 %v200
      %v325 = vunpack.c.l.b16 %v201
      %v326 = vunpack.c.h.b16 %v201
      %v327 = vunpack.c.l.b16 %v202
      %v328 = vunpack.c.h.b16 %v202
      %v329 = vunpack.c.l.b16 %v203
      %v330 = vunpack.c.h.b16 %v203
      %v331 = vunpack.c.l.b16 %v204
      %v332 = vunpack.c.h.b16 %v204
      %v333 = vunpack.c.l.b16 %v205
      %v334 = vunpack.c.h.b16 %v205
      %v335 = vunpack.c.l.b16 %v206
      %v336 = vunpack.c.h.b16 %v206
      %v337 = vunpack.c.l.b16 %v207
      %v338 = vunpack.c.h.b16 %v207
      %v339 = vunpack.c.l.b16 %v208
      %v340 = vunpack.c.h.b16 %v208
      %v341 = vpack.c.b16 %v279, %v277
      %v342 = vpack.c.b16 %v280, %v278
      %v343 = vpack.c.b16 %v283, %v281
      %v344 = vpack.c.b16 %v284, %v282
      %v345 = vpack.c.b16 %v287, %v285
      %v346 = vpack.c.b16 %v288, %v286
      %v347 = vpack.c.b16 %v291, %v289
      %v348 = vpack.c.b16 %v292, %v290
      %v349 = vpack.c.b16 %v295, %v293
      %v350 = vpack.c.b16 %v296, %v294
      %v351 = vpack.c.b16 %v299, %v297
      %v352 = vpack.c.b16 %v300, %v298
      %v353 = vpack.c.b16 %v303, %v301
      %v354 = vpack.c.b16 %v304, %v302
      %v355 = vpack.c.b16 %v307, %v305
      %v356 = vpack.c.b16 %v308, %v306
      %v357 = vpack.c.b16 %v311, %v309
      %v358 = vpack.c.b16 %v312, %v310
      %v359 = vpack.c.b16 %v315, %v313
      %v360 = vpack.c.b16 %v316, %v314
      %v361 = vpack.c.b16 %v319, %v317
      %v362 = vpack.c.b16 %v320, %v318
      %v363 = vpack.c.b16 %v323, %v321
      %v364 = vpack.c.b16 %v324, %v322
      %v365 = vpack.c.b16 %v327, %v325
      %v366 = vpack.c.b16 %v328, %v326
      %v367 = vpack.c.b16 %v331, %v329
      %v368 = vpack.c.b16 %v332, %v330
      %v369 = vpack.c.b16 %v335, %v333
      %v370 = vpack.c.b16 %v336, %v334
      %v371 = vpack.c.b16 %v339, %v337
      %v372 = vpack.c.b16 %v340, %v338
      %v437 = vunpack.c.l.b16 %v209
      %v438 = vunpack.c.l.b16 %v210
      %v439 = vunpack.c.l.b16 %v211
      %v440 = vunpack.c.l.b16 %v212
      %v441 = vunpack.c.l.b16 %v213
      %v442 = vunpack.c.l.b16 %v214
      %v443 = vunpack.c.l.b16 %v215
      %v444 = vunpack.c.l.b16 %v216
      %v445 = vunpack.c.l.b16 %v217
      %v446 = vunpack.c.l.b16 %v218
      %v447 = vunpack.c.l.b16 %v219
      %v448 = vunpack.c.l.b16 %v220
      %v449 = vunpack.c.l.b16 %v221
      %v450 = vunpack.c.l.b16 %v222
      %v451 = vunpack.c.l.b16 %v223
      %v452 = vunpack.c.l.b16 %v224
      %v453 = vunpack.c.l.b16 %v225
      %v454 = vunpack.c.l.b16 %v226
      %v455 = vunpack.c.l.b16 %v227
      %v456 = vunpack.c.l.b16 %v228
      %v457 = vunpack.c.l.b16 %v229
      %v458 = vunpack.c.l.b16 %v230
      %v459 = vunpack.c.l.b16 %v231
      %v460 = vunpack.c.l.b16 %v232
      %v461 = vunpack.c.l.b16 %v233
      %v462 = vunpack.c.l.b16 %v234
      %v463 = vunpack.c.l.b16 %v235
      %v464 = vunpack.c.l.b16 %v236
      %v465 = vunpack.c.l.b16 %v237
      %v466 = vunpack.c.l.b16 %v238
      %v467 = vunpack.c.l.b16 %v239
      %v468 = vunpack.c.l.b16 %v240
      %v469 = vpack.c.b16 %v438, %v437
      %v470 = vpack.c.b16 %v440, %v439
      %v471 = vpack.c.b16 %v442, %v441
      %v472 = vpack.c.b16 %v444, %v443
      %v473 = vpack.c.b16 %v446, %v445
      %v474 = vpack.c.b16 %v448, %v447
      %v475 = vpack.c.b16 %v450, %v449
      %v476 = vpack.c.b16 %v452, %v451
      %v477 = vpack.c.b16 %v454, %v453
      %v478 = vpack.c.b16 %v456, %v455
      %v479 = vpack.c.b16 %v458, %v457
      %v480 = vpack.c.b16 %v460, %v459
      %v481 = vpack.c.b16 %v462, %v461
      %v482 = vpack.c.b16 %v464, %v463
      %v483 = vpack.c.b16 %v466, %v465
      %v484 = vpack.c.b16 %v468, %v467
      %501 = vmatpush.bf16.msra.mxu0 %v476
      %502 = vmatpush.bf16.msra.mxu0 %v475
      %503 = vmatpush.bf16.msra.mxu0 %v474
      %504 = vmatpush.bf16.msra.mxu0 %v473
      %505 = vmatpush.bf16.msra.mxu0 %v472
      %506 = vmatpush.bf16.msra.mxu0 %v471
      %507 = vmatpush.bf16.msra.mxu0 %v470
      %508 = vmatpush.bf16.msra.mxu0 %v469
      %509 = vmatmul.bf16.gmra.mxu0 %v341
      %v510 = vpop.f32.mrf.mxu0
      %v511 = vadd.f32 %v243, %v510
      %v512 = vpop.f32.mrf.mxu0
      %v513 = vadd.f32 %v243, %v512
      %514 = vmatmul.bf16.gmra.mxu0 %v343
      %v515 = vpop.f32.mrf.mxu0
      %v516 = vadd.f32 %v243, %v515
      %v517 = vpop.f32.mrf.mxu0
      %v518 = vadd.f32 %v243, %v517
      %519 = vmatmul.bf16.gmra.mxu0 %v345
      %v520 = vpop.f32.mrf.mxu0
      %v521 = vadd.f32 %v243, %v520
      %v522 = vpop.f32.mrf.mxu0
      %v523 = vadd.f32 %v243, %v522
      %524 = vmatmul.bf16.gmra.mxu0 %v347
      %v525 = vpop.f32.mrf.mxu0
      %v526 = vadd.f32 %v243, %v525
      %v527 = vpop.f32.mrf.mxu0
      %v528 = vadd.f32 %v243, %v527
      %529 = vmatmul.bf16.gmra.mxu0 %v349
      %v530 = vpop.f32.mrf.mxu0
      %v531 = vadd.f32 %v243, %v530
      %v532 = vpop.f32.mrf.mxu0
      %v533 = vadd.f32 %v243, %v532
      %534 = vmatmul.bf16.gmra.mxu0 %v351
      %v535 = vpop.f32.mrf.mxu0
      %v536 = vadd.f32 %v243, %v535
      %v537 = vpop.f32.mrf.mxu0
      %v538 = vadd.f32 %v243, %v537
      %539 = vmatmul.bf16.gmra.mxu0 %v353
      %v540 = vpop.f32.mrf.mxu0
      %v541 = vadd.f32 %v243, %v540
      %v542 = vpop.f32.mrf.mxu0
      %v543 = vadd.f32 %v243, %v542
      %544 = vmatmul.bf16.gmra.mxu0 %v355
      %v545 = vpop.f32.mrf.mxu0
      %v546 = vadd.f32 %v243, %v545
      %v547 = vpop.f32.mrf.mxu0
      %v548 = vadd.f32 %v243, %v547
      %549 = vmatmul.bf16.gmra.mxu0 %v357
      %v550 = vpop.f32.mrf.mxu0
      %v551 = vadd.f32 %v243, %v550
      %v552 = vpop.f32.mrf.mxu0
      %v553 = vadd.f32 %v243, %v552
      %554 = vmatmul.bf16.gmra.mxu0 %v359
      %v555 = vpop.f32.mrf.mxu0
      %v556 = vadd.f32 %v243, %v555
      %v557 = vpop.f32.mrf.mxu0
      %v558 = vadd.f32 %v243, %v557
      %559 = vmatmul.bf16.gmra.mxu0 %v361
      %v560 = vpop.f32.mrf.mxu0
      %v561 = vadd.f32 %v243, %v560
      %v562 = vpop.f32.mrf.mxu0
      %v563 = vadd.f32 %v243, %v562
      %564 = vmatmul.bf16.gmra.mxu0 %v363
      %v565 = vpop.f32.mrf.mxu0
      %v566 = vadd.f32 %v243, %v565
      %v567 = vpop.f32.mrf.mxu0
      %v568 = vadd.f32 %v243, %v567
      %569 = vmatmul.bf16.gmra.mxu0 %v365
      %v570 = vpop.f32.mrf.mxu0
      %v571 = vadd.f32 %v243, %v570
      %v572 = vpop.f32.mrf.mxu0
      %v573 = vadd.f32 %v243, %v572
      %574 = vmatmul.bf16.gmra.mxu0 %v367
      %v575 = vpop.f32.mrf.mxu0
      %v576 = vadd.f32 %v243, %v575
      %v577 = vpop.f32.mrf.mxu0
      %v578 = vadd.f32 %v243, %v577
      %579 = vmatmul.bf16.gmra.mxu0 %v369
      %v580 = vpop.f32.mrf.mxu0
      %v581 = vadd.f32 %v243, %v580
      %v582 = vpop.f32.mrf.mxu0
      %v583 = vadd.f32 %v243, %v582
      %584 = vmatmul.bf16.gmra.mxu0 %v371
      %v585 = vpop.f32.mrf.mxu0
      %v586 = vadd.f32 %v243, %v585
      %v587 = vpop.f32.mrf.mxu0
      %v588 = vadd.f32 %v243, %v587
      %589 = vdwg.mxu0
      %590 = vmatpush.bf16.msra.mxu0 %v484
      %591 = vmatpush.bf16.msra.mxu0 %v483
      %592 = vmatpush.bf16.msra.mxu0 %v482
      %593 = vmatpush.bf16.msra.mxu0 %v481
      %594 = vmatpush.bf16.msra.mxu0 %v480
      %595 = vmatpush.bf16.msra.mxu0 %v479
      %596 = vmatpush.bf16.msra.mxu0 %v478
      %597 = vmatpush.bf16.msra.mxu0 %v477
      %598 = vmatmul.bf16.gmra.mxu0 %v342
      %v599 = vpop.f32.mrf.mxu0
      %v600 = vadd.f32 %v511, %v599
      %v601 = vpop.f32.mrf.mxu0
      %v602 = vadd.f32 %v513, %v601
      %603 = vmatmul.bf16.gmra.mxu0 %v344
      %v604 = vpop.f32.mrf.mxu0
      %v605 = vadd.f32 %v516, %v604
      %v606 = vpop.f32.mrf.mxu0
      %v607 = vadd.f32 %v518, %v606
      %608 = vmatmul.bf16.gmra.mxu0 %v346
      %v609 = vpop.f32.mrf.mxu0
      %v610 = vadd.f32 %v521, %v609
      %v611 = vpop.f32.mrf.mxu0
      %v612 = vadd.f32 %v523, %v611
      %613 = vmatmul.bf16.gmra.mxu0 %v348
      %v614 = vpop.f32.mrf.mxu0
      %v615 = vadd.f32 %v526, %v614
      %v616 = vpop.f32.mrf.mxu0
      %v617 = vadd.f32 %v528, %v616
      %618 = vmatmul.bf16.gmra.mxu0 %v350
      %v619 = vpop.f32.mrf.mxu0
      %v620 = vadd.f32 %v531, %v619
      %v621 = vpop.f32.mrf.mxu0
      %v622 = vadd.f32 %v533, %v621
      %623 = vmatmul.bf16.gmra.mxu0 %v352
      %v624 = vpop.f32.mrf.mxu0
      %v625 = vadd.f32 %v536, %v624
      %v626 = vpop.f32.mrf.mxu0
      %v627 = vadd.f32 %v538, %v626
      %628 = vmatmul.bf16.gmra.mxu0 %v354
      %v629 = vpop.f32.mrf.mxu0
      %v630 = vadd.f32 %v541, %v629
      %v631 = vpop.f32.mrf.mxu0
      %v632 = vadd.f32 %v543, %v631
      %633 = vmatmul.bf16.gmra.mxu0 %v356
      %v634 = vpop.f32.mrf.mxu0
      %v635 = vadd.f32 %v546, %v634
      %v636 = vpop.f32.mrf.mxu0
      %v637 = vadd.f32 %v548, %v636
      %638 = vmatmul.bf16.gmra.mxu0 %v358
      %v639 = vpop.f32.mrf.mxu0
      %v640 = vadd.f32 %v551, %v639
      %v641 = vpop.f32.mrf.mxu0
      %v642 = vadd.f32 %v553, %v641
      %643 = vmatmul.bf16.gmra.mxu0 %v360
      %v644 = vpop.f32.mrf.mxu0
      %v645 = vadd.f32 %v556, %v644
      %v646 = vpop.f32.mrf.mxu0
      %v647 = vadd.f32 %v558, %v646
      %648 = vmatmul.bf16.gmra.mxu0 %v362
      %v649 = vpop.f32.mrf.mxu0
      %v650 = vadd.f32 %v561, %v649
      %v651 = vpop.f32.mrf.mxu0
      %v652 = vadd.f32 %v563, %v651
      %653 = vmatmul.bf16.gmra.mxu0 %v364
      %v654 = vpop.f32.mrf.mxu0
      %v655 = vadd.f32 %v566, %v654
      %v656 = vpop.f32.mrf.mxu0
      %v657 = vadd.f32 %v568, %v656
      %658 = vmatmul.bf16.gmra.mxu0 %v366
      %v659 = vpop.f32.mrf.mxu0
      %v660 = vadd.f32 %v571, %v659
      %v661 = vpop.f32.mrf.mxu0
      %v662 = vadd.f32 %v573, %v661
      %663 = vmatmul.bf16.gmra.mxu0 %v368
      %v664 = vpop.f32.mrf.mxu0
      %v665 = vadd.f32 %v576, %v664
      %v666 = vpop.f32.mrf.mxu0
      %v667 = vadd.f32 %v578, %v666
      %668 = vmatmul.bf16.gmra.mxu0 %v370
      %v669 = vpop.f32.mrf.mxu0
      %v670 = vadd.f32 %v581, %v669
      %v671 = vpop.f32.mrf.mxu0
      %v672 = vadd.f32 %v583, %v671
      %673 = vmatmul.bf16.gmra.mxu0 %v372
      %v674 = vpop.f32.mrf.mxu0
      %v675 = vadd.f32 %v586, %v674
      %v676 = vpop.f32.mrf.mxu0
      %v677 = vadd.f32 %v588, %v676
      %678 = vdwg.mxu0
      %vm679 = vcmp.gt.f32.partialorder %v600, 0.0
      %vm680 = vcmp.gt.f32.partialorder %v602, 0.0
      %vm681 = vcmp.gt.f32.partialorder %v605, 0.0
      %vm682 = vcmp.gt.f32.partialorder %v607, 0.0
      %vm683 = vcmp.gt.f32.partialorder %v610, 0.0
      %vm684 = vcmp.gt.f32.partialorder %v612, 0.0
      %vm685 = vcmp.gt.f32.partialorder %v615, 0.0
      %vm686 = vcmp.gt.f32.partialorder %v617, 0.0
      %vm687 = vcmp.gt.f32.partialorder %v620, 0.0
      %vm688 = vcmp.gt.f32.partialorder %v622, 0.0
      %vm689 = vcmp.gt.f32.partialorder %v625, 0.0
      %vm690 = vcmp.gt.f32.partialorder %v627, 0.0
      %vm691 = vcmp.gt.f32.partialorder %v630, 0.0
      %vm692 = vcmp.gt.f32.partialorder %v632, 0.0
      %vm693 = vcmp.gt.f32.partialorder %v635, 0.0
      %vm694 = vcmp.gt.f32.partialorder %v637, 0.0
      %vm695 = vcmp.gt.f32.partialorder %v640, 0.0
      %vm696 = vcmp.gt.f32.partialorder %v642, 0.0
      %vm697 = vcmp.gt.f32.partialorder %v645, 0.0
      %vm698 = vcmp.gt.f32.partialorder %v647, 0.0
      %vm699 = vcmp.gt.f32.partialorder %v650, 0.0
      %vm700 = vcmp.gt.f32.partialorder %v652, 0.0
      %vm701 = vcmp.gt.f32.partialorder %v655, 0.0
      %vm702 = vcmp.gt.f32.partialorder %v657, 0.0
      %vm703 = vcmp.gt.f32.partialorder %v660, 0.0
      %vm704 = vcmp.gt.f32.partialorder %v662, 0.0
      %vm705 = vcmp.gt.f32.partialorder %v665, 0.0
      %vm706 = vcmp.gt.f32.partialorder %v667, 0.0
      %vm707 = vcmp.gt.f32.partialorder %v670, 0.0
      %vm708 = vcmp.gt.f32.partialorder %v672, 0.0
      %vm709 = vcmp.gt.f32.partialorder %v675, 0.0
      %vm710 = vcmp.gt.f32.partialorder %v677, 0.0
      %v711 = vmul.f32 %v600, 0.2
      %v712 = vmul.f32 %v602, 0.2
      %v713 = vmul.f32 %v605, 0.2
      %v714 = vmul.f32 %v607, 0.2
      %v715 = vmul.f32 %v610, 0.2
      %v716 = vmul.f32 %v612, 0.2
      %v717 = vmul.f32 %v615, 0.2
      %v718 = vmul.f32 %v617, 0.2
      %v719 = vmul.f32 %v620, 0.2
      %v720 = vmul.f32 %v622, 0.2
      %v721 = vmul.f32 %v625, 0.2
      %v722 = vmul.f32 %v627, 0.2
      %v723 = vmul.f32 %v630, 0.2
      %v724 = vmul.f32 %v632, 0.2
      %v725 = vmul.f32 %v635, 0.2
      %v726 = vmul.f32 %v637, 0.2
      %v727 = vmul.f32 %v640, 0.2
      %v728 = vmul.f32 %v642, 0.2
      %v729 = vmul.f32 %v645, 0.2
      %v730 = vmul.f32 %v647, 0.2
      %v731 = vmul.f32 %v650, 0.2
      %v732 = vmul.f32 %v652, 0.2
      %v733 = vmul.f32 %v655, 0.2
      %v734 = vmul.f32 %v657, 0.2
      %v735 = vmul.f32 %v660, 0.2
      %v736 = vmul.f32 %v662, 0.2
      %v737 = vmul.f32 %v665, 0.2
      %v738 = vmul.f32 %v667, 0.2
      %v739 = vmul.f32 %v670, 0.2
      %v740 = vmul.f32 %v672, 0.2
      %v741 = vmul.f32 %v675, 0.2
      %v742 = vmul.f32 %v677, 0.2
      %v743 = vsel %vm679, %v600, %v711
      %v744 = vsel %vm680, %v602, %v712
      %v745 = vsel %vm681, %v605, %v713
      %v746 = vsel %vm682, %v607, %v714
      %v747 = vsel %vm683, %v610, %v715
      %v748 = vsel %vm684, %v612, %v716
      %v749 = vsel %vm685, %v615, %v717
      %v750 = vsel %vm686, %v617, %v718
      %v751 = vsel %vm687, %v620, %v719
      %v752 = vsel %vm688, %v622, %v720
      %v753 = vsel %vm689, %v625, %v721
      %v754 = vsel %vm690, %v627, %v722
      %v755 = vsel %vm691, %v630, %v723
      %v756 = vsel %vm692, %v632, %v724
      %v757 = vsel %vm693, %v635, %v725
      %v758 = vsel %vm694, %v637, %v726
      %v759 = vsel %vm695, %v640, %v727
      %v760 = vsel %vm696, %v642, %v728
      %v761 = vsel %vm697, %v645, %v729
      %v762 = vsel %vm698, %v647, %v730
      %v763 = vsel %vm699, %v650, %v731
      %v764 = vsel %vm700, %v652, %v732
      %v765 = vsel %vm701, %v655, %v733
      %v766 = vsel %vm702, %v657, %v734
      %v767 = vsel %vm703, %v660, %v735
      %v768 = vsel %vm704, %v662, %v736
      %v769 = vsel %vm705, %v665, %v737
      %v770 = vsel %vm706, %v667, %v738
      %v771 = vsel %vm707, %v670, %v739
      %v772 = vsel %vm708, %v672, %v740
      %v773 = vsel %vm709, %v675, %v741
      %v774 = vsel %vm710, %v677, %v742
      %v775 = vpack.c.bf16 %v743, %v743
      %v776 = vpack.c.bf16 %v744, %v744
      %v777 = vpack.c.bf16 %v745, %v745
      %v778 = vpack.c.bf16 %v746, %v746
      %v779 = vpack.c.bf16 %v747, %v747
      %v780 = vpack.c.bf16 %v748, %v748
      %v781 = vpack.c.bf16 %v749, %v749
      %v782 = vpack.c.bf16 %v750, %v750
      %v783 = vpack.c.bf16 %v751, %v751
      %v784 = vpack.c.bf16 %v752, %v752
      %v785 = vpack.c.bf16 %v753, %v753
      %v786 = vpack.c.bf16 %v754, %v754
      %v787 = vpack.c.bf16 %v755, %v755
      %v788 = vpack.c.bf16 %v756, %v756
      %v789 = vpack.c.bf16 %v757, %v757
      %v790 = vpack.c.bf16 %v758, %v758
      %v791 = vpack.c.bf16 %v759, %v759
      %v792 = vpack.c.bf16 %v760, %v760
      %v793 = vpack.c.bf16 %v761, %v761
      %v794 = vpack.c.bf16 %v762, %v762
      %v795 = vpack.c.bf16 %v763, %v763
      %v796 = vpack.c.bf16 %v764, %v764
      %v797 = vpack.c.bf16 %v765, %v765
      %v798 = vpack.c.bf16 %v766, %v766
      %v799 = vpack.c.bf16 %v767, %v767
      %v800 = vpack.c.bf16 %v768, %v768
      %v801 = vpack.c.bf16 %v769, %v769
      %v802 = vpack.c.bf16 %v770, %v770
      %v803 = vpack.c.bf16 %v771, %v771
      %v804 = vpack.c.bf16 %v772, %v772
      %v805 = vpack.c.bf16 %v773, %v773
      %v806 = vpack.c.bf16 %v774, %v774
      %807 = vst [vmem:[%s175] sm:$0xf] %v775
      %808 = vst [vmem:[%s175 + $0x4] sm:$0xf] %v776
      %809 = vst [vmem:[%s175 + $0x8] sm:$0xf] %v777
      %810 = vst [vmem:[%s175 + $0xc] sm:$0xf] %v778
      %811 = vst [vmem:[%s175 + $0x10] sm:$0xf] %v779
      %812 = vst [vmem:[%s175 + $0x14] sm:$0xf] %v780
      %813 = vst [vmem:[%s175 + $0x18] sm:$0xf] %v781
      %814 = vst [vmem:[%s175 + $0x1c] sm:$0xf] %v782
      %815 = vst [vmem:[%s175 + $0x20] sm:$0xf] %v783
      %816 = vst [vmem:[%s175 + $0x24] sm:$0xf] %v784
      %817 = vst [vmem:[%s175 + $0x28] sm:$0xf] %v785
      %818 = vst [vmem:[%s175 + $0x2c] sm:$0xf] %v786
      %819 = vst [vmem:[%s175 + $0x30] sm:$0xf] %v787
      %820 = vst [vmem:[%s175 + $0x34] sm:$0xf] %v788
      %821 = vst [vmem:[%s175 + $0x38] sm:$0xf] %v789
      %822 = vst [vmem:[%s175 + $0x3c] sm:$0xf] %v790
      %823 = vst [vmem:[%s175 + $0x40] sm:$0xf] %v791
      %824 = vst [vmem:[%s175 + $0x44] sm:$0xf] %v792
      %825 = vst [vmem:[%s175 + $0x48] sm:$0xf] %v793
      %826 = vst [vmem:[%s175 + $0x4c] sm:$0xf] %v794
      %827 = vst [vmem:[%s175 + $0x50] sm:$0xf] %v795
      %828 = vst [vmem:[%s175 + $0x54] sm:$0xf] %v796
      %829 = vst [vmem:[%s175 + $0x58] sm:$0xf] %v797
      %830 = vst [vmem:[%s175 + $0x5c] sm:$0xf] %v798
      %831 = vst [vmem:[%s175 + $0x60] sm:$0xf] %v799
      %832 = vst [vmem:[%s175 + $0x64] sm:$0xf] %v800
      %833 = vst [vmem:[%s175 + $0x68] sm:$0xf] %v801
      %834 = vst [vmem:[%s175 + $0x6c] sm:$0xf] %v802
      %835 = vst [vmem:[%s175 + $0x70] sm:$0xf] %v803
      %836 = vst [vmem:[%s175 + $0x74] sm:$0xf] %v804
      %837 = vst [vmem:[%s175 + $0x78] sm:$0xf] %v805
      %838 = vst [vmem:[%s175 + $0x7c] sm:$0xf] %v806
      %s839 = smul.u32 32, %s14
      %p840 = scmp.lt.s32.totalorder %s839, 63
      %s841 = scalar_select %p840, %s839, 63
      %s842 = smul.addr %s841, 4
      %s843 = scalar_lea.vmem %s3, %s842
      // Predicated region
      $region33: #{ae_forward.11} parent=31 // pred_check
        %p844 = pneg %p100
      $region34: #{ae_forward.11} parent=31 // pred_check_branch
        %846 = sbr.rel (%p844) target = $region36
      $region35: #{ae_forward.11} parent=31 // pred_region
        %s847 = smul.u32 32, %s14
      $region36: #{ae_forward.11} parent=31 // pred_fallthru
        _
    $region32: #{ae_forward.11} parent=5 // pred_fallthru
      _
    %p848 = scmp.le.s32.totalorder 2, %s9
    // Predicated region
    $region37: #{ae_forward.11} parent=5 // pred_check
      %p849 = pneg %p848
    $region38: #{ae_forward.11} parent=5 // pred_check_branch
      %851 = sbr.rel (%p849) target = $region40
    $region39: #{ae_forward.11} parent=5 // pred_region
      %s852 = ssub.s32 %s9, 2
      // Predicated region
      $region41: #{ae_forward.11} parent=39 // pred_check
        %p853 = pneg %p106
      $region42: #{ae_forward.11} parent=39 // pred_check_branch
        %855 = sbr.rel (%p853) target = $region44
      $region43: #{ae_forward.11} parent=39 // pred_region
        %s856 = smul.u32 32, %s15
        %p857 = scmp.lt.s32.totalorder %s856, 63
        %s858 = scalar_select %p857, %s856, 63
        %s859 = smul.addr %s858, 4
        %s860 = scalar_lea.vmem %s3, %s859
      $region44: #{ae_forward.11} parent=39 // pred_fallthru
        _
    $region40: #{ae_forward.11} parent=5 // pred_fallthru
      _
  $region6: #{ae_forward.11} parent=0 // loop_footer
    %s13 = sadd.s32 1, %s9
  $region7: #{ae_forward.11} parent=0 // loop_footer_branch
    %8 = sbr.rel target = $region3
  $region8: #{ae_forward.11} parent=0 // loop_exit
    _

// kernel: ae_forward.12
$region0: #{ae_forward.12}
  #allocation0 [shape = 'u32[]', space=smem, size = 0x4, offset = 0x4, fixed_abs, tag = 'smem constant byte address 0x4 - core index']
  #allocation1 [shape = 'u32[72,128]{1,0:T(1,128)}', space=vmem, size = 0x9000, scoped, tag = 'internal scratch']
  %s0 = inlined_call_operand.vmem [shape: bf16[80,512], index: 0, kind: input, shape index: {}]
  %s1 = inlined_call_operand.vmem [shape: bf16[512,128], index: 1, kind: input, shape index: {}]
  %s2 = inlined_call_operand.vmem [shape: f32[1,128], index: 2, kind: input, shape index: {}]
  %s3 = inlined_call_operand.vmem [shape: bf16[80,128], index: 3, kind: output, shape index: {}]
  %s4 = sld [smem:[#allocation0]]
  $region22: #{ae_forward.12} parent=0
    _
  %s6 = ssub.s32 1, %s4
  %s7 = scalar_select 0, %s6, %s4
  // Predicated region
  $region2: #{ae_forward.12} parent=0 // pred_check
    _
  $region3: #{ae_forward.12} parent=0 // pred_check_branch
    %9 = sbr.rel (0) target = $region5
  $region4: #{ae_forward.12} parent=0 // pred_region
    _
  $region5: #{ae_forward.12} parent=0 // pred_fallthru
    _
  // Predicated region
  $region6: #{ae_forward.12} parent=0 // pred_check
    _
  $region7: #{ae_forward.12} parent=0 // pred_check_branch
    %11 = sbr.rel (0) target = $region9
  $region8: #{ae_forward.12} parent=0 // pred_region
    _
  $region9: #{ae_forward.12} parent=0 // pred_fallthru
    _
  // Predicated region
  $region10: #{ae_forward.12} parent=0 // pred_check
    _
  $region11: #{ae_forward.12} parent=0 // pred_check_branch
    %13 = sbr.rel (0) target = $region13
  $region12: #{ae_forward.12} parent=0 // pred_region
    _
  $region13: #{ae_forward.12} parent=0 // pred_fallthru
    _
  %v14 = vld [vmem:[%s0] sm:$0xff]
  %v15 = vld [vmem:[%s0 + $0x8] sm:$0xff]
  %v16 = vld [vmem:[%s0 + $0x10] sm:$0xff]
  %v17 = vld [vmem:[%s0 + $0x18] sm:$0xff]
  %v18 = vld [vmem:[%s0 + $0x20] sm:$0xff]
  %v19 = vld [vmem:[%s0 + $0x28] sm:$0xff]
  %v20 = vld [vmem:[%s0 + $0x30] sm:$0xff]
  %v21 = vld [vmem:[%s0 + $0x38] sm:$0xff]
  %v22 = vld [vmem:[%s0 + $0x40] sm:$0xff]
  %v23 = vld [vmem:[%s0 + $0x48] sm:$0xff]
  %v24 = vld [vmem:[%s0 + $0x50] sm:$0xff]
  %v25 = vld [vmem:[%s0 + $0x58] sm:$0xff]
  %v26 = vld [vmem:[%s0 + $0x60] sm:$0xff]
  %v27 = vld [vmem:[%s0 + $0x68] sm:$0xff]
  %v28 = vld [vmem:[%s0 + $0x70] sm:$0xff]
  %v29 = vld [vmem:[%s0 + $0x78] sm:$0xff]
  %v30 = vld [vmem:[%s0 + $0x80] sm:$0xff]
  %v31 = vld [vmem:[%s0 + $0x88] sm:$0xff]
  %v32 = vld [vmem:[%s0 + $0x90] sm:$0xff]
  %v33 = vld [vmem:[%s0 + $0x98] sm:$0xff]
  %v34 = vld [vmem:[%s1] sm:$0xf]
  %v35 = vld [vmem:[%s1 + $0x4] sm:$0xf]
  %v36 = vld [vmem:[%s1 + $0x8] sm:$0xf]
  %v37 = vld [vmem:[%s1 + $0xc] sm:$0xf]
  %v38 = vld [vmem:[%s1 + $0x10] sm:$0xf]
  %v39 = vld [vmem:[%s1 + $0x14] sm:$0xf]
  %v40 = vld [vmem:[%s1 + $0x18] sm:$0xf]
  %v41 = vld [vmem:[%s1 + $0x1c] sm:$0xf]
  %v42 = vld [vmem:[%s1 + $0x20] sm:$0xf]
  %v43 = vld [vmem:[%s1 + $0x24] sm:$0xf]
  %v44 = vld [vmem:[%s1 + $0x28] sm:$0xf]
  %v45 = vld [vmem:[%s1 + $0x2c] sm:$0xf]
  %v46 = vld [vmem:[%s1 + $0x30] sm:$0xf]
  %v47 = vld [vmem:[%s1 + $0x34] sm:$0xf]
  %v48 = vld [vmem:[%s1 + $0x38] sm:$0xf]
  %v49 = vld [vmem:[%s1 + $0x3c] sm:$0xf]
  %v50 = vld [vmem:[%s1 + $0x40] sm:$0xf]
  %v51 = vld [vmem:[%s1 + $0x44] sm:$0xf]
  %v52 = vld [vmem:[%s1 + $0x48] sm:$0xf]
  %v53 = vld [vmem:[%s1 + $0x4c] sm:$0xf]
  %v54 = vld [vmem:[%s1 + $0x50] sm:$0xf]
  %v55 = vld [vmem:[%s1 + $0x54] sm:$0xf]
  %v56 = vld [vmem:[%s1 + $0x58] sm:$0xf]
  %v57 = vld [vmem:[%s1 + $0x5c] sm:$0xf]
  %v58 = vld [vmem:[%s1 + $0x60] sm:$0xf]
  %v59 = vld [vmem:[%s1 + $0x64] sm:$0xf]
  %v60 = vld [vmem:[%s1 + $0x68] sm:$0xf]
  %v61 = vld [vmem:[%s1 + $0x6c] sm:$0xf]
  %v62 = vld [vmem:[%s1 + $0x70] sm:$0xf]
  %v63 = vld [vmem:[%s1 + $0x74] sm:$0xf]
  %v64 = vld [vmem:[%s1 + $0x78] sm:$0xf]
  %v65 = vld [vmem:[%s1 + $0x7c] sm:$0xf]
  %v66 = vld [vmem:[%s1 + $0x80] sm:$0xf]
  %v67 = vld [vmem:[%s1 + $0x84] sm:$0xf]
  %v68 = vld [vmem:[%s1 + $0x88] sm:$0xf]
  %v69 = vld [vmem:[%s1 + $0x8c] sm:$0xf]
  %v70 = vld [vmem:[%s1 + $0x90] sm:$0xf]
  %v71 = vld [vmem:[%s1 + $0x94] sm:$0xf]
  %v72 = vld [vmem:[%s1 + $0x98] sm:$0xf]
  %v73 = vld [vmem:[%s1 + $0x9c] sm:$0xf]
  %v74 = vld [vmem:[%s1 + $0xa0] sm:$0xf]
  %v75 = vld [vmem:[%s1 + $0xa4] sm:$0xf]
  %v76 = vld [vmem:[%s1 + $0xa8] sm:$0xf]
  %v77 = vld [vmem:[%s1 + $0xac] sm:$0xf]
  %v78 = vld [vmem:[%s1 + $0xb0] sm:$0xf]
  %v79 = vld [vmem:[%s1 + $0xb4] sm:$0xf]
  %v80 = vld [vmem:[%s1 + $0xb8] sm:$0xf]
  %v81 = vld [vmem:[%s1 + $0xbc] sm:$0xf]
  %v82 = vld [vmem:[%s1 + $0xc0] sm:$0xf]
  %v83 = vld [vmem:[%s1 + $0xc4] sm:$0xf]
  %v84 = vld [vmem:[%s1 + $0xc8] sm:$0xf]
  %v85 = vld [vmem:[%s1 + $0xcc] sm:$0xf]
  %v86 = vld [vmem:[%s1 + $0xd0] sm:$0xf]
  %v87 = vld [vmem:[%s1 + $0xd4] sm:$0xf]
  %v88 = vld [vmem:[%s1 + $0xd8] sm:$0xf]
  %v89 = vld [vmem:[%s1 + $0xdc] sm:$0xf]
  %v90 = vld [vmem:[%s1 + $0xe0] sm:$0xf]
  %v91 = vld [vmem:[%s1 + $0xe4] sm:$0xf]
  %v92 = vld [vmem:[%s1 + $0xe8] sm:$0xf]
  %v93 = vld [vmem:[%s1 + $0xec] sm:$0xf]
  %v94 = vld [vmem:[%s1 + $0xf0] sm:$0xf]
  %v95 = vld [vmem:[%s1 + $0xf4] sm:$0xf]
  %v96 = vld [vmem:[%s1 + $0xf8] sm:$0xf]
  %v97 = vld [vmem:[%s1 + $0xfc] sm:$0xf]
  %v98 = vld [vmem:[%s2] sm:$0x1]
  %v100 = vperm.slane %v98, 0
  %v122 = vunpack.c.l.b16 %v14
  %v123 = vunpack.c.h.b16 %v14
  %v124 = vunpack.c.l.b16 %v15
  %v125 = vunpack.c.h.b16 %v15
  %v126 = vunpack.c.l.b16 %v16
  %v127 = vunpack.c.h.b16 %v16
  %v128 = vunpack.c.l.b16 %v17
  %v129 = vunpack.c.h.b16 %v17
  %v130 = vunpack.c.l.b16 %v18
  %v131 = vunpack.c.h.b16 %v18
  %v132 = vunpack.c.l.b16 %v19
  %v133 = vunpack.c.h.b16 %v19
  %v134 = vunpack.c.l.b16 %v20
  %v135 = vunpack.c.h.b16 %v20
  %v136 = vunpack.c.l.b16 %v21
  %v137 = vunpack.c.h.b16 %v21
  %v138 = vunpack.c.l.b16 %v22
  %v139 = vunpack.c.h.b16 %v22
  %v140 = vunpack.c.l.b16 %v23
  %v141 = vunpack.c.h.b16 %v23
  %v142 = vunpack.c.l.b16 %v24
  %v143 = vunpack.c.h.b16 %v24
  %v144 = vunpack.c.l.b16 %v25
  %v145 = vunpack.c.h.b16 %v25
  %v146 = vunpack.c.l.b16 %v26
  %v147 = vunpack.c.h.b16 %v26
  %v148 = vunpack.c.l.b16 %v27
  %v149 = vunpack.c.h.b16 %v27
  %v150 = vunpack.c.l.b16 %v28
  %v151 = vunpack.c.h.b16 %v28
  %v152 = vunpack.c.l.b16 %v29
  %v153 = vunpack.c.h.b16 %v29
  %v154 = vunpack.c.l.b16 %v30
  %v155 = vunpack.c.h.b16 %v30
  %v156 = vunpack.c.l.b16 %v31
  %v157 = vunpack.c.h.b16 %v31
  %v158 = vunpack.c.l.b16 %v32
  %v159 = vunpack.c.h.b16 %v32
  %v160 = vunpack.c.l.b16 %v33
  %v161 = vunpack.c.h.b16 %v33
  %v162 = vpack.c.b16 %v126, %v122
  %v163 = vpack.c.b16 %v127, %v123
  %v164 = vpack.c.b16 %v128, %v124
  %v165 = vpack.c.b16 %v129, %v125
  %v166 = vpack.c.b16 %v134, %v130
  %v167 = vpack.c.b16 %v135, %v131
  %v168 = vpack.c.b16 %v136, %v132
  %v169 = vpack.c.b16 %v137, %v133
  %v170 = vpack.c.b16 %v142, %v138
  %v171 = vpack.c.b16 %v143, %v139
  %v172 = vpack.c.b16 %v144, %v140
  %v173 = vpack.c.b16 %v145, %v141
  %v174 = vpack.c.b16 %v150, %v146
  %v175 = vpack.c.b16 %v151, %v147
  %v176 = vpack.c.b16 %v152, %v148
  %v177 = vpack.c.b16 %v153, %v149
  %v178 = vpack.c.b16 %v158, %v154
  %v179 = vpack.c.b16 %v159, %v155
  %v180 = vpack.c.b16 %v160, %v156
  %v181 = vpack.c.b16 %v161, %v157
  %v266 = vunpack.c.l.b16 %v34
  %v267 = vunpack.c.l.b16 %v35
  %v268 = vunpack.c.l.b16 %v36
  %v269 = vunpack.c.l.b16 %v37
  %v270 = vunpack.c.l.b16 %v38
  %v271 = vunpack.c.l.b16 %v39
  %v272 = vunpack.c.l.b16 %v40
  %v273 = vunpack.c.l.b16 %v41
  %v274 = vunpack.c.l.b16 %v42
  %v275 = vunpack.c.l.b16 %v43
  %v276 = vunpack.c.l.b16 %v44
  %v277 = vunpack.c.l.b16 %v45
  %v278 = vunpack.c.l.b16 %v46
  %v279 = vunpack.c.l.b16 %v47
  %v280 = vunpack.c.l.b16 %v48
  %v281 = vunpack.c.l.b16 %v49
  %v282 = vunpack.c.l.b16 %v50
  %v283 = vunpack.c.l.b16 %v51
  %v284 = vunpack.c.l.b16 %v52
  %v285 = vunpack.c.l.b16 %v53
  %v286 = vunpack.c.l.b16 %v54
  %v287 = vunpack.c.l.b16 %v55
  %v288 = vunpack.c.l.b16 %v56
  %v289 = vunpack.c.l.b16 %v57
  %v290 = vunpack.c.l.b16 %v58
  %v291 = vunpack.c.l.b16 %v59
  %v292 = vunpack.c.l.b16 %v60
  %v293 = vunpack.c.l.b16 %v61
  %v294 = vunpack.c.l.b16 %v62
  %v295 = vunpack.c.l.b16 %v63
  %v296 = vunpack.c.l.b16 %v64
  %v297 = vunpack.c.l.b16 %v65
  %v298 = vunpack.c.l.b16 %v66
  %v299 = vunpack.c.l.b16 %v67
  %v300 = vunpack.c.l.b16 %v68
  %v301 = vunpack.c.l.b16 %v69
  %v302 = vunpack.c.l.b16 %v70
  %v303 = vunpack.c.l.b16 %v71
  %v304 = vunpack.c.l.b16 %v72
  %v305 = vunpack.c.l.b16 %v73
  %v306 = vunpack.c.l.b16 %v74
  %v307 = vunpack.c.l.b16 %v75
  %v308 = vunpack.c.l.b16 %v76
  %v309 = vunpack.c.l.b16 %v77
  %v310 = vunpack.c.l.b16 %v78
  %v311 = vunpack.c.l.b16 %v79
  %v312 = vunpack.c.l.b16 %v80
  %v313 = vunpack.c.l.b16 %v81
  %v314 = vunpack.c.l.b16 %v82
  %v315 = vunpack.c.l.b16 %v83
  %v316 = vunpack.c.l.b16 %v84
  %v317 = vunpack.c.l.b16 %v85
  %v318 = vunpack.c.l.b16 %v86
  %v319 = vunpack.c.l.b16 %v87
  %v320 = vunpack.c.l.b16 %v88
  %v321 = vunpack.c.l.b16 %v89
  %v322 = vunpack.c.l.b16 %v90
  %v323 = vunpack.c.l.b16 %v91
  %v324 = vunpack.c.l.b16 %v92
  %v325 = vunpack.c.l.b16 %v93
  %v326 = vunpack.c.l.b16 %v94
  %v327 = vunpack.c.l.b16 %v95
  %v328 = vunpack.c.l.b16 %v96
  %v329 = vunpack.c.l.b16 %v97
  %v330 = vpack.c.b16 %v267, %v266
  %v331 = vpack.c.b16 %v269, %v268
  %v332 = vpack.c.b16 %v271, %v270
  %v333 = vpack.c.b16 %v273, %v272
  %v334 = vpack.c.b16 %v275, %v274
  %v335 = vpack.c.b16 %v277, %v276
  %v336 = vpack.c.b16 %v279, %v278
  %v337 = vpack.c.b16 %v281, %v280
  %v338 = vpack.c.b16 %v283, %v282
  %v339 = vpack.c.b16 %v285, %v284
  %v340 = vpack.c.b16 %v287, %v286
  %v341 = vpack.c.b16 %v289, %v288
  %v342 = vpack.c.b16 %v291, %v290
  %v343 = vpack.c.b16 %v293, %v292
  %v344 = vpack.c.b16 %v295, %v294
  %v345 = vpack.c.b16 %v297, %v296
  %v346 = vpack.c.b16 %v299, %v298
  %v347 = vpack.c.b16 %v301, %v300
  %v348 = vpack.c.b16 %v303, %v302
  %v349 = vpack.c.b16 %v305, %v304
  %v350 = vpack.c.b16 %v307, %v306
  %v351 = vpack.c.b16 %v309, %v308
  %v352 = vpack.c.b16 %v311, %v310
  %v353 = vpack.c.b16 %v313, %v312
  %v354 = vpack.c.b16 %v315, %v314
  %v355 = vpack.c.b16 %v317, %v316
  %v356 = vpack.c.b16 %v319, %v318
  %v357 = vpack.c.b16 %v321, %v320
  %v358 = vpack.c.b16 %v323, %v322
  %v359 = vpack.c.b16 %v325, %v324
  %v360 = vpack.c.b16 %v327, %v326
  %v361 = vpack.c.b16 %v329, %v328
  %394 = vmatpush.bf16.msra.mxu0 %v337
  %395 = vmatpush.bf16.msra.mxu0 %v336
  %396 = vmatpush.bf16.msra.mxu0 %v335
  %397 = vmatpush.bf16.msra.mxu0 %v334
  %398 = vmatpush.bf16.msra.mxu0 %v333
  %399 = vmatpush.bf16.msra.mxu0 %v332
  %400 = vmatpush.bf16.msra.mxu0 %v331
  %401 = vmatpush.bf16.msra.mxu0 %v330
  %402 = vmatmul.bf16.gmra.mxu0 %v162
  %v403 = vpop.f32.mrf.mxu0
  %v404 = vadd.f32 %v100, %v403
  %v405 = vpop.f32.mrf.mxu0
  %v406 = vadd.f32 %v100, %v405
  %407 = vmatmul.bf16.gmra.mxu0 %v166
  %v408 = vpop.f32.mrf.mxu0
  %v409 = vadd.f32 %v100, %v408
  %v410 = vpop.f32.mrf.mxu0
  %v411 = vadd.f32 %v100, %v410
  %412 = vmatmul.bf16.gmra.mxu0 %v170
  %v413 = vpop.f32.mrf.mxu0
  %v414 = vadd.f32 %v100, %v413
  %v415 = vpop.f32.mrf.mxu0
  %v416 = vadd.f32 %v100, %v415
  %417 = vmatmul.bf16.gmra.mxu0 %v174
  %v418 = vpop.f32.mrf.mxu0
  %v419 = vadd.f32 %v100, %v418
  %v420 = vpop.f32.mrf.mxu0
  %v421 = vadd.f32 %v100, %v420
  %422 = vmatmul.bf16.gmra.mxu0 %v178
  %v423 = vpop.f32.mrf.mxu0
  %v424 = vadd.f32 %v100, %v423
  %v425 = vpop.f32.mrf.mxu0
  %v426 = vadd.f32 %v100, %v425
  %427 = vdwg.mxu0
  %428 = vmatpush.bf16.msra.mxu0 %v345
  %429 = vmatpush.bf16.msra.mxu0 %v344
  %430 = vmatpush.bf16.msra.mxu0 %v343
  %431 = vmatpush.bf16.msra.mxu0 %v342
  %432 = vmatpush.bf16.msra.mxu0 %v341
  %433 = vmatpush.bf16.msra.mxu0 %v340
  %434 = vmatpush.bf16.msra.mxu0 %v339
  %435 = vmatpush.bf16.msra.mxu0 %v338
  %436 = vmatmul.bf16.gmra.mxu0 %v163
  %v437 = vpop.f32.mrf.mxu0
  %v438 = vadd.f32 %v404, %v437
  %v439 = vpop.f32.mrf.mxu0
  %v440 = vadd.f32 %v406, %v439
  %441 = vmatmul.bf16.gmra.mxu0 %v167
  %v442 = vpop.f32.mrf.mxu0
  %v443 = vadd.f32 %v409, %v442
  %v444 = vpop.f32.mrf.mxu0
  %v445 = vadd.f32 %v411, %v444
  %446 = vmatmul.bf16.gmra.mxu0 %v171
  %v447 = vpop.f32.mrf.mxu0
  %v448 = vadd.f32 %v414, %v447
  %v449 = vpop.f32.mrf.mxu0
  %v450 = vadd.f32 %v416, %v449
  %451 = vmatmul.bf16.gmra.mxu0 %v175
  %v452 = vpop.f32.mrf.mxu0
  %v453 = vadd.f32 %v419, %v452
  %v454 = vpop.f32.mrf.mxu0
  %v455 = vadd.f32 %v421, %v454
  %456 = vmatmul.bf16.gmra.mxu0 %v179
  %v457 = vpop.f32.mrf.mxu0
  %v458 = vadd.f32 %v424, %v457
  %v459 = vpop.f32.mrf.mxu0
  %v460 = vadd.f32 %v426, %v459
  %461 = vdwg.mxu0
  %462 = vmatpush.bf16.msra.mxu0 %v353
  %463 = vmatpush.bf16.msra.mxu0 %v352
  %464 = vmatpush.bf16.msra.mxu0 %v351
  %465 = vmatpush.bf16.msra.mxu0 %v350
  %466 = vmatpush.bf16.msra.mxu0 %v349
  %467 = vmatpush.bf16.msra.mxu0 %v348
  %468 = vmatpush.bf16.msra.mxu0 %v347
  %469 = vmatpush.bf16.msra.mxu0 %v346
  %470 = vmatmul.bf16.gmra.mxu0 %v164
  %v471 = vpop.f32.mrf.mxu0
  %v472 = vadd.f32 %v438, %v471
  %v473 = vpop.f32.mrf.mxu0
  %v474 = vadd.f32 %v440, %v473
  %475 = vmatmul.bf16.gmra.mxu0 %v168
  %v476 = vpop.f32.mrf.mxu0
  %v477 = vadd.f32 %v443, %v476
  %v478 = vpop.f32.mrf.mxu0
  %v479 = vadd.f32 %v445, %v478
  %480 = vmatmul.bf16.gmra.mxu0 %v172
  %v481 = vpop.f32.mrf.mxu0
  %v482 = vadd.f32 %v448, %v481
  %v483 = vpop.f32.mrf.mxu0
  %v484 = vadd.f32 %v450, %v483
  %485 = vmatmul.bf16.gmra.mxu0 %v176
  %v486 = vpop.f32.mrf.mxu0
  %v487 = vadd.f32 %v453, %v486
  %v488 = vpop.f32.mrf.mxu0
  %v489 = vadd.f32 %v455, %v488
  %490 = vmatmul.bf16.gmra.mxu0 %v180
  %v491 = vpop.f32.mrf.mxu0
  %v492 = vadd.f32 %v458, %v491
  %v493 = vpop.f32.mrf.mxu0
  %v494 = vadd.f32 %v460, %v493
  %495 = vdwg.mxu0
  %496 = vmatpush.bf16.msra.mxu0 %v361
  %497 = vmatpush.bf16.msra.mxu0 %v360
  %498 = vmatpush.bf16.msra.mxu0 %v359
  %499 = vmatpush.bf16.msra.mxu0 %v358
  %500 = vmatpush.bf16.msra.mxu0 %v357
  %501 = vmatpush.bf16.msra.mxu0 %v356
  %502 = vmatpush.bf16.msra.mxu0 %v355
  %503 = vmatpush.bf16.msra.mxu0 %v354
  %504 = vmatmul.bf16.gmra.mxu0 %v165
  %v505 = vpop.f32.mrf.mxu0
  %v506 = vadd.f32 %v472, %v505
  %v507 = vpop.f32.mrf.mxu0
  %v508 = vadd.f32 %v474, %v507
  %509 = vmatmul.bf16.gmra.mxu0 %v169
  %v510 = vpop.f32.mrf.mxu0
  %v511 = vadd.f32 %v477, %v510
  %v512 = vpop.f32.mrf.mxu0
  %v513 = vadd.f32 %v479, %v512
  %514 = vmatmul.bf16.gmra.mxu0 %v173
  %v515 = vpop.f32.mrf.mxu0
  %v516 = vadd.f32 %v482, %v515
  %v517 = vpop.f32.mrf.mxu0
  %v518 = vadd.f32 %v484, %v517
  %519 = vmatmul.bf16.gmra.mxu0 %v177
  %v520 = vpop.f32.mrf.mxu0
  %v521 = vadd.f32 %v487, %v520
  %v522 = vpop.f32.mrf.mxu0
  %v523 = vadd.f32 %v489, %v522
  %524 = vmatmul.bf16.gmra.mxu0 %v181
  %v525 = vpop.f32.mrf.mxu0
  %v526 = vadd.f32 %v492, %v525
  %v527 = vpop.f32.mrf.mxu0
  %v528 = vadd.f32 %v494, %v527
  %529 = vdwg.mxu0
  %vm530 = vcmp.gt.f32.partialorder %v506, 0.0
  %vm531 = vcmp.gt.f32.partialorder %v508, 0.0
  %vm532 = vcmp.gt.f32.partialorder %v511, 0.0
  %vm533 = vcmp.gt.f32.partialorder %v513, 0.0
  %vm534 = vcmp.gt.f32.partialorder %v516, 0.0
  %vm535 = vcmp.gt.f32.partialorder %v518, 0.0
  %vm536 = vcmp.gt.f32.partialorder %v521, 0.0
  %vm537 = vcmp.gt.f32.partialorder %v523, 0.0
  %vm538 = vcmp.gt.f32.partialorder %v526, 0.0
  %vm539 = vcmp.gt.f32.partialorder %v528, 0.0
  %v540 = vmul.f32 %v506, 0.2
  %v541 = vmul.f32 %v508, 0.2
  %v542 = vmul.f32 %v511, 0.2
  %v543 = vmul.f32 %v513, 0.2
  %v544 = vmul.f32 %v516, 0.2
  %v545 = vmul.f32 %v518, 0.2
  %v546 = vmul.f32 %v521, 0.2
  %v547 = vmul.f32 %v523, 0.2
  %v548 = vmul.f32 %v526, 0.2
  %v549 = vmul.f32 %v528, 0.2
  %v550 = vsel %vm530, %v506, %v540
  %v551 = vsel %vm531, %v508, %v541
  %v552 = vsel %vm532, %v511, %v542
  %v553 = vsel %vm533, %v513, %v543
  %v554 = vsel %vm534, %v516, %v544
  %v555 = vsel %vm535, %v518, %v545
  %v556 = vsel %vm536, %v521, %v546
  %v557 = vsel %vm537, %v523, %v547
  %v558 = vsel %vm538, %v526, %v548
  %v559 = vsel %vm539, %v528, %v549
  %v560 = vpack.c.bf16 %v550, %v550
  %v561 = vpack.c.bf16 %v551, %v551
  %v562 = vpack.c.bf16 %v552, %v552
  %v563 = vpack.c.bf16 %v553, %v553
  %v564 = vpack.c.bf16 %v554, %v554
  %v565 = vpack.c.bf16 %v555, %v555
  %v566 = vpack.c.bf16 %v556, %v556
  %v567 = vpack.c.bf16 %v557, %v557
  %v568 = vpack.c.bf16 %v558, %v558
  %v569 = vpack.c.bf16 %v559, %v559
  %570 = vst [vmem:[%s3] sm:$0xf] %v560
  %571 = vst [vmem:[%s3 + $0x4] sm:$0xf] %v561
  %572 = vst [vmem:[%s3 + $0x8] sm:$0xf] %v562
  %573 = vst [vmem:[%s3 + $0xc] sm:$0xf] %v563
  %574 = vst [vmem:[%s3 + $0x10] sm:$0xf] %v564
  %575 = vst [vmem:[%s3 + $0x14] sm:$0xf] %v565
  %576 = vst [vmem:[%s3 + $0x18] sm:$0xf] %v566
  %577 = vst [vmem:[%s3 + $0x1c] sm:$0xf] %v567
  %578 = vst [vmem:[%s3 + $0x20] sm:$0xf] %v568
  %579 = vst [vmem:[%s3 + $0x24] sm:$0xf] %v569
  // Predicated region
  $region14: #{ae_forward.12} parent=0 // pred_check
    _
  $region15: #{ae_forward.12} parent=0 // pred_check_branch
    %581 = sbr.rel (0) target = $region17
  $region16: #{ae_forward.12} parent=0 // pred_region
    _
  $region17: #{ae_forward.12} parent=0 // pred_fallthru
    _
  // Predicated region
  $region18: #{ae_forward.12} parent=0 // pred_check
    _
  $region19: #{ae_forward.12} parent=0 // pred_check_branch
    %583 = sbr.rel (0) target = $region21
  $region20: #{ae_forward.12} parent=0 // pred_region
    _
  $region21: #{ae_forward.12} parent=0 // pred_fallthru
    _

// kernel: ae_forward.13
$region0: #{ae_forward.13}
  #allocation0 [shape = 'u32[]', space=smem, size = 0x4, offset = 0x4, fixed_abs, tag = 'smem constant byte address 0x4 - core index']
  #allocation1 [shape = 'u32[72,128]{1,0:T(1,128)}', space=vmem, size = 0x9000, scoped, tag = 'internal scratch']
  %s0 = inlined_call_operand.vmem [shape: bf16[32,1024], index: 0, kind: input, shape index: {}]
  %s1 = inlined_call_operand.vmem [shape: bf16[1024,128], index: 1, kind: input, shape index: {}]
  %s2 = inlined_call_operand.vmem [shape: f32[1,128], index: 2, kind: input, shape index: {}]
  %s3 = inlined_call_operand.vmem [shape: bf16[32,128], index: 3, kind: output, shape index: {}]
  %s4 = sld [smem:[#allocation0]]
  $region22: #{ae_forward.13} parent=0
    _
  %s6 = ssub.s32 1, %s4
  %s7 = scalar_select 0, %s6, %s4
  // Predicated region
  $region2: #{ae_forward.13} parent=0 // pred_check
    _
  $region3: #{ae_forward.13} parent=0 // pred_check_branch
    %9 = sbr.rel (0) target = $region5
  $region4: #{ae_forward.13} parent=0 // pred_region
    _
  $region5: #{ae_forward.13} parent=0 // pred_fallthru
    _
  // Predicated region
  $region6: #{ae_forward.13} parent=0 // pred_check
    _
  $region7: #{ae_forward.13} parent=0 // pred_check_branch
    %11 = sbr.rel (0) target = $region9
  $region8: #{ae_forward.13} parent=0 // pred_region
    _
  $region9: #{ae_forward.13} parent=0 // pred_fallthru
    _
  // Predicated region
  $region10: #{ae_forward.13} parent=0 // pred_check
    _
  $region11: #{ae_forward.13} parent=0 // pred_check_branch
    %13 = sbr.rel (0) target = $region13
  $region12: #{ae_forward.13} parent=0 // pred_region
    _
  $region13: #{ae_forward.13} parent=0 // pred_fallthru
    _
  %v14 = vld [vmem:[%s0] sm:$0xff]
  %v15 = vld [vmem:[%s0 + $0x8] sm:$0xff]
  %v16 = vld [vmem:[%s0 + $0x10] sm:$0xff]
  %v17 = vld [vmem:[%s0 + $0x18] sm:$0xff]
  %v18 = vld [vmem:[%s0 + $0x20] sm:$0xff]
  %v19 = vld [vmem:[%s0 + $0x28] sm:$0xff]
  %v20 = vld [vmem:[%s0 + $0x30] sm:$0xff]
  %v21 = vld [vmem:[%s0 + $0x38] sm:$0xff]
  %v22 = vld [vmem:[%s0 + $0x40] sm:$0xff]
  %v23 = vld [vmem:[%s0 + $0x48] sm:$0xff]
  %v24 = vld [vmem:[%s0 + $0x50] sm:$0xff]
  %v25 = vld [vmem:[%s0 + $0x58] sm:$0xff]
  %v26 = vld [vmem:[%s0 + $0x60] sm:$0xff]
  %v27 = vld [vmem:[%s0 + $0x68] sm:$0xff]
  %v28 = vld [vmem:[%s0 + $0x70] sm:$0xff]
  %v29 = vld [vmem:[%s0 + $0x78] sm:$0xff]
  %v30 = vld [vmem:[%s1] sm:$0xf]
  %v31 = vld [vmem:[%s1 + $0x4] sm:$0xf]
  %v32 = vld [vmem:[%s1 + $0x8] sm:$0xf]
  %v33 = vld [vmem:[%s1 + $0xc] sm:$0xf]
  %v34 = vld [vmem:[%s1 + $0x10] sm:$0xf]
  %v35 = vld [vmem:[%s1 + $0x14] sm:$0xf]
  %v36 = vld [vmem:[%s1 + $0x18] sm:$0xf]
  %v37 = vld [vmem:[%s1 + $0x1c] sm:$0xf]
  %v38 = vld [vmem:[%s1 + $0x20] sm:$0xf]
  %v39 = vld [vmem:[%s1 + $0x24] sm:$0xf]
  %v40 = vld [vmem:[%s1 + $0x28] sm:$0xf]
  %v41 = vld [vmem:[%s1 + $0x2c] sm:$0xf]
  %v42 = vld [vmem:[%s1 + $0x30] sm:$0xf]
  %v43 = vld [vmem:[%s1 + $0x34] sm:$0xf]
  %v44 = vld [vmem:[%s1 + $0x38] sm:$0xf]
  %v45 = vld [vmem:[%s1 + $0x3c] sm:$0xf]
  %v46 = vld [vmem:[%s1 + $0x40] sm:$0xf]
  %v47 = vld [vmem:[%s1 + $0x44] sm:$0xf]
  %v48 = vld [vmem:[%s1 + $0x48] sm:$0xf]
  %v49 = vld [vmem:[%s1 + $0x4c] sm:$0xf]
  %v50 = vld [vmem:[%s1 + $0x50] sm:$0xf]
  %v51 = vld [vmem:[%s1 + $0x54] sm:$0xf]
  %v52 = vld [vmem:[%s1 + $0x58] sm:$0xf]
  %v53 = vld [vmem:[%s1 + $0x5c] sm:$0xf]
  %v54 = vld [vmem:[%s1 + $0x60] sm:$0xf]
  %v55 = vld [vmem:[%s1 + $0x64] sm:$0xf]
  %v56 = vld [vmem:[%s1 + $0x68] sm:$0xf]
  %v57 = vld [vmem:[%s1 + $0x6c] sm:$0xf]
  %v58 = vld [vmem:[%s1 + $0x70] sm:$0xf]
  %v59 = vld [vmem:[%s1 + $0x74] sm:$0xf]
  %v60 = vld [vmem:[%s1 + $0x78] sm:$0xf]
  %v61 = vld [vmem:[%s1 + $0x7c] sm:$0xf]
  %v62 = vld [vmem:[%s1 + $0x80] sm:$0xf]
  %v63 = vld [vmem:[%s1 + $0x84] sm:$0xf]
  %v64 = vld [vmem:[%s1 + $0x88] sm:$0xf]
  %v65 = vld [vmem:[%s1 + $0x8c] sm:$0xf]
  %v66 = vld [vmem:[%s1 + $0x90] sm:$0xf]
  %v67 = vld [vmem:[%s1 + $0x94] sm:$0xf]
  %v68 = vld [vmem:[%s1 + $0x98] sm:$0xf]
  %v69 = vld [vmem:[%s1 + $0x9c] sm:$0xf]
  %v70 = vld [vmem:[%s1 + $0xa0] sm:$0xf]
  %v71 = vld [vmem:[%s1 + $0xa4] sm:$0xf]
  %v72 = vld [vmem:[%s1 + $0xa8] sm:$0xf]
  %v73 = vld [vmem:[%s1 + $0xac] sm:$0xf]
  %v74 = vld [vmem:[%s1 + $0xb0] sm:$0xf]
  %v75 = vld [vmem:[%s1 + $0xb4] sm:$0xf]
  %v76 = vld [vmem:[%s1 + $0xb8] sm:$0xf]
  %v77 = vld [vmem:[%s1 + $0xbc] sm:$0xf]
  %v78 = vld [vmem:[%s1 + $0xc0] sm:$0xf]
  %v79 = vld [vmem:[%s1 + $0xc4] sm:$0xf]
  %v80 = vld [vmem:[%s1 + $0xc8] sm:$0xf]
  %v81 = vld [vmem:[%s1 + $0xcc] sm:$0xf]
  %v82 = vld [vmem:[%s1 + $0xd0] sm:$0xf]
  %v83 = vld [vmem:[%s1 + $0xd4] sm:$0xf]
  %v84 = vld [vmem:[%s1 + $0xd8] sm:$0xf]
  %v85 = vld [vmem:[%s1 + $0xdc] sm:$0xf]
  %v86 = vld [vmem:[%s1 + $0xe0] sm:$0xf]
  %v87 = vld [vmem:[%s1 + $0xe4] sm:$0xf]
  %v88 = vld [vmem:[%s1 + $0xe8] sm:$0xf]
  %v89 = vld [vmem:[%s1 + $0xec] sm:$0xf]
  %v90 = vld [vmem:[%s1 + $0xf0] sm:$0xf]
  %v91 = vld [vmem:[%s1 + $0xf4] sm:$0xf]
  %v92 = vld [vmem:[%s1 + $0xf8] sm:$0xf]
  %v93 = vld [vmem:[%s1 + $0xfc] sm:$0xf]
  %v94 = vld [vmem:[%s1 + $0x100] sm:$0xf]
  %v95 = vld [vmem:[%s1 + $0x104] sm:$0xf]
  %v96 = vld [vmem:[%s1 + $0x108] sm:$0xf]
  %v97 = vld [vmem:[%s1 + $0x10c] sm:$0xf]
  %v98 = vld [vmem:[%s1 + $0x110] sm:$0xf]
  %v99 = vld [vmem:[%s1 + $0x114] sm:$0xf]
  %v100 = vld [vmem:[%s1 + $0x118] sm:$0xf]
  %v101 = vld [vmem:[%s1 + $0x11c] sm:$0xf]
  %v102 = vld [vmem:[%s1 + $0x120] sm:$0xf]
  %v103 = vld [vmem:[%s1 + $0x124] sm:$0xf]
  %v104 = vld [vmem:[%s1 + $0x128] sm:$0xf]
  %v105 = vld [vmem:[%s1 + $0x12c] sm:$0xf]
  %v106 = vld [vmem:[%s1 + $0x130] sm:$0xf]
  %v107 = vld [vmem:[%s1 + $0x134] sm:$0xf]
  %v108 = vld [vmem:[%s1 + $0x138] sm:$0xf]
  %v109 = vld [vmem:[%s1 + $0x13c] sm:$0xf]
  %v110 = vld [vmem:[%s1 + $0x140] sm:$0xf]
  %v111 = vld [vmem:[%s1 + $0x144] sm:$0xf]
  %v112 = vld [vmem:[%s1 + $0x148] sm:$0xf]
  %v113 = vld [vmem:[%s1 + $0x14c] sm:$0xf]
  %v114 = vld [vmem:[%s1 + $0x150] sm:$0xf]
  %v115 = vld [vmem:[%s1 + $0x154] sm:$0xf]
  %v116 = vld [vmem:[%s1 + $0x158] sm:$0xf]
  %v117 = vld [vmem:[%s1 + $0x15c] sm:$0xf]
  %v118 = vld [vmem:[%s1 + $0x160] sm:$0xf]
  %v119 = vld [vmem:[%s1 + $0x164] sm:$0xf]
  %v120 = vld [vmem:[%s1 + $0x168] sm:$0xf]
  %v121 = vld [vmem:[%s1 + $0x16c] sm:$0xf]
  %v122 = vld [vmem:[%s1 + $0x170] sm:$0xf]
  %v123 = vld [vmem:[%s1 + $0x174] sm:$0xf]
  %v124 = vld [vmem:[%s1 + $0x178] sm:$0xf]
  %v125 = vld [vmem:[%s1 + $0x17c] sm:$0xf]
  %v126 = vld [vmem:[%s1 + $0x180] sm:$0xf]
  %v127 = vld [vmem:[%s1 + $0x184] sm:$0xf]
  %v128 = vld [vmem:[%s1 + $0x188] sm:$0xf]
  %v129 = vld [vmem:[%s1 + $0x18c] sm:$0xf]
  %v130 = vld [vmem:[%s1 + $0x190] sm:$0xf]
  %v131 = vld [vmem:[%s1 + $0x194] sm:$0xf]
  %v132 = vld [vmem:[%s1 + $0x198] sm:$0xf]
  %v133 = vld [vmem:[%s1 + $0x19c] sm:$0xf]
  %v134 = vld [vmem:[%s1 + $0x1a0] sm:$0xf]
  %v135 = vld [vmem:[%s1 + $0x1a4] sm:$0xf]
  %v136 = vld [vmem:[%s1 + $0x1a8] sm:$0xf]
  %v137 = vld [vmem:[%s1 + $0x1ac] sm:$0xf]
  %v138 = vld [vmem:[%s1 + $0x1b0] sm:$0xf]
  %v139 = vld [vmem:[%s1 + $0x1b4] sm:$0xf]
  %v140 = vld [vmem:[%s1 + $0x1b8] sm:$0xf]
  %v141 = vld [vmem:[%s1 + $0x1bc] sm:$0xf]
  %v142 = vld [vmem:[%s1 + $0x1c0] sm:$0xf]
  %v143 = vld [vmem:[%s1 + $0x1c4] sm:$0xf]
  %v144 = vld [vmem:[%s1 + $0x1c8] sm:$0xf]
  %v145 = vld [vmem:[%s1 + $0x1cc] sm:$0xf]
  %v146 = vld [vmem:[%s1 + $0x1d0] sm:$0xf]
  %v147 = vld [vmem:[%s1 + $0x1d4] sm:$0xf]
  %v148 = vld [vmem:[%s1 + $0x1d8] sm:$0xf]
  %v149 = vld [vmem:[%s1 + $0x1dc] sm:$0xf]
  %v150 = vld [vmem:[%s1 + $0x1e0] sm:$0xf]
  %v151 = vld [vmem:[%s1 + $0x1e4] sm:$0xf]
  %v152 = vld [vmem:[%s1 + $0x1e8] sm:$0xf]
  %v153 = vld [vmem:[%s1 + $0x1ec] sm:$0xf]
  %v154 = vld [vmem:[%s1 + $0x1f0] sm:$0xf]
  %v155 = vld [vmem:[%s1 + $0x1f4] sm:$0xf]
  %v156 = vld [vmem:[%s1 + $0x1f8] sm:$0xf]
  %v157 = vld [vmem:[%s1 + $0x1fc] sm:$0xf]
  %v158 = vld [vmem:[%s2] sm:$0x1]
  %v160 = vperm.slane %v158, 0
  %v178 = vunpack.c.l.b16 %v14
  %v179 = vunpack.c.h.b16 %v14
  %v180 = vunpack.c.l.b16 %v15
  %v181 = vunpack.c.h.b16 %v15
  %v182 = vunpack.c.l.b16 %v16
  %v183 = vunpack.c.h.b16 %v16
  %v184 = vunpack.c.l.b16 %v17
  %v185 = vunpack.c.h.b16 %v17
  %v186 = vunpack.c.l.b16 %v18
  %v187 = vunpack.c.h.b16 %v18
  %v188 = vunpack.c.l.b16 %v19
  %v189 = vunpack.c.h.b16 %v19
  %v190 = vunpack.c.l.b16 %v20
  %v191 = vunpack.c.h.b16 %v20
  %v192 = vunpack.c.l.b16 %v21
  %v193 = vunpack.c.h.b16 %v21
  %v194 = vunpack.c.l.b16 %v22
  %v195 = vunpack.c.h.b16 %v22
  %v196 = vunpack.c.l.b16 %v23
  %v197 = vunpack.c.h.b16 %v23
  %v198 = vunpack.c.l.b16 %v24
  %v199 = vunpack.c.h.b16 %v24
  %v200 = vunpack.c.l.b16 %v25
  %v201 = vunpack.c.h.b16 %v25
  %v202 = vunpack.c.l.b16 %v26
  %v203 = vunpack.c.h.b16 %v26
  %v204 = vunpack.c.l.b16 %v27
  %v205 = vunpack.c.h.b16 %v27
  %v206 = vunpack.c.l.b16 %v28
  %v207 = vunpack.c.h.b16 %v28
  %v208 = vunpack.c.l.b16 %v29
  %v209 = vunpack.c.h.b16 %v29
  %v210 = vpack.c.b16 %v186, %v178
  %v211 = vpack.c.b16 %v187, %v179
  %v212 = vpack.c.b16 %v188, %v180
  %v213 = vpack.c.b16 %v189, %v181
  %v214 = vpack.c.b16 %v190, %v182
  %v215 = vpack.c.b16 %v191, %v183
  %v216 = vpack.c.b16 %v192, %v184
  %v217 = vpack.c.b16 %v193, %v185
  %v218 = vpack.c.b16 %v202, %v194
  %v219 = vpack.c.b16 %v203, %v195
  %v220 = vpack.c.b16 %v204, %v196
  %v221 = vpack.c.b16 %v205, %v197
  %v222 = vpack.c.b16 %v206, %v198
  %v223 = vpack.c.b16 %v207, %v199
  %v224 = vpack.c.b16 %v208, %v200
  %v225 = vpack.c.b16 %v209, %v201
  %v370 = vunpack.c.l.b16 %v30
  %v371 = vunpack.c.l.b16 %v31
  %v372 = vunpack.c.l.b16 %v32
  %v373 = vunpack.c.l.b16 %v33
  %v374 = vunpack.c.l.b16 %v34
  %v375 = vunpack.c.l.b16 %v35
  %v376 = vunpack.c.l.b16 %v36
  %v377 = vunpack.c.l.b16 %v37
  %v378 = vunpack.c.l.b16 %v38
  %v379 = vunpack.c.l.b16 %v39
  %v380 = vunpack.c.l.b16 %v40
  %v381 = vunpack.c.l.b16 %v41
  %v382 = vunpack.c.l.b16 %v42
  %v383 = vunpack.c.l.b16 %v43
  %v384 = vunpack.c.l.b16 %v44
  %v385 = vunpack.c.l.b16 %v45
  %v386 = vunpack.c.l.b16 %v46
  %v387 = vunpack.c.l.b16 %v47
  %v388 = vunpack.c.l.b16 %v48
  %v389 = vunpack.c.l.b16 %v49
  %v390 = vunpack.c.l.b16 %v50
  %v391 = vunpack.c.l.b16 %v51
  %v392 = vunpack.c.l.b16 %v52
  %v393 = vunpack.c.l.b16 %v53
  %v394 = vunpack.c.l.b16 %v54
  %v395 = vunpack.c.l.b16 %v55
  %v396 = vunpack.c.l.b16 %v56
  %v397 = vunpack.c.l.b16 %v57
  %v398 = vunpack.c.l.b16 %v58
  %v399 = vunpack.c.l.b16 %v59
  %v400 = vunpack.c.l.b16 %v60
  %v401 = vunpack.c.l.b16 %v61
  %v402 = vunpack.c.l.b16 %v62
  %v403 = vunpack.c.l.b16 %v63
  %v404 = vunpack.c.l.b16 %v64
  %v405 = vunpack.c.l.b16 %v65
  %v406 = vunpack.c.l.b16 %v66
  %v407 = vunpack.c.l.b16 %v67
  %v408 = vunpack.c.l.b16 %v68
  %v409 = vunpack.c.l.b16 %v69
  %v410 = vunpack.c.l.b16 %v70
  %v411 = vunpack.c.l.b16 %v71
  %v412 = vunpack.c.l.b16 %v72
  %v413 = vunpack.c.l.b16 %v73
  %v414 = vunpack.c.l.b16 %v74
  %v415 = vunpack.c.l.b16 %v75
  %v416 = vunpack.c.l.b16 %v76
  %v417 = vunpack.c.l.b16 %v77
  %v418 = vunpack.c.l.b16 %v78
  %v419 = vunpack.c.l.b16 %v79
  %v420 = vunpack.c.l.b16 %v80
  %v421 = vunpack.c.l.b16 %v81
  %v422 = vunpack.c.l.b16 %v82
  %v423 = vunpack.c.l.b16 %v83
  %v424 = vunpack.c.l.b16 %v84
  %v425 = vunpack.c.l.b16 %v85
  %v426 = vunpack.c.l.b16 %v86
  %v427 = vunpack.c.l.b16 %v87
  %v428 = vunpack.c.l.b16 %v88
  %v429 = vunpack.c.l.b16 %v89
  %v430 = vunpack.c.l.b16 %v90
  %v431 = vunpack.c.l.b16 %v91
  %v432 = vunpack.c.l.b16 %v92
  %v433 = vunpack.c.l.b16 %v93
  %v434 = vunpack.c.l.b16 %v94
  %v435 = vunpack.c.l.b16 %v95
  %v436 = vunpack.c.l.b16 %v96
  %v437 = vunpack.c.l.b16 %v97
  %v438 = vunpack.c.l.b16 %v98
  %v439 = vunpack.c.l.b16 %v99
  %v440 = vunpack.c.l.b16 %v100
  %v441 = vunpack.c.l.b16 %v101
  %v442 = vunpack.c.l.b16 %v102
  %v443 = vunpack.c.l.b16 %v103
  %v444 = vunpack.c.l.b16 %v104
  %v445 = vunpack.c.l.b16 %v105
  %v446 = vunpack.c.l.b16 %v106
  %v447 = vunpack.c.l.b16 %v107
  %v448 = vunpack.c.l.b16 %v108
  %v449 = vunpack.c.l.b16 %v109
  %v450 = vunpack.c.l.b16 %v110
  %v451 = vunpack.c.l.b16 %v111
  %v452 = vunpack.c.l.b16 %v112
  %v453 = vunpack.c.l.b16 %v113
  %v454 = vunpack.c.l.b16 %v114
  %v455 = vunpack.c.l.b16 %v115
  %v456 = vunpack.c.l.b16 %v116
  %v457 = vunpack.c.l.b16 %v117
  %v458 = vunpack.c.l.b16 %v118
  %v459 = vunpack.c.l.b16 %v119
  %v460 = vunpack.c.l.b16 %v120
  %v461 = vunpack.c.l.b16 %v121
  %v462 = vunpack.c.l.b16 %v122
  %v463 = vunpack.c.l.b16 %v123
  %v464 = vunpack.c.l.b16 %v124
  %v465 = vunpack.c.l.b16 %v125
  %v466 = vunpack.c.l.b16 %v126
  %v467 = vunpack.c.l.b16 %v127
  %v468 = vunpack.c.l.b16 %v128
  %v469 = vunpack.c.l.b16 %v129
  %v470 = vunpack.c.l.b16 %v130
  %v471 = vunpack.c.l.b16 %v131
  %v472 = vunpack.c.l.b16 %v132
  %v473 = vunpack.c.l.b16 %v133
  %v474 = vunpack.c.l.b16 %v134
  %v475 = vunpack.c.l.b16 %v135
  %v476 = vunpack.c.l.b16 %v136
  %v477 = vunpack.c.l.b16 %v137
  %v478 = vunpack.c.l.b16 %v138
  %v479 = vunpack.c.l.b16 %v139
  %v480 = vunpack.c.l.b16 %v140
  %v481 = vunpack.c.l.b16 %v141
  %v482 = vunpack.c.l.b16 %v142
  %v483 = vunpack.c.l.b16 %v143
  %v484 = vunpack.c.l.b16 %v144
  %v485 = vunpack.c.l.b16 %v145
  %v486 = vunpack.c.l.b16 %v146
  %v487 = vunpack.c.l.b16 %v147
  %v488 = vunpack.c.l.b16 %v148
  %v489 = vunpack.c.l.b16 %v149
  %v490 = vunpack.c.l.b16 %v150
  %v491 = vunpack.c.l.b16 %v151
  %v492 = vunpack.c.l.b16 %v152
  %v493 = vunpack.c.l.b16 %v153
  %v494 = vunpack.c.l.b16 %v154
  %v495 = vunpack.c.l.b16 %v155
  %v496 = vunpack.c.l.b16 %v156
  %v497 = vunpack.c.l.b16 %v157
  %v498 = vpack.c.b16 %v371, %v370
  %v499 = vpack.c.b16 %v373, %v372
  %v500 = vpack.c.b16 %v375, %v374
  %v501 = vpack.c.b16 %v377, %v376
  %v502 = vpack.c.b16 %v379, %v378
  %v503 = vpack.c.b16 %v381, %v380
  %v504 = vpack.c.b16 %v383, %v382
  %v505 = vpack.c.b16 %v385, %v384
  %v506 = vpack.c.b16 %v387, %v386
  %v507 = vpack.c.b16 %v389, %v388
  %v508 = vpack.c.b16 %v391, %v390
  %v509 = vpack.c.b16 %v393, %v392
  %v510 = vpack.c.b16 %v395, %v394
  %v511 = vpack.c.b16 %v397, %v396
  %v512 = vpack.c.b16 %v399, %v398
  %v513 = vpack.c.b16 %v401, %v400
  %v514 = vpack.c.b16 %v403, %v402
  %v515 = vpack.c.b16 %v405, %v404
  %v516 = vpack.c.b16 %v407, %v406
  %v517 = vpack.c.b16 %v409, %v408
  %v518 = vpack.c.b16 %v411, %v410
  %v519 = vpack.c.b16 %v413, %v412
  %v520 = vpack.c.b16 %v415, %v414
  %v521 = vpack.c.b16 %v417, %v416
  %v522 = vpack.c.b16 %v419, %v418
  %v523 = vpack.c.b16 %v421, %v420
  %v524 = vpack.c.b16 %v423, %v422
  %v525 = vpack.c.b16 %v425, %v424
  %v526 = vpack.c.b16 %v427, %v426
  %v527 = vpack.c.b16 %v429, %v428
  %v528 = vpack.c.b16 %v431, %v430
  %v529 = vpack.c.b16 %v433, %v432
  %v530 = vpack.c.b16 %v435, %v434
  %v531 = vpack.c.b16 %v437, %v436
  %v532 = vpack.c.b16 %v439, %v438
  %v533 = vpack.c.b16 %v441, %v440
  %v534 = vpack.c.b16 %v443, %v442
  %v535 = vpack.c.b16 %v445, %v444
  %v536 = vpack.c.b16 %v447, %v446
  %v537 = vpack.c.b16 %v449, %v448
  %v538 = vpack.c.b16 %v451, %v450
  %v539 = vpack.c.b16 %v453, %v452
  %v540 = vpack.c.b16 %v455, %v454
  %v541 = vpack.c.b16 %v457, %v456
  %v542 = vpack.c.b16 %v459, %v458
  %v543 = vpack.c.b16 %v461, %v460
  %v544 = vpack.c.b16 %v463, %v462
  %v545 = vpack.c.b16 %v465, %v464
  %v546 = vpack.c.b16 %v467, %v466
  %v547 = vpack.c.b16 %v469, %v468
  %v548 = vpack.c.b16 %v471, %v470
  %v549 = vpack.c.b16 %v473, %v472
  %v550 = vpack.c.b16 %v475, %v474
  %v551 = vpack.c.b16 %v477, %v476
  %v552 = vpack.c.b16 %v479, %v478
  %v553 = vpack.c.b16 %v481, %v480
  %v554 = vpack.c.b16 %v483, %v482
  %v555 = vpack.c.b16 %v485, %v484
  %v556 = vpack.c.b16 %v487, %v486
  %v557 = vpack.c.b16 %v489, %v488
  %v558 = vpack.c.b16 %v491, %v490
  %v559 = vpack.c.b16 %v493, %v492
  %v560 = vpack.c.b16 %v495, %v494
  %v561 = vpack.c.b16 %v497, %v496
  %626 = vmatpush.bf16.msra.mxu0 %v505
  %627 = vmatpush.bf16.msra.mxu0 %v504
  %628 = vmatpush.bf16.msra.mxu0 %v503
  %629 = vmatpush.bf16.msra.mxu0 %v502
  %630 = vmatpush.bf16.msra.mxu0 %v501
  %631 = vmatpush.bf16.msra.mxu0 %v500
  %632 = vmatpush.bf16.msra.mxu0 %v499
  %633 = vmatpush.bf16.msra.mxu0 %v498
  %634 = vmatmul.bf16.gmra.mxu0 %v210
  %v635 = vpop.f32.mrf.mxu0
  %v636 = vadd.f32 %v160, %v635
  %v637 = vpop.f32.mrf.mxu0
  %v638 = vadd.f32 %v160, %v637
  %639 = vmatmul.bf16.gmra.mxu0 %v218
  %v640 = vpop.f32.mrf.mxu0
  %v641 = vadd.f32 %v160, %v640
  %v642 = vpop.f32.mrf.mxu0
  %v643 = vadd.f32 %v160, %v642
  %644 = vdwg.mxu0
  %645 = vmatpush.bf16.msra.mxu0 %v513
  %646 = vmatpush.bf16.msra.mxu0 %v512
  %647 = vmatpush.bf16.msra.mxu0 %v511
  %648 = vmatpush.bf16.msra.mxu0 %v510
  %649 = vmatpush.bf16.msra.mxu0 %v509
  %650 = vmatpush.bf16.msra.mxu0 %v508
  %651 = vmatpush.bf16.msra.mxu0 %v507
  %652 = vmatpush.bf16.msra.mxu0 %v506
  %653 = vmatmul.bf16.gmra.mxu0 %v211
  %v654 = vpop.f32.mrf.mxu0
  %v655 = vadd.f32 %v636, %v654
  %v656 = vpop.f32.mrf.mxu0
  %v657 = vadd.f32 %v638, %v656
  %658 = vmatmul.bf16.gmra.mxu0 %v219
  %v659 = vpop.f32.mrf.mxu0
  %v660 = vadd.f32 %v641, %v659
  %v661 = vpop.f32.mrf.mxu0
  %v662 = vadd.f32 %v643, %v661
  %663 = vdwg.mxu0
  %664 = vmatpush.bf16.msra.mxu0 %v521
  %665 = vmatpush.bf16.msra.mxu0 %v520
  %666 = vmatpush.bf16.msra.mxu0 %v519
  %667 = vmatpush.bf16.msra.mxu0 %v518
  %668 = vmatpush.bf16.msra.mxu0 %v517
  %669 = vmatpush.bf16.msra.mxu0 %v516
  %670 = vmatpush.bf16.msra.mxu0 %v515
  %671 = vmatpush.bf16.msra.mxu0 %v514
  %672 = vmatmul.bf16.gmra.mxu0 %v212
  %v673 = vpop.f32.mrf.mxu0
  %v674 = vadd.f32 %v655, %v673
  %v675 = vpop.f32.mrf.mxu0
  %v676 = vadd.f32 %v657, %v675
  %677 = vmatmul.bf16.gmra.mxu0 %v220
  %v678 = vpop.f32.mrf.mxu0
  %v679 = vadd.f32 %v660, %v678
  %v680 = vpop.f32.mrf.mxu0
  %v681 = vadd.f32 %v662, %v680
  %682 = vdwg.mxu0
  %683 = vmatpush.bf16.msra.mxu0 %v529
  %684 = vmatpush.bf16.msra.mxu0 %v528
  %685 = vmatpush.bf16.msra.mxu0 %v527
  %686 = vmatpush.bf16.msra.mxu0 %v526
  %687 = vmatpush.bf16.msra.mxu0 %v525
  %688 = vmatpush.bf16.msra.mxu0 %v524
  %689 = vmatpush.bf16.msra.mxu0 %v523
  %690 = vmatpush.bf16.msra.mxu0 %v522
  %691 = vmatmul.bf16.gmra.mxu0 %v213
  %v692 = vpop.f32.mrf.mxu0
  %v693 = vadd.f32 %v674, %v692
  %v694 = vpop.f32.mrf.mxu0
  %v695 = vadd.f32 %v676, %v694
  %696 = vmatmul.bf16.gmra.mxu0 %v221
  %v697 = vpop.f32.mrf.mxu0
  %v698 = vadd.f32 %v679, %v697
  %v699 = vpop.f32.mrf.mxu0
  %v700 = vadd.f32 %v681, %v699
  %701 = vdwg.mxu0
  %702 = vmatpush.bf16.msra.mxu0 %v537
  %703 = vmatpush.bf16.msra.mxu0 %v536
  %704 = vmatpush.bf16.msra.mxu0 %v535
  %705 = vmatpush.bf16.msra.mxu0 %v534
  %706 = vmatpush.bf16.msra.mxu0 %v533
  %707 = vmatpush.bf16.msra.mxu0 %v532
  %708 = vmatpush.bf16.msra.mxu0 %v531
  %709 = vmatpush.bf16.msra.mxu0 %v530
  %710 = vmatmul.bf16.gmra.mxu0 %v214
  %v711 = vpop.f32.mrf.mxu0
  %v712 = vadd.f32 %v693, %v711
  %v713 = vpop.f32.mrf.mxu0
  %v714 = vadd.f32 %v695, %v713
  %715 = vmatmul.bf16.gmra.mxu0 %v222
  %v716 = vpop.f32.mrf.mxu0
  %v717 = vadd.f32 %v698, %v716
  %v718 = vpop.f32.mrf.mxu0
  %v719 = vadd.f32 %v700, %v718
  %720 = vdwg.mxu0
  %721 = vmatpush.bf16.msra.mxu0 %v545
  %722 = vmatpush.bf16.msra.mxu0 %v544
  %723 = vmatpush.bf16.msra.mxu0 %v543
  %724 = vmatpush.bf16.msra.mxu0 %v542
  %725 = vmatpush.bf16.msra.mxu0 %v541
  %726 = vmatpush.bf16.msra.mxu0 %v540
  %727 = vmatpush.bf16.msra.mxu0 %v539
  %728 = vmatpush.bf16.msra.mxu0 %v538
  %729 = vmatmul.bf16.gmra.mxu0 %v215
  %v730 = vpop.f32.mrf.mxu0
  %v731 = vadd.f32 %v712, %v730
  %v732 = vpop.f32.mrf.mxu0
  %v733 = vadd.f32 %v714, %v732
  %734 = vmatmul.bf16.gmra.mxu0 %v223
  %v735 = vpop.f32.mrf.mxu0
  %v736 = vadd.f32 %v717, %v735
  %v737 = vpop.f32.mrf.mxu0
  %v738 = vadd.f32 %v719, %v737
  %739 = vdwg.mxu0
  %740 = vmatpush.bf16.msra.mxu0 %v553
  %741 = vmatpush.bf16.msra.mxu0 %v552
  %742 = vmatpush.bf16.msra.mxu0 %v551
  %743 = vmatpush.bf16.msra.mxu0 %v550
  %744 = vmatpush.bf16.msra.mxu0 %v549
  %745 = vmatpush.bf16.msra.mxu0 %v548
  %746 = vmatpush.bf16.msra.mxu0 %v547
  %747 = vmatpush.bf16.msra.mxu0 %v546
  %748 = vmatmul.bf16.gmra.mxu0 %v216
  %v749 = vpop.f32.mrf.mxu0
  %v750 = vadd.f32 %v731, %v749
  %v751 = vpop.f32.mrf.mxu0
  %v752 = vadd.f32 %v733, %v751
  %753 = vmatmul.bf16.gmra.mxu0 %v224
  %v754 = vpop.f32.mrf.mxu0
  %v755 = vadd.f32 %v736, %v754
  %v756 = vpop.f32.mrf.mxu0
  %v757 = vadd.f32 %v738, %v756
  %758 = vdwg.mxu0
  %759 = vmatpush.bf16.msra.mxu0 %v561
  %760 = vmatpush.bf16.msra.mxu0 %v560
  %761 = vmatpush.bf16.msra.mxu0 %v559
  %762 = vmatpush.bf16.msra.mxu0 %v558
  %763 = vmatpush.bf16.msra.mxu0 %v557
  %764 = vmatpush.bf16.msra.mxu0 %v556
  %765 = vmatpush.bf16.msra.mxu0 %v555
  %766 = vmatpush.bf16.msra.mxu0 %v554
  %767 = vmatmul.bf16.gmra.mxu0 %v217
  %v768 = vpop.f32.mrf.mxu0
  %v769 = vadd.f32 %v750, %v768
  %v770 = vpop.f32.mrf.mxu0
  %v771 = vadd.f32 %v752, %v770
  %772 = vmatmul.bf16.gmra.mxu0 %v225
  %v773 = vpop.f32.mrf.mxu0
  %v774 = vadd.f32 %v755, %v773
  %v775 = vpop.f32.mrf.mxu0
  %v776 = vadd.f32 %v757, %v775
  %777 = vdwg.mxu0
  %vm778 = vcmp.gt.f32.partialorder %v769, 0.0
  %vm779 = vcmp.gt.f32.partialorder %v771, 0.0
  %vm780 = vcmp.gt.f32.partialorder %v774, 0.0
  %vm781 = vcmp.gt.f32.partialorder %v776, 0.0
  %v782 = vmul.f32 %v769, 0.2
  %v783 = vmul.f32 %v771, 0.2
  %v784 = vmul.f32 %v774, 0.2
  %v785 = vmul.f32 %v776, 0.2
  %v786 = vsel %vm778, %v769, %v782
  %v787 = vsel %vm779, %v771, %v783
  %v788 = vsel %vm780, %v774, %v784
  %v789 = vsel %vm781, %v776, %v785
  %v790 = vpack.c.bf16 %v786, %v786
  %v791 = vpack.c.bf16 %v787, %v787
  %v792 = vpack.c.bf16 %v788, %v788
  %v793 = vpack.c.bf16 %v789, %v789
  %794 = vst [vmem:[%s3] sm:$0xf] %v790
  %795 = vst [vmem:[%s3 + $0x4] sm:$0xf] %v791
  %796 = vst [vmem:[%s3 + $0x8] sm:$0xf] %v792
  %797 = vst [vmem:[%s3 + $0xc] sm:$0xf] %v793
  // Predicated region
  $region14: #{ae_forward.13} parent=0 // pred_check
    _
  $region15: #{ae_forward.13} parent=0 // pred_check_branch
    %799 = sbr.rel (0) target = $region17
  $region16: #{ae_forward.13} parent=0 // pred_region
    _
  $region17: #{ae_forward.13} parent=0 // pred_fallthru
    _
  // Predicated region
  $region18: #{ae_forward.13} parent=0 // pred_check
    _
  $region19: #{ae_forward.13} parent=0 // pred_check_branch
    %801 = sbr.rel (0) target = $region21
  $region20: #{ae_forward.13} parent=0 // pred_region
    _
  $region21: #{ae_forward.13} parent=0 // pred_fallthru
    _

// kernel: ae_forward.14
$region0: #{ae_forward.14}
  #allocation0 [shape = 'u32[]', space=smem, size = 0x4, offset = 0x4, fixed_abs, tag = 'smem constant byte address 0x4 - core index']
  #allocation1 [shape = 'u32[72,128]{1,0:T(1,128)}', space=vmem, size = 0x9000, scoped, tag = 'internal scratch']
  %s0 = inlined_call_operand.vmem [shape: bf16[16,1152], index: 0, kind: input, shape index: {}]
  %s1 = inlined_call_operand.vmem [shape: bf16[1152,256], index: 1, kind: input, shape index: {}]
  %s2 = inlined_call_operand.vmem [shape: f32[1,256], index: 2, kind: input, shape index: {}]
  %s3 = inlined_call_operand.vmem [shape: bf16[16,256], index: 3, kind: output, shape index: {}]
  %s4 = sld [smem:[#allocation0]]
  $region22: #{ae_forward.14} parent=0
    _
  %s6 = ssub.s32 1, %s4
  %s7 = scalar_select 0, %s6, %s4
  // Predicated region
  $region2: #{ae_forward.14} parent=0 // pred_check
    _
  $region3: #{ae_forward.14} parent=0 // pred_check_branch
    %9 = sbr.rel (0) target = $region5
  $region4: #{ae_forward.14} parent=0 // pred_region
    _
  $region5: #{ae_forward.14} parent=0 // pred_fallthru
    _
  // Predicated region
  $region6: #{ae_forward.14} parent=0 // pred_check
    _
  $region7: #{ae_forward.14} parent=0 // pred_check_branch
    %11 = sbr.rel (0) target = $region9
  $region8: #{ae_forward.14} parent=0 // pred_region
    _
  $region9: #{ae_forward.14} parent=0 // pred_fallthru
    _
  // Predicated region
  $region10: #{ae_forward.14} parent=0 // pred_check
    _
  $region11: #{ae_forward.14} parent=0 // pred_check_branch
    %13 = sbr.rel (0) target = $region13
  $region12: #{ae_forward.14} parent=0 // pred_region
    _
  $region13: #{ae_forward.14} parent=0 // pred_fallthru
    _
  %v14 = vld [vmem:[%s0] sm:$0xff]
  %v15 = vld [vmem:[%s0 + $0x8] sm:$0xff]
  %v16 = vld [vmem:[%s0 + $0x10] sm:$0xff]
  %v17 = vld [vmem:[%s0 + $0x18] sm:$0xff]
  %v18 = vld [vmem:[%s0 + $0x20] sm:$0xf]
  %v19 = vld [vmem:[%s0 + $0x24] sm:$0xff]
  %v20 = vld [vmem:[%s0 + $0x2c] sm:$0xff]
  %v21 = vld [vmem:[%s0 + $0x34] sm:$0xff]
  %v22 = vld [vmem:[%s0 + $0x3c] sm:$0xff]
  %v23 = vld [vmem:[%s0 + $0x44] sm:$0xf]
  %v24 = vld [vmem:[%s1] sm:$0xff]
  %v25 = vld [vmem:[%s1 + $0x8] sm:$0xff]
  %v26 = vld [vmem:[%s1 + $0x10] sm:$0xff]
  %v27 = vld [vmem:[%s1 + $0x18] sm:$0xff]
  %v28 = vld [vmem:[%s1 + $0x20] sm:$0xff]
  %v29 = vld [vmem:[%s1 + $0x28] sm:$0xff]
  %v30 = vld [vmem:[%s1 + $0x30] sm:$0xff]
  %v31 = vld [vmem:[%s1 + $0x38] sm:$0xff]
  %v32 = vld [vmem:[%s1 + $0x40] sm:$0xff]
  %v33 = vld [vmem:[%s1 + $0x48] sm:$0xff]
  %v34 = vld [vmem:[%s1 + $0x50] sm:$0xff]
  %v35 = vld [vmem:[%s1 + $0x58] sm:$0xff]
  %v36 = vld [vmem:[%s1 + $0x60] sm:$0xff]
  %v37 = vld [vmem:[%s1 + $0x68] sm:$0xff]
  %v38 = vld [vmem:[%s1 + $0x70] sm:$0xff]
  %v39 = vld [vmem:[%s1 + $0x78] sm:$0xff]
  %v40 = vld [vmem:[%s1 + $0x80] sm:$0xff]
  %v41 = vld [vmem:[%s1 + $0x88] sm:$0xff]
  %v42 = vld [vmem:[%s1 + $0x90] sm:$0xff]
  %v43 = vld [vmem:[%s1 + $0x98] sm:$0xff]
  %v44 = vld [vmem:[%s1 + $0xa0] sm:$0xff]
  %v45 = vld [vmem:[%s1 + $0xa8] sm:$0xff]
  %v46 = vld [vmem:[%s1 + $0xb0] sm:$0xff]
  %v47 = vld [vmem:[%s1 + $0xb8] sm:$0xff]
  %v48 = vld [vmem:[%s1 + $0xc0] sm:$0xff]
  %v49 = vld [vmem:[%s1 + $0xc8] sm:$0xff]
  %v50 = vld [vmem:[%s1 + $0xd0] sm:$0xff]
  %v51 = vld [vmem:[%s1 + $0xd8] sm:$0xff]
  %v52 = vld [vmem:[%s1 + $0xe0] sm:$0xff]
  %v53 = vld [vmem:[%s1 + $0xe8] sm:$0xff]
  %v54 = vld [vmem:[%s1 + $0xf0] sm:$0xff]
  %v55 = vld [vmem:[%s1 + $0xf8] sm:$0xff]
  %v56 = vld [vmem:[%s1 + $0x100] sm:$0xff]
  %v57 = vld [vmem:[%s1 + $0x108] sm:$0xff]
  %v58 = vld [vmem:[%s1 + $0x110] sm:$0xff]
  %v59 = vld [vmem:[%s1 + $0x118] sm:$0xff]
  %v60 = vld [vmem:[%s1 + $0x120] sm:$0xff]
  %v61 = vld [vmem:[%s1 + $0x128] sm:$0xff]
  %v62 = vld [vmem:[%s1 + $0x130] sm:$0xff]
  %v63 = vld [vmem:[%s1 + $0x138] sm:$0xff]
  %v64 = vld [vmem:[%s1 + $0x140] sm:$0xff]
  %v65 = vld [vmem:[%s1 + $0x148] sm:$0xff]
  %v66 = vld [vmem:[%s1 + $0x150] sm:$0xff]
  %v67 = vld [vmem:[%s1 + $0x158] sm:$0xff]
  %v68 = vld [vmem:[%s1 + $0x160] sm:$0xff]
  %v69 = vld [vmem:[%s1 + $0x168] sm:$0xff]
  %v70 = vld [vmem:[%s1 + $0x170] sm:$0xff]
  %v71 = vld [vmem:[%s1 + $0x178] sm:$0xff]
  %v72 = vld [vmem:[%s1 + $0x180] sm:$0xff]
  %v73 = vld [vmem:[%s1 + $0x188] sm:$0xff]
  %v74 = vld [vmem:[%s1 + $0x190] sm:$0xff]
  %v75 = vld [vmem:[%s1 + $0x198] sm:$0xff]
  %v76 = vld [vmem:[%s1 + $0x1a0] sm:$0xff]
  %v77 = vld [vmem:[%s1 + $0x1a8] sm:$0xff]
  %v78 = vld [vmem:[%s1 + $0x1b0] sm:$0xff]
  %v79 = vld [vmem:[%s1 + $0x1b8] sm:$0xff]
  %v80 = vld [vmem:[%s1 + $0x1c0] sm:$0xff]
  %v81 = vld [vmem:[%s1 + $0x1c8] sm:$0xff]
  %v82 = vld [vmem:[%s1 + $0x1d0] sm:$0xff]
  %v83 = vld [vmem:[%s1 + $0x1d8] sm:$0xff]
  %v84 = vld [vmem:[%s1 + $0x1e0] sm:$0xff]
  %v85 = vld [vmem:[%s1 + $0x1e8] sm:$0xff]
  %v86 = vld [vmem:[%s1 + $0x1f0] sm:$0xff]
  %v87 = vld [vmem:[%s1 + $0x1f8] sm:$0xff]
  %v88 = vld [vmem:[%s1 + $0x200] sm:$0xff]
  %v89 = vld [vmem:[%s1 + $0x208] sm:$0xff]
  %v90 = vld [vmem:[%s1 + $0x210] sm:$0xff]
  %v91 = vld [vmem:[%s1 + $0x218] sm:$0xff]
  %v92 = vld [vmem:[%s1 + $0x220] sm:$0xff]
  %v93 = vld [vmem:[%s1 + $0x228] sm:$0xff]
  %v94 = vld [vmem:[%s1 + $0x230] sm:$0xff]
  %v95 = vld [vmem:[%s1 + $0x238] sm:$0xff]
  %v96 = vld [vmem:[%s1 + $0x240] sm:$0xff]
  %v97 = vld [vmem:[%s1 + $0x248] sm:$0xff]
  %v98 = vld [vmem:[%s1 + $0x250] sm:$0xff]
  %v99 = vld [vmem:[%s1 + $0x258] sm:$0xff]
  %v100 = vld [vmem:[%s1 + $0x260] sm:$0xff]
  %v101 = vld [vmem:[%s1 + $0x268] sm:$0xff]
  %v102 = vld [vmem:[%s1 + $0x270] sm:$0xff]
  %v103 = vld [vmem:[%s1 + $0x278] sm:$0xff]
  %v104 = vld [vmem:[%s1 + $0x280] sm:$0xff]
  %v105 = vld [vmem:[%s1 + $0x288] sm:$0xff]
  %v106 = vld [vmem:[%s1 + $0x290] sm:$0xff]
  %v107 = vld [vmem:[%s1 + $0x298] sm:$0xff]
  %v108 = vld [vmem:[%s1 + $0x2a0] sm:$0xff]
  %v109 = vld [vmem:[%s1 + $0x2a8] sm:$0xff]
  %v110 = vld [vmem:[%s1 + $0x2b0] sm:$0xff]
  %v111 = vld [vmem:[%s1 + $0x2b8] sm:$0xff]
  %v112 = vld [vmem:[%s1 + $0x2c0] sm:$0xff]
  %v113 = vld [vmem:[%s1 + $0x2c8] sm:$0xff]
  %v114 = vld [vmem:[%s1 + $0x2d0] sm:$0xff]
  %v115 = vld [vmem:[%s1 + $0x2d8] sm:$0xff]
  %v116 = vld [vmem:[%s1 + $0x2e0] sm:$0xff]
  %v117 = vld [vmem:[%s1 + $0x2e8] sm:$0xff]
  %v118 = vld [vmem:[%s1 + $0x2f0] sm:$0xff]
  %v119 = vld [vmem:[%s1 + $0x2f8] sm:$0xff]
  %v120 = vld [vmem:[%s1 + $0x300] sm:$0xff]
  %v121 = vld [vmem:[%s1 + $0x308] sm:$0xff]
  %v122 = vld [vmem:[%s1 + $0x310] sm:$0xff]
  %v123 = vld [vmem:[%s1 + $0x318] sm:$0xff]
  %v124 = vld [vmem:[%s1 + $0x320] sm:$0xff]
  %v125 = vld [vmem:[%s1 + $0x328] sm:$0xff]
  %v126 = vld [vmem:[%s1 + $0x330] sm:$0xff]
  %v127 = vld [vmem:[%s1 + $0x338] sm:$0xff]
  %v128 = vld [vmem:[%s1 + $0x340] sm:$0xff]
  %v129 = vld [vmem:[%s1 + $0x348] sm:$0xff]
  %v130 = vld [vmem:[%s1 + $0x350] sm:$0xff]
  %v131 = vld [vmem:[%s1 + $0x358] sm:$0xff]
  %v132 = vld [vmem:[%s1 + $0x360] sm:$0xff]
  %v133 = vld [vmem:[%s1 + $0x368] sm:$0xff]
  %v134 = vld [vmem:[%s1 + $0x370] sm:$0xff]
  %v135 = vld [vmem:[%s1 + $0x378] sm:$0xff]
  %v136 = vld [vmem:[%s1 + $0x380] sm:$0xff]
  %v137 = vld [vmem:[%s1 + $0x388] sm:$0xff]
  %v138 = vld [vmem:[%s1 + $0x390] sm:$0xff]
  %v139 = vld [vmem:[%s1 + $0x398] sm:$0xff]
  %v140 = vld [vmem:[%s1 + $0x3a0] sm:$0xff]
  %v141 = vld [vmem:[%s1 + $0x3a8] sm:$0xff]
  %v142 = vld [vmem:[%s1 + $0x3b0] sm:$0xff]
  %v143 = vld [vmem:[%s1 + $0x3b8] sm:$0xff]
  %v144 = vld [vmem:[%s1 + $0x3c0] sm:$0xff]
  %v145 = vld [vmem:[%s1 + $0x3c8] sm:$0xff]
  %v146 = vld [vmem:[%s1 + $0x3d0] sm:$0xff]
  %v147 = vld [vmem:[%s1 + $0x3d8] sm:$0xff]
  %v148 = vld [vmem:[%s1 + $0x3e0] sm:$0xff]
  %v149 = vld [vmem:[%s1 + $0x3e8] sm:$0xff]
  %v150 = vld [vmem:[%s1 + $0x3f0] sm:$0xff]
  %v151 = vld [vmem:[%s1 + $0x3f8] sm:$0xff]
  %v152 = vld [vmem:[%s1 + $0x400] sm:$0xff]
  %v153 = vld [vmem:[%s1 + $0x408] sm:$0xff]
  %v154 = vld [vmem:[%s1 + $0x410] sm:$0xff]
  %v155 = vld [vmem:[%s1 + $0x418] sm:$0xff]
  %v156 = vld [vmem:[%s1 + $0x420] sm:$0xff]
  %v157 = vld [vmem:[%s1 + $0x428] sm:$0xff]
  %v158 = vld [vmem:[%s1 + $0x430] sm:$0xff]
  %v159 = vld [vmem:[%s1 + $0x438] sm:$0xff]
  %v160 = vld [vmem:[%s1 + $0x440] sm:$0xff]
  %v161 = vld [vmem:[%s1 + $0x448] sm:$0xff]
  %v162 = vld [vmem:[%s1 + $0x450] sm:$0xff]
  %v163 = vld [vmem:[%s1 + $0x458] sm:$0xff]
  %v164 = vld [vmem:[%s1 + $0x460] sm:$0xff]
  %v165 = vld [vmem:[%s1 + $0x468] sm:$0xff]
  %v166 = vld [vmem:[%s1 + $0x470] sm:$0xff]
  %v167 = vld [vmem:[%s1 + $0x478] sm:$0xff]
  %v168 = vld [vmem:[%s2] sm:$0x3]
  %v170 = vperm.slane %v168, 0
  %v171 = vperm.slane %v168, 1
  %v184 = vunpack.c.l.b16 %v14
  %v185 = vunpack.c.h.b16 %v14
  %v186 = vunpack.c.l.b16 %v15
  %v187 = vunpack.c.h.b16 %v15
  %v188 = vunpack.c.l.b16 %v16
  %v189 = vunpack.c.h.b16 %v16
  %v190 = vunpack.c.l.b16 %v17
  %v191 = vunpack.c.h.b16 %v17
  %v192 = vunpack.c.l.b16 %v18
  %v193 = vunpack.c.l.b16 %v19
  %v194 = vunpack.c.h.b16 %v19
  %v195 = vunpack.c.l.b16 %v20
  %v196 = vunpack.c.h.b16 %v20
  %v197 = vunpack.c.l.b16 %v21
  %v198 = vunpack.c.h.b16 %v21
  %v199 = vunpack.c.l.b16 %v22
  %v200 = vunpack.c.h.b16 %v22
  %v201 = vunpack.c.l.b16 %v23
  %v202 = vpack.c.b16 %v193, %v184
  %v203 = vpack.c.b16 %v194, %v185
  %v204 = vpack.c.b16 %v195, %v186
  %v205 = vpack.c.b16 %v196, %v187
  %v206 = vpack.c.b16 %v197, %v188
  %v207 = vpack.c.b16 %v198, %v189
  %v208 = vpack.c.b16 %v199, %v190
  %v209 = vpack.c.b16 %v200, %v191
  %v210 = vpack.c.b16 %v201, %v192
  %v364 = vunpack.c.l.b16 %v24
  %v365 = vunpack.c.h.b16 %v24
  %v366 = vunpack.c.l.b16 %v25
  %v367 = vunpack.c.h.b16 %v25
  %v368 = vunpack.c.l.b16 %v26
  %v369 = vunpack.c.h.b16 %v26
  %v370 = vunpack.c.l.b16 %v27
  %v371 = vunpack.c.h.b16 %v27
  %v372 = vunpack.c.l.b16 %v28
  %v373 = vunpack.c.h.b16 %v28
  %v374 = vunpack.c.l.b16 %v29
  %v375 = vunpack.c.h.b16 %v29
  %v376 = vunpack.c.l.b16 %v30
  %v377 = vunpack.c.h.b16 %v30
  %v378 = vunpack.c.l.b16 %v31
  %v379 = vunpack.c.h.b16 %v31
  %v380 = vunpack.c.l.b16 %v32
  %v381 = vunpack.c.h.b16 %v32
  %v382 = vunpack.c.l.b16 %v33
  %v383 = vunpack.c.h.b16 %v33
  %v384 = vunpack.c.l.b16 %v34
  %v385 = vunpack.c.h.b16 %v34
  %v386 = vunpack.c.l.b16 %v35
  %v387 = vunpack.c.h.b16 %v35
  %v388 = vunpack.c.l.b16 %v36
  %v389 = vunpack.c.h.b16 %v36
  %v390 = vunpack.c.l.b16 %v37
  %v391 = vunpack.c.h.b16 %v37
  %v392 = vunpack.c.l.b16 %v38
  %v393 = vunpack.c.h.b16 %v38
  %v394 = vunpack.c.l.b16 %v39
  %v395 = vunpack.c.h.b16 %v39
  %v396 = vunpack.c.l.b16 %v40
  %v397 = vunpack.c.h.b16 %v40
  %v398 = vunpack.c.l.b16 %v41
  %v399 = vunpack.c.h.b16 %v41
  %v400 = vunpack.c.l.b16 %v42
  %v401 = vunpack.c.h.b16 %v42
  %v402 = vunpack.c.l.b16 %v43
  %v403 = vunpack.c.h.b16 %v43
  %v404 = vunpack.c.l.b16 %v44
  %v405 = vunpack.c.h.b16 %v44
  %v406 = vunpack.c.l.b16 %v45
  %v407 = vunpack.c.h.b16 %v45
  %v408 = vunpack.c.l.b16 %v46
  %v409 = vunpack.c.h.b16 %v46
  %v410 = vunpack.c.l.b16 %v47
  %v411 = vunpack.c.h.b16 %v47
  %v412 = vunpack.c.l.b16 %v48
  %v413 = vunpack.c.h.b16 %v48
  %v414 = vunpack.c.l.b16 %v49
  %v415 = vunpack.c.h.b16 %v49
  %v416 = vunpack.c.l.b16 %v50
  %v417 = vunpack.c.h.b16 %v50
  %v418 = vunpack.c.l.b16 %v51
  %v419 = vunpack.c.h.b16 %v51
  %v420 = vunpack.c.l.b16 %v52
  %v421 = vunpack.c.h.b16 %v52
  %v422 = vunpack.c.l.b16 %v53
  %v423 = vunpack.c.h.b16 %v53
  %v424 = vunpack.c.l.b16 %v54
  %v425 = vunpack.c.h.b16 %v54
  %v426 = vunpack.c.l.b16 %v55
  %v427 = vunpack.c.h.b16 %v55
  %v428 = vunpack.c.l.b16 %v56
  %v429 = vunpack.c.h.b16 %v56
  %v430 = vunpack.c.l.b16 %v57
  %v431 = vunpack.c.h.b16 %v57
  %v432 = vunpack.c.l.b16 %v58
  %v433 = vunpack.c.h.b16 %v58
  %v434 = vunpack.c.l.b16 %v59
  %v435 = vunpack.c.h.b16 %v59
  %v436 = vunpack.c.l.b16 %v60
  %v437 = vunpack.c.h.b16 %v60
  %v438 = vunpack.c.l.b16 %v61
  %v439 = vunpack.c.h.b16 %v61
  %v440 = vunpack.c.l.b16 %v62
  %v441 = vunpack.c.h.b16 %v62
  %v442 = vunpack.c.l.b16 %v63
  %v443 = vunpack.c.h.b16 %v63
  %v444 = vunpack.c.l.b16 %v64
  %v445 = vunpack.c.h.b16 %v64
  %v446 = vunpack.c.l.b16 %v65
  %v447 = vunpack.c.h.b16 %v65
  %v448 = vunpack.c.l.b16 %v66
  %v449 = vunpack.c.h.b16 %v66
  %v450 = vunpack.c.l.b16 %v67
  %v451 = vunpack.c.h.b16 %v67
  %v452 = vunpack.c.l.b16 %v68
  %v453 = vunpack.c.h.b16 %v68
  %v454 = vunpack.c.l.b16 %v69
  %v455 = vunpack.c.h.b16 %v69
  %v456 = vunpack.c.l.b16 %v70
  %v457 = vunpack.c.h.b16 %v70
  %v458 = vunpack.c.l.b16 %v71
  %v459 = vunpack.c.h.b16 %v71
  %v460 = vunpack.c.l.b16 %v72
  %v461 = vunpack.c.h.b16 %v72
  %v462 = vunpack.c.l.b16 %v73
  %v463 = vunpack.c.h.b16 %v73
  %v464 = vunpack.c.l.b16 %v74
  %v465 = vunpack.c.h.b16 %v74
  %v466 = vunpack.c.l.b16 %v75
  %v467 = vunpack.c.h.b16 %v75
  %v468 = vunpack.c.l.b16 %v76
  %v469 = vunpack.c.h.b16 %v76
  %v470 = vunpack.c.l.b16 %v77
  %v471 = vunpack.c.h.b16 %v77
  %v472 = vunpack.c.l.b16 %v78
  %v473 = vunpack.c.h.b16 %v78
  %v474 = vunpack.c.l.b16 %v79
  %v475 = vunpack.c.h.b16 %v79
  %v476 = vunpack.c.l.b16 %v80
  %v477 = vunpack.c.h.b16 %v80
  %v478 = vunpack.c.l.b16 %v81
  %v479 = vunpack.c.h.b16 %v81
  %v480 = vunpack.c.l.b16 %v82
  %v481 = vunpack.c.h.b16 %v82
  %v482 = vunpack.c.l.b16 %v83
  %v483 = vunpack.c.h.b16 %v83
  %v484 = vunpack.c.l.b16 %v84
  %v485 = vunpack.c.h.b16 %v84
  %v486 = vunpack.c.l.b16 %v85
  %v487 = vunpack.c.h.b16 %v85
  %v488 = vunpack.c.l.b16 %v86
  %v489 = vunpack.c.h.b16 %v86
  %v490 = vunpack.c.l.b16 %v87
  %v491 = vunpack.c.h.b16 %v87
  %v492 = vunpack.c.l.b16 %v88
  %v493 = vunpack.c.h.b16 %v88
  %v494 = vunpack.c.l.b16 %v89
  %v495 = vunpack.c.h.b16 %v89
  %v496 = vunpack.c.l.b16 %v90
  %v497 = vunpack.c.h.b16 %v90
  %v498 = vunpack.c.l.b16 %v91
  %v499 = vunpack.c.h.b16 %v91
  %v500 = vunpack.c.l.b16 %v92
  %v501 = vunpack.c.h.b16 %v92
  %v502 = vunpack.c.l.b16 %v93
  %v503 = vunpack.c.h.b16 %v93
  %v504 = vunpack.c.l.b16 %v94
  %v505 = vunpack.c.h.b16 %v94
  %v506 = vunpack.c.l.b16 %v95
  %v507 = vunpack.c.h.b16 %v95
  %v508 = vunpack.c.l.b16 %v96
  %v509 = vunpack.c.h.b16 %v96
  %v510 = vunpack.c.l.b16 %v97
  %v511 = vunpack.c.h.b16 %v97
  %v512 = vunpack.c.l.b16 %v98
  %v513 = vunpack.c.h.b16 %v98
  %v514 = vunpack.c.l.b16 %v99
  %v515 = vunpack.c.h.b16 %v99
  %v516 = vunpack.c.l.b16 %v100
  %v517 = vunpack.c.h.b16 %v100
  %v518 = vunpack.c.l.b16 %v101
  %v519 = vunpack.c.h.b16 %v101
  %v520 = vunpack.c.l.b16 %v102
  %v521 = vunpack.c.h.b16 %v102
  %v522 = vunpack.c.l.b16 %v103
  %v523 = vunpack.c.h.b16 %v103
  %v524 = vunpack.c.l.b16 %v104
  %v525 = vunpack.c.h.b16 %v104
  %v526 = vunpack.c.l.b16 %v105
  %v527 = vunpack.c.h.b16 %v105
  %v528 = vunpack.c.l.b16 %v106
  %v529 = vunpack.c.h.b16 %v106
  %v530 = vunpack.c.l.b16 %v107
  %v531 = vunpack.c.h.b16 %v107
  %v532 = vunpack.c.l.b16 %v108
  %v533 = vunpack.c.h.b16 %v108
  %v534 = vunpack.c.l.b16 %v109
  %v535 = vunpack.c.h.b16 %v109
  %v536 = vunpack.c.l.b16 %v110
  %v537 = vunpack.c.h.b16 %v110
  %v538 = vunpack.c.l.b16 %v111
  %v539 = vunpack.c.h.b16 %v111
  %v540 = vunpack.c.l.b16 %v112
  %v541 = vunpack.c.h.b16 %v112
  %v542 = vunpack.c.l.b16 %v113
  %v543 = vunpack.c.h.b16 %v113
  %v544 = vunpack.c.l.b16 %v114
  %v545 = vunpack.c.h.b16 %v114
  %v546 = vunpack.c.l.b16 %v115
  %v547 = vunpack.c.h.b16 %v115
  %v548 = vunpack.c.l.b16 %v116
  %v549 = vunpack.c.h.b16 %v116
  %v550 = vunpack.c.l.b16 %v117
  %v551 = vunpack.c.h.b16 %v117
  %v552 = vunpack.c.l.b16 %v118
  %v553 = vunpack.c.h.b16 %v118
  %v554 = vunpack.c.l.b16 %v119
  %v555 = vunpack.c.h.b16 %v119
  %v556 = vunpack.c.l.b16 %v120
  %v557 = vunpack.c.h.b16 %v120
  %v558 = vunpack.c.l.b16 %v121
  %v559 = vunpack.c.h.b16 %v121
  %v560 = vunpack.c.l.b16 %v122
  %v561 = vunpack.c.h.b16 %v122
  %v562 = vunpack.c.l.b16 %v123
  %v563 = vunpack.c.h.b16 %v123
  %v564 = vunpack.c.l.b16 %v124
  %v565 = vunpack.c.h.b16 %v124
  %v566 = vunpack.c.l.b16 %v125
  %v567 = vunpack.c.h.b16 %v125
  %v568 = vunpack.c.l.b16 %v126
  %v569 = vunpack.c.h.b16 %v126
  %v570 = vunpack.c.l.b16 %v127
  %v571 = vunpack.c.h.b16 %v127
  %v572 = vunpack.c.l.b16 %v128
  %v573 = vunpack.c.h.b16 %v128
  %v574 = vunpack.c.l.b16 %v129
  %v575 = vunpack.c.h.b16 %v129
  %v576 = vunpack.c.l.b16 %v130
  %v577 = vunpack.c.h.b16 %v130
  %v578 = vunpack.c.l.b16 %v131
  %v579 = vunpack.c.h.b16 %v131
  %v580 = vunpack.c.l.b16 %v132
  %v581 = vunpack.c.h.b16 %v132
  %v582 = vunpack.c.l.b16 %v133
  %v583 = vunpack.c.h.b16 %v133
  %v584 = vunpack.c.l.b16 %v134
  %v585 = vunpack.c.h.b16 %v134
  %v586 = vunpack.c.l.b16 %v135
  %v587 = vunpack.c.h.b16 %v135
  %v588 = vunpack.c.l.b16 %v136
  %v589 = vunpack.c.h.b16 %v136
  %v590 = vunpack.c.l.b16 %v137
  %v591 = vunpack.c.h.b16 %v137
  %v592 = vunpack.c.l.b16 %v138
  %v593 = vunpack.c.h.b16 %v138
  %v594 = vunpack.c.l.b16 %v139
  %v595 = vunpack.c.h.b16 %v139
  %v596 = vunpack.c.l.b16 %v140
  %v597 = vunpack.c.h.b16 %v140
  %v598 = vunpack.c.l.b16 %v141
  %v599 = vunpack.c.h.b16 %v141
  %v600 = vunpack.c.l.b16 %v142
  %v601 = vunpack.c.h.b16 %v142
  %v602 = vunpack.c.l.b16 %v143
  %v603 = vunpack.c.h.b16 %v143
  %v604 = vunpack.c.l.b16 %v144
  %v605 = vunpack.c.h.b16 %v144
  %v606 = vunpack.c.l.b16 %v145
  %v607 = vunpack.c.h.b16 %v145
  %v608 = vunpack.c.l.b16 %v146
  %v609 = vunpack.c.h.b16 %v146
  %v610 = vunpack.c.l.b16 %v147
  %v611 = vunpack.c.h.b16 %v147
  %v612 = vunpack.c.l.b16 %v148
  %v613 = vunpack.c.h.b16 %v148
  %v614 = vunpack.c.l.b16 %v149
  %v615 = vunpack.c.h.b16 %v149
  %v616 = vunpack.c.l.b16 %v150
  %v617 = vunpack.c.h.b16 %v150
  %v618 = vunpack.c.l.b16 %v151
  %v619 = vunpack.c.h.b16 %v151
  %v620 = vunpack.c.l.b16 %v152
  %v621 = vunpack.c.h.b16 %v152
  %v622 = vunpack.c.l.b16 %v153
  %v623 = vunpack.c.h.b16 %v153
  %v624 = vunpack.c.l.b16 %v154
  %v625 = vunpack.c.h.b16 %v154
  %v626 = vunpack.c.l.b16 %v155
  %v627 = vunpack.c.h.b16 %v155
  %v628 = vunpack.c.l.b16 %v156
  %v629 = vunpack.c.h.b16 %v156
  %v630 = vunpack.c.l.b16 %v157
  %v631 = vunpack.c.h.b16 %v157
  %v632 = vunpack.c.l.b16 %v158
  %v633 = vunpack.c.h.b16 %v158
  %v634 = vunpack.c.l.b16 %v159
  %v635 = vunpack.c.h.b16 %v159
  %v636 = vunpack.c.l.b16 %v160
  %v637 = vunpack.c.h.b16 %v160
  %v638 = vunpack.c.l.b16 %v161
  %v639 = vunpack.c.h.b16 %v161
  %v640 = vunpack.c.l.b16 %v162
  %v641 = vunpack.c.h.b16 %v162
  %v642 = vunpack.c.l.b16 %v163
  %v643 = vunpack.c.h.b16 %v163
  %v644 = vunpack.c.l.b16 %v164
  %v645 = vunpack.c.h.b16 %v164
  %v646 = vunpack.c.l.b16 %v165
  %v647 = vunpack.c.h.b16 %v165
  %v648 = vunpack.c.l.b16 %v166
  %v649 = vunpack.c.h.b16 %v166
  %v650 = vunpack.c.l.b16 %v167
  %v651 = vunpack.c.h.b16 %v167
  %v652 = vpack.c.b16 %v366, %v364
  %v653 = vpack.c.b16 %v367, %v365
  %v654 = vpack.c.b16 %v370, %v368
  %v655 = vpack.c.b16 %v371, %v369
  %v656 = vpack.c.b16 %v374, %v372
  %v657 = vpack.c.b16 %v375, %v373
  %v658 = vpack.c.b16 %v378, %v376
  %v659 = vpack.c.b16 %v379, %v377
  %v660 = vpack.c.b16 %v382, %v380
  %v661 = vpack.c.b16 %v383, %v381
  %v662 = vpack.c.b16 %v386, %v384
  %v663 = vpack.c.b16 %v387, %v385
  %v664 = vpack.c.b16 %v390, %v388
  %v665 = vpack.c.b16 %v391, %v389
  %v666 = vpack.c.b16 %v394, %v392
  %v667 = vpack.c.b16 %v395, %v393
  %v668 = vpack.c.b16 %v398, %v396
  %v669 = vpack.c.b16 %v399, %v397
  %v670 = vpack.c.b16 %v402, %v400
  %v671 = vpack.c.b16 %v403, %v401
  %v672 = vpack.c.b16 %v406, %v404
  %v673 = vpack.c.b16 %v407, %v405
  %v674 = vpack.c.b16 %v410, %v408
  %v675 = vpack.c.b16 %v411, %v409
  %v676 = vpack.c.b16 %v414, %v412
  %v677 = vpack.c.b16 %v415, %v413
  %v678 = vpack.c.b16 %v418, %v416
  %v679 = vpack.c.b16 %v419, %v417
  %v680 = vpack.c.b16 %v422, %v420
  %v681 = vpack.c.b16 %v423, %v421
  %v682 = vpack.c.b16 %v426, %v424
  %v683 = vpack.c.b16 %v427, %v425
  %v684 = vpack.c.b16 %v430, %v428
  %v685 = vpack.c.b16 %v431, %v429
  %v686 = vpack.c.b16 %v434, %v432
  %v687 = vpack.c.b16 %v435, %v433
  %v688 = vpack.c.b16 %v438, %v436
  %v689 = vpack.c.b16 %v439, %v437
  %v690 = vpack.c.b16 %v442, %v440
  %v691 = vpack.c.b16 %v443, %v441
  %v692 = vpack.c.b16 %v446, %v444
  %v693 = vpack.c.b16 %v447, %v445
  %v694 = vpack.c.b16 %v450, %v448
  %v695 = vpack.c.b16 %v451, %v449
  %v696 = vpack.c.b16 %v454, %v452
  %v697 = vpack.c.b16 %v455, %v453
  %v698 = vpack.c.b16 %v458, %v456
  %v699 = vpack.c.b16 %v459, %v457
  %v700 = vpack.c.b16 %v462, %v460
  %v701 = vpack.c.b16 %v463, %v461
  %v702 = vpack.c.b16 %v466, %v464
  %v703 = vpack.c.b16 %v467, %v465
  %v704 = vpack.c.b16 %v470, %v468
  %v705 = vpack.c.b16 %v471, %v469
  %v706 = vpack.c.b16 %v474, %v472
  %v707 = vpack.c.b16 %v475, %v473
  %v708 = vpack.c.b16 %v478, %v476
  %v709 = vpack.c.b16 %v479, %v477
  %v710 = vpack.c.b16 %v482, %v480
  %v711 = vpack.c.b16 %v483, %v481
  %v712 = vpack.c.b16 %v486, %v484
  %v713 = vpack.c.b16 %v487, %v485
  %v714 = vpack.c.b16 %v490, %v488
  %v715 = vpack.c.b16 %v491, %v489
  %v716 = vpack.c.b16 %v494, %v492
  %v717 = vpack.c.b16 %v495, %v493
  %v718 = vpack.c.b16 %v498, %v496
  %v719 = vpack.c.b16 %v499, %v497
  %v720 = vpack.c.b16 %v502, %v500
  %v721 = vpack.c.b16 %v503, %v501
  %v722 = vpack.c.b16 %v506, %v504
  %v723 = vpack.c.b16 %v507, %v505
  %v724 = vpack.c.b16 %v510, %v508
  %v725 = vpack.c.b16 %v511, %v509
  %v726 = vpack.c.b16 %v514, %v512
  %v727 = vpack.c.b16 %v515, %v513
  %v728 = vpack.c.b16 %v518, %v516
  %v729 = vpack.c.b16 %v519, %v517
  %v730 = vpack.c.b16 %v522, %v520
  %v731 = vpack.c.b16 %v523, %v521
  %v732 = vpack.c.b16 %v526, %v524
  %v733 = vpack.c.b16 %v527, %v525
  %v734 = vpack.c.b16 %v530, %v528
  %v735 = vpack.c.b16 %v531, %v529
  %v736 = vpack.c.b16 %v534, %v532
  %v737 = vpack.c.b16 %v535, %v533
  %v738 = vpack.c.b16 %v538, %v536
  %v739 = vpack.c.b16 %v539, %v537
  %v740 = vpack.c.b16 %v542, %v540
  %v741 = vpack.c.b16 %v543, %v541
  %v742 = vpack.c.b16 %v546, %v544
  %v743 = vpack.c.b16 %v547, %v545
  %v744 = vpack.c.b16 %v550, %v548
  %v745 = vpack.c.b16 %v551, %v549
  %v746 = vpack.c.b16 %v554, %v552
  %v747 = vpack.c.b16 %v555, %v553
  %v748 = vpack.c.b16 %v558, %v556
  %v749 = vpack.c.b16 %v559, %v557
  %v750 = vpack.c.b16 %v562, %v560
  %v751 = vpack.c.b16 %v563, %v561
  %v752 = vpack.c.b16 %v566, %v564
  %v753 = vpack.c.b16 %v567, %v565
  %v754 = vpack.c.b16 %v570, %v568
  %v755 = vpack.c.b16 %v571, %v569
  %v756 = vpack.c.b16 %v574, %v572
  %v757 = vpack.c.b16 %v575, %v573
  %v758 = vpack.c.b16 %v578, %v576
  %v759 = vpack.c.b16 %v579, %v577
  %v760 = vpack.c.b16 %v582, %v580
  %v761 = vpack.c.b16 %v583, %v581
  %v762 = vpack.c.b16 %v586, %v584
  %v763 = vpack.c.b16 %v587, %v585
  %v764 = vpack.c.b16 %v590, %v588
  %v765 = vpack.c.b16 %v591, %v589
  %v766 = vpack.c.b16 %v594, %v592
  %v767 = vpack.c.b16 %v595, %v593
  %v768 = vpack.c.b16 %v598, %v596
  %v769 = vpack.c.b16 %v599, %v597
  %v770 = vpack.c.b16 %v602, %v600
  %v771 = vpack.c.b16 %v603, %v601
  %v772 = vpack.c.b16 %v606, %v604
  %v773 = vpack.c.b16 %v607, %v605
  %v774 = vpack.c.b16 %v610, %v608
  %v775 = vpack.c.b16 %v611, %v609
  %v776 = vpack.c.b16 %v614, %v612
  %v777 = vpack.c.b16 %v615, %v613
  %v778 = vpack.c.b16 %v618, %v616
  %v779 = vpack.c.b16 %v619, %v617
  %v780 = vpack.c.b16 %v622, %v620
  %v781 = vpack.c.b16 %v623, %v621
  %v782 = vpack.c.b16 %v626, %v624
  %v783 = vpack.c.b16 %v627, %v625
  %v784 = vpack.c.b16 %v630, %v628
  %v785 = vpack.c.b16 %v631, %v629
  %v786 = vpack.c.b16 %v634, %v632
  %v787 = vpack.c.b16 %v635, %v633
  %v788 = vpack.c.b16 %v638, %v636
  %v789 = vpack.c.b16 %v639, %v637
  %v790 = vpack.c.b16 %v642, %v640
  %v791 = vpack.c.b16 %v643, %v641
  %v792 = vpack.c.b16 %v646, %v644
  %v793 = vpack.c.b16 %v647, %v645
  %v794 = vpack.c.b16 %v650, %v648
  %v795 = vpack.c.b16 %v651, %v649
  %940 = vmatpush.bf16.msra.mxu0 %v666
  %941 = vmatpush.bf16.msra.mxu0 %v664
  %942 = vmatpush.bf16.msra.mxu0 %v662
  %943 = vmatpush.bf16.msra.mxu0 %v660
  %944 = vmatpush.bf16.msra.mxu0 %v658
  %945 = vmatpush.bf16.msra.mxu0 %v656
  %946 = vmatpush.bf16.msra.mxu0 %v654
  %947 = vmatpush.bf16.msra.mxu0 %v652
  %948 = vmatmul.bf16.gmra.mxu0 %v202
  %v949 = vpop.f32.mrf.mxu0
  %v950 = vadd.f32 %v170, %v949
  %v951 = vpop.f32.mrf.mxu0
  %v952 = vadd.f32 %v170, %v951
  %953 = vdwg.mxu0
  %954 = vmatpush.bf16.msra.mxu0 %v682
  %955 = vmatpush.bf16.msra.mxu0 %v680
  %956 = vmatpush.bf16.msra.mxu0 %v678
  %957 = vmatpush.bf16.msra.mxu0 %v676
  %958 = vmatpush.bf16.msra.mxu0 %v674
  %959 = vmatpush.bf16.msra.mxu0 %v672
  %960 = vmatpush.bf16.msra.mxu0 %v670
  %961 = vmatpush.bf16.msra.mxu0 %v668
  %962 = vmatmul.bf16.gmra.mxu0 %v203
  %v963 = vpop.f32.mrf.mxu0
  %v964 = vadd.f32 %v950, %v963
  %v965 = vpop.f32.mrf.mxu0
  %v966 = vadd.f32 %v952, %v965
  %967 = vdwg.mxu0
  %968 = vmatpush.bf16.msra.mxu0 %v698
  %969 = vmatpush.bf16.msra.mxu0 %v696
  %970 = vmatpush.bf16.msra.mxu0 %v694
  %971 = vmatpush.bf16.msra.mxu0 %v692
  %972 = vmatpush.bf16.msra.mxu0 %v690
  %973 = vmatpush.bf16.msra.mxu0 %v688
  %974 = vmatpush.bf16.msra.mxu0 %v686
  %975 = vmatpush.bf16.msra.mxu0 %v684
  %976 = vmatmul.bf16.gmra.mxu0 %v204
  %v977 = vpop.f32.mrf.mxu0
  %v978 = vadd.f32 %v964, %v977
  %v979 = vpop.f32.mrf.mxu0
  %v980 = vadd.f32 %v966, %v979
  %981 = vdwg.mxu0
  %982 = vmatpush.bf16.msra.mxu0 %v714
  %983 = vmatpush.bf16.msra.mxu0 %v712
  %984 = vmatpush.bf16.msra.mxu0 %v710
  %985 = vmatpush.bf16.msra.mxu0 %v708
  %986 = vmatpush.bf16.msra.mxu0 %v706
  %987 = vmatpush.bf16.msra.mxu0 %v704
  %988 = vmatpush.bf16.msra.mxu0 %v702
  %989 = vmatpush.bf16.msra.mxu0 %v700
  %990 = vmatmul.bf16.gmra.mxu0 %v205
  %v991 = vpop.f32.mrf.mxu0
  %v992 = vadd.f32 %v978, %v991
  %v993 = vpop.f32.mrf.mxu0
  %v994 = vadd.f32 %v980, %v993
  %995 = vdwg.mxu0
  %996 = vmatpush.bf16.msra.mxu0 %v730
  %997 = vmatpush.bf16.msra.mxu0 %v728
  %998 = vmatpush.bf16.msra.mxu0 %v726
  %999 = vmatpush.bf16.msra.mxu0 %v724
  %1000 = vmatpush.bf16.msra.mxu0 %v722
  %1001 = vmatpush.bf16.msra.mxu0 %v720
  %1002 = vmatpush.bf16.msra.mxu0 %v718
  %1003 = vmatpush.bf16.msra.mxu0 %v716
  %1004 = vmatmul.bf16.gmra.mxu0 %v206
  %v1005 = vpop.f32.mrf.mxu0
  %v1006 = vadd.f32 %v992, %v1005
  %v1007 = vpop.f32.mrf.mxu0
  %v1008 = vadd.f32 %v994, %v1007
  %1009 = vdwg.mxu0
  %1010 = vmatpush.bf16.msra.mxu0 %v746
  %1011 = vmatpush.bf16.msra.mxu0 %v744
  %1012 = vmatpush.bf16.msra.mxu0 %v742
  %1013 = vmatpush.bf16.msra.mxu0 %v740
  %1014 = vmatpush.bf16.msra.mxu0 %v738
  %1015 = vmatpush.bf16.msra.mxu0 %v736
  %1016 = vmatpush.bf16.msra.mxu0 %v734
  %1017 = vmatpush.bf16.msra.mxu0 %v732
  %1018 = vmatmul.bf16.gmra.mxu0 %v207
  %v1019 = vpop.f32.mrf.mxu0
  %v1020 = vadd.f32 %v1006, %v1019
  %v1021 = vpop.f32.mrf.mxu0
  %v1022 = vadd.f32 %v1008, %v1021
  %1023 = vdwg.mxu0
  %1024 = vmatpush.bf16.msra.mxu0 %v762
  %1025 = vmatpush.bf16.msra.mxu0 %v760
  %1026 = vmatpush.bf16.msra.mxu0 %v758
  %1027 = vmatpush.bf16.msra.mxu0 %v756
  %1028 = vmatpush.bf16.msra.mxu0 %v754
  %1029 = vmatpush.bf16.msra.mxu0 %v752
  %1030 = vmatpush.bf16.msra.mxu0 %v750
  %1031 = vmatpush.bf16.msra.mxu0 %v748
  %1032 = vmatmul.bf16.gmra.mxu0 %v208
  %v1033 = vpop.f32.mrf.mxu0
  %v1034 = vadd.f32 %v1020, %v1033
  %v1035 = vpop.f32.mrf.mxu0
  %v1036 = vadd.f32 %v1022, %v1035
  %1037 = vdwg.mxu0
  %1038 = vmatpush.bf16.msra.mxu0 %v778
  %1039 = vmatpush.bf16.msra.mxu0 %v776
  %1040 = vmatpush.bf16.msra.mxu0 %v774
  %1041 = vmatpush.bf16.msra.mxu0 %v772
  %1042 = vmatpush.bf16.msra.mxu0 %v770
  %1043 = vmatpush.bf16.msra.mxu0 %v768
  %1044 = vmatpush.bf16.msra.mxu0 %v766
  %1045 = vmatpush.bf16.msra.mxu0 %v764
  %1046 = vmatmul.bf16.gmra.mxu0 %v209
  %v1047 = vpop.f32.mrf.mxu0
  %v1048 = vadd.f32 %v1034, %v1047
  %v1049 = vpop.f32.mrf.mxu0
  %v1050 = vadd.f32 %v1036, %v1049
  %1051 = vdwg.mxu0
  %1052 = vmatpush.bf16.msra.mxu0 %v794
  %1053 = vmatpush.bf16.msra.mxu0 %v792
  %1054 = vmatpush.bf16.msra.mxu0 %v790
  %1055 = vmatpush.bf16.msra.mxu0 %v788
  %1056 = vmatpush.bf16.msra.mxu0 %v786
  %1057 = vmatpush.bf16.msra.mxu0 %v784
  %1058 = vmatpush.bf16.msra.mxu0 %v782
  %1059 = vmatpush.bf16.msra.mxu0 %v780
  %1060 = vmatmul.bf16.gmra.mxu0 %v210
  %v1061 = vpop.f32.mrf.mxu0
  %v1062 = vadd.f32 %v1048, %v1061
  %v1063 = vpop.f32.mrf.mxu0
  %v1064 = vadd.f32 %v1050, %v1063
  %1065 = vdwg.mxu0
  %1066 = vmatpush.bf16.msra.mxu0 %v667
  %1067 = vmatpush.bf16.msra.mxu0 %v665
  %1068 = vmatpush.bf16.msra.mxu0 %v663
  %1069 = vmatpush.bf16.msra.mxu0 %v661
  %1070 = vmatpush.bf16.msra.mxu0 %v659
  %1071 = vmatpush.bf16.msra.mxu0 %v657
  %1072 = vmatpush.bf16.msra.mxu0 %v655
  %1073 = vmatpush.bf16.msra.mxu0 %v653
  %1074 = vmatmul.bf16.gmra.mxu0 %v202
  %v1075 = vpop.f32.mrf.mxu0
  %v1076 = vadd.f32 %v171, %v1075
  %v1077 = vpop.f32.mrf.mxu0
  %v1078 = vadd.f32 %v171, %v1077
  %1079 = vdwg.mxu0
  %1080 = vmatpush.bf16.msra.mxu0 %v683
  %1081 = vmatpush.bf16.msra.mxu0 %v681
  %1082 = vmatpush.bf16.msra.mxu0 %v679
  %1083 = vmatpush.bf16.msra.mxu0 %v677
  %1084 = vmatpush.bf16.msra.mxu0 %v675
  %1085 = vmatpush.bf16.msra.mxu0 %v673
  %1086 = vmatpush.bf16.msra.mxu0 %v671
  %1087 = vmatpush.bf16.msra.mxu0 %v669
  %1088 = vmatmul.bf16.gmra.mxu0 %v203
  %v1089 = vpop.f32.mrf.mxu0
  %v1090 = vadd.f32 %v1076, %v1089
  %v1091 = vpop.f32.mrf.mxu0
  %v1092 = vadd.f32 %v1078, %v1091
  %1093 = vdwg.mxu0
  %1094 = vmatpush.bf16.msra.mxu0 %v699
  %1095 = vmatpush.bf16.msra.mxu0 %v697
  %1096 = vmatpush.bf16.msra.mxu0 %v695
  %1097 = vmatpush.bf16.msra.mxu0 %v693
  %1098 = vmatpush.bf16.msra.mxu0 %v691
  %1099 = vmatpush.bf16.msra.mxu0 %v689
  %1100 = vmatpush.bf16.msra.mxu0 %v687
  %1101 = vmatpush.bf16.msra.mxu0 %v685
  %1102 = vmatmul.bf16.gmra.mxu0 %v204
  %v1103 = vpop.f32.mrf.mxu0
  %v1104 = vadd.f32 %v1090, %v1103
  %v1105 = vpop.f32.mrf.mxu0
  %v1106 = vadd.f32 %v1092, %v1105
  %1107 = vdwg.mxu0
  %1108 = vmatpush.bf16.msra.mxu0 %v715
  %1109 = vmatpush.bf16.msra.mxu0 %v713
  %1110 = vmatpush.bf16.msra.mxu0 %v711
  %1111 = vmatpush.bf16.msra.mxu0 %v709
  %1112 = vmatpush.bf16.msra.mxu0 %v707
  %1113 = vmatpush.bf16.msra.mxu0 %v705
  %1114 = vmatpush.bf16.msra.mxu0 %v703
  %1115 = vmatpush.bf16.msra.mxu0 %v701
  %1116 = vmatmul.bf16.gmra.mxu0 %v205
  %v1117 = vpop.f32.mrf.mxu0
  %v1118 = vadd.f32 %v1104, %v1117
  %v1119 = vpop.f32.mrf.mxu0
  %v1120 = vadd.f32 %v1106, %v1119
  %1121 = vdwg.mxu0
  %1122 = vmatpush.bf16.msra.mxu0 %v731
  %1123 = vmatpush.bf16.msra.mxu0 %v729
  %1124 = vmatpush.bf16.msra.mxu0 %v727
  %1125 = vmatpush.bf16.msra.mxu0 %v725
  %1126 = vmatpush.bf16.msra.mxu0 %v723
  %1127 = vmatpush.bf16.msra.mxu0 %v721
  %1128 = vmatpush.bf16.msra.mxu0 %v719
  %1129 = vmatpush.bf16.msra.mxu0 %v717
  %1130 = vmatmul.bf16.gmra.mxu0 %v206
  %v1131 = vpop.f32.mrf.mxu0
  %v1132 = vadd.f32 %v1118, %v1131
  %v1133 = vpop.f32.mrf.mxu0
  %v1134 = vadd.f32 %v1120, %v1133
  %1135 = vdwg.mxu0
  %1136 = vmatpush.bf16.msra.mxu0 %v747
  %1137 = vmatpush.bf16.msra.mxu0 %v745
  %1138 = vmatpush.bf16.msra.mxu0 %v743
  %1139 = vmatpush.bf16.msra.mxu0 %v741
  %1140 = vmatpush.bf16.msra.mxu0 %v739
  %1141 = vmatpush.bf16.msra.mxu0 %v737
  %1142 = vmatpush.bf16.msra.mxu0 %v735
  %1143 = vmatpush.bf16.msra.mxu0 %v733
  %1144 = vmatmul.bf16.gmra.mxu0 %v207
  %v1145 = vpop.f32.mrf.mxu0
  %v1146 = vadd.f32 %v1132, %v1145
  %v1147 = vpop.f32.mrf.mxu0
  %v1148 = vadd.f32 %v1134, %v1147
  %1149 = vdwg.mxu0
  %1150 = vmatpush.bf16.msra.mxu0 %v763
  %1151 = vmatpush.bf16.msra.mxu0 %v761
  %1152 = vmatpush.bf16.msra.mxu0 %v759
  %1153 = vmatpush.bf16.msra.mxu0 %v757
  %1154 = vmatpush.bf16.msra.mxu0 %v755
  %1155 = vmatpush.bf16.msra.mxu0 %v753
  %1156 = vmatpush.bf16.msra.mxu0 %v751
  %1157 = vmatpush.bf16.msra.mxu0 %v749
  %1158 = vmatmul.bf16.gmra.mxu0 %v208
  %v1159 = vpop.f32.mrf.mxu0
  %v1160 = vadd.f32 %v1146, %v1159
  %v1161 = vpop.f32.mrf.mxu0
  %v1162 = vadd.f32 %v1148, %v1161
  %1163 = vdwg.mxu0
  %1164 = vmatpush.bf16.msra.mxu0 %v779
  %1165 = vmatpush.bf16.msra.mxu0 %v777
  %1166 = vmatpush.bf16.msra.mxu0 %v775
  %1167 = vmatpush.bf16.msra.mxu0 %v773
  %1168 = vmatpush.bf16.msra.mxu0 %v771
  %1169 = vmatpush.bf16.msra.mxu0 %v769
  %1170 = vmatpush.bf16.msra.mxu0 %v767
  %1171 = vmatpush.bf16.msra.mxu0 %v765
  %1172 = vmatmul.bf16.gmra.mxu0 %v209
  %v1173 = vpop.f32.mrf.mxu0
  %v1174 = vadd.f32 %v1160, %v1173
  %v1175 = vpop.f32.mrf.mxu0
  %v1176 = vadd.f32 %v1162, %v1175
  %1177 = vdwg.mxu0
  %1178 = vmatpush.bf16.msra.mxu0 %v795
  %1179 = vmatpush.bf16.msra.mxu0 %v793
  %1180 = vmatpush.bf16.msra.mxu0 %v791
  %1181 = vmatpush.bf16.msra.mxu0 %v789
  %1182 = vmatpush.bf16.msra.mxu0 %v787
  %1183 = vmatpush.bf16.msra.mxu0 %v785
  %1184 = vmatpush.bf16.msra.mxu0 %v783
  %1185 = vmatpush.bf16.msra.mxu0 %v781
  %1186 = vmatmul.bf16.gmra.mxu0 %v210
  %v1187 = vpop.f32.mrf.mxu0
  %v1188 = vadd.f32 %v1174, %v1187
  %v1189 = vpop.f32.mrf.mxu0
  %v1190 = vadd.f32 %v1176, %v1189
  %1191 = vdwg.mxu0
  %vm1192 = vcmp.gt.f32.partialorder %v1062, 0.0
  %vm1193 = vcmp.gt.f32.partialorder %v1188, 0.0
  %vm1194 = vcmp.gt.f32.partialorder %v1064, 0.0
  %vm1195 = vcmp.gt.f32.partialorder %v1190, 0.0
  %v1196 = vmul.f32 %v1062, 0.2
  %v1197 = vmul.f32 %v1188, 0.2
  %v1198 = vmul.f32 %v1064, 0.2
  %v1199 = vmul.f32 %v1190, 0.2
  %v1200 = vsel %vm1192, %v1062, %v1196
  %v1201 = vsel %vm1193, %v1188, %v1197
  %v1202 = vsel %vm1194, %v1064, %v1198
  %v1203 = vsel %vm1195, %v1190, %v1199
  %v1204 = vpack.c.bf16 %v1201, %v1200
  %v1205 = vpack.c.bf16 %v1203, %v1202
  %1206 = vst [vmem:[%s3] sm:$0xff] %v1204
  %1207 = vst [vmem:[%s3 + $0x8] sm:$0xff] %v1205
  // Predicated region
  $region14: #{ae_forward.14} parent=0 // pred_check
    _
  $region15: #{ae_forward.14} parent=0 // pred_check_branch
    %1209 = sbr.rel (0) target = $region17
  $region16: #{ae_forward.14} parent=0 // pred_region
    _
  $region17: #{ae_forward.14} parent=0 // pred_fallthru
    _
  // Predicated region
  $region18: #{ae_forward.14} parent=0 // pred_check
    _
  $region19: #{ae_forward.14} parent=0 // pred_check_branch
    %1211 = sbr.rel (0) target = $region21
  $region20: #{ae_forward.14} parent=0 // pred_region
    _
  $region21: #{ae_forward.14} parent=0 // pred_fallthru
    _

// kernel: ae_forward.16
$region0: #{ae_forward.16}
  #allocation0 [shape = 'u32[]', space=smem, size = 0x4, offset = 0x4, fixed_abs, tag = 'smem constant byte address 0x4 - core index']
  #allocation1 [shape = 'u32[72,128]{1,0:T(1,128)}', space=vmem, size = 0x9000, scoped, tag = 'internal scratch']
  %s0 = inlined_call_operand.vmem [shape: bf16[16,512], index: 0, kind: input, shape index: {}]
  %s1 = inlined_call_operand.vmem [shape: bf16[512,1024], index: 1, kind: input, shape index: {}]
  %s2 = inlined_call_operand.vmem [shape: f32[1,1024], index: 2, kind: input, shape index: {}]
  %s3 = inlined_call_operand.vmem [shape: f32[16,1024], index: 3, kind: output, shape index: {}]
  %s4 = sld [smem:[#allocation0]]
  $region22: #{ae_forward.16} parent=0
    _
  %s6 = ssub.s32 1, %s4
  %s7 = scalar_select 0, %s6, %s4
  // Predicated region
  $region2: #{ae_forward.16} parent=0 // pred_check
    _
  $region3: #{ae_forward.16} parent=0 // pred_check_branch
    %9 = sbr.rel (0) target = $region5
  $region4: #{ae_forward.16} parent=0 // pred_region
    _
  $region5: #{ae_forward.16} parent=0 // pred_fallthru
    _
  // Predicated region
  $region6: #{ae_forward.16} parent=0 // pred_check
    _
  $region7: #{ae_forward.16} parent=0 // pred_check_branch
    %11 = sbr.rel (0) target = $region9
  $region8: #{ae_forward.16} parent=0 // pred_region
    _
  $region9: #{ae_forward.16} parent=0 // pred_fallthru
    _
  // Predicated region
  $region10: #{ae_forward.16} parent=0 // pred_check
    _
  $region11: #{ae_forward.16} parent=0 // pred_check_branch
    %13 = sbr.rel (0) target = $region13
  $region12: #{ae_forward.16} parent=0 // pred_region
    _
  $region13: #{ae_forward.16} parent=0 // pred_fallthru
    _
  %v14 = vld [vmem:[%s0] sm:$0xff]
  %v15 = vld [vmem:[%s0 + $0x8] sm:$0xff]
  %v16 = vld [vmem:[%s0 + $0x10] sm:$0xff]
  %v17 = vld [vmem:[%s0 + $0x18] sm:$0xff]
  %v18 = vld [vmem:[%s1] sm:$0xff]
  %v19 = vld [vmem:[%s1 + $0x8] sm:$0xff]
  %v20 = vld [vmem:[%s1 + $0x10] sm:$0xff]
  %v21 = vld [vmem:[%s1 + $0x18] sm:$0xff]
  %v22 = vld [vmem:[%s1 + $0x20] sm:$0xff]
  %v23 = vld [vmem:[%s1 + $0x28] sm:$0xff]
  %v24 = vld [vmem:[%s1 + $0x30] sm:$0xff]
  %v25 = vld [vmem:[%s1 + $0x38] sm:$0xff]
  %v26 = vld [vmem:[%s1 + $0x40] sm:$0xff]
  %v27 = vld [vmem:[%s1 + $0x48] sm:$0xff]
  %v28 = vld [vmem:[%s1 + $0x50] sm:$0xff]
  %v29 = vld [vmem:[%s1 + $0x58] sm:$0xff]
  %v30 = vld [vmem:[%s1 + $0x60] sm:$0xff]
  %v31 = vld [vmem:[%s1 + $0x68] sm:$0xff]
  %v32 = vld [vmem:[%s1 + $0x70] sm:$0xff]
  %v33 = vld [vmem:[%s1 + $0x78] sm:$0xff]
  %v34 = vld [vmem:[%s1 + $0x80] sm:$0xff]
  %v35 = vld [vmem:[%s1 + $0x88] sm:$0xff]
  %v36 = vld [vmem:[%s1 + $0x90] sm:$0xff]
  %v37 = vld [vmem:[%s1 + $0x98] sm:$0xff]
  %v38 = vld [vmem:[%s1 + $0xa0] sm:$0xff]
  %v39 = vld [vmem:[%s1 + $0xa8] sm:$0xff]
  %v40 = vld [vmem:[%s1 + $0xb0] sm:$0xff]
  %v41 = vld [vmem:[%s1 + $0xb8] sm:$0xff]
  %v42 = vld [vmem:[%s1 + $0xc0] sm:$0xff]
  %v43 = vld [vmem:[%s1 + $0xc8] sm:$0xff]
  %v44 = vld [vmem:[%s1 + $0xd0] sm:$0xff]
  %v45 = vld [vmem:[%s1 + $0xd8] sm:$0xff]
  %v46 = vld [vmem:[%s1 + $0xe0] sm:$0xff]
  %v47 = vld [vmem:[%s1 + $0xe8] sm:$0xff]
  %v48 = vld [vmem:[%s1 + $0xf0] sm:$0xff]
  %v49 = vld [vmem:[%s1 + $0xf8] sm:$0xff]
  %v50 = vld [vmem:[%s1 + $0x100] sm:$0xff]
  %v51 = vld [vmem:[%s1 + $0x108] sm:$0xff]
  %v52 = vld [vmem:[%s1 + $0x110] sm:$0xff]
  %v53 = vld [vmem:[%s1 + $0x118] sm:$0xff]
  %v54 = vld [vmem:[%s1 + $0x120] sm:$0xff]
  %v55 = vld [vmem:[%s1 + $0x128] sm:$0xff]
  %v56 = vld [vmem:[%s1 + $0x130] sm:$0xff]
  %v57 = vld [vmem:[%s1 + $0x138] sm:$0xff]
  %v58 = vld [vmem:[%s1 + $0x140] sm:$0xff]
  %v59 = vld [vmem:[%s1 + $0x148] sm:$0xff]
  %v60 = vld [vmem:[%s1 + $0x150] sm:$0xff]
  %v61 = vld [vmem:[%s1 + $0x158] sm:$0xff]
  %v62 = vld [vmem:[%s1 + $0x160] sm:$0xff]
  %v63 = vld [vmem:[%s1 + $0x168] sm:$0xff]
  %v64 = vld [vmem:[%s1 + $0x170] sm:$0xff]
  %v65 = vld [vmem:[%s1 + $0x178] sm:$0xff]
  %v66 = vld [vmem:[%s1 + $0x180] sm:$0xff]
  %v67 = vld [vmem:[%s1 + $0x188] sm:$0xff]
  %v68 = vld [vmem:[%s1 + $0x190] sm:$0xff]
  %v69 = vld [vmem:[%s1 + $0x198] sm:$0xff]
  %v70 = vld [vmem:[%s1 + $0x1a0] sm:$0xff]
  %v71 = vld [vmem:[%s1 + $0x1a8] sm:$0xff]
  %v72 = vld [vmem:[%s1 + $0x1b0] sm:$0xff]
  %v73 = vld [vmem:[%s1 + $0x1b8] sm:$0xff]
  %v74 = vld [vmem:[%s1 + $0x1c0] sm:$0xff]
  %v75 = vld [vmem:[%s1 + $0x1c8] sm:$0xff]
  %v76 = vld [vmem:[%s1 + $0x1d0] sm:$0xff]
  %v77 = vld [vmem:[%s1 + $0x1d8] sm:$0xff]
  %v78 = vld [vmem:[%s1 + $0x1e0] sm:$0xff]
  %v79 = vld [vmem:[%s1 + $0x1e8] sm:$0xff]
  %v80 = vld [vmem:[%s1 + $0x1f0] sm:$0xff]
  %v81 = vld [vmem:[%s1 + $0x1f8] sm:$0xff]
  %v82 = vld [vmem:[%s1 + $0x200] sm:$0xff]
  %v83 = vld [vmem:[%s1 + $0x208] sm:$0xff]
  %v84 = vld [vmem:[%s1 + $0x210] sm:$0xff]
  %v85 = vld [vmem:[%s1 + $0x218] sm:$0xff]
  %v86 = vld [vmem:[%s1 + $0x220] sm:$0xff]
  %v87 = vld [vmem:[%s1 + $0x228] sm:$0xff]
  %v88 = vld [vmem:[%s1 + $0x230] sm:$0xff]
  %v89 = vld [vmem:[%s1 + $0x238] sm:$0xff]
  %v90 = vld [vmem:[%s1 + $0x240] sm:$0xff]
  %v91 = vld [vmem:[%s1 + $0x248] sm:$0xff]
  %v92 = vld [vmem:[%s1 + $0x250] sm:$0xff]
  %v93 = vld [vmem:[%s1 + $0x258] sm:$0xff]
  %v94 = vld [vmem:[%s1 + $0x260] sm:$0xff]
  %v95 = vld [vmem:[%s1 + $0x268] sm:$0xff]
  %v96 = vld [vmem:[%s1 + $0x270] sm:$0xff]
  %v97 = vld [vmem:[%s1 + $0x278] sm:$0xff]
  %v98 = vld [vmem:[%s1 + $0x280] sm:$0xff]
  %v99 = vld [vmem:[%s1 + $0x288] sm:$0xff]
  %v100 = vld [vmem:[%s1 + $0x290] sm:$0xff]
  %v101 = vld [vmem:[%s1 + $0x298] sm:$0xff]
  %v102 = vld [vmem:[%s1 + $0x2a0] sm:$0xff]
  %v103 = vld [vmem:[%s1 + $0x2a8] sm:$0xff]
  %v104 = vld [vmem:[%s1 + $0x2b0] sm:$0xff]
  %v105 = vld [vmem:[%s1 + $0x2b8] sm:$0xff]
  %v106 = vld [vmem:[%s1 + $0x2c0] sm:$0xff]
  %v107 = vld [vmem:[%s1 + $0x2c8] sm:$0xff]
  %v108 = vld [vmem:[%s1 + $0x2d0] sm:$0xff]
  %v109 = vld [vmem:[%s1 + $0x2d8] sm:$0xff]
  %v110 = vld [vmem:[%s1 + $0x2e0] sm:$0xff]
  %v111 = vld [vmem:[%s1 + $0x2e8] sm:$0xff]
  %v112 = vld [vmem:[%s1 + $0x2f0] sm:$0xff]
  %v113 = vld [vmem:[%s1 + $0x2f8] sm:$0xff]
  %v114 = vld [vmem:[%s1 + $0x300] sm:$0xff]
  %v115 = vld [vmem:[%s1 + $0x308] sm:$0xff]
  %v116 = vld [vmem:[%s1 + $0x310] sm:$0xff]
  %v117 = vld [vmem:[%s1 + $0x318] sm:$0xff]
  %v118 = vld [vmem:[%s1 + $0x320] sm:$0xff]
  %v119 = vld [vmem:[%s1 + $0x328] sm:$0xff]
  %v120 = vld [vmem:[%s1 + $0x330] sm:$0xff]
  %v121 = vld [vmem:[%s1 + $0x338] sm:$0xff]
  %v122 = vld [vmem:[%s1 + $0x340] sm:$0xff]
  %v123 = vld [vmem:[%s1 + $0x348] sm:$0xff]
  %v124 = vld [vmem:[%s1 + $0x350] sm:$0xff]
  %v125 = vld [vmem:[%s1 + $0x358] sm:$0xff]
  %v126 = vld [vmem:[%s1 + $0x360] sm:$0xff]
  %v127 = vld [vmem:[%s1 + $0x368] sm:$0xff]
  %v128 = vld [vmem:[%s1 + $0x370] sm:$0xff]
  %v129 = vld [vmem:[%s1 + $0x378] sm:$0xff]
  %v130 = vld [vmem:[%s1 + $0x380] sm:$0xff]
  %v131 = vld [vmem:[%s1 + $0x388] sm:$0xff]
  %v132 = vld [vmem:[%s1 + $0x390] sm:$0xff]
  %v133 = vld [vmem:[%s1 + $0x398] sm:$0xff]
  %v134 = vld [vmem:[%s1 + $0x3a0] sm:$0xff]
  %v135 = vld [vmem:[%s1 + $0x3a8] sm:$0xff]
  %v136 = vld [vmem:[%s1 + $0x3b0] sm:$0xff]
  %v137 = vld [vmem:[%s1 + $0x3b8] sm:$0xff]
  %v138 = vld [vmem:[%s1 + $0x3c0] sm:$0xff]
  %v139 = vld [vmem:[%s1 + $0x3c8] sm:$0xff]
  %v140 = vld [vmem:[%s1 + $0x3d0] sm:$0xff]
  %v141 = vld [vmem:[%s1 + $0x3d8] sm:$0xff]
  %v142 = vld [vmem:[%s1 + $0x3e0] sm:$0xff]
  %v143 = vld [vmem:[%s1 + $0x3e8] sm:$0xff]
  %v144 = vld [vmem:[%s1 + $0x3f0] sm:$0xff]
  %v145 = vld [vmem:[%s1 + $0x3f8] sm:$0xff]
  %v146 = vld [vmem:[%s1 + $0x400] sm:$0xff]
  %v147 = vld [vmem:[%s1 + $0x408] sm:$0xff]
  %v148 = vld [vmem:[%s1 + $0x410] sm:$0xff]
  %v149 = vld [vmem:[%s1 + $0x418] sm:$0xff]
  %v150 = vld [vmem:[%s1 + $0x420] sm:$0xff]
  %v151 = vld [vmem:[%s1 + $0x428] sm:$0xff]
  %v152 = vld [vmem:[%s1 + $0x430] sm:$0xff]
  %v153 = vld [vmem:[%s1 + $0x438] sm:$0xff]
  %v154 = vld [vmem:[%s1 + $0x440] sm:$0xff]
  %v155 = vld [vmem:[%s1 + $0x448] sm:$0xff]
  %v156 = vld [vmem:[%s1 + $0x450] sm:$0xff]
  %v157 = vld [vmem:[%s1 + $0x458] sm:$0xff]
  %v158 = vld [vmem:[%s1 + $0x460] sm:$0xff]
  %v159 = vld [vmem:[%s1 + $0x468] sm:$0xff]
  %v160 = vld [vmem:[%s1 + $0x470] sm:$0xff]
  %v161 = vld [vmem:[%s1 + $0x478] sm:$0xff]
  %v162 = vld [vmem:[%s1 + $0x480] sm:$0xff]
  %v163 = vld [vmem:[%s1 + $0x488] sm:$0xff]
  %v164 = vld [vmem:[%s1 + $0x490] sm:$0xff]
  %v165 = vld [vmem:[%s1 + $0x498] sm:$0xff]
  %v166 = vld [vmem:[%s1 + $0x4a0] sm:$0xff]
  %v167 = vld [vmem:[%s1 + $0x4a8] sm:$0xff]
  %v168 = vld [vmem:[%s1 + $0x4b0] sm:$0xff]
  %v169 = vld [vmem:[%s1 + $0x4b8] sm:$0xff]
  %v170 = vld [vmem:[%s1 + $0x4c0] sm:$0xff]
  %v171 = vld [vmem:[%s1 + $0x4c8] sm:$0xff]
  %v172 = vld [vmem:[%s1 + $0x4d0] sm:$0xff]
  %v173 = vld [vmem:[%s1 + $0x4d8] sm:$0xff]
  %v174 = vld [vmem:[%s1 + $0x4e0] sm:$0xff]
  %v175 = vld [vmem:[%s1 + $0x4e8] sm:$0xff]
  %v176 = vld [vmem:[%s1 + $0x4f0] sm:$0xff]
  %v177 = vld [vmem:[%s1 + $0x4f8] sm:$0xff]
  %v178 = vld [vmem:[%s1 + $0x500] sm:$0xff]
  %v179 = vld [vmem:[%s1 + $0x508] sm:$0xff]
  %v180 = vld [vmem:[%s1 + $0x510] sm:$0xff]
  %v181 = vld [vmem:[%s1 + $0x518] sm:$0xff]
  %v182 = vld [vmem:[%s1 + $0x520] sm:$0xff]
  %v183 = vld [vmem:[%s1 + $0x528] sm:$0xff]
  %v184 = vld [vmem:[%s1 + $0x530] sm:$0xff]
  %v185 = vld [vmem:[%s1 + $0x538] sm:$0xff]
  %v186 = vld [vmem:[%s1 + $0x540] sm:$0xff]
  %v187 = vld [vmem:[%s1 + $0x548] sm:$0xff]
  %v188 = vld [vmem:[%s1 + $0x550] sm:$0xff]
  %v189 = vld [vmem:[%s1 + $0x558] sm:$0xff]
  %v190 = vld [vmem:[%s1 + $0x560] sm:$0xff]
  %v191 = vld [vmem:[%s1 + $0x568] sm:$0xff]
  %v192 = vld [vmem:[%s1 + $0x570] sm:$0xff]
  %v193 = vld [vmem:[%s1 + $0x578] sm:$0xff]
  %v194 = vld [vmem:[%s1 + $0x580] sm:$0xff]
  %v195 = vld [vmem:[%s1 + $0x588] sm:$0xff]
  %v196 = vld [vmem:[%s1 + $0x590] sm:$0xff]
  %v197 = vld [vmem:[%s1 + $0x598] sm:$0xff]
  %v198 = vld [vmem:[%s1 + $0x5a0] sm:$0xff]
  %v199 = vld [vmem:[%s1 + $0x5a8] sm:$0xff]
  %v200 = vld [vmem:[%s1 + $0x5b0] sm:$0xff]
  %v201 = vld [vmem:[%s1 + $0x5b8] sm:$0xff]
  %v202 = vld [vmem:[%s1 + $0x5c0] sm:$0xff]
  %v203 = vld [vmem:[%s1 + $0x5c8] sm:$0xff]
  %v204 = vld [vmem:[%s1 + $0x5d0] sm:$0xff]
  %v205 = vld [vmem:[%s1 + $0x5d8] sm:$0xff]
  %v206 = vld [vmem:[%s1 + $0x5e0] sm:$0xff]
  %v207 = vld [vmem:[%s1 + $0x5e8] sm:$0xff]
  %v208 = vld [vmem:[%s1 + $0x5f0] sm:$0xff]
  %v209 = vld [vmem:[%s1 + $0x5f8] sm:$0xff]
  %v210 = vld [vmem:[%s1 + $0x600] sm:$0xff]
  %v211 = vld [vmem:[%s1 + $0x608] sm:$0xff]
  %v212 = vld [vmem:[%s1 + $0x610] sm:$0xff]
  %v213 = vld [vmem:[%s1 + $0x618] sm:$0xff]
  %v214 = vld [vmem:[%s1 + $0x620] sm:$0xff]
  %v215 = vld [vmem:[%s1 + $0x628] sm:$0xff]
  %v216 = vld [vmem:[%s1 + $0x630] sm:$0xff]
  %v217 = vld [vmem:[%s1 + $0x638] sm:$0xff]
  %v218 = vld [vmem:[%s1 + $0x640] sm:$0xff]
  %v219 = vld [vmem:[%s1 + $0x648] sm:$0xff]
  %v220 = vld [vmem:[%s1 + $0x650] sm:$0xff]
  %v221 = vld [vmem:[%s1 + $0x658] sm:$0xff]
  %v222 = vld [vmem:[%s1 + $0x660] sm:$0xff]
  %v223 = vld [vmem:[%s1 + $0x668] sm:$0xff]
  %v224 = vld [vmem:[%s1 + $0x670] sm:$0xff]
  %v225 = vld [vmem:[%s1 + $0x678] sm:$0xff]
  %v226 = vld [vmem:[%s1 + $0x680] sm:$0xff]
  %v227 = vld [vmem:[%s1 + $0x688] sm:$0xff]
  %v228 = vld [vmem:[%s1 + $0x690] sm:$0xff]
  %v229 = vld [vmem:[%s1 + $0x698] sm:$0xff]
  %v230 = vld [vmem:[%s1 + $0x6a0] sm:$0xff]
  %v231 = vld [vmem:[%s1 + $0x6a8] sm:$0xff]
  %v232 = vld [vmem:[%s1 + $0x6b0] sm:$0xff]
  %v233 = vld [vmem:[%s1 + $0x6b8] sm:$0xff]
  %v234 = vld [vmem:[%s1 + $0x6c0] sm:$0xff]
  %v235 = vld [vmem:[%s1 + $0x6c8] sm:$0xff]
  %v236 = vld [vmem:[%s1 + $0x6d0] sm:$0xff]
  %v237 = vld [vmem:[%s1 + $0x6d8] sm:$0xff]
  %v238 = vld [vmem:[%s1 + $0x6e0] sm:$0xff]
  %v239 = vld [vmem:[%s1 + $0x6e8] sm:$0xff]
  %v240 = vld [vmem:[%s1 + $0x6f0] sm:$0xff]
  %v241 = vld [vmem:[%s1 + $0x6f8] sm:$0xff]
  %v242 = vld [vmem:[%s1 + $0x700] sm:$0xff]
  %v243 = vld [vmem:[%s1 + $0x708] sm:$0xff]
  %v244 = vld [vmem:[%s1 + $0x710] sm:$0xff]
  %v245 = vld [vmem:[%s1 + $0x718] sm:$0xff]
  %v246 = vld [vmem:[%s1 + $0x720] sm:$0xff]
  %v247 = vld [vmem:[%s1 + $0x728] sm:$0xff]
  %v248 = vld [vmem:[%s1 + $0x730] sm:$0xff]
  %v249 = vld [vmem:[%s1 + $0x738] sm:$0xff]
  %v250 = vld [vmem:[%s1 + $0x740] sm:$0xff]
  %v251 = vld [vmem:[%s1 + $0x748] sm:$0xff]
  %v252 = vld [vmem:[%s1 + $0x750] sm:$0xff]
  %v253 = vld [vmem:[%s1 + $0x758] sm:$0xff]
  %v254 = vld [vmem:[%s1 + $0x760] sm:$0xff]
  %v255 = vld [vmem:[%s1 + $0x768] sm:$0xff]
  %v256 = vld [vmem:[%s1 + $0x770] sm:$0xff]
  %v257 = vld [vmem:[%s1 + $0x778] sm:$0xff]
  %v258 = vld [vmem:[%s1 + $0x780] sm:$0xff]
  %v259 = vld [vmem:[%s1 + $0x788] sm:$0xff]
  %v260 = vld [vmem:[%s1 + $0x790] sm:$0xff]
  %v261 = vld [vmem:[%s1 + $0x798] sm:$0xff]
  %v262 = vld [vmem:[%s1 + $0x7a0] sm:$0xff]
  %v263 = vld [vmem:[%s1 + $0x7a8] sm:$0xff]
  %v264 = vld [vmem:[%s1 + $0x7b0] sm:$0xff]
  %v265 = vld [vmem:[%s1 + $0x7b8] sm:$0xff]
  %v266 = vld [vmem:[%s1 + $0x7c0] sm:$0xff]
  %v267 = vld [vmem:[%s1 + $0x7c8] sm:$0xff]
  %v268 = vld [vmem:[%s1 + $0x7d0] sm:$0xff]
  %v269 = vld [vmem:[%s1 + $0x7d8] sm:$0xff]
  %v270 = vld [vmem:[%s1 + $0x7e0] sm:$0xff]
  %v271 = vld [vmem:[%s1 + $0x7e8] sm:$0xff]
  %v272 = vld [vmem:[%s1 + $0x7f0] sm:$0xff]
  %v273 = vld [vmem:[%s1 + $0x7f8] sm:$0xff]
  %v274 = vld [vmem:[%s2] sm:$0xff]
  %v276 = vperm.slane %v274, 0
  %v277 = vperm.slane %v274, 1
  %v278 = vperm.slane %v274, 2
  %v279 = vperm.slane %v274, 3
  %v280 = vperm.slane %v274, 4
  %v281 = vperm.slane %v274, 5
  %v282 = vperm.slane %v274, 6
  %v283 = vperm.slane %v274, 7
  %v296 = vunpack.c.l.b16 %v14
  %v297 = vunpack.c.h.b16 %v14
  %v298 = vunpack.c.l.b16 %v15
  %v299 = vunpack.c.h.b16 %v15
  %v300 = vunpack.c.l.b16 %v16
  %v301 = vunpack.c.h.b16 %v16
  %v302 = vunpack.c.l.b16 %v17
  %v303 = vunpack.c.h.b16 %v17
  %v304 = vpack.c.b16 %v300, %v296
  %v305 = vpack.c.b16 %v301, %v297
  %v306 = vpack.c.b16 %v302, %v298
  %v307 = vpack.c.b16 %v303, %v299
  %v568 = vunpack.c.l.b16 %v18
  %v569 = vunpack.c.h.b16 %v18
  %v570 = vunpack.c.l.b16 %v19
  %v571 = vunpack.c.h.b16 %v19
  %v572 = vunpack.c.l.b16 %v20
  %v573 = vunpack.c.h.b16 %v20
  %v574 = vunpack.c.l.b16 %v21
  %v575 = vunpack.c.h.b16 %v21
  %v576 = vunpack.c.l.b16 %v22
  %v577 = vunpack.c.h.b16 %v22
  %v578 = vunpack.c.l.b16 %v23
  %v579 = vunpack.c.h.b16 %v23
  %v580 = vunpack.c.l.b16 %v24
  %v581 = vunpack.c.h.b16 %v24
  %v582 = vunpack.c.l.b16 %v25
  %v583 = vunpack.c.h.b16 %v25
  %v584 = vunpack.c.l.b16 %v26
  %v585 = vunpack.c.h.b16 %v26
  %v586 = vunpack.c.l.b16 %v27
  %v587 = vunpack.c.h.b16 %v27
  %v588 = vunpack.c.l.b16 %v28
  %v589 = vunpack.c.h.b16 %v28
  %v590 = vunpack.c.l.b16 %v29
  %v591 = vunpack.c.h.b16 %v29
  %v592 = vunpack.c.l.b16 %v30
  %v593 = vunpack.c.h.b16 %v30
  %v594 = vunpack.c.l.b16 %v31
  %v595 = vunpack.c.h.b16 %v31
  %v596 = vunpack.c.l.b16 %v32
  %v597 = vunpack.c.h.b16 %v32
  %v598 = vunpack.c.l.b16 %v33
  %v599 = vunpack.c.h.b16 %v33
  %v600 = vunpack.c.l.b16 %v34
  %v601 = vunpack.c.h.b16 %v34
  %v602 = vunpack.c.l.b16 %v35
  %v603 = vunpack.c.h.b16 %v35
  %v604 = vunpack.c.l.b16 %v36
  %v605 = vunpack.c.h.b16 %v36
  %v606 = vunpack.c.l.b16 %v37
  %v607 = vunpack.c.h.b16 %v37
  %v608 = vunpack.c.l.b16 %v38
  %v609 = vunpack.c.h.b16 %v38
  %v610 = vunpack.c.l.b16 %v39
  %v611 = vunpack.c.h.b16 %v39
  %v612 = vunpack.c.l.b16 %v40
  %v613 = vunpack.c.h.b16 %v40
  %v614 = vunpack.c.l.b16 %v41
  %v615 = vunpack.c.h.b16 %v41
  %v616 = vunpack.c.l.b16 %v42
  %v617 = vunpack.c.h.b16 %v42
  %v618 = vunpack.c.l.b16 %v43
  %v619 = vunpack.c.h.b16 %v43
  %v620 = vunpack.c.l.b16 %v44
  %v621 = vunpack.c.h.b16 %v44
  %v622 = vunpack.c.l.b16 %v45
  %v623 = vunpack.c.h.b16 %v45
  %v624 = vunpack.c.l.b16 %v46
  %v625 = vunpack.c.h.b16 %v46
  %v626 = vunpack.c.l.b16 %v47
  %v627 = vunpack.c.h.b16 %v47
  %v628 = vunpack.c.l.b16 %v48
  %v629 = vunpack.c.h.b16 %v48
  %v630 = vunpack.c.l.b16 %v49
  %v631 = vunpack.c.h.b16 %v49
  %v632 = vunpack.c.l.b16 %v50
  %v633 = vunpack.c.h.b16 %v50
  %v634 = vunpack.c.l.b16 %v51
  %v635 = vunpack.c.h.b16 %v51
  %v636 = vunpack.c.l.b16 %v52
  %v637 = vunpack.c.h.b16 %v52
  %v638 = vunpack.c.l.b16 %v53
  %v639 = vunpack.c.h.b16 %v53
  %v640 = vunpack.c.l.b16 %v54
  %v641 = vunpack.c.h.b16 %v54
  %v642 = vunpack.c.l.b16 %v55
  %v643 = vunpack.c.h.b16 %v55
  %v644 = vunpack.c.l.b16 %v56
  %v645 = vunpack.c.h.b16 %v56
  %v646 = vunpack.c.l.b16 %v57
  %v647 = vunpack.c.h.b16 %v57
  %v648 = vunpack.c.l.b16 %v58
  %v649 = vunpack.c.h.b16 %v58
  %v650 = vunpack.c.l.b16 %v59
  %v651 = vunpack.c.h.b16 %v59
  %v652 = vunpack.c.l.b16 %v60
  %v653 = vunpack.c.h.b16 %v60
  %v654 = vunpack.c.l.b16 %v61
  %v655 = vunpack.c.h.b16 %v61
  %v656 = vunpack.c.l.b16 %v62
  %v657 = vunpack.c.h.b16 %v62
  %v658 = vunpack.c.l.b16 %v63
  %v659 = vunpack.c.h.b16 %v63
  %v660 = vunpack.c.l.b16 %v64
  %v661 = vunpack.c.h.b16 %v64
  %v662 = vunpack.c.l.b16 %v65
  %v663 = vunpack.c.h.b16 %v65
  %v664 = vunpack.c.l.b16 %v66
  %v665 = vunpack.c.h.b16 %v66
  %v666 = vunpack.c.l.b16 %v67
  %v667 = vunpack.c.h.b16 %v67
  %v668 = vunpack.c.l.b16 %v68
  %v669 = vunpack.c.h.b16 %v68
  %v670 = vunpack.c.l.b16 %v69
  %v671 = vunpack.c.h.b16 %v69
  %v672 = vunpack.c.l.b16 %v70
  %v673 = vunpack.c.h.b16 %v70
  %v674 = vunpack.c.l.b16 %v71
  %v675 = vunpack.c.h.b16 %v71
  %v676 = vunpack.c.l.b16 %v72
  %v677 = vunpack.c.h.b16 %v72
  %v678 = vunpack.c.l.b16 %v73
  %v679 = vunpack.c.h.b16 %v73
  %v680 = vunpack.c.l.b16 %v74
  %v681 = vunpack.c.h.b16 %v74
  %v682 = vunpack.c.l.b16 %v75
  %v683 = vunpack.c.h.b16 %v75
  %v684 = vunpack.c.l.b16 %v76
  %v685 = vunpack.c.h.b16 %v76
  %v686 = vunpack.c.l.b16 %v77
  %v687 = vunpack.c.h.b16 %v77
  %v688 = vunpack.c.l.b16 %v78
  %v689 = vunpack.c.h.b16 %v78
  %v690 = vunpack.c.l.b16 %v79
  %v691 = vunpack.c.h.b16 %v79
  %v692 = vunpack.c.l.b16 %v80
  %v693 = vunpack.c.h.b16 %v80
  %v694 = vunpack.c.l.b16 %v81
  %v695 = vunpack.c.h.b16 %v81
  %v696 = vunpack.c.l.b16 %v82
  %v697 = vunpack.c.h.b16 %v82
  %v698 = vunpack.c.l.b16 %v83
  %v699 = vunpack.c.h.b16 %v83
  %v700 = vunpack.c.l.b16 %v84
  %v701 = vunpack.c.h.b16 %v84
  %v702 = vunpack.c.l.b16 %v85
  %v703 = vunpack.c.h.b16 %v85
  %v704 = vunpack.c.l.b16 %v86
  %v705 = vunpack.c.h.b16 %v86
  %v706 = vunpack.c.l.b16 %v87
  %v707 = vunpack.c.h.b16 %v87
  %v708 = vunpack.c.l.b16 %v88
  %v709 = vunpack.c.h.b16 %v88
  %v710 = vunpack.c.l.b16 %v89
  %v711 = vunpack.c.h.b16 %v89
  %v712 = vunpack.c.l.b16 %v90
  %v713 = vunpack.c.h.b16 %v90
  %v714 = vunpack.c.l.b16 %v91
  %v715 = vunpack.c.h.b16 %v91
  %v716 = vunpack.c.l.b16 %v92
  %v717 = vunpack.c.h.b16 %v92
  %v718 = vunpack.c.l.b16 %v93
  %v719 = vunpack.c.h.b16 %v93
  %v720 = vunpack.c.l.b16 %v94
  %v721 = vunpack.c.h.b16 %v94
  %v722 = vunpack.c.l.b16 %v95
  %v723 = vunpack.c.h.b16 %v95
  %v724 = vunpack.c.l.b16 %v96
  %v725 = vunpack.c.h.b16 %v96
  %v726 = vunpack.c.l.b16 %v97
  %v727 = vunpack.c.h.b16 %v97
  %v728 = vunpack.c.l.b16 %v98
  %v729 = vunpack.c.h.b16 %v98
  %v730 = vunpack.c.l.b16 %v99
  %v731 = vunpack.c.h.b16 %v99
  %v732 = vunpack.c.l.b16 %v100
  %v733 = vunpack.c.h.b16 %v100
  %v734 = vunpack.c.l.b16 %v101
  %v735 = vunpack.c.h.b16 %v101
  %v736 = vunpack.c.l.b16 %v102
  %v737 = vunpack.c.h.b16 %v102
  %v738 = vunpack.c.l.b16 %v103
  %v739 = vunpack.c.h.b16 %v103
  %v740 = vunpack.c.l.b16 %v104
  %v741 = vunpack.c.h.b16 %v104
  %v742 = vunpack.c.l.b16 %v105
  %v743 = vunpack.c.h.b16 %v105
  %v744 = vunpack.c.l.b16 %v106
  %v745 = vunpack.c.h.b16 %v106
  %v746 = vunpack.c.l.b16 %v107
  %v747 = vunpack.c.h.b16 %v107
  %v748 = vunpack.c.l.b16 %v108
  %v749 = vunpack.c.h.b16 %v108
  %v750 = vunpack.c.l.b16 %v109
  %v751 = vunpack.c.h.b16 %v109
  %v752 = vunpack.c.l.b16 %v110
  %v753 = vunpack.c.h.b16 %v110
  %v754 = vunpack.c.l.b16 %v111
  %v755 = vunpack.c.h.b16 %v111
  %v756 = vunpack.c.l.b16 %v112
  %v757 = vunpack.c.h.b16 %v112
  %v758 = vunpack.c.l.b16 %v113
  %v759 = vunpack.c.h.b16 %v113
  %v760 = vunpack.c.l.b16 %v114
  %v761 = vunpack.c.h.b16 %v114
  %v762 = vunpack.c.l.b16 %v115
  %v763 = vunpack.c.h.b16 %v115
  %v764 = vunpack.c.l.b16 %v116
  %v765 = vunpack.c.h.b16 %v116
  %v766 = vunpack.c.l.b16 %v117
  %v767 = vunpack.c.h.b16 %v117
  %v768 = vunpack.c.l.b16 %v118
  %v769 = vunpack.c.h.b16 %v118
  %v770 = vunpack.c.l.b16 %v119
  %v771 = vunpack.c.h.b16 %v119
  %v772 = vunpack.c.l.b16 %v120
  %v773 = vunpack.c.h.b16 %v120
  %v774 = vunpack.c.l.b16 %v121
  %v775 = vunpack.c.h.b16 %v121
  %v776 = vunpack.c.l.b16 %v122
  %v777 = vunpack.c.h.b16 %v122
  %v778 = vunpack.c.l.b16 %v123
  %v779 = vunpack.c.h.b16 %v123
  %v780 = vunpack.c.l.b16 %v124
  %v781 = vunpack.c.h.b16 %v124
  %v782 = vunpack.c.l.b16 %v125
  %v783 = vunpack.c.h.b16 %v125
  %v784 = vunpack.c.l.b16 %v126
  %v785 = vunpack.c.h.b16 %v126
  %v786 = vunpack.c.l.b16 %v127
  %v787 = vunpack.c.h.b16 %v127
  %v788 = vunpack.c.l.b16 %v128
  %v789 = vunpack.c.h.b16 %v128
  %v790 = vunpack.c.l.b16 %v129
  %v791 = vunpack.c.h.b16 %v129
  %v792 = vunpack.c.l.b16 %v130
  %v793 = vunpack.c.h.b16 %v130
  %v794 = vunpack.c.l.b16 %v131
  %v795 = vunpack.c.h.b16 %v131
  %v796 = vunpack.c.l.b16 %v132
  %v797 = vunpack.c.h.b16 %v132
  %v798 = vunpack.c.l.b16 %v133
  %v799 = vunpack.c.h.b16 %v133
  %v800 = vunpack.c.l.b16 %v134
  %v801 = vunpack.c.h.b16 %v134
  %v802 = vunpack.c.l.b16 %v135
  %v803 = vunpack.c.h.b16 %v135
  %v804 = vunpack.c.l.b16 %v136
  %v805 = vunpack.c.h.b16 %v136
  %v806 = vunpack.c.l.b16 %v137
  %v807 = vunpack.c.h.b16 %v137
  %v808 = vunpack.c.l.b16 %v138
  %v809 = vunpack.c.h.b16 %v138
  %v810 = vunpack.c.l.b16 %v139
  %v811 = vunpack.c.h.b16 %v139
  %v812 = vunpack.c.l.b16 %v140
  %v813 = vunpack.c.h.b16 %v140
  %v814 = vunpack.c.l.b16 %v141
  %v815 = vunpack.c.h.b16 %v141
  %v816 = vunpack.c.l.b16 %v142
  %v817 = vunpack.c.h.b16 %v142
  %v818 = vunpack.c.l.b16 %v143
  %v819 = vunpack.c.h.b16 %v143
  %v820 = vunpack.c.l.b16 %v144
  %v821 = vunpack.c.h.b16 %v144
  %v822 = vunpack.c.l.b16 %v145
  %v823 = vunpack.c.h.b16 %v145
  %v824 = vunpack.c.l.b16 %v146
  %v825 = vunpack.c.h.b16 %v146
  %v826 = vunpack.c.l.b16 %v147
  %v827 = vunpack.c.h.b16 %v147
  %v828 = vunpack.c.l.b16 %v148
  %v829 = vunpack.c.h.b16 %v148
  %v830 = vunpack.c.l.b16 %v149
  %v831 = vunpack.c.h.b16 %v149
  %v832 = vunpack.c.l.b16 %v150
  %v833 = vunpack.c.h.b16 %v150
  %v834 = vunpack.c.l.b16 %v151
  %v835 = vunpack.c.h.b16 %v151
  %v836 = vunpack.c.l.b16 %v152
  %v837 = vunpack.c.h.b16 %v152
  %v838 = vunpack.c.l.b16 %v153
  %v839 = vunpack.c.h.b16 %v153
  %v840 = vunpack.c.l.b16 %v154
  %v841 = vunpack.c.h.b16 %v154
  %v842 = vunpack.c.l.b16 %v155
  %v843 = vunpack.c.h.b16 %v155
  %v844 = vunpack.c.l.b16 %v156
  %v845 = vunpack.c.h.b16 %v156
  %v846 = vunpack.c.l.b16 %v157
  %v847 = vunpack.c.h.b16 %v157
  %v848 = vunpack.c.l.b16 %v158
  %v849 = vunpack.c.h.b16 %v158
  %v850 = vunpack.c.l.b16 %v159
  %v851 = vunpack.c.h.b16 %v159
  %v852 = vunpack.c.l.b16 %v160
  %v853 = vunpack.c.h.b16 %v160
  %v854 = vunpack.c.l.b16 %v161
  %v855 = vunpack.c.h.b16 %v161
  %v856 = vunpack.c.l.b16 %v162
  %v857 = vunpack.c.h.b16 %v162
  %v858 = vunpack.c.l.b16 %v163
  %v859 = vunpack.c.h.b16 %v163
  %v860 = vunpack.c.l.b16 %v164
  %v861 = vunpack.c.h.b16 %v164
  %v862 = vunpack.c.l.b16 %v165
  %v863 = vunpack.c.h.b16 %v165
  %v864 = vunpack.c.l.b16 %v166
  %v865 = vunpack.c.h.b16 %v166
  %v866 = vunpack.c.l.b16 %v167
  %v867 = vunpack.c.h.b16 %v167
  %v868 = vunpack.c.l.b16 %v168
  %v869 = vunpack.c.h.b16 %v168
  %v870 = vunpack.c.l.b16 %v169
  %v871 = vunpack.c.h.b16 %v169
  %v872 = vunpack.c.l.b16 %v170
  %v873 = vunpack.c.h.b16 %v170
  %v874 = vunpack.c.l.b16 %v171
  %v875 = vunpack.c.h.b16 %v171
  %v876 = vunpack.c.l.b16 %v172
  %v877 = vunpack.c.h.b16 %v172
  %v878 = vunpack.c.l.b16 %v173
  %v879 = vunpack.c.h.b16 %v173
  %v880 = vunpack.c.l.b16 %v174
  %v881 = vunpack.c.h.b16 %v174
  %v882 = vunpack.c.l.b16 %v175
  %v883 = vunpack.c.h.b16 %v175
  %v884 = vunpack.c.l.b16 %v176
  %v885 = vunpack.c.h.b16 %v176
  %v886 = vunpack.c.l.b16 %v177
  %v887 = vunpack.c.h.b16 %v177
  %v888 = vunpack.c.l.b16 %v178
  %v889 = vunpack.c.h.b16 %v178
  %v890 = vunpack.c.l.b16 %v179
  %v891 = vunpack.c.h.b16 %v179
  %v892 = vunpack.c.l.b16 %v180
  %v893 = vunpack.c.h.b16 %v180
  %v894 = vunpack.c.l.b16 %v181
  %v895 = vunpack.c.h.b16 %v181
  %v896 = vunpack.c.l.b16 %v182
  %v897 = vunpack.c.h.b16 %v182
  %v898 = vunpack.c.l.b16 %v183
  %v899 = vunpack.c.h.b16 %v183
  %v900 = vunpack.c.l.b16 %v184
  %v901 = vunpack.c.h.b16 %v184
  %v902 = vunpack.c.l.b16 %v185
  %v903 = vunpack.c.h.b16 %v185
  %v904 = vunpack.c.l.b16 %v186
  %v905 = vunpack.c.h.b16 %v186
  %v906 = vunpack.c.l.b16 %v187
  %v907 = vunpack.c.h.b16 %v187
  %v908 = vunpack.c.l.b16 %v188
  %v909 = vunpack.c.h.b16 %v188
  %v910 = vunpack.c.l.b16 %v189
  %v911 = vunpack.c.h.b16 %v189
  %v912 = vunpack.c.l.b16 %v190
  %v913 = vunpack.c.h.b16 %v190
  %v914 = vunpack.c.l.b16 %v191
  %v915 = vunpack.c.h.b16 %v191
  %v916 = vunpack.c.l.b16 %v192
  %v917 = vunpack.c.h.b16 %v192
  %v918 = vunpack.c.l.b16 %v193
  %v919 = vunpack.c.h.b16 %v193
  %v920 = vunpack.c.l.b16 %v194
  %v921 = vunpack.c.h.b16 %v194
  %v922 = vunpack.c.l.b16 %v195
  %v923 = vunpack.c.h.b16 %v195
  %v924 = vunpack.c.l.b16 %v196
  %v925 = vunpack.c.h.b16 %v196
  %v926 = vunpack.c.l.b16 %v197
  %v927 = vunpack.c.h.b16 %v197
  %v928 = vunpack.c.l.b16 %v198
  %v929 = vunpack.c.h.b16 %v198
  %v930 = vunpack.c.l.b16 %v199
  %v931 = vunpack.c.h.b16 %v199
  %v932 = vunpack.c.l.b16 %v200
  %v933 = vunpack.c.h.b16 %v200
  %v934 = vunpack.c.l.b16 %v201
  %v935 = vunpack.c.h.b16 %v201
  %v936 = vunpack.c.l.b16 %v202
  %v937 = vunpack.c.h.b16 %v202
  %v938 = vunpack.c.l.b16 %v203
  %v939 = vunpack.c.h.b16 %v203
  %v940 = vunpack.c.l.b16 %v204
  %v941 = vunpack.c.h.b16 %v204
  %v942 = vunpack.c.l.b16 %v205
  %v943 = vunpack.c.h.b16 %v205
  %v944 = vunpack.c.l.b16 %v206
  %v945 = vunpack.c.h.b16 %v206
  %v946 = vunpack.c.l.b16 %v207
  %v947 = vunpack.c.h.b16 %v207
  %v948 = vunpack.c.l.b16 %v208
  %v949 = vunpack.c.h.b16 %v208
  %v950 = vunpack.c.l.b16 %v209
  %v951 = vunpack.c.h.b16 %v209
  %v952 = vunpack.c.l.b16 %v210
  %v953 = vunpack.c.h.b16 %v210
  %v954 = vunpack.c.l.b16 %v211
  %v955 = vunpack.c.h.b16 %v211
  %v956 = vunpack.c.l.b16 %v212
  %v957 = vunpack.c.h.b16 %v212
  %v958 = vunpack.c.l.b16 %v213
  %v959 = vunpack.c.h.b16 %v213
  %v960 = vunpack.c.l.b16 %v214
  %v961 = vunpack.c.h.b16 %v214
  %v962 = vunpack.c.l.b16 %v215
  %v963 = vunpack.c.h.b16 %v215
  %v964 = vunpack.c.l.b16 %v216
  %v965 = vunpack.c.h.b16 %v216
  %v966 = vunpack.c.l.b16 %v217
  %v967 = vunpack.c.h.b16 %v217
  %v968 = vunpack.c.l.b16 %v218
  %v969 = vunpack.c.h.b16 %v218
  %v970 = vunpack.c.l.b16 %v219
  %v971 = vunpack.c.h.b16 %v219
  %v972 = vunpack.c.l.b16 %v220
  %v973 = vunpack.c.h.b16 %v220
  %v974 = vunpack.c.l.b16 %v221
  %v975 = vunpack.c.h.b16 %v221
  %v976 = vunpack.c.l.b16 %v222
  %v977 = vunpack.c.h.b16 %v222
  %v978 = vunpack.c.l.b16 %v223
  %v979 = vunpack.c.h.b16 %v223
  %v980 = vunpack.c.l.b16 %v224
  %v981 = vunpack.c.h.b16 %v224
  %v982 = vunpack.c.l.b16 %v225
  %v983 = vunpack.c.h.b16 %v225
  %v984 = vunpack.c.l.b16 %v226
  %v985 = vunpack.c.h.b16 %v226
  %v986 = vunpack.c.l.b16 %v227
  %v987 = vunpack.c.h.b16 %v227
  %v988 = vunpack.c.l.b16 %v228
  %v989 = vunpack.c.h.b16 %v228
  %v990 = vunpack.c.l.b16 %v229
  %v991 = vunpack.c.h.b16 %v229
  %v992 = vunpack.c.l.b16 %v230
  %v993 = vunpack.c.h.b16 %v230
  %v994 = vunpack.c.l.b16 %v231
  %v995 = vunpack.c.h.b16 %v231
  %v996 = vunpack.c.l.b16 %v232
  %v997 = vunpack.c.h.b16 %v232
  %v998 = vunpack.c.l.b16 %v233
  %v999 = vunpack.c.h.b16 %v233
  %v1000 = vunpack.c.l.b16 %v234
  %v1001 = vunpack.c.h.b16 %v234
  %v1002 = vunpack.c.l.b16 %v235
  %v1003 = vunpack.c.h.b16 %v235
  %v1004 = vunpack.c.l.b16 %v236
  %v1005 = vunpack.c.h.b16 %v236
  %v1006 = vunpack.c.l.b16 %v237
  %v1007 = vunpack.c.h.b16 %v237
  %v1008 = vunpack.c.l.b16 %v238
  %v1009 = vunpack.c.h.b16 %v238
  %v1010 = vunpack.c.l.b16 %v239
  %v1011 = vunpack.c.h.b16 %v239
  %v1012 = vunpack.c.l.b16 %v240
  %v1013 = vunpack.c.h.b16 %v240
  %v1014 = vunpack.c.l.b16 %v241
  %v1015 = vunpack.c.h.b16 %v241
  %v1016 = vunpack.c.l.b16 %v242
  %v1017 = vunpack.c.h.b16 %v242
  %v1018 = vunpack.c.l.b16 %v243
  %v1019 = vunpack.c.h.b16 %v243
  %v1020 = vunpack.c.l.b16 %v244
  %v1021 = vunpack.c.h.b16 %v244
  %v1022 = vunpack.c.l.b16 %v245
  %v1023 = vunpack.c.h.b16 %v245
  %v1024 = vunpack.c.l.b16 %v246
  %v1025 = vunpack.c.h.b16 %v246
  %v1026 = vunpack.c.l.b16 %v247
  %v1027 = vunpack.c.h.b16 %v247
  %v1028 = vunpack.c.l.b16 %v248
  %v1029 = vunpack.c.h.b16 %v248
  %v1030 = vunpack.c.l.b16 %v249
  %v1031 = vunpack.c.h.b16 %v249
  %v1032 = vunpack.c.l.b16 %v250
  %v1033 = vunpack.c.h.b16 %v250
  %v1034 = vunpack.c.l.b16 %v251
  %v1035 = vunpack.c.h.b16 %v251
  %v1036 = vunpack.c.l.b16 %v252
  %v1037 = vunpack.c.h.b16 %v252
  %v1038 = vunpack.c.l.b16 %v253
  %v1039 = vunpack.c.h.b16 %v253
  %v1040 = vunpack.c.l.b16 %v254
  %v1041 = vunpack.c.h.b16 %v254
  %v1042 = vunpack.c.l.b16 %v255
  %v1043 = vunpack.c.h.b16 %v255
  %v1044 = vunpack.c.l.b16 %v256
  %v1045 = vunpack.c.h.b16 %v256
  %v1046 = vunpack.c.l.b16 %v257
  %v1047 = vunpack.c.h.b16 %v257
  %v1048 = vunpack.c.l.b16 %v258
  %v1049 = vunpack.c.h.b16 %v258
  %v1050 = vunpack.c.l.b16 %v259
  %v1051 = vunpack.c.h.b16 %v259
  %v1052 = vunpack.c.l.b16 %v260
  %v1053 = vunpack.c.h.b16 %v260
  %v1054 = vunpack.c.l.b16 %v261
  %v1055 = vunpack.c.h.b16 %v261
  %v1056 = vunpack.c.l.b16 %v262
  %v1057 = vunpack.c.h.b16 %v262
  %v1058 = vunpack.c.l.b16 %v263
  %v1059 = vunpack.c.h.b16 %v263
  %v1060 = vunpack.c.l.b16 %v264
  %v1061 = vunpack.c.h.b16 %v264
  %v1062 = vunpack.c.l.b16 %v265
  %v1063 = vunpack.c.h.b16 %v265
  %v1064 = vunpack.c.l.b16 %v266
  %v1065 = vunpack.c.h.b16 %v266
  %v1066 = vunpack.c.l.b16 %v267
  %v1067 = vunpack.c.h.b16 %v267
  %v1068 = vunpack.c.l.b16 %v268
  %v1069 = vunpack.c.h.b16 %v268
  %v1070 = vunpack.c.l.b16 %v269
  %v1071 = vunpack.c.h.b16 %v269
  %v1072 = vunpack.c.l.b16 %v270
  %v1073 = vunpack.c.h.b16 %v270
  %v1074 = vunpack.c.l.b16 %v271
  %v1075 = vunpack.c.h.b16 %v271
  %v1076 = vunpack.c.l.b16 %v272
  %v1077 = vunpack.c.h.b16 %v272
  %v1078 = vunpack.c.l.b16 %v273
  %v1079 = vunpack.c.h.b16 %v273
  %v1080 = vpack.c.b16 %v576, %v568
  %v1081 = vpack.c.b16 %v577, %v569
  %v1082 = vpack.c.b16 %v578, %v570
  %v1083 = vpack.c.b16 %v579, %v571
  %v1084 = vpack.c.b16 %v580, %v572
  %v1085 = vpack.c.b16 %v581, %v573
  %v1086 = vpack.c.b16 %v582, %v574
  %v1087 = vpack.c.b16 %v583, %v575
  %v1088 = vpack.c.b16 %v592, %v584
  %v1089 = vpack.c.b16 %v593, %v585
  %v1090 = vpack.c.b16 %v594, %v586
  %v1091 = vpack.c.b16 %v595, %v587
  %v1092 = vpack.c.b16 %v596, %v588
  %v1093 = vpack.c.b16 %v597, %v589
  %v1094 = vpack.c.b16 %v598, %v590
  %v1095 = vpack.c.b16 %v599, %v591
  %v1096 = vpack.c.b16 %v608, %v600
  %v1097 = vpack.c.b16 %v609, %v601
  %v1098 = vpack.c.b16 %v610, %v602
  %v1099 = vpack.c.b16 %v611, %v603
  %v1100 = vpack.c.b16 %v612, %v604
  %v1101 = vpack.c.b16 %v613, %v605
  %v1102 = vpack.c.b16 %v614, %v606
  %v1103 = vpack.c.b16 %v615, %v607
  %v1104 = vpack.c.b16 %v624, %v616
  %v1105 = vpack.c.b16 %v625, %v617
  %v1106 = vpack.c.b16 %v626, %v618
  %v1107 = vpack.c.b16 %v627, %v619
  %v1108 = vpack.c.b16 %v628, %v620
  %v1109 = vpack.c.b16 %v629, %v621
  %v1110 = vpack.c.b16 %v630, %v622
  %v1111 = vpack.c.b16 %v631, %v623
  %v1112 = vpack.c.b16 %v640, %v632
  %v1113 = vpack.c.b16 %v641, %v633
  %v1114 = vpack.c.b16 %v642, %v634
  %v1115 = vpack.c.b16 %v643, %v635
  %v1116 = vpack.c.b16 %v644, %v636
  %v1117 = vpack.c.b16 %v645, %v637
  %v1118 = vpack.c.b16 %v646, %v638
  %v1119 = vpack.c.b16 %v647, %v639
  %v1120 = vpack.c.b16 %v656, %v648
  %v1121 = vpack.c.b16 %v657, %v649
  %v1122 = vpack.c.b16 %v658, %v650
  %v1123 = vpack.c.b16 %v659, %v651
  %v1124 = vpack.c.b16 %v660, %v652
  %v1125 = vpack.c.b16 %v661, %v653
  %v1126 = vpack.c.b16 %v662, %v654
  %v1127 = vpack.c.b16 %v663, %v655
  %v1128 = vpack.c.b16 %v672, %v664
  %v1129 = vpack.c.b16 %v673, %v665
  %v1130 = vpack.c.b16 %v674, %v666
  %v1131 = vpack.c.b16 %v675, %v667
  %v1132 = vpack.c.b16 %v676, %v668
  %v1133 = vpack.c.b16 %v677, %v669
  %v1134 = vpack.c.b16 %v678, %v670
  %v1135 = vpack.c.b16 %v679, %v671
  %v1136 = vpack.c.b16 %v688, %v680
  %v1137 = vpack.c.b16 %v689, %v681
  %v1138 = vpack.c.b16 %v690, %v682
  %v1139 = vpack.c.b16 %v691, %v683
  %v1140 = vpack.c.b16 %v692, %v684
  %v1141 = vpack.c.b16 %v693, %v685
  %v1142 = vpack.c.b16 %v694, %v686
  %v1143 = vpack.c.b16 %v695, %v687
  %v1144 = vpack.c.b16 %v704, %v696
  %v1145 = vpack.c.b16 %v705, %v697
  %v1146 = vpack.c.b16 %v706, %v698
  %v1147 = vpack.c.b16 %v707, %v699
  %v1148 = vpack.c.b16 %v708, %v700
  %v1149 = vpack.c.b16 %v709, %v701
  %v1150 = vpack.c.b16 %v710, %v702
  %v1151 = vpack.c.b16 %v711, %v703
  %v1152 = vpack.c.b16 %v720, %v712
  %v1153 = vpack.c.b16 %v721, %v713
  %v1154 = vpack.c.b16 %v722, %v714
  %v1155 = vpack.c.b16 %v723, %v715
  %v1156 = vpack.c.b16 %v724, %v716
  %v1157 = vpack.c.b16 %v725, %v717
  %v1158 = vpack.c.b16 %v726, %v718
  %v1159 = vpack.c.b16 %v727, %v719
  %v1160 = vpack.c.b16 %v736, %v728
  %v1161 = vpack.c.b16 %v737, %v729
  %v1162 = vpack.c.b16 %v738, %v730
  %v1163 = vpack.c.b16 %v739, %v731
  %v1164 = vpack.c.b16 %v740, %v732
  %v1165 = vpack.c.b16 %v741, %v733
  %v1166 = vpack.c.b16 %v742, %v734
  %v1167 = vpack.c.b16 %v743, %v735
  %v1168 = vpack.c.b16 %v752, %v744
  %v1169 = vpack.c.b16 %v753, %v745
  %v1170 = vpack.c.b16 %v754, %v746
  %v1171 = vpack.c.b16 %v755, %v747
  %v1172 = vpack.c.b16 %v756, %v748
  %v1173 = vpack.c.b16 %v757, %v749
  %v1174 = vpack.c.b16 %v758, %v750
  %v1175 = vpack.c.b16 %v759, %v751
  %v1176 = vpack.c.b16 %v768, %v760
  %v1177 = vpack.c.b16 %v769, %v761
  %v1178 = vpack.c.b16 %v770, %v762
  %v1179 = vpack.c.b16 %v771, %v763
  %v1180 = vpack.c.b16 %v772, %v764
  %v1181 = vpack.c.b16 %v773, %v765
  %v1182 = vpack.c.b16 %v774, %v766
  %v1183 = vpack.c.b16 %v775, %v767
  %v1184 = vpack.c.b16 %v784, %v776
  %v1185 = vpack.c.b16 %v785, %v777
  %v1186 = vpack.c.b16 %v786, %v778
  %v1187 = vpack.c.b16 %v787, %v779
  %v1188 = vpack.c.b16 %v788, %v780
  %v1189 = vpack.c.b16 %v789, %v781
  %v1190 = vpack.c.b16 %v790, %v782
  %v1191 = vpack.c.b16 %v791, %v783
  %v1192 = vpack.c.b16 %v800, %v792
  %v1193 = vpack.c.b16 %v801, %v793
  %v1194 = vpack.c.b16 %v802, %v794
  %v1195 = vpack.c.b16 %v803, %v795
  %v1196 = vpack.c.b16 %v804, %v796
  %v1197 = vpack.c.b16 %v805, %v797
  %v1198 = vpack.c.b16 %v806, %v798
  %v1199 = vpack.c.b16 %v807, %v799
  %v1200 = vpack.c.b16 %v816, %v808
  %v1201 = vpack.c.b16 %v817, %v809
  %v1202 = vpack.c.b16 %v818, %v810
  %v1203 = vpack.c.b16 %v819, %v811
  %v1204 = vpack.c.b16 %v820, %v812
  %v1205 = vpack.c.b16 %v821, %v813
  %v1206 = vpack.c.b16 %v822, %v814
  %v1207 = vpack.c.b16 %v823, %v815
  %v1208 = vpack.c.b16 %v832, %v824
  %v1209 = vpack.c.b16 %v833, %v825
  %v1210 = vpack.c.b16 %v834, %v826
  %v1211 = vpack.c.b16 %v835, %v827
  %v1212 = vpack.c.b16 %v836, %v828
  %v1213 = vpack.c.b16 %v837, %v829
  %v1214 = vpack.c.b16 %v838, %v830
  %v1215 = vpack.c.b16 %v839, %v831
  %v1216 = vpack.c.b16 %v848, %v840
  %v1217 = vpack.c.b16 %v849, %v841
  %v1218 = vpack.c.b16 %v850, %v842
  %v1219 = vpack.c.b16 %v851, %v843
  %v1220 = vpack.c.b16 %v852, %v844
  %v1221 = vpack.c.b16 %v853, %v845
  %v1222 = vpack.c.b16 %v854, %v846
  %v1223 = vpack.c.b16 %v855, %v847
  %v1224 = vpack.c.b16 %v864, %v856
  %v1225 = vpack.c.b16 %v865, %v857
  %v1226 = vpack.c.b16 %v866, %v858
  %v1227 = vpack.c.b16 %v867, %v859
  %v1228 = vpack.c.b16 %v868, %v860
  %v1229 = vpack.c.b16 %v869, %v861
  %v1230 = vpack.c.b16 %v870, %v862
  %v1231 = vpack.c.b16 %v871, %v863
  %v1232 = vpack.c.b16 %v880, %v872
  %v1233 = vpack.c.b16 %v881, %v873
  %v1234 = vpack.c.b16 %v882, %v874
  %v1235 = vpack.c.b16 %v883, %v875
  %v1236 = vpack.c.b16 %v884, %v876
  %v1237 = vpack.c.b16 %v885, %v877
  %v1238 = vpack.c.b16 %v886, %v878
  %v1239 = vpack.c.b16 %v887, %v879
  %v1240 = vpack.c.b16 %v896, %v888
  %v1241 = vpack.c.b16 %v897, %v889
  %v1242 = vpack.c.b16 %v898, %v890
  %v1243 = vpack.c.b16 %v899, %v891
  %v1244 = vpack.c.b16 %v900, %v892
  %v1245 = vpack.c.b16 %v901, %v893
  %v1246 = vpack.c.b16 %v902, %v894
  %v1247 = vpack.c.b16 %v903, %v895
  %v1248 = vpack.c.b16 %v912, %v904
  %v1249 = vpack.c.b16 %v913, %v905
  %v1250 = vpack.c.b16 %v914, %v906
  %v1251 = vpack.c.b16 %v915, %v907
  %v1252 = vpack.c.b16 %v916, %v908
  %v1253 = vpack.c.b16 %v917, %v909
  %v1254 = vpack.c.b16 %v918, %v910
  %v1255 = vpack.c.b16 %v919, %v911
  %v1256 = vpack.c.b16 %v928, %v920
  %v1257 = vpack.c.b16 %v929, %v921
  %v1258 = vpack.c.b16 %v930, %v922
  %v1259 = vpack.c.b16 %v931, %v923
  %v1260 = vpack.c.b16 %v932, %v924
  %v1261 = vpack.c.b16 %v933, %v925
  %v1262 = vpack.c.b16 %v934, %v926
  %v1263 = vpack.c.b16 %v935, %v927
  %v1264 = vpack.c.b16 %v944, %v936
  %v1265 = vpack.c.b16 %v945, %v937
  %v1266 = vpack.c.b16 %v946, %v938
  %v1267 = vpack.c.b16 %v947, %v939
  %v1268 = vpack.c.b16 %v948, %v940
  %v1269 = vpack.c.b16 %v949, %v941
  %v1270 = vpack.c.b16 %v950, %v942
  %v1271 = vpack.c.b16 %v951, %v943
  %v1272 = vpack.c.b16 %v960, %v952
  %v1273 = vpack.c.b16 %v961, %v953
  %v1274 = vpack.c.b16 %v962, %v954
  %v1275 = vpack.c.b16 %v963, %v955
  %v1276 = vpack.c.b16 %v964, %v956
  %v1277 = vpack.c.b16 %v965, %v957
  %v1278 = vpack.c.b16 %v966, %v958
  %v1279 = vpack.c.b16 %v967, %v959
  %v1280 = vpack.c.b16 %v976, %v968
  %v1281 = vpack.c.b16 %v977, %v969
  %v1282 = vpack.c.b16 %v978, %v970
  %v1283 = vpack.c.b16 %v979, %v971
  %v1284 = vpack.c.b16 %v980, %v972
  %v1285 = vpack.c.b16 %v981, %v973
  %v1286 = vpack.c.b16 %v982, %v974
  %v1287 = vpack.c.b16 %v983, %v975
  %v1288 = vpack.c.b16 %v992, %v984
  %v1289 = vpack.c.b16 %v993, %v985
  %v1290 = vpack.c.b16 %v994, %v986
  %v1291 = vpack.c.b16 %v995, %v987
  %v1292 = vpack.c.b16 %v996, %v988
  %v1293 = vpack.c.b16 %v997, %v989
  %v1294 = vpack.c.b16 %v998, %v990
  %v1295 = vpack.c.b16 %v999, %v991
  %v1296 = vpack.c.b16 %v1008, %v1000
  %v1297 = vpack.c.b16 %v1009, %v1001
  %v1298 = vpack.c.b16 %v1010, %v1002
  %v1299 = vpack.c.b16 %v1011, %v1003
  %v1300 = vpack.c.b16 %v1012, %v1004
  %v1301 = vpack.c.b16 %v1013, %v1005
  %v1302 = vpack.c.b16 %v1014, %v1006
  %v1303 = vpack.c.b16 %v1015, %v1007
  %v1304 = vpack.c.b16 %v1024, %v1016
  %v1305 = vpack.c.b16 %v1025, %v1017
  %v1306 = vpack.c.b16 %v1026, %v1018
  %v1307 = vpack.c.b16 %v1027, %v1019
  %v1308 = vpack.c.b16 %v1028, %v1020
  %v1309 = vpack.c.b16 %v1029, %v1021
  %v1310 = vpack.c.b16 %v1030, %v1022
  %v1311 = vpack.c.b16 %v1031, %v1023
  %v1312 = vpack.c.b16 %v1040, %v1032
  %v1313 = vpack.c.b16 %v1041, %v1033
  %v1314 = vpack.c.b16 %v1042, %v1034
  %v1315 = vpack.c.b16 %v1043, %v1035
  %v1316 = vpack.c.b16 %v1044, %v1036
  %v1317 = vpack.c.b16 %v1045, %v1037
  %v1318 = vpack.c.b16 %v1046, %v1038
  %v1319 = vpack.c.b16 %v1047, %v1039
  %v1320 = vpack.c.b16 %v1056, %v1048
  %v1321 = vpack.c.b16 %v1057, %v1049
  %v1322 = vpack.c.b16 %v1058, %v1050
  %v1323 = vpack.c.b16 %v1059, %v1051
  %v1324 = vpack.c.b16 %v1060, %v1052
  %v1325 = vpack.c.b16 %v1061, %v1053
  %v1326 = vpack.c.b16 %v1062, %v1054
  %v1327 = vpack.c.b16 %v1063, %v1055
  %v1328 = vpack.c.b16 %v1072, %v1064
  %v1329 = vpack.c.b16 %v1073, %v1065
  %v1330 = vpack.c.b16 %v1074, %v1066
  %v1331 = vpack.c.b16 %v1075, %v1067
  %v1332 = vpack.c.b16 %v1076, %v1068
  %v1333 = vpack.c.b16 %v1077, %v1069
  %v1334 = vpack.c.b16 %v1078, %v1070
  %v1335 = vpack.c.b16 %v1079, %v1071
  %1592 = vmatpush.bf16.msra.mxu0 %v1136
  %1593 = vmatpush.bf16.msra.mxu0 %v1128
  %1594 = vmatpush.bf16.msra.mxu0 %v1120
  %1595 = vmatpush.bf16.msra.mxu0 %v1112
  %1596 = vmatpush.bf16.msra.mxu0 %v1104
  %1597 = vmatpush.bf16.msra.mxu0 %v1096
  %1598 = vmatpush.bf16.msra.mxu0 %v1088
  %1599 = vmatpush.bf16.msra.mxu0 %v1080
  %1600 = vmatmul.bf16.gmra.mxu0 %v304
  %v1601 = vpop.f32.mrf.mxu0
  %v1602 = vadd.f32 %v276, %v1601
  %v1603 = vpop.f32.mrf.mxu0
  %v1604 = vadd.f32 %v276, %v1603
  %1605 = vdwg.mxu0
  %1606 = vmatpush.bf16.msra.mxu0 %v1200
  %1607 = vmatpush.bf16.msra.mxu0 %v1192
  %1608 = vmatpush.bf16.msra.mxu0 %v1184
  %1609 = vmatpush.bf16.msra.mxu0 %v1176
  %1610 = vmatpush.bf16.msra.mxu0 %v1168
  %1611 = vmatpush.bf16.msra.mxu0 %v1160
  %1612 = vmatpush.bf16.msra.mxu0 %v1152
  %1613 = vmatpush.bf16.msra.mxu0 %v1144
  %1614 = vmatmul.bf16.gmra.mxu0 %v305
  %v1615 = vpop.f32.mrf.mxu0
  %v1616 = vadd.f32 %v1602, %v1615
  %v1617 = vpop.f32.mrf.mxu0
  %v1618 = vadd.f32 %v1604, %v1617
  %1619 = vdwg.mxu0
  %1620 = vmatpush.bf16.msra.mxu0 %v1264
  %1621 = vmatpush.bf16.msra.mxu0 %v1256
  %1622 = vmatpush.bf16.msra.mxu0 %v1248
  %1623 = vmatpush.bf16.msra.mxu0 %v1240
  %1624 = vmatpush.bf16.msra.mxu0 %v1232
  %1625 = vmatpush.bf16.msra.mxu0 %v1224
  %1626 = vmatpush.bf16.msra.mxu0 %v1216
  %1627 = vmatpush.bf16.msra.mxu0 %v1208
  %1628 = vmatmul.bf16.gmra.mxu0 %v306
  %v1629 = vpop.f32.mrf.mxu0
  %v1630 = vadd.f32 %v1616, %v1629
  %v1631 = vpop.f32.mrf.mxu0
  %v1632 = vadd.f32 %v1618, %v1631
  %1633 = vdwg.mxu0
  %1634 = vmatpush.bf16.msra.mxu0 %v1328
  %1635 = vmatpush.bf16.msra.mxu0 %v1320
  %1636 = vmatpush.bf16.msra.mxu0 %v1312
  %1637 = vmatpush.bf16.msra.mxu0 %v1304
  %1638 = vmatpush.bf16.msra.mxu0 %v1296
  %1639 = vmatpush.bf16.msra.mxu0 %v1288
  %1640 = vmatpush.bf16.msra.mxu0 %v1280
  %1641 = vmatpush.bf16.msra.mxu0 %v1272
  %1642 = vmatmul.bf16.gmra.mxu0 %v307
  %v1643 = vpop.f32.mrf.mxu0
  %v1644 = vadd.f32 %v1630, %v1643
  %v1645 = vpop.f32.mrf.mxu0
  %v1646 = vadd.f32 %v1632, %v1645
  %1647 = vdwg.mxu0
  %1648 = vmatpush.bf16.msra.mxu0 %v1137
  %1649 = vmatpush.bf16.msra.mxu0 %v1129
  %1650 = vmatpush.bf16.msra.mxu0 %v1121
  %1651 = vmatpush.bf16.msra.mxu0 %v1113
  %1652 = vmatpush.bf16.msra.mxu0 %v1105
  %1653 = vmatpush.bf16.msra.mxu0 %v1097
  %1654 = vmatpush.bf16.msra.mxu0 %v1089
  %1655 = vmatpush.bf16.msra.mxu0 %v1081
  %1656 = vmatmul.bf16.gmra.mxu0 %v304
  %v1657 = vpop.f32.mrf.mxu0
  %v1658 = vadd.f32 %v277, %v1657
  %v1659 = vpop.f32.mrf.mxu0
  %v1660 = vadd.f32 %v277, %v1659
  %1661 = vdwg.mxu0
  %1662 = vmatpush.bf16.msra.mxu0 %v1201
  %1663 = vmatpush.bf16.msra.mxu0 %v1193
  %1664 = vmatpush.bf16.msra.mxu0 %v1185
  %1665 = vmatpush.bf16.msra.mxu0 %v1177
  %1666 = vmatpush.bf16.msra.mxu0 %v1169
  %1667 = vmatpush.bf16.msra.mxu0 %v1161
  %1668 = vmatpush.bf16.msra.mxu0 %v1153
  %1669 = vmatpush.bf16.msra.mxu0 %v1145
  %1670 = vmatmul.bf16.gmra.mxu0 %v305
  %v1671 = vpop.f32.mrf.mxu0
  %v1672 = vadd.f32 %v1658, %v1671
  %v1673 = vpop.f32.mrf.mxu0
  %v1674 = vadd.f32 %v1660, %v1673
  %1675 = vdwg.mxu0
  %1676 = vmatpush.bf16.msra.mxu0 %v1265
  %1677 = vmatpush.bf16.msra.mxu0 %v1257
  %1678 = vmatpush.bf16.msra.mxu0 %v1249
  %1679 = vmatpush.bf16.msra.mxu0 %v1241
  %1680 = vmatpush.bf16.msra.mxu0 %v1233
  %1681 = vmatpush.bf16.msra.mxu0 %v1225
  %1682 = vmatpush.bf16.msra.mxu0 %v1217
  %1683 = vmatpush.bf16.msra.mxu0 %v1209
  %1684 = vmatmul.bf16.gmra.mxu0 %v306
  %v1685 = vpop.f32.mrf.mxu0
  %v1686 = vadd.f32 %v1672, %v1685
  %v1687 = vpop.f32.mrf.mxu0
  %v1688 = vadd.f32 %v1674, %v1687
  %1689 = vdwg.mxu0
  %1690 = vmatpush.bf16.msra.mxu0 %v1329
  %1691 = vmatpush.bf16.msra.mxu0 %v1321
  %1692 = vmatpush.bf16.msra.mxu0 %v1313
  %1693 = vmatpush.bf16.msra.mxu0 %v1305
  %1694 = vmatpush.bf16.msra.mxu0 %v1297
  %1695 = vmatpush.bf16.msra.mxu0 %v1289
  %1696 = vmatpush.bf16.msra.mxu0 %v1281
  %1697 = vmatpush.bf16.msra.mxu0 %v1273
  %1698 = vmatmul.bf16.gmra.mxu0 %v307
  %v1699 = vpop.f32.mrf.mxu0
  %v1700 = vadd.f32 %v1686, %v1699
  %v1701 = vpop.f32.mrf.mxu0
  %v1702 = vadd.f32 %v1688, %v1701
  %1703 = vdwg.mxu0
  %1704 = vmatpush.bf16.msra.mxu0 %v1138
  %1705 = vmatpush.bf16.msra.mxu0 %v1130
  %1706 = vmatpush.bf16.msra.mxu0 %v1122
  %1707 = vmatpush.bf16.msra.mxu0 %v1114
  %1708 = vmatpush.bf16.msra.mxu0 %v1106
  %1709 = vmatpush.bf16.msra.mxu0 %v1098
  %1710 = vmatpush.bf16.msra.mxu0 %v1090
  %1711 = vmatpush.bf16.msra.mxu0 %v1082
  %1712 = vmatmul.bf16.gmra.mxu0 %v304
  %v1713 = vpop.f32.mrf.mxu0
  %v1714 = vadd.f32 %v278, %v1713
  %v1715 = vpop.f32.mrf.mxu0
  %v1716 = vadd.f32 %v278, %v1715
  %1717 = vdwg.mxu0
  %1718 = vmatpush.bf16.msra.mxu0 %v1202
  %1719 = vmatpush.bf16.msra.mxu0 %v1194
  %1720 = vmatpush.bf16.msra.mxu0 %v1186
  %1721 = vmatpush.bf16.msra.mxu0 %v1178
  %1722 = vmatpush.bf16.msra.mxu0 %v1170
  %1723 = vmatpush.bf16.msra.mxu0 %v1162
  %1724 = vmatpush.bf16.msra.mxu0 %v1154
  %1725 = vmatpush.bf16.msra.mxu0 %v1146
  %1726 = vmatmul.bf16.gmra.mxu0 %v305
  %v1727 = vpop.f32.mrf.mxu0
  %v1728 = vadd.f32 %v1714, %v1727
  %v1729 = vpop.f32.mrf.mxu0
  %v1730 = vadd.f32 %v1716, %v1729
  %1731 = vdwg.mxu0
  %1732 = vmatpush.bf16.msra.mxu0 %v1266
  %1733 = vmatpush.bf16.msra.mxu0 %v1258
  %1734 = vmatpush.bf16.msra.mxu0 %v1250
  %1735 = vmatpush.bf16.msra.mxu0 %v1242
  %1736 = vmatpush.bf16.msra.mxu0 %v1234
  %1737 = vmatpush.bf16.msra.mxu0 %v1226
  %1738 = vmatpush.bf16.msra.mxu0 %v1218
  %1739 = vmatpush.bf16.msra.mxu0 %v1210
  %1740 = vmatmul.bf16.gmra.mxu0 %v306
  %v1741 = vpop.f32.mrf.mxu0
  %v1742 = vadd.f32 %v1728, %v1741
  %v1743 = vpop.f32.mrf.mxu0
  %v1744 = vadd.f32 %v1730, %v1743
  %1745 = vdwg.mxu0
  %1746 = vmatpush.bf16.msra.mxu0 %v1330
  %1747 = vmatpush.bf16.msra.mxu0 %v1322
  %1748 = vmatpush.bf16.msra.mxu0 %v1314
  %1749 = vmatpush.bf16.msra.mxu0 %v1306
  %1750 = vmatpush.bf16.msra.mxu0 %v1298
  %1751 = vmatpush.bf16.msra.mxu0 %v1290
  %1752 = vmatpush.bf16.msra.mxu0 %v1282
  %1753 = vmatpush.bf16.msra.mxu0 %v1274
  %1754 = vmatmul.bf16.gmra.mxu0 %v307
  %v1755 = vpop.f32.mrf.mxu0
  %v1756 = vadd.f32 %v1742, %v1755
  %v1757 = vpop.f32.mrf.mxu0
  %v1758 = vadd.f32 %v1744, %v1757
  %1759 = vdwg.mxu0
  %1760 = vmatpush.bf16.msra.mxu0 %v1139
  %1761 = vmatpush.bf16.msra.mxu0 %v1131
  %1762 = vmatpush.bf16.msra.mxu0 %v1123
  %1763 = vmatpush.bf16.msra.mxu0 %v1115
  %1764 = vmatpush.bf16.msra.mxu0 %v1107
  %1765 = vmatpush.bf16.msra.mxu0 %v1099
  %1766 = vmatpush.bf16.msra.mxu0 %v1091
  %1767 = vmatpush.bf16.msra.mxu0 %v1083
  %1768 = vmatmul.bf16.gmra.mxu0 %v304
  %v1769 = vpop.f32.mrf.mxu0
  %v1770 = vadd.f32 %v279, %v1769
  %v1771 = vpop.f32.mrf.mxu0
  %v1772 = vadd.f32 %v279, %v1771
  %1773 = vdwg.mxu0
  %1774 = vmatpush.bf16.msra.mxu0 %v1203
  %1775 = vmatpush.bf16.msra.mxu0 %v1195
  %1776 = vmatpush.bf16.msra.mxu0 %v1187
  %1777 = vmatpush.bf16.msra.mxu0 %v1179
  %1778 = vmatpush.bf16.msra.mxu0 %v1171
  %1779 = vmatpush.bf16.msra.mxu0 %v1163
  %1780 = vmatpush.bf16.msra.mxu0 %v1155
  %1781 = vmatpush.bf16.msra.mxu0 %v1147
  %1782 = vmatmul.bf16.gmra.mxu0 %v305
  %v1783 = vpop.f32.mrf.mxu0
  %v1784 = vadd.f32 %v1770, %v1783
  %v1785 = vpop.f32.mrf.mxu0
  %v1786 = vadd.f32 %v1772, %v1785
  %1787 = vdwg.mxu0
  %1788 = vmatpush.bf16.msra.mxu0 %v1267
  %1789 = vmatpush.bf16.msra.mxu0 %v1259
  %1790 = vmatpush.bf16.msra.mxu0 %v1251
  %1791 = vmatpush.bf16.msra.mxu0 %v1243
  %1792 = vmatpush.bf16.msra.mxu0 %v1235
  %1793 = vmatpush.bf16.msra.mxu0 %v1227
  %1794 = vmatpush.bf16.msra.mxu0 %v1219
  %1795 = vmatpush.bf16.msra.mxu0 %v1211
  %1796 = vmatmul.bf16.gmra.mxu0 %v306
  %v1797 = vpop.f32.mrf.mxu0
  %v1798 = vadd.f32 %v1784, %v1797
  %v1799 = vpop.f32.mrf.mxu0
  %v1800 = vadd.f32 %v1786, %v1799
  %1801 = vdwg.mxu0
  %1802 = vmatpush.bf16.msra.mxu0 %v1331
  %1803 = vmatpush.bf16.msra.mxu0 %v1323
  %1804 = vmatpush.bf16.msra.mxu0 %v1315
  %1805 = vmatpush.bf16.msra.mxu0 %v1307
  %1806 = vmatpush.bf16.msra.mxu0 %v1299
  %1807 = vmatpush.bf16.msra.mxu0 %v1291
  %1808 = vmatpush.bf16.msra.mxu0 %v1283
  %1809 = vmatpush.bf16.msra.mxu0 %v1275
  %1810 = vmatmul.bf16.gmra.mxu0 %v307
  %v1811 = vpop.f32.mrf.mxu0
  %v1812 = vadd.f32 %v1798, %v1811
  %v1813 = vpop.f32.mrf.mxu0
  %v1814 = vadd.f32 %v1800, %v1813
  %1815 = vdwg.mxu0
  %1816 = vmatpush.bf16.msra.mxu0 %v1140
  %1817 = vmatpush.bf16.msra.mxu0 %v1132
  %1818 = vmatpush.bf16.msra.mxu0 %v1124
  %1819 = vmatpush.bf16.msra.mxu0 %v1116
  %1820 = vmatpush.bf16.msra.mxu0 %v1108
  %1821 = vmatpush.bf16.msra.mxu0 %v1100
  %1822 = vmatpush.bf16.msra.mxu0 %v1092
  %1823 = vmatpush.bf16.msra.mxu0 %v1084
  %1824 = vmatmul.bf16.gmra.mxu0 %v304
  %v1825 = vpop.f32.mrf.mxu0
  %v1826 = vadd.f32 %v280, %v1825
  %v1827 = vpop.f32.mrf.mxu0
  %v1828 = vadd.f32 %v280, %v1827
  %1829 = vdwg.mxu0
  %1830 = vmatpush.bf16.msra.mxu0 %v1204
  %1831 = vmatpush.bf16.msra.mxu0 %v1196
  %1832 = vmatpush.bf16.msra.mxu0 %v1188
  %1833 = vmatpush.bf16.msra.mxu0 %v1180
  %1834 = vmatpush.bf16.msra.mxu0 %v1172
  %1835 = vmatpush.bf16.msra.mxu0 %v1164
  %1836 = vmatpush.bf16.msra.mxu0 %v1156
  %1837 = vmatpush.bf16.msra.mxu0 %v1148
  %1838 = vmatmul.bf16.gmra.mxu0 %v305
  %v1839 = vpop.f32.mrf.mxu0
  %v1840 = vadd.f32 %v1826, %v1839
  %v1841 = vpop.f32.mrf.mxu0
  %v1842 = vadd.f32 %v1828, %v1841
  %1843 = vdwg.mxu0
  %1844 = vmatpush.bf16.msra.mxu0 %v1268
  %1845 = vmatpush.bf16.msra.mxu0 %v1260
  %1846 = vmatpush.bf16.msra.mxu0 %v1252
  %1847 = vmatpush.bf16.msra.mxu0 %v1244
  %1848 = vmatpush.bf16.msra.mxu0 %v1236
  %1849 = vmatpush.bf16.msra.mxu0 %v1228
  %1850 = vmatpush.bf16.msra.mxu0 %v1220
  %1851 = vmatpush.bf16.msra.mxu0 %v1212
  %1852 = vmatmul.bf16.gmra.mxu0 %v306
  %v1853 = vpop.f32.mrf.mxu0
  %v1854 = vadd.f32 %v1840, %v1853
  %v1855 = vpop.f32.mrf.mxu0
  %v1856 = vadd.f32 %v1842, %v1855
  %1857 = vdwg.mxu0
  %1858 = vmatpush.bf16.msra.mxu0 %v1332
  %1859 = vmatpush.bf16.msra.mxu0 %v1324
  %1860 = vmatpush.bf16.msra.mxu0 %v1316
  %1861 = vmatpush.bf16.msra.mxu0 %v1308
  %1862 = vmatpush.bf16.msra.mxu0 %v1300
  %1863 = vmatpush.bf16.msra.mxu0 %v1292
  %1864 = vmatpush.bf16.msra.mxu0 %v1284
  %1865 = vmatpush.bf16.msra.mxu0 %v1276
  %1866 = vmatmul.bf16.gmra.mxu0 %v307
  %v1867 = vpop.f32.mrf.mxu0
  %v1868 = vadd.f32 %v1854, %v1867
  %v1869 = vpop.f32.mrf.mxu0
  %v1870 = vadd.f32 %v1856, %v1869
  %1871 = vdwg.mxu0
  %1872 = vmatpush.bf16.msra.mxu0 %v1141
  %1873 = vmatpush.bf16.msra.mxu0 %v1133
  %1874 = vmatpush.bf16.msra.mxu0 %v1125
  %1875 = vmatpush.bf16.msra.mxu0 %v1117
  %1876 = vmatpush.bf16.msra.mxu0 %v1109
  %1877 = vmatpush.bf16.msra.mxu0 %v1101
  %1878 = vmatpush.bf16.msra.mxu0 %v1093
  %1879 = vmatpush.bf16.msra.mxu0 %v1085
  %1880 = vmatmul.bf16.gmra.mxu0 %v304
  %v1881 = vpop.f32.mrf.mxu0
  %v1882 = vadd.f32 %v281, %v1881
  %v1883 = vpop.f32.mrf.mxu0
  %v1884 = vadd.f32 %v281, %v1883
  %1885 = vdwg.mxu0
  %1886 = vmatpush.bf16.msra.mxu0 %v1205
  %1887 = vmatpush.bf16.msra.mxu0 %v1197
  %1888 = vmatpush.bf16.msra.mxu0 %v1189
  %1889 = vmatpush.bf16.msra.mxu0 %v1181
  %1890 = vmatpush.bf16.msra.mxu0 %v1173
  %1891 = vmatpush.bf16.msra.mxu0 %v1165
  %1892 = vmatpush.bf16.msra.mxu0 %v1157
  %1893 = vmatpush.bf16.msra.mxu0 %v1149
  %1894 = vmatmul.bf16.gmra.mxu0 %v305
  %v1895 = vpop.f32.mrf.mxu0
  %v1896 = vadd.f32 %v1882, %v1895
  %v1897 = vpop.f32.mrf.mxu0
  %v1898 = vadd.f32 %v1884, %v1897
  %1899 = vdwg.mxu0
  %1900 = vmatpush.bf16.msra.mxu0 %v1269
  %1901 = vmatpush.bf16.msra.mxu0 %v1261
  %1902 = vmatpush.bf16.msra.mxu0 %v1253
  %1903 = vmatpush.bf16.msra.mxu0 %v1245
  %1904 = vmatpush.bf16.msra.mxu0 %v1237
  %1905 = vmatpush.bf16.msra.mxu0 %v1229
  %1906 = vmatpush.bf16.msra.mxu0 %v1221
  %1907 = vmatpush.bf16.msra.mxu0 %v1213
  %1908 = vmatmul.bf16.gmra.mxu0 %v306
  %v1909 = vpop.f32.mrf.mxu0
  %v1910 = vadd.f32 %v1896, %v1909
  %v1911 = vpop.f32.mrf.mxu0
  %v1912 = vadd.f32 %v1898, %v1911
  %1913 = vdwg.mxu0
  %1914 = vmatpush.bf16.msra.mxu0 %v1333
  %1915 = vmatpush.bf16.msra.mxu0 %v1325
  %1916 = vmatpush.bf16.msra.mxu0 %v1317
  %1917 = vmatpush.bf16.msra.mxu0 %v1309
  %1918 = vmatpush.bf16.msra.mxu0 %v1301
  %1919 = vmatpush.bf16.msra.mxu0 %v1293
  %1920 = vmatpush.bf16.msra.mxu0 %v1285
  %1921 = vmatpush.bf16.msra.mxu0 %v1277
  %1922 = vmatmul.bf16.gmra.mxu0 %v307
  %v1923 = vpop.f32.mrf.mxu0
  %v1924 = vadd.f32 %v1910, %v1923
  %v1925 = vpop.f32.mrf.mxu0
  %v1926 = vadd.f32 %v1912, %v1925
  %1927 = vdwg.mxu0
  %1928 = vmatpush.bf16.msra.mxu0 %v1142
  %1929 = vmatpush.bf16.msra.mxu0 %v1134
  %1930 = vmatpush.bf16.msra.mxu0 %v1126
  %1931 = vmatpush.bf16.msra.mxu0 %v1118
  %1932 = vmatpush.bf16.msra.mxu0 %v1110
  %1933 = vmatpush.bf16.msra.mxu0 %v1102
  %1934 = vmatpush.bf16.msra.mxu0 %v1094
  %1935 = vmatpush.bf16.msra.mxu0 %v1086
  %1936 = vmatmul.bf16.gmra.mxu0 %v304
  %v1937 = vpop.f32.mrf.mxu0
  %v1938 = vadd.f32 %v282, %v1937
  %v1939 = vpop.f32.mrf.mxu0
  %v1940 = vadd.f32 %v282, %v1939
  %1941 = vdwg.mxu0
  %1942 = vmatpush.bf16.msra.mxu0 %v1206
  %1943 = vmatpush.bf16.msra.mxu0 %v1198
  %1944 = vmatpush.bf16.msra.mxu0 %v1190
  %1945 = vmatpush.bf16.msra.mxu0 %v1182
  %1946 = vmatpush.bf16.msra.mxu0 %v1174
  %1947 = vmatpush.bf16.msra.mxu0 %v1166
  %1948 = vmatpush.bf16.msra.mxu0 %v1158
  %1949 = vmatpush.bf16.msra.mxu0 %v1150
  %1950 = vmatmul.bf16.gmra.mxu0 %v305
  %v1951 = vpop.f32.mrf.mxu0
  %v1952 = vadd.f32 %v1938, %v1951
  %v1953 = vpop.f32.mrf.mxu0
  %v1954 = vadd.f32 %v1940, %v1953
  %1955 = vdwg.mxu0
  %1956 = vmatpush.bf16.msra.mxu0 %v1270
  %1957 = vmatpush.bf16.msra.mxu0 %v1262
  %1958 = vmatpush.bf16.msra.mxu0 %v1254
  %1959 = vmatpush.bf16.msra.mxu0 %v1246
  %1960 = vmatpush.bf16.msra.mxu0 %v1238
  %1961 = vmatpush.bf16.msra.mxu0 %v1230
  %1962 = vmatpush.bf16.msra.mxu0 %v1222
  %1963 = vmatpush.bf16.msra.mxu0 %v1214
  %1964 = vmatmul.bf16.gmra.mxu0 %v306
  %v1965 = vpop.f32.mrf.mxu0
  %v1966 = vadd.f32 %v1952, %v1965
  %v1967 = vpop.f32.mrf.mxu0
  %v1968 = vadd.f32 %v1954, %v1967
  %1969 = vdwg.mxu0
  %1970 = vmatpush.bf16.msra.mxu0 %v1334
  %1971 = vmatpush.bf16.msra.mxu0 %v1326
  %1972 = vmatpush.bf16.msra.mxu0 %v1318
  %1973 = vmatpush.bf16.msra.mxu0 %v1310
  %1974 = vmatpush.bf16.msra.mxu0 %v1302
  %1975 = vmatpush.bf16.msra.mxu0 %v1294
  %1976 = vmatpush.bf16.msra.mxu0 %v1286
  %1977 = vmatpush.bf16.msra.mxu0 %v1278
  %1978 = vmatmul.bf16.gmra.mxu0 %v307
  %v1979 = vpop.f32.mrf.mxu0
  %v1980 = vadd.f32 %v1966, %v1979
  %v1981 = vpop.f32.mrf.mxu0
  %v1982 = vadd.f32 %v1968, %v1981
  %1983 = vdwg.mxu0
  %1984 = vmatpush.bf16.msra.mxu0 %v1143
  %1985 = vmatpush.bf16.msra.mxu0 %v1135
  %1986 = vmatpush.bf16.msra.mxu0 %v1127
  %1987 = vmatpush.bf16.msra.mxu0 %v1119
  %1988 = vmatpush.bf16.msra.mxu0 %v1111
  %1989 = vmatpush.bf16.msra.mxu0 %v1103
  %1990 = vmatpush.bf16.msra.mxu0 %v1095
  %1991 = vmatpush.bf16.msra.mxu0 %v1087
  %1992 = vmatmul.bf16.gmra.mxu0 %v304
  %v1993 = vpop.f32.mrf.mxu0
  %v1994 = vadd.f32 %v283, %v1993
  %v1995 = vpop.f32.mrf.mxu0
  %v1996 = vadd.f32 %v283, %v1995
  %1997 = vdwg.mxu0
  %1998 = vmatpush.bf16.msra.mxu0 %v1207
  %1999 = vmatpush.bf16.msra.mxu0 %v1199
  %2000 = vmatpush.bf16.msra.mxu0 %v1191
  %2001 = vmatpush.bf16.msra.mxu0 %v1183
  %2002 = vmatpush.bf16.msra.mxu0 %v1175
  %2003 = vmatpush.bf16.msra.mxu0 %v1167
  %2004 = vmatpush.bf16.msra.mxu0 %v1159
  %2005 = vmatpush.bf16.msra.mxu0 %v1151
  %2006 = vmatmul.bf16.gmra.mxu0 %v305
  %v2007 = vpop.f32.mrf.mxu0
  %v2008 = vadd.f32 %v1994, %v2007
  %v2009 = vpop.f32.mrf.mxu0
  %v2010 = vadd.f32 %v1996, %v2009
  %2011 = vdwg.mxu0
  %2012 = vmatpush.bf16.msra.mxu0 %v1271
  %2013 = vmatpush.bf16.msra.mxu0 %v1263
  %2014 = vmatpush.bf16.msra.mxu0 %v1255
  %2015 = vmatpush.bf16.msra.mxu0 %v1247
  %2016 = vmatpush.bf16.msra.mxu0 %v1239
  %2017 = vmatpush.bf16.msra.mxu0 %v1231
  %2018 = vmatpush.bf16.msra.mxu0 %v1223
  %2019 = vmatpush.bf16.msra.mxu0 %v1215
  %2020 = vmatmul.bf16.gmra.mxu0 %v306
  %v2021 = vpop.f32.mrf.mxu0
  %v2022 = vadd.f32 %v2008, %v2021
  %v2023 = vpop.f32.mrf.mxu0
  %v2024 = vadd.f32 %v2010, %v2023
  %2025 = vdwg.mxu0
  %2026 = vmatpush.bf16.msra.mxu0 %v1335
  %2027 = vmatpush.bf16.msra.mxu0 %v1327
  %2028 = vmatpush.bf16.msra.mxu0 %v1319
  %2029 = vmatpush.bf16.msra.mxu0 %v1311
  %2030 = vmatpush.bf16.msra.mxu0 %v1303
  %2031 = vmatpush.bf16.msra.mxu0 %v1295
  %2032 = vmatpush.bf16.msra.mxu0 %v1287
  %2033 = vmatpush.bf16.msra.mxu0 %v1279
  %2034 = vmatmul.bf16.gmra.mxu0 %v307
  %v2035 = vpop.f32.mrf.mxu0
  %v2036 = vadd.f32 %v2022, %v2035
  %v2037 = vpop.f32.mrf.mxu0
  %v2038 = vadd.f32 %v2024, %v2037
  %2039 = vdwg.mxu0
  %2040 = vst [vmem:[%s3] sm:$0xff] %v1644
  %2041 = vst [vmem:[%s3 + $0x8] sm:$0xff] %v1700
  %2042 = vst [vmem:[%s3 + $0x10] sm:$0xff] %v1756
  %2043 = vst [vmem:[%s3 + $0x18] sm:$0xff] %v1812
  %2044 = vst [vmem:[%s3 + $0x20] sm:$0xff] %v1868
  %2045 = vst [vmem:[%s3 + $0x28] sm:$0xff] %v1924
  %2046 = vst [vmem:[%s3 + $0x30] sm:$0xff] %v1980
  %2047 = vst [vmem:[%s3 + $0x38] sm:$0xff] %v2036
  %2048 = vst [vmem:[%s3 + $0x40] sm:$0xff] %v1646
  %2049 = vst [vmem:[%s3 + $0x48] sm:$0xff] %v1702
  %2050 = vst [vmem:[%s3 + $0x50] sm:$0xff] %v1758
  %2051 = vst [vmem:[%s3 + $0x58] sm:$0xff] %v1814
  %2052 = vst [vmem:[%s3 + $0x60] sm:$0xff] %v1870
  %2053 = vst [vmem:[%s3 + $0x68] sm:$0xff] %v1926
  %2054 = vst [vmem:[%s3 + $0x70] sm:$0xff] %v1982
  %2055 = vst [vmem:[%s3 + $0x78] sm:$0xff] %v2038
  // Predicated region
  $region14: #{ae_forward.16} parent=0 // pred_check
    _
  $region15: #{ae_forward.16} parent=0 // pred_check_branch
    %2057 = sbr.rel (0) target = $region17
  $region16: #{ae_forward.16} parent=0 // pred_region
    _
  $region17: #{ae_forward.16} parent=0 // pred_fallthru
    _
  // Predicated region
  $region18: #{ae_forward.16} parent=0 // pred_check
    _
  $region19: #{ae_forward.16} parent=0 // pred_check_branch
    %2059 = sbr.rel (0) target = $region21
  $region20: #{ae_forward.16} parent=0 // pred_region
    _
  $region21: #{ae_forward.16} parent=0 // pred_fallthru
    _

// kernel: ae_forward.15
$region0: #{ae_forward.15}
  #allocation0 [shape = 'u32[]', space=smem, size = 0x4, offset = 0x4, fixed_abs, tag = 'smem constant byte address 0x4 - core index']
  #allocation1 [shape = 'u32[72,128]{1,0:T(1,128)}', space=vmem, size = 0x9000, scoped, tag = 'internal scratch']
  %s0 = inlined_call_operand.vmem [shape: bf16[8,1024], index: 0, kind: input, shape index: {}]
  %s1 = inlined_call_operand.vmem [shape: bf16[1024,128], index: 1, kind: input, shape index: {}]
  %s2 = inlined_call_operand.vmem [shape: f32[1,128], index: 2, kind: input, shape index: {}]
  %s3 = inlined_call_operand.vmem [shape: bf16[128,512], index: 3, kind: input, shape index: {}]
  %s4 = inlined_call_operand.vmem [shape: f32[1,512], index: 4, kind: input, shape index: {}]
  %s5 = inlined_call_operand.vmem [shape: f32[8,128], index: 5, kind: output, shape index: {0}]
  %s6 = inlined_call_operand.vmem [shape: bf16[8,512], index: 6, kind: output, shape index: {1}]
  %7 = xla_tuple %s5, %s6
  %s8 = sld [smem:[#allocation0]]
  $region38: #{ae_forward.15} parent=0
    _
  %s10 = ssub.s32 1, %s8
  %s11 = scalar_select 0, %s10, %s8
  // Predicated region
  $region2: #{ae_forward.15} parent=0 // pred_check
    _
  $region3: #{ae_forward.15} parent=0 // pred_check_branch
    %13 = sbr.rel (0) target = $region5
  $region4: #{ae_forward.15} parent=0 // pred_region
    _
  $region5: #{ae_forward.15} parent=0 // pred_fallthru
    _
  // Predicated region
  $region6: #{ae_forward.15} parent=0 // pred_check
    _
  $region7: #{ae_forward.15} parent=0 // pred_check_branch
    %15 = sbr.rel (0) target = $region9
  $region8: #{ae_forward.15} parent=0 // pred_region
    _
  $region9: #{ae_forward.15} parent=0 // pred_fallthru
    _
  // Predicated region
  $region10: #{ae_forward.15} parent=0 // pred_check
    _
  $region11: #{ae_forward.15} parent=0 // pred_check_branch
    %17 = sbr.rel (0) target = $region13
  $region12: #{ae_forward.15} parent=0 // pred_region
    _
  $region13: #{ae_forward.15} parent=0 // pred_fallthru
    _
  // Predicated region
  $region14: #{ae_forward.15} parent=0 // pred_check
    _
  $region15: #{ae_forward.15} parent=0 // pred_check_branch
    %19 = sbr.rel (0) target = $region17
  $region16: #{ae_forward.15} parent=0 // pred_region
    _
  $region17: #{ae_forward.15} parent=0 // pred_fallthru
    _
  // Predicated region
  $region18: #{ae_forward.15} parent=0 // pred_check
    _
  $region19: #{ae_forward.15} parent=0 // pred_check_branch
    %21 = sbr.rel (0) target = $region21
  $region20: #{ae_forward.15} parent=0 // pred_region
    _
  $region21: #{ae_forward.15} parent=0 // pred_fallthru
    _
  %v22 = vld [vmem:[%s0] sm:$0xff]
  %v23 = vld [vmem:[%s0 + $0x8] sm:$0xff]
  %v24 = vld [vmem:[%s0 + $0x10] sm:$0xff]
  %v25 = vld [vmem:[%s0 + $0x18] sm:$0xff]
  %v26 = vld [vmem:[%s1] sm:$0xf]
  %v27 = vld [vmem:[%s1 + $0x4] sm:$0xf]
  %v28 = vld [vmem:[%s1 + $0x8] sm:$0xf]
  %v29 = vld [vmem:[%s1 + $0xc] sm:$0xf]
  %v30 = vld [vmem:[%s1 + $0x10] sm:$0xf]
  %v31 = vld [vmem:[%s1 + $0x14] sm:$0xf]
  %v32 = vld [vmem:[%s1 + $0x18] sm:$0xf]
  %v33 = vld [vmem:[%s1 + $0x1c] sm:$0xf]
  %v34 = vld [vmem:[%s1 + $0x20] sm:$0xf]
  %v35 = vld [vmem:[%s1 + $0x24] sm:$0xf]
  %v36 = vld [vmem:[%s1 + $0x28] sm:$0xf]
  %v37 = vld [vmem:[%s1 + $0x2c] sm:$0xf]
  %v38 = vld [vmem:[%s1 + $0x30] sm:$0xf]
  %v39 = vld [vmem:[%s1 + $0x34] sm:$0xf]
  %v40 = vld [vmem:[%s1 + $0x38] sm:$0xf]
  %v41 = vld [vmem:[%s1 + $0x3c] sm:$0xf]
  %v42 = vld [vmem:[%s1 + $0x40] sm:$0xf]
  %v43 = vld [vmem:[%s1 + $0x44] sm:$0xf]
  %v44 = vld [vmem:[%s1 + $0x48] sm:$0xf]
  %v45 = vld [vmem:[%s1 + $0x4c] sm:$0xf]
  %v46 = vld [vmem:[%s1 + $0x50] sm:$0xf]
  %v47 = vld [vmem:[%s1 + $0x54] sm:$0xf]
  %v48 = vld [vmem:[%s1 + $0x58] sm:$0xf]
  %v49 = vld [vmem:[%s1 + $0x5c] sm:$0xf]
  %v50 = vld [vmem:[%s1 + $0x60] sm:$0xf]
  %v51 = vld [vmem:[%s1 + $0x64] sm:$0xf]
  %v52 = vld [vmem:[%s1 + $0x68] sm:$0xf]
  %v53 = vld [vmem:[%s1 + $0x6c] sm:$0xf]
  %v54 = vld [vmem:[%s1 + $0x70] sm:$0xf]
  %v55 = vld [vmem:[%s1 + $0x74] sm:$0xf]
  %v56 = vld [vmem:[%s1 + $0x78] sm:$0xf]
  %v57 = vld [vmem:[%s1 + $0x7c] sm:$0xf]
  %v58 = vld [vmem:[%s1 + $0x80] sm:$0xf]
  %v59 = vld [vmem:[%s1 + $0x84] sm:$0xf]
  %v60 = vld [vmem:[%s1 + $0x88] sm:$0xf]
  %v61 = vld [vmem:[%s1 + $0x8c] sm:$0xf]
  %v62 = vld [vmem:[%s1 + $0x90] sm:$0xf]
  %v63 = vld [vmem:[%s1 + $0x94] sm:$0xf]
  %v64 = vld [vmem:[%s1 + $0x98] sm:$0xf]
  %v65 = vld [vmem:[%s1 + $0x9c] sm:$0xf]
  %v66 = vld [vmem:[%s1 + $0xa0] sm:$0xf]
  %v67 = vld [vmem:[%s1 + $0xa4] sm:$0xf]
  %v68 = vld [vmem:[%s1 + $0xa8] sm:$0xf]
  %v69 = vld [vmem:[%s1 + $0xac] sm:$0xf]
  %v70 = vld [vmem:[%s1 + $0xb0] sm:$0xf]
  %v71 = vld [vmem:[%s1 + $0xb4] sm:$0xf]
  %v72 = vld [vmem:[%s1 + $0xb8] sm:$0xf]
  %v73 = vld [vmem:[%s1 + $0xbc] sm:$0xf]
  %v74 = vld [vmem:[%s1 + $0xc0] sm:$0xf]
  %v75 = vld [vmem:[%s1 + $0xc4] sm:$0xf]
  %v76 = vld [vmem:[%s1 + $0xc8] sm:$0xf]
  %v77 = vld [vmem:[%s1 + $0xcc] sm:$0xf]
  %v78 = vld [vmem:[%s1 + $0xd0] sm:$0xf]
  %v79 = vld [vmem:[%s1 + $0xd4] sm:$0xf]
  %v80 = vld [vmem:[%s1 + $0xd8] sm:$0xf]
  %v81 = vld [vmem:[%s1 + $0xdc] sm:$0xf]
  %v82 = vld [vmem:[%s1 + $0xe0] sm:$0xf]
  %v83 = vld [vmem:[%s1 + $0xe4] sm:$0xf]
  %v84 = vld [vmem:[%s1 + $0xe8] sm:$0xf]
  %v85 = vld [vmem:[%s1 + $0xec] sm:$0xf]
  %v86 = vld [vmem:[%s1 + $0xf0] sm:$0xf]
  %v87 = vld [vmem:[%s1 + $0xf4] sm:$0xf]
  %v88 = vld [vmem:[%s1 + $0xf8] sm:$0xf]
  %v89 = vld [vmem:[%s1 + $0xfc] sm:$0xf]
  %v90 = vld [vmem:[%s1 + $0x100] sm:$0xf]
  %v91 = vld [vmem:[%s1 + $0x104] sm:$0xf]
  %v92 = vld [vmem:[%s1 + $0x108] sm:$0xf]
  %v93 = vld [vmem:[%s1 + $0x10c] sm:$0xf]
  %v94 = vld [vmem:[%s1 + $0x110] sm:$0xf]
  %v95 = vld [vmem:[%s1 + $0x114] sm:$0xf]
  %v96 = vld [vmem:[%s1 + $0x118] sm:$0xf]
  %v97 = vld [vmem:[%s1 + $0x11c] sm:$0xf]
  %v98 = vld [vmem:[%s1 + $0x120] sm:$0xf]
  %v99 = vld [vmem:[%s1 + $0x124] sm:$0xf]
  %v100 = vld [vmem:[%s1 + $0x128] sm:$0xf]
  %v101 = vld [vmem:[%s1 + $0x12c] sm:$0xf]
  %v102 = vld [vmem:[%s1 + $0x130] sm:$0xf]
  %v103 = vld [vmem:[%s1 + $0x134] sm:$0xf]
  %v104 = vld [vmem:[%s1 + $0x138] sm:$0xf]
  %v105 = vld [vmem:[%s1 + $0x13c] sm:$0xf]
  %v106 = vld [vmem:[%s1 + $0x140] sm:$0xf]
  %v107 = vld [vmem:[%s1 + $0x144] sm:$0xf]
  %v108 = vld [vmem:[%s1 + $0x148] sm:$0xf]
  %v109 = vld [vmem:[%s1 + $0x14c] sm:$0xf]
  %v110 = vld [vmem:[%s1 + $0x150] sm:$0xf]
  %v111 = vld [vmem:[%s1 + $0x154] sm:$0xf]
  %v112 = vld [vmem:[%s1 + $0x158] sm:$0xf]
  %v113 = vld [vmem:[%s1 + $0x15c] sm:$0xf]
  %v114 = vld [vmem:[%s1 + $0x160] sm:$0xf]
  %v115 = vld [vmem:[%s1 + $0x164] sm:$0xf]
  %v116 = vld [vmem:[%s1 + $0x168] sm:$0xf]
  %v117 = vld [vmem:[%s1 + $0x16c] sm:$0xf]
  %v118 = vld [vmem:[%s1 + $0x170] sm:$0xf]
  %v119 = vld [vmem:[%s1 + $0x174] sm:$0xf]
  %v120 = vld [vmem:[%s1 + $0x178] sm:$0xf]
  %v121 = vld [vmem:[%s1 + $0x17c] sm:$0xf]
  %v122 = vld [vmem:[%s1 + $0x180] sm:$0xf]
  %v123 = vld [vmem:[%s1 + $0x184] sm:$0xf]
  %v124 = vld [vmem:[%s1 + $0x188] sm:$0xf]
  %v125 = vld [vmem:[%s1 + $0x18c] sm:$0xf]
  %v126 = vld [vmem:[%s1 + $0x190] sm:$0xf]
  %v127 = vld [vmem:[%s1 + $0x194] sm:$0xf]
  %v128 = vld [vmem:[%s1 + $0x198] sm:$0xf]
  %v129 = vld [vmem:[%s1 + $0x19c] sm:$0xf]
  %v130 = vld [vmem:[%s1 + $0x1a0] sm:$0xf]
  %v131 = vld [vmem:[%s1 + $0x1a4] sm:$0xf]
  %v132 = vld [vmem:[%s1 + $0x1a8] sm:$0xf]
  %v133 = vld [vmem:[%s1 + $0x1ac] sm:$0xf]
  %v134 = vld [vmem:[%s1 + $0x1b0] sm:$0xf]
  %v135 = vld [vmem:[%s1 + $0x1b4] sm:$0xf]
  %v136 = vld [vmem:[%s1 + $0x1b8] sm:$0xf]
  %v137 = vld [vmem:[%s1 + $0x1bc] sm:$0xf]
  %v138 = vld [vmem:[%s1 + $0x1c0] sm:$0xf]
  %v139 = vld [vmem:[%s1 + $0x1c4] sm:$0xf]
  %v140 = vld [vmem:[%s1 + $0x1c8] sm:$0xf]
  %v141 = vld [vmem:[%s1 + $0x1cc] sm:$0xf]
  %v142 = vld [vmem:[%s1 + $0x1d0] sm:$0xf]
  %v143 = vld [vmem:[%s1 + $0x1d4] sm:$0xf]
  %v144 = vld [vmem:[%s1 + $0x1d8] sm:$0xf]
  %v145 = vld [vmem:[%s1 + $0x1dc] sm:$0xf]
  %v146 = vld [vmem:[%s1 + $0x1e0] sm:$0xf]
  %v147 = vld [vmem:[%s1 + $0x1e4] sm:$0xf]
  %v148 = vld [vmem:[%s1 + $0x1e8] sm:$0xf]
  %v149 = vld [vmem:[%s1 + $0x1ec] sm:$0xf]
  %v150 = vld [vmem:[%s1 + $0x1f0] sm:$0xf]
  %v151 = vld [vmem:[%s1 + $0x1f4] sm:$0xf]
  %v152 = vld [vmem:[%s1 + $0x1f8] sm:$0xf]
  %v153 = vld [vmem:[%s1 + $0x1fc] sm:$0xf]
  %v154 = vld [vmem:[%s2] sm:$0x1]
  %v156 = vperm.slane %v154, 0
  %v162 = vunpack.c.l.b16 %v22
  %v163 = vunpack.c.h.b16 %v22
  %v164 = vunpack.c.l.b16 %v23
  %v165 = vunpack.c.h.b16 %v23
  %v166 = vunpack.c.l.b16 %v24
  %v167 = vunpack.c.h.b16 %v24
  %v168 = vunpack.c.l.b16 %v25
  %v169 = vunpack.c.h.b16 %v25
  %v170 = vpack.c.b16 %v162, %v162
  %v171 = vpack.c.b16 %v163, %v163
  %v172 = vpack.c.b16 %v164, %v164
  %v173 = vpack.c.b16 %v165, %v165
  %v174 = vpack.c.b16 %v166, %v166
  %v175 = vpack.c.b16 %v167, %v167
  %v176 = vpack.c.b16 %v168, %v168
  %v177 = vpack.c.b16 %v169, %v169
  %v314 = vunpack.c.l.b16 %v26
  %v315 = vunpack.c.l.b16 %v27
  %v316 = vunpack.c.l.b16 %v28
  %v317 = vunpack.c.l.b16 %v29
  %v318 = vunpack.c.l.b16 %v30
  %v319 = vunpack.c.l.b16 %v31
  %v320 = vunpack.c.l.b16 %v32
  %v321 = vunpack.c.l.b16 %v33
  %v322 = vunpack.c.l.b16 %v34
  %v323 = vunpack.c.l.b16 %v35
  %v324 = vunpack.c.l.b16 %v36
  %v325 = vunpack.c.l.b16 %v37
  %v326 = vunpack.c.l.b16 %v38
  %v327 = vunpack.c.l.b16 %v39
  %v328 = vunpack.c.l.b16 %v40
  %v329 = vunpack.c.l.b16 %v41
  %v330 = vunpack.c.l.b16 %v42
  %v331 = vunpack.c.l.b16 %v43
  %v332 = vunpack.c.l.b16 %v44
  %v333 = vunpack.c.l.b16 %v45
  %v334 = vunpack.c.l.b16 %v46
  %v335 = vunpack.c.l.b16 %v47
  %v336 = vunpack.c.l.b16 %v48
  %v337 = vunpack.c.l.b16 %v49
  %v338 = vunpack.c.l.b16 %v50
  %v339 = vunpack.c.l.b16 %v51
  %v340 = vunpack.c.l.b16 %v52
  %v341 = vunpack.c.l.b16 %v53
  %v342 = vunpack.c.l.b16 %v54
  %v343 = vunpack.c.l.b16 %v55
  %v344 = vunpack.c.l.b16 %v56
  %v345 = vunpack.c.l.b16 %v57
  %v346 = vunpack.c.l.b16 %v58
  %v347 = vunpack.c.l.b16 %v59
  %v348 = vunpack.c.l.b16 %v60
  %v349 = vunpack.c.l.b16 %v61
  %v350 = vunpack.c.l.b16 %v62
  %v351 = vunpack.c.l.b16 %v63
  %v352 = vunpack.c.l.b16 %v64
  %v353 = vunpack.c.l.b16 %v65
  %v354 = vunpack.c.l.b16 %v66
  %v355 = vunpack.c.l.b16 %v67
  %v356 = vunpack.c.l.b16 %v68
  %v357 = vunpack.c.l.b16 %v69
  %v358 = vunpack.c.l.b16 %v70
  %v359 = vunpack.c.l.b16 %v71
  %v360 = vunpack.c.l.b16 %v72
  %v361 = vunpack.c.l.b16 %v73
  %v362 = vunpack.c.l.b16 %v74
  %v363 = vunpack.c.l.b16 %v75
  %v364 = vunpack.c.l.b16 %v76
  %v365 = vunpack.c.l.b16 %v77
  %v366 = vunpack.c.l.b16 %v78
  %v367 = vunpack.c.l.b16 %v79
  %v368 = vunpack.c.l.b16 %v80
  %v369 = vunpack.c.l.b16 %v81
  %v370 = vunpack.c.l.b16 %v82
  %v371 = vunpack.c.l.b16 %v83
  %v372 = vunpack.c.l.b16 %v84
  %v373 = vunpack.c.l.b16 %v85
  %v374 = vunpack.c.l.b16 %v86
  %v375 = vunpack.c.l.b16 %v87
  %v376 = vunpack.c.l.b16 %v88
  %v377 = vunpack.c.l.b16 %v89
  %v378 = vunpack.c.l.b16 %v90
  %v379 = vunpack.c.l.b16 %v91
  %v380 = vunpack.c.l.b16 %v92
  %v381 = vunpack.c.l.b16 %v93
  %v382 = vunpack.c.l.b16 %v94
  %v383 = vunpack.c.l.b16 %v95
  %v384 = vunpack.c.l.b16 %v96
  %v385 = vunpack.c.l.b16 %v97
  %v386 = vunpack.c.l.b16 %v98
  %v387 = vunpack.c.l.b16 %v99
  %v388 = vunpack.c.l.b16 %v100
  %v389 = vunpack.c.l.b16 %v101
  %v390 = vunpack.c.l.b16 %v102
  %v391 = vunpack.c.l.b16 %v103
  %v392 = vunpack.c.l.b16 %v104
  %v393 = vunpack.c.l.b16 %v105
  %v394 = vunpack.c.l.b16 %v106
  %v395 = vunpack.c.l.b16 %v107
  %v396 = vunpack.c.l.b16 %v108
  %v397 = vunpack.c.l.b16 %v109
  %v398 = vunpack.c.l.b16 %v110
  %v399 = vunpack.c.l.b16 %v111
  %v400 = vunpack.c.l.b16 %v112
  %v401 = vunpack.c.l.b16 %v113
  %v402 = vunpack.c.l.b16 %v114
  %v403 = vunpack.c.l.b16 %v115
  %v404 = vunpack.c.l.b16 %v116
  %v405 = vunpack.c.l.b16 %v117
  %v406 = vunpack.c.l.b16 %v118
  %v407 = vunpack.c.l.b16 %v119
  %v408 = vunpack.c.l.b16 %v120
  %v409 = vunpack.c.l.b16 %v121
  %v410 = vunpack.c.l.b16 %v122
  %v411 = vunpack.c.l.b16 %v123
  %v412 = vunpack.c.l.b16 %v124
  %v413 = vunpack.c.l.b16 %v125
  %v414 = vunpack.c.l.b16 %v126
  %v415 = vunpack.c.l.b16 %v127
  %v416 = vunpack.c.l.b16 %v128
  %v417 = vunpack.c.l.b16 %v129
  %v418 = vunpack.c.l.b16 %v130
  %v419 = vunpack.c.l.b16 %v131
  %v420 = vunpack.c.l.b16 %v132
  %v421 = vunpack.c.l.b16 %v133
  %v422 = vunpack.c.l.b16 %v134
  %v423 = vunpack.c.l.b16 %v135
  %v424 = vunpack.c.l.b16 %v136
  %v425 = vunpack.c.l.b16 %v137
  %v426 = vunpack.c.l.b16 %v138
  %v427 = vunpack.c.l.b16 %v139
  %v428 = vunpack.c.l.b16 %v140
  %v429 = vunpack.c.l.b16 %v141
  %v430 = vunpack.c.l.b16 %v142
  %v431 = vunpack.c.l.b16 %v143
  %v432 = vunpack.c.l.b16 %v144
  %v433 = vunpack.c.l.b16 %v145
  %v434 = vunpack.c.l.b16 %v146
  %v435 = vunpack.c.l.b16 %v147
  %v436 = vunpack.c.l.b16 %v148
  %v437 = vunpack.c.l.b16 %v149
  %v438 = vunpack.c.l.b16 %v150
  %v439 = vunpack.c.l.b16 %v151
  %v440 = vunpack.c.l.b16 %v152
  %v441 = vunpack.c.l.b16 %v153
  %v442 = vpack.c.b16 %v315, %v314
  %v443 = vpack.c.b16 %v317, %v316
  %v444 = vpack.c.b16 %v319, %v318
  %v445 = vpack.c.b16 %v321, %v320
  %v446 = vpack.c.b16 %v323, %v322
  %v447 = vpack.c.b16 %v325, %v324
  %v448 = vpack.c.b16 %v327, %v326
  %v449 = vpack.c.b16 %v329, %v328
  %v450 = vpack.c.b16 %v331, %v330
  %v451 = vpack.c.b16 %v333, %v332
  %v452 = vpack.c.b16 %v335, %v334
  %v453 = vpack.c.b16 %v337, %v336
  %v454 = vpack.c.b16 %v339, %v338
  %v455 = vpack.c.b16 %v341, %v340
  %v456 = vpack.c.b16 %v343, %v342
  %v457 = vpack.c.b16 %v345, %v344
  %v458 = vpack.c.b16 %v347, %v346
  %v459 = vpack.c.b16 %v349, %v348
  %v460 = vpack.c.b16 %v351, %v350
  %v461 = vpack.c.b16 %v353, %v352
  %v462 = vpack.c.b16 %v355, %v354
  %v463 = vpack.c.b16 %v357, %v356
  %v464 = vpack.c.b16 %v359, %v358
  %v465 = vpack.c.b16 %v361, %v360
  %v466 = vpack.c.b16 %v363, %v362
  %v467 = vpack.c.b16 %v365, %v364
  %v468 = vpack.c.b16 %v367, %v366
  %v469 = vpack.c.b16 %v369, %v368
  %v470 = vpack.c.b16 %v371, %v370
  %v471 = vpack.c.b16 %v373, %v372
  %v472 = vpack.c.b16 %v375, %v374
  %v473 = vpack.c.b16 %v377, %v376
  %v474 = vpack.c.b16 %v379, %v378
  %v475 = vpack.c.b16 %v381, %v380
  %v476 = vpack.c.b16 %v383, %v382
  %v477 = vpack.c.b16 %v385, %v384
  %v478 = vpack.c.b16 %v387, %v386
  %v479 = vpack.c.b16 %v389, %v388
  %v480 = vpack.c.b16 %v391, %v390
  %v481 = vpack.c.b16 %v393, %v392
  %v482 = vpack.c.b16 %v395, %v394
  %v483 = vpack.c.b16 %v397, %v396
  %v484 = vpack.c.b16 %v399, %v398
  %v485 = vpack.c.b16 %v401, %v400
  %v486 = vpack.c.b16 %v403, %v402
  %v487 = vpack.c.b16 %v405, %v404
  %v488 = vpack.c.b16 %v407, %v406
  %v489 = vpack.c.b16 %v409, %v408
  %v490 = vpack.c.b16 %v411, %v410
  %v491 = vpack.c.b16 %v413, %v412
  %v492 = vpack.c.b16 %v415, %v414
  %v493 = vpack.c.b16 %v417, %v416
  %v494 = vpack.c.b16 %v419, %v418
  %v495 = vpack.c.b16 %v421, %v420
  %v496 = vpack.c.b16 %v423, %v422
  %v497 = vpack.c.b16 %v425, %v424
  %v498 = vpack.c.b16 %v427, %v426
  %v499 = vpack.c.b16 %v429, %v428
  %v500 = vpack.c.b16 %v431, %v430
  %v501 = vpack.c.b16 %v433, %v432
  %v502 = vpack.c.b16 %v435, %v434
  %v503 = vpack.c.b16 %v437, %v436
  %v504 = vpack.c.b16 %v439, %v438
  %v505 = vpack.c.b16 %v441, %v440
  %570 = vmatpush.bf16.msra.mxu0 %v449
  %571 = vmatpush.bf16.msra.mxu0 %v448
  %572 = vmatpush.bf16.msra.mxu0 %v447
  %573 = vmatpush.bf16.msra.mxu0 %v446
  %574 = vmatpush.bf16.msra.mxu0 %v445
  %575 = vmatpush.bf16.msra.mxu0 %v444
  %576 = vmatpush.bf16.msra.mxu0 %v443
  %577 = vmatpush.bf16.msra.mxu0 %v442
  %578 = vmatmul.bf16.gmra.mxu0 %v170
  %v579 = vpop.f32.mrf.mxu0
  %v580 = vadd.f32 %v156, %v579
  %v581 = vpop.f32.mrf.mxu0
  %582 = vdwg.mxu0
  %583 = vmatpush.bf16.msra.mxu0 %v457
  %584 = vmatpush.bf16.msra.mxu0 %v456
  %585 = vmatpush.bf16.msra.mxu0 %v455
  %586 = vmatpush.bf16.msra.mxu0 %v454
  %587 = vmatpush.bf16.msra.mxu0 %v453
  %588 = vmatpush.bf16.msra.mxu0 %v452
  %589 = vmatpush.bf16.msra.mxu0 %v451
  %590 = vmatpush.bf16.msra.mxu0 %v450
  %591 = vmatmul.bf16.gmra.mxu0 %v171
  %v592 = vpop.f32.mrf.mxu0
  %v593 = vadd.f32 %v580, %v592
  %v594 = vpop.f32.mrf.mxu0
  %595 = vdwg.mxu0
  %596 = vmatpush.bf16.msra.mxu0 %v465
  %597 = vmatpush.bf16.msra.mxu0 %v464
  %598 = vmatpush.bf16.msra.mxu0 %v463
  %599 = vmatpush.bf16.msra.mxu0 %v462
  %600 = vmatpush.bf16.msra.mxu0 %v461
  %601 = vmatpush.bf16.msra.mxu0 %v460
  %602 = vmatpush.bf16.msra.mxu0 %v459
  %603 = vmatpush.bf16.msra.mxu0 %v458
  %604 = vmatmul.bf16.gmra.mxu0 %v172
  %v605 = vpop.f32.mrf.mxu0
  %v606 = vadd.f32 %v593, %v605
  %v607 = vpop.f32.mrf.mxu0
  %608 = vdwg.mxu0
  %609 = vmatpush.bf16.msra.mxu0 %v473
  %610 = vmatpush.bf16.msra.mxu0 %v472
  %611 = vmatpush.bf16.msra.mxu0 %v471
  %612 = vmatpush.bf16.msra.mxu0 %v470
  %613 = vmatpush.bf16.msra.mxu0 %v469
  %614 = vmatpush.bf16.msra.mxu0 %v468
  %615 = vmatpush.bf16.msra.mxu0 %v467
  %616 = vmatpush.bf16.msra.mxu0 %v466
  %617 = vmatmul.bf16.gmra.mxu0 %v173
  %v618 = vpop.f32.mrf.mxu0
  %v619 = vadd.f32 %v606, %v618
  %v620 = vpop.f32.mrf.mxu0
  %621 = vdwg.mxu0
  %622 = vmatpush.bf16.msra.mxu0 %v481
  %623 = vmatpush.bf16.msra.mxu0 %v480
  %624 = vmatpush.bf16.msra.mxu0 %v479
  %625 = vmatpush.bf16.msra.mxu0 %v478
  %626 = vmatpush.bf16.msra.mxu0 %v477
  %627 = vmatpush.bf16.msra.mxu0 %v476
  %628 = vmatpush.bf16.msra.mxu0 %v475
  %629 = vmatpush.bf16.msra.mxu0 %v474
  %630 = vmatmul.bf16.gmra.mxu0 %v174
  %v631 = vpop.f32.mrf.mxu0
  %v632 = vadd.f32 %v619, %v631
  %v633 = vpop.f32.mrf.mxu0
  %634 = vdwg.mxu0
  %635 = vmatpush.bf16.msra.mxu0 %v489
  %636 = vmatpush.bf16.msra.mxu0 %v488
  %637 = vmatpush.bf16.msra.mxu0 %v487
  %638 = vmatpush.bf16.msra.mxu0 %v486
  %639 = vmatpush.bf16.msra.mxu0 %v485
  %640 = vmatpush.bf16.msra.mxu0 %v484
  %641 = vmatpush.bf16.msra.mxu0 %v483
  %642 = vmatpush.bf16.msra.mxu0 %v482
  %643 = vmatmul.bf16.gmra.mxu0 %v175
  %v644 = vpop.f32.mrf.mxu0
  %v645 = vadd.f32 %v632, %v644
  %v646 = vpop.f32.mrf.mxu0
  %647 = vdwg.mxu0
  %648 = vmatpush.bf16.msra.mxu0 %v497
  %649 = vmatpush.bf16.msra.mxu0 %v496
  %650 = vmatpush.bf16.msra.mxu0 %v495
  %651 = vmatpush.bf16.msra.mxu0 %v494
  %652 = vmatpush.bf16.msra.mxu0 %v493
  %653 = vmatpush.bf16.msra.mxu0 %v492
  %654 = vmatpush.bf16.msra.mxu0 %v491
  %655 = vmatpush.bf16.msra.mxu0 %v490
  %656 = vmatmul.bf16.gmra.mxu0 %v176
  %v657 = vpop.f32.mrf.mxu0
  %v658 = vadd.f32 %v645, %v657
  %v659 = vpop.f32.mrf.mxu0
  %660 = vdwg.mxu0
  %661 = vmatpush.bf16.msra.mxu0 %v505
  %662 = vmatpush.bf16.msra.mxu0 %v504
  %663 = vmatpush.bf16.msra.mxu0 %v503
  %664 = vmatpush.bf16.msra.mxu0 %v502
  %665 = vmatpush.bf16.msra.mxu0 %v501
  %666 = vmatpush.bf16.msra.mxu0 %v500
  %667 = vmatpush.bf16.msra.mxu0 %v499
  %668 = vmatpush.bf16.msra.mxu0 %v498
  %669 = vmatmul.bf16.gmra.mxu0 %v177
  %v670 = vpop.f32.mrf.mxu0
  %v671 = vadd.f32 %v658, %v670
  %v672 = vpop.f32.mrf.mxu0
  %673 = vdwg.mxu0
  %vm674 = vcmp.gt.f32.partialorder %v671, 0.0
  %v675 = vmul.f32 %v671, 0.2
  %v676 = vsel %vm674, %v671, %v675
  %677 = vst [vmem:[%s5] sm:$0xff] %v676
  %v678 = vpack.c.bf16 %v676, %v676
  %v679 = vld [vmem:[%s3] sm:$0xff]
  %v680 = vld [vmem:[%s3 + $0x8] sm:$0xff]
  %v681 = vld [vmem:[%s3 + $0x10] sm:$0xff]
  %v682 = vld [vmem:[%s3 + $0x18] sm:$0xff]
  %v683 = vld [vmem:[%s3 + $0x20] sm:$0xff]
  %v684 = vld [vmem:[%s3 + $0x28] sm:$0xff]
  %v685 = vld [vmem:[%s3 + $0x30] sm:$0xff]
  %v686 = vld [vmem:[%s3 + $0x38] sm:$0xff]
  %v687 = vld [vmem:[%s3 + $0x40] sm:$0xff]
  %v688 = vld [vmem:[%s3 + $0x48] sm:$0xff]
  %v689 = vld [vmem:[%s3 + $0x50] sm:$0xff]
  %v690 = vld [vmem:[%s3 + $0x58] sm:$0xff]
  %v691 = vld [vmem:[%s3 + $0x60] sm:$0xff]
  %v692 = vld [vmem:[%s3 + $0x68] sm:$0xff]
  %v693 = vld [vmem:[%s3 + $0x70] sm:$0xff]
  %v694 = vld [vmem:[%s3 + $0x78] sm:$0xff]
  %v695 = vld [vmem:[%s3 + $0x80] sm:$0xff]
  %v696 = vld [vmem:[%s3 + $0x88] sm:$0xff]
  %v697 = vld [vmem:[%s3 + $0x90] sm:$0xff]
  %v698 = vld [vmem:[%s3 + $0x98] sm:$0xff]
  %v699 = vld [vmem:[%s3 + $0xa0] sm:$0xff]
  %v700 = vld [vmem:[%s3 + $0xa8] sm:$0xff]
  %v701 = vld [vmem:[%s3 + $0xb0] sm:$0xff]
  %v702 = vld [vmem:[%s3 + $0xb8] sm:$0xff]
  %v703 = vld [vmem:[%s3 + $0xc0] sm:$0xff]
  %v704 = vld [vmem:[%s3 + $0xc8] sm:$0xff]
  %v705 = vld [vmem:[%s3 + $0xd0] sm:$0xff]
  %v706 = vld [vmem:[%s3 + $0xd8] sm:$0xff]
  %v707 = vld [vmem:[%s3 + $0xe0] sm:$0xff]
  %v708 = vld [vmem:[%s3 + $0xe8] sm:$0xff]
  %v709 = vld [vmem:[%s3 + $0xf0] sm:$0xff]
  %v710 = vld [vmem:[%s3 + $0xf8] sm:$0xff]
  %v711 = vld [vmem:[%s4] sm:$0xf]
  %v713 = vperm.slane %v711, 0
  %v714 = vperm.slane %v711, 1
  %v715 = vperm.slane %v711, 2
  %v716 = vperm.slane %v711, 3
  %v753 = vunpack.c.l.b16 %v679
  %v754 = vunpack.c.h.b16 %v679
  %v755 = vunpack.c.l.b16 %v680
  %v756 = vunpack.c.h.b16 %v680
  %v757 = vunpack.c.l.b16 %v681
  %v758 = vunpack.c.h.b16 %v681
  %v759 = vunpack.c.l.b16 %v682
  %v760 = vunpack.c.h.b16 %v682
  %v761 = vunpack.c.l.b16 %v683
  %v762 = vunpack.c.h.b16 %v683
  %v763 = vunpack.c.l.b16 %v684
  %v764 = vunpack.c.h.b16 %v684
  %v765 = vunpack.c.l.b16 %v685
  %v766 = vunpack.c.h.b16 %v685
  %v767 = vunpack.c.l.b16 %v686
  %v768 = vunpack.c.h.b16 %v686
  %v769 = vunpack.c.l.b16 %v687
  %v770 = vunpack.c.h.b16 %v687
  %v771 = vunpack.c.l.b16 %v688
  %v772 = vunpack.c.h.b16 %v688
  %v773 = vunpack.c.l.b16 %v689
  %v774 = vunpack.c.h.b16 %v689
  %v775 = vunpack.c.l.b16 %v690
  %v776 = vunpack.c.h.b16 %v690
  %v777 = vunpack.c.l.b16 %v691
  %v778 = vunpack.c.h.b16 %v691
  %v779 = vunpack.c.l.b16 %v692
  %v780 = vunpack.c.h.b16 %v692
  %v781 = vunpack.c.l.b16 %v693
  %v782 = vunpack.c.h.b16 %v693
  %v783 = vunpack.c.l.b16 %v694
  %v784 = vunpack.c.h.b16 %v694
  %v785 = vunpack.c.l.b16 %v695
  %v786 = vunpack.c.h.b16 %v695
  %v787 = vunpack.c.l.b16 %v696
  %v788 = vunpack.c.h.b16 %v696
  %v789 = vunpack.c.l.b16 %v697
  %v790 = vunpack.c.h.b16 %v697
  %v791 = vunpack.c.l.b16 %v698
  %v792 = vunpack.c.h.b16 %v698
  %v793 = vunpack.c.l.b16 %v699
  %v794 = vunpack.c.h.b16 %v699
  %v795 = vunpack.c.l.b16 %v700
  %v796 = vunpack.c.h.b16 %v700
  %v797 = vunpack.c.l.b16 %v701
  %v798 = vunpack.c.h.b16 %v701
  %v799 = vunpack.c.l.b16 %v702
  %v800 = vunpack.c.h.b16 %v702
  %v801 = vunpack.c.l.b16 %v703
  %v802 = vunpack.c.h.b16 %v703
  %v803 = vunpack.c.l.b16 %v704
  %v804 = vunpack.c.h.b16 %v704
  %v805 = vunpack.c.l.b16 %v705
  %v806 = vunpack.c.h.b16 %v705
  %v807 = vunpack.c.l.b16 %v706
  %v808 = vunpack.c.h.b16 %v706
  %v809 = vunpack.c.l.b16 %v707
  %v810 = vunpack.c.h.b16 %v707
  %v811 = vunpack.c.l.b16 %v708
  %v812 = vunpack.c.h.b16 %v708
  %v813 = vunpack.c.l.b16 %v709
  %v814 = vunpack.c.h.b16 %v709
  %v815 = vunpack.c.l.b16 %v710
  %v816 = vunpack.c.h.b16 %v710
  %v817 = vpack.c.b16 %v757, %v753
  %v818 = vpack.c.b16 %v758, %v754
  %v819 = vpack.c.b16 %v759, %v755
  %v820 = vpack.c.b16 %v760, %v756
  %v821 = vpack.c.b16 %v765, %v761
  %v822 = vpack.c.b16 %v766, %v762
  %v823 = vpack.c.b16 %v767, %v763
  %v824 = vpack.c.b16 %v768, %v764
  %v825 = vpack.c.b16 %v773, %v769
  %v826 = vpack.c.b16 %v774, %v770
  %v827 = vpack.c.b16 %v775, %v771
  %v828 = vpack.c.b16 %v776, %v772
  %v829 = vpack.c.b16 %v781, %v777
  %v830 = vpack.c.b16 %v782, %v778
  %v831 = vpack.c.b16 %v783, %v779
  %v832 = vpack.c.b16 %v784, %v780
  %v833 = vpack.c.b16 %v789, %v785
  %v834 = vpack.c.b16 %v790, %v786
  %v835 = vpack.c.b16 %v791, %v787
  %v836 = vpack.c.b16 %v792, %v788
  %v837 = vpack.c.b16 %v797, %v793
  %v838 = vpack.c.b16 %v798, %v794
  %v839 = vpack.c.b16 %v799, %v795
  %v840 = vpack.c.b16 %v800, %v796
  %v841 = vpack.c.b16 %v805, %v801
  %v842 = vpack.c.b16 %v806, %v802
  %v843 = vpack.c.b16 %v807, %v803
  %v844 = vpack.c.b16 %v808, %v804
  %v845 = vpack.c.b16 %v813, %v809
  %v846 = vpack.c.b16 %v814, %v810
  %v847 = vpack.c.b16 %v815, %v811
  %v848 = vpack.c.b16 %v816, %v812
  %881 = vmatpush.bf16.msra.mxu0 %v845
  %882 = vmatpush.bf16.msra.mxu0 %v841
  %883 = vmatpush.bf16.msra.mxu0 %v837
  %884 = vmatpush.bf16.msra.mxu0 %v833
  %885 = vmatpush.bf16.msra.mxu0 %v829
  %886 = vmatpush.bf16.msra.mxu0 %v825
  %887 = vmatpush.bf16.msra.mxu0 %v821
  %888 = vmatpush.bf16.msra.mxu0 %v817
  %889 = vmatmul.bf16.gmra.mxu0 %v678
  %v890 = vpop.f32.mrf.mxu0
  %v891 = vadd.f32 %v713, %v890
  %v892 = vpop.f32.mrf.mxu0
  %893 = vdwg.mxu0
  %894 = vmatpush.bf16.msra.mxu0 %v846
  %895 = vmatpush.bf16.msra.mxu0 %v842
  %896 = vmatpush.bf16.msra.mxu0 %v838
  %897 = vmatpush.bf16.msra.mxu0 %v834
  %898 = vmatpush.bf16.msra.mxu0 %v830
  %899 = vmatpush.bf16.msra.mxu0 %v826
  %900 = vmatpush.bf16.msra.mxu0 %v822
  %901 = vmatpush.bf16.msra.mxu0 %v818
  %902 = vmatmul.bf16.gmra.mxu0 %v678
  %v903 = vpop.f32.mrf.mxu0
  %v904 = vadd.f32 %v714, %v903
  %v905 = vpop.f32.mrf.mxu0
  %906 = vdwg.mxu0
  %907 = vmatpush.bf16.msra.mxu0 %v847
  %908 = vmatpush.bf16.msra.mxu0 %v843
  %909 = vmatpush.bf16.msra.mxu0 %v839
  %910 = vmatpush.bf16.msra.mxu0 %v835
  %911 = vmatpush.bf16.msra.mxu0 %v831
  %912 = vmatpush.bf16.msra.mxu0 %v827
  %913 = vmatpush.bf16.msra.mxu0 %v823
  %914 = vmatpush.bf16.msra.mxu0 %v819
  %915 = vmatmul.bf16.gmra.mxu0 %v678
  %v916 = vpop.f32.mrf.mxu0
  %v917 = vadd.f32 %v715, %v916
  %v918 = vpop.f32.mrf.mxu0
  %919 = vdwg.mxu0
  %920 = vmatpush.bf16.msra.mxu0 %v848
  %921 = vmatpush.bf16.msra.mxu0 %v844
  %922 = vmatpush.bf16.msra.mxu0 %v840
  %923 = vmatpush.bf16.msra.mxu0 %v836
  %924 = vmatpush.bf16.msra.mxu0 %v832
  %925 = vmatpush.bf16.msra.mxu0 %v828
  %926 = vmatpush.bf16.msra.mxu0 %v824
  %927 = vmatpush.bf16.msra.mxu0 %v820
  %928 = vmatmul.bf16.gmra.mxu0 %v678
  %v929 = vpop.f32.mrf.mxu0
  %v930 = vadd.f32 %v716, %v929
  %v931 = vpop.f32.mrf.mxu0
  %932 = vdwg.mxu0
  %v933 = vmax.f32 %v891, 0.0
  %v934 = vmax.f32 %v904, 0.0
  %v935 = vmax.f32 %v917, 0.0
  %v936 = vmax.f32 %v930, 0.0
  %v937 = vpack.c.bf16 %v934, %v933
  %v938 = vpack.c.bf16 %v936, %v935
  %939 = vst [vmem:[%s6] sm:$0xff] %v937
  %940 = vst [vmem:[%s6 + $0x8] sm:$0xff] %v938
  // Predicated region
  $region22: #{ae_forward.15} parent=0 // pred_check
    _
  $region23: #{ae_forward.15} parent=0 // pred_check_branch
    %942 = sbr.rel (0) target = $region25
  $region24: #{ae_forward.15} parent=0 // pred_region
    _
  $region25: #{ae_forward.15} parent=0 // pred_fallthru
    _
  // Predicated region
  $region26: #{ae_forward.15} parent=0 // pred_check
    _
  $region27: #{ae_forward.15} parent=0 // pred_check_branch
    %944 = sbr.rel (0) target = $region29
  $region28: #{ae_forward.15} parent=0 // pred_region
    _
  $region29: #{ae_forward.15} parent=0 // pred_fallthru
    _
  // Predicated region
  $region30: #{ae_forward.15} parent=0 // pred_check
    _
  $region31: #{ae_forward.15} parent=0 // pred_check_branch
    %946 = sbr.rel (0) target = $region33
  $region32: #{ae_forward.15} parent=0 // pred_region
    _
  $region33: #{ae_forward.15} parent=0 // pred_fallthru
    _
  // Predicated region
  $region34: #{ae_forward.15} parent=0 // pred_check
    _
  $region35: #{ae_forward.15} parent=0 // pred_check_branch
    %948 = sbr.rel (0) target = $region37
  $region36: #{ae_forward.15} parent=0 // pred_region
    _
  $region37: #{ae_forward.15} parent=0 // pred_fallthru
    _

// kernel: ae_forward.17
$region0: #{ae_forward.17}
  #allocation0 [shape = 'u32[]', space=smem, size = 0x4, offset = 0x4, fixed_abs, tag = 'smem constant byte address 0x4 - core index']
  #allocation1 [shape = 'u32[72,128]{1,0:T(1,128)}', space=vmem, size = 0x9000, scoped, tag = 'internal scratch']
  %s0 = inlined_call_operand.vmem [shape: bf16[32,64], index: 0, kind: input, shape index: {}]
  %s1 = inlined_call_operand.vmem [shape: bf16[64,384], index: 1, kind: input, shape index: {}]
  %s2 = inlined_call_operand.vmem [shape: f32[1,384], index: 2, kind: input, shape index: {}]
  %s3 = inlined_call_operand.vmem [shape: f32[32,384], index: 3, kind: output, shape index: {}]
  %s4 = sld [smem:[#allocation0]]
  $region22: #{ae_forward.17} parent=0
    _
  %s6 = ssub.s32 1, %s4
  %s7 = scalar_select 0, %s6, %s4
  // Predicated region
  $region2: #{ae_forward.17} parent=0 // pred_check
    _
  $region3: #{ae_forward.17} parent=0 // pred_check_branch
    %9 = sbr.rel (0) target = $region5
  $region4: #{ae_forward.17} parent=0 // pred_region
    _
  $region5: #{ae_forward.17} parent=0 // pred_fallthru
    _
  // Predicated region
  $region6: #{ae_forward.17} parent=0 // pred_check
    _
  $region7: #{ae_forward.17} parent=0 // pred_check_branch
    %11 = sbr.rel (0) target = $region9
  $region8: #{ae_forward.17} parent=0 // pred_region
    _
  $region9: #{ae_forward.17} parent=0 // pred_fallthru
    _
  // Predicated region
  $region10: #{ae_forward.17} parent=0 // pred_check
    _
  $region11: #{ae_forward.17} parent=0 // pred_check_branch
    %13 = sbr.rel (0) target = $region13
  $region12: #{ae_forward.17} parent=0 // pred_region
    _
  $region13: #{ae_forward.17} parent=0 // pred_fallthru
    _
  %v15 = vld [vmem:[%s0] sm:$0xf]
  %v16 = vld [vmem:[%s0 + $0x4] sm:$0xf]
  %v17 = vld [vmem:[%s0 + $0x8] sm:$0xf]
  %v18 = vld [vmem:[%s0 + $0xc] sm:$0xf]
  %v19 = vld [vmem:[%s1] sm:$0xff]
  %v20 = vld [vmem:[%s1 + $0x8] sm:$0xf]
  %v21 = vld [vmem:[%s1 + $0xc] sm:$0xff]
  %v22 = vld [vmem:[%s1 + $0x14] sm:$0xf]
  %v23 = vld [vmem:[%s1 + $0x18] sm:$0xff]
  %v24 = vld [vmem:[%s1 + $0x20] sm:$0xf]
  %v25 = vld [vmem:[%s1 + $0x24] sm:$0xff]
  %v26 = vld [vmem:[%s1 + $0x2c] sm:$0xf]
  %v27 = vld [vmem:[%s1 + $0x30] sm:$0xff]
  %v28 = vld [vmem:[%s1 + $0x38] sm:$0xf]
  %v29 = vld [vmem:[%s1 + $0x3c] sm:$0xff]
  %v30 = vld [vmem:[%s1 + $0x44] sm:$0xf]
  %v31 = vld [vmem:[%s1 + $0x48] sm:$0xff]
  %v32 = vld [vmem:[%s1 + $0x50] sm:$0xf]
  %v33 = vld [vmem:[%s1 + $0x54] sm:$0xff]
  %v34 = vld [vmem:[%s1 + $0x5c] sm:$0xf]
  %v35 = vld [vmem:[%s2] sm:$0x7]
  %v37 = vperm.slane %v35, 0
  %v38 = vperm.slane %v35, 1
  %v39 = vperm.slane %v35, 2
  %v47 = vunpack.c.l.b16 %v15
  %v48 = vunpack.c.l.b16 %v16
  %v49 = vunpack.c.l.b16 %v17
  %v50 = vunpack.c.l.b16 %v18
  %v51 = vpack.c.b16 %v48, %v47
  %v52 = vpack.c.b16 %v50, %v49
  %v69 = vunpack.c.l.b16 %v19
  %v70 = vunpack.c.h.b16 %v19
  %v71 = vunpack.c.l.b16 %v20
  %v72 = vunpack.c.l.b16 %v21
  %v73 = vunpack.c.h.b16 %v21
  %v74 = vunpack.c.l.b16 %v22
  %v75 = vunpack.c.l.b16 %v23
  %v76 = vunpack.c.h.b16 %v23
  %v77 = vunpack.c.l.b16 %v24
  %v78 = vunpack.c.l.b16 %v25
  %v79 = vunpack.c.h.b16 %v25
  %v80 = vunpack.c.l.b16 %v26
  %v81 = vunpack.c.l.b16 %v27
  %v82 = vunpack.c.h.b16 %v27
  %v83 = vunpack.c.l.b16 %v28
  %v84 = vunpack.c.l.b16 %v29
  %v85 = vunpack.c.h.b16 %v29
  %v86 = vunpack.c.l.b16 %v30
  %v87 = vunpack.c.l.b16 %v31
  %v88 = vunpack.c.h.b16 %v31
  %v89 = vunpack.c.l.b16 %v32
  %v90 = vunpack.c.l.b16 %v33
  %v91 = vunpack.c.h.b16 %v33
  %v92 = vunpack.c.l.b16 %v34
  %v93 = vpack.c.b16 %v72, %v69
  %v94 = vpack.c.b16 %v73, %v70
  %v95 = vpack.c.b16 %v74, %v71
  %v96 = vpack.c.b16 %v78, %v75
  %v97 = vpack.c.b16 %v79, %v76
  %v98 = vpack.c.b16 %v80, %v77
  %v99 = vpack.c.b16 %v84, %v81
  %v100 = vpack.c.b16 %v85, %v82
  %v101 = vpack.c.b16 %v86, %v83
  %v102 = vpack.c.b16 %v90, %v87
  %v103 = vpack.c.b16 %v91, %v88
  %v104 = vpack.c.b16 %v92, %v89
  %vm117 = vcmask 523264
  %v119 = vsel %vm117, %v51, 0
  %v122 = vsel %vm117, %v52, 0
  %124 = vmatpush.bf16.msra.mxu0 0
  %125 = vmatpush.bf16.msra.mxu0 0
  %126 = vmatpush.bf16.msra.mxu0 0
  %127 = vmatpush.bf16.msra.mxu0 0
  %128 = vmatpush.bf16.msra.mxu0 %v102
  %129 = vmatpush.bf16.msra.mxu0 %v99
  %130 = vmatpush.bf16.msra.mxu0 %v96
  %131 = vmatpush.bf16.msra.mxu0 %v93
  %132 = vmatmul.bf16.gmra.mxu0 %v119
  %v133 = vpop.f32.mrf.mxu0
  %v134 = vadd.f32 %v37, %v133
  %v135 = vpop.f32.mrf.mxu0
  %v136 = vadd.f32 %v37, %v135
  %137 = vmatmul.bf16.gmra.mxu0 %v122
  %v138 = vpop.f32.mrf.mxu0
  %v139 = vadd.f32 %v37, %v138
  %v140 = vpop.f32.mrf.mxu0
  %v141 = vadd.f32 %v37, %v140
  %142 = vdwg.mxu0
  %143 = vmatpush.bf16.msra.mxu0 0
  %144 = vmatpush.bf16.msra.mxu0 0
  %145 = vmatpush.bf16.msra.mxu0 0
  %146 = vmatpush.bf16.msra.mxu0 0
  %147 = vmatpush.bf16.msra.mxu0 %v103
  %148 = vmatpush.bf16.msra.mxu0 %v100
  %149 = vmatpush.bf16.msra.mxu0 %v97
  %150 = vmatpush.bf16.msra.mxu0 %v94
  %151 = vmatmul.bf16.gmra.mxu0 %v119
  %v152 = vpop.f32.mrf.mxu0
  %v153 = vadd.f32 %v38, %v152
  %v154 = vpop.f32.mrf.mxu0
  %v155 = vadd.f32 %v38, %v154
  %156 = vmatmul.bf16.gmra.mxu0 %v122
  %v157 = vpop.f32.mrf.mxu0
  %v158 = vadd.f32 %v38, %v157
  %v159 = vpop.f32.mrf.mxu0
  %v160 = vadd.f32 %v38, %v159
  %161 = vdwg.mxu0
  %162 = vmatpush.bf16.msra.mxu0 0
  %163 = vmatpush.bf16.msra.mxu0 0
  %164 = vmatpush.bf16.msra.mxu0 0
  %165 = vmatpush.bf16.msra.mxu0 0
  %166 = vmatpush.bf16.msra.mxu0 %v104
  %167 = vmatpush.bf16.msra.mxu0 %v101
  %168 = vmatpush.bf16.msra.mxu0 %v98
  %169 = vmatpush.bf16.msra.mxu0 %v95
  %170 = vmatmul.bf16.gmra.mxu0 %v119
  %v171 = vpop.f32.mrf.mxu0
  %v172 = vadd.f32 %v39, %v171
  %v173 = vpop.f32.mrf.mxu0
  %v174 = vadd.f32 %v39, %v173
  %175 = vmatmul.bf16.gmra.mxu0 %v122
  %v176 = vpop.f32.mrf.mxu0
  %v177 = vadd.f32 %v39, %v176
  %v178 = vpop.f32.mrf.mxu0
  %v179 = vadd.f32 %v39, %v178
  %180 = vdwg.mxu0
  %181 = vst [vmem:[%s3] sm:$0xff] %v134
  %182 = vst [vmem:[%s3 + $0x8] sm:$0xff] %v153
  %183 = vst [vmem:[%s3 + $0x10] sm:$0xff] %v172
  %184 = vst [vmem:[%s3 + $0x18] sm:$0xff] %v136
  %185 = vst [vmem:[%s3 + $0x20] sm:$0xff] %v155
  %186 = vst [vmem:[%s3 + $0x28] sm:$0xff] %v174
  %187 = vst [vmem:[%s3 + $0x30] sm:$0xff] %v139
  %188 = vst [vmem:[%s3 + $0x38] sm:$0xff] %v158
  %189 = vst [vmem:[%s3 + $0x40] sm:$0xff] %v177
  %190 = vst [vmem:[%s3 + $0x48] sm:$0xff] %v141
  %191 = vst [vmem:[%s3 + $0x50] sm:$0xff] %v160
  %192 = vst [vmem:[%s3 + $0x58] sm:$0xff] %v179
  // Predicated region
  $region14: #{ae_forward.17} parent=0 // pred_check
    _
  $region15: #{ae_forward.17} parent=0 // pred_check_branch
    %194 = sbr.rel (0) target = $region17
  $region16: #{ae_forward.17} parent=0 // pred_region
    _
  $region17: #{ae_forward.17} parent=0 // pred_fallthru
    _
  // Predicated region
  $region18: #{ae_forward.17} parent=0 // pred_check
    _
  $region19: #{ae_forward.17} parent=0 // pred_check_branch
    %196 = sbr.rel (0) target = $region21
  $region20: #{ae_forward.17} parent=0 // pred_region
    _
  $region21: #{ae_forward.17} parent=0 // pred_fallthru
    _

// kernel: ae_forward.18
$region0: #{ae_forward.18}
  #allocation0 [shape = 'u32[]', space=smem, size = 0x4, offset = 0x4, fixed_abs, tag = 'smem constant byte address 0x4 - core index']
  #allocation1 [shape = 'u32[72,128]{1,0:T(1,128)}', space=vmem, size = 0x9000, scoped, tag = 'internal scratch']
  %s0 = inlined_call_operand.vmem [shape: bf16[112,32], index: 0, kind: input, shape index: {}]
  %s1 = inlined_call_operand.vmem [shape: bf16[32,256], index: 1, kind: input, shape index: {}]
  %s2 = inlined_call_operand.vmem [shape: f32[1,256], index: 2, kind: input, shape index: {}]
  %s3 = inlined_call_operand.vmem [shape: f32[112,256], index: 3, kind: output, shape index: {}]
  %s4 = sld [smem:[#allocation0]]
  $region22: #{ae_forward.18} parent=0
    _
  %s6 = ssub.s32 1, %s4
  %s7 = scalar_select 0, %s6, %s4
  // Predicated region
  $region2: #{ae_forward.18} parent=0 // pred_check
    _
  $region3: #{ae_forward.18} parent=0 // pred_check_branch
    %9 = sbr.rel (0) target = $region5
  $region4: #{ae_forward.18} parent=0 // pred_region
    _
  $region5: #{ae_forward.18} parent=0 // pred_fallthru
    _
  // Predicated region
  $region6: #{ae_forward.18} parent=0 // pred_check
    _
  $region7: #{ae_forward.18} parent=0 // pred_check_branch
    %11 = sbr.rel (0) target = $region9
  $region8: #{ae_forward.18} parent=0 // pred_region
    _
  $region9: #{ae_forward.18} parent=0 // pred_fallthru
    _
  // Predicated region
  $region10: #{ae_forward.18} parent=0 // pred_check
    _
  $region11: #{ae_forward.18} parent=0 // pred_check_branch
    %13 = sbr.rel (0) target = $region13
  $region12: #{ae_forward.18} parent=0 // pred_region
    _
  $region13: #{ae_forward.18} parent=0 // pred_fallthru
    _
  %v15 = vld [vmem:[%s0] sm:$0xf]
  %v16 = vld [vmem:[%s0 + $0x4] sm:$0xf]
  %v17 = vld [vmem:[%s0 + $0x8] sm:$0xf]
  %v18 = vld [vmem:[%s0 + $0xc] sm:$0xf]
  %v19 = vld [vmem:[%s0 + $0x10] sm:$0xf]
  %v20 = vld [vmem:[%s0 + $0x14] sm:$0xf]
  %v21 = vld [vmem:[%s0 + $0x18] sm:$0xf]
  %v22 = vld [vmem:[%s0 + $0x1c] sm:$0xf]
  %v23 = vld [vmem:[%s0 + $0x20] sm:$0xf]
  %v24 = vld [vmem:[%s0 + $0x24] sm:$0xf]
  %v25 = vld [vmem:[%s0 + $0x28] sm:$0xf]
  %v26 = vld [vmem:[%s0 + $0x2c] sm:$0xf]
  %v27 = vld [vmem:[%s0 + $0x30] sm:$0xf]
  %v28 = vld [vmem:[%s0 + $0x34] sm:$0xf]
  %v29 = vld [vmem:[%s1] sm:$0xff]
  %v30 = vld [vmem:[%s1 + $0x8] sm:$0xff]
  %v31 = vld [vmem:[%s1 + $0x10] sm:$0xff]
  %v32 = vld [vmem:[%s1 + $0x18] sm:$0xff]
  %v33 = vld [vmem:[%s2] sm:$0x3]
  %v35 = vperm.slane %v33, 0
  %v36 = vperm.slane %v33, 1
  %v53 = vunpack.c.l.b16 %v15
  %v54 = vunpack.c.l.b16 %v16
  %v55 = vunpack.c.l.b16 %v17
  %v56 = vunpack.c.l.b16 %v18
  %v57 = vunpack.c.l.b16 %v19
  %v58 = vunpack.c.l.b16 %v20
  %v59 = vunpack.c.l.b16 %v21
  %v60 = vunpack.c.l.b16 %v22
  %v61 = vunpack.c.l.b16 %v23
  %v62 = vunpack.c.l.b16 %v24
  %v63 = vunpack.c.l.b16 %v25
  %v64 = vunpack.c.l.b16 %v26
  %v65 = vunpack.c.l.b16 %v27
  %v66 = vunpack.c.l.b16 %v28
  %v67 = vpack.c.b16 %v54, %v53
  %v68 = vpack.c.b16 %v56, %v55
  %v69 = vpack.c.b16 %v58, %v57
  %v70 = vpack.c.b16 %v60, %v59
  %v71 = vpack.c.b16 %v62, %v61
  %v72 = vpack.c.b16 %v64, %v63
  %v73 = vpack.c.b16 %v66, %v65
  %v78 = vunpack.c.l.b16 %v29
  %v79 = vunpack.c.h.b16 %v29
  %v80 = vunpack.c.l.b16 %v30
  %v81 = vunpack.c.h.b16 %v30
  %v82 = vunpack.c.l.b16 %v31
  %v83 = vunpack.c.h.b16 %v31
  %v84 = vunpack.c.l.b16 %v32
  %v85 = vunpack.c.h.b16 %v32
  %v86 = vpack.c.b16 %v80, %v78
  %v87 = vpack.c.b16 %v81, %v79
  %v88 = vpack.c.b16 %v84, %v82
  %v89 = vpack.c.b16 %v85, %v83
  %vm94 = vcmask 261120
  %v96 = vsel %vm94, %v67, 0
  %v99 = vsel %vm94, %v68, 0
  %v102 = vsel %vm94, %v69, 0
  %v105 = vsel %vm94, %v70, 0
  %v108 = vsel %vm94, %v71, 0
  %v111 = vsel %vm94, %v72, 0
  %v114 = vsel %vm94, %v73, 0
  %116 = vmatpush.bf16.msra.mxu0 0
  %117 = vmatpush.bf16.msra.mxu0 0
  %118 = vmatpush.bf16.msra.mxu0 0
  %119 = vmatpush.bf16.msra.mxu0 0
  %120 = vmatpush.bf16.msra.mxu0 0
  %121 = vmatpush.bf16.msra.mxu0 0
  %122 = vmatpush.bf16.msra.mxu0 %v88
  %123 = vmatpush.bf16.msra.mxu0 %v86
  %124 = vmatmul.bf16.gmra.mxu0 %v96
  %v125 = vpop.f32.mrf.mxu0
  %v126 = vadd.f32 %v35, %v125
  %v127 = vpop.f32.mrf.mxu0
  %v128 = vadd.f32 %v35, %v127
  %129 = vmatmul.bf16.gmra.mxu0 %v99
  %v130 = vpop.f32.mrf.mxu0
  %v131 = vadd.f32 %v35, %v130
  %v132 = vpop.f32.mrf.mxu0
  %v133 = vadd.f32 %v35, %v132
  %134 = vmatmul.bf16.gmra.mxu0 %v102
  %v135 = vpop.f32.mrf.mxu0
  %v136 = vadd.f32 %v35, %v135
  %v137 = vpop.f32.mrf.mxu0
  %v138 = vadd.f32 %v35, %v137
  %139 = vmatmul.bf16.gmra.mxu0 %v105
  %v140 = vpop.f32.mrf.mxu0
  %v141 = vadd.f32 %v35, %v140
  %v142 = vpop.f32.mrf.mxu0
  %v143 = vadd.f32 %v35, %v142
  %144 = vmatmul.bf16.gmra.mxu0 %v108
  %v145 = vpop.f32.mrf.mxu0
  %v146 = vadd.f32 %v35, %v145
  %v147 = vpop.f32.mrf.mxu0
  %v148 = vadd.f32 %v35, %v147
  %149 = vmatmul.bf16.gmra.mxu0 %v111
  %v150 = vpop.f32.mrf.mxu0
  %v151 = vadd.f32 %v35, %v150
  %v152 = vpop.f32.mrf.mxu0
  %v153 = vadd.f32 %v35, %v152
  %154 = vmatmul.bf16.gmra.mxu0 %v114
  %v155 = vpop.f32.mrf.mxu0
  %v156 = vadd.f32 %v35, %v155
  %v157 = vpop.f32.mrf.mxu0
  %v158 = vadd.f32 %v35, %v157
  %159 = vdwg.mxu0
  %160 = vmatpush.bf16.msra.mxu0 0
  %161 = vmatpush.bf16.msra.mxu0 0
  %162 = vmatpush.bf16.msra.mxu0 0
  %163 = vmatpush.bf16.msra.mxu0 0
  %164 = vmatpush.bf16.msra.mxu0 0
  %165 = vmatpush.bf16.msra.mxu0 0
  %166 = vmatpush.bf16.msra.mxu0 %v89
  %167 = vmatpush.bf16.msra.mxu0 %v87
  %168 = vmatmul.bf16.gmra.mxu0 %v96
  %v169 = vpop.f32.mrf.mxu0
  %v170 = vadd.f32 %v36, %v169
  %v171 = vpop.f32.mrf.mxu0
  %v172 = vadd.f32 %v36, %v171
  %173 = vmatmul.bf16.gmra.mxu0 %v99
  %v174 = vpop.f32.mrf.mxu0
  %v175 = vadd.f32 %v36, %v174
  %v176 = vpop.f32.mrf.mxu0
  %v177 = vadd.f32 %v36, %v176
  %178 = vmatmul.bf16.gmra.mxu0 %v102
  %v179 = vpop.f32.mrf.mxu0
  %v180 = vadd.f32 %v36, %v179
  %v181 = vpop.f32.mrf.mxu0
  %v182 = vadd.f32 %v36, %v181
  %183 = vmatmul.bf16.gmra.mxu0 %v105
  %v184 = vpop.f32.mrf.mxu0
  %v185 = vadd.f32 %v36, %v184
  %v186 = vpop.f32.mrf.mxu0
  %v187 = vadd.f32 %v36, %v186
  %188 = vmatmul.bf16.gmra.mxu0 %v108
  %v189 = vpop.f32.mrf.mxu0
  %v190 = vadd.f32 %v36, %v189
  %v191 = vpop.f32.mrf.mxu0
  %v192 = vadd.f32 %v36, %v191
  %193 = vmatmul.bf16.gmra.mxu0 %v111
  %v194 = vpop.f32.mrf.mxu0
  %v195 = vadd.f32 %v36, %v194
  %v196 = vpop.f32.mrf.mxu0
  %v197 = vadd.f32 %v36, %v196
  %198 = vmatmul.bf16.gmra.mxu0 %v114
  %v199 = vpop.f32.mrf.mxu0
  %v200 = vadd.f32 %v36, %v199
  %v201 = vpop.f32.mrf.mxu0
  %v202 = vadd.f32 %v36, %v201
  %203 = vdwg.mxu0
  %204 = vst [vmem:[%s3] sm:$0xff] %v126
  %205 = vst [vmem:[%s3 + $0x8] sm:$0xff] %v170
  %206 = vst [vmem:[%s3 + $0x10] sm:$0xff] %v128
  %207 = vst [vmem:[%s3 + $0x18] sm:$0xff] %v172
  %208 = vst [vmem:[%s3 + $0x20] sm:$0xff] %v131
  %209 = vst [vmem:[%s3 + $0x28] sm:$0xff] %v175
  %210 = vst [vmem:[%s3 + $0x30] sm:$0xff] %v133
  %211 = vst [vmem:[%s3 + $0x38] sm:$0xff] %v177
  %212 = vst [vmem:[%s3 + $0x40] sm:$0xff] %v136
  %213 = vst [vmem:[%s3 + $0x48] sm:$0xff] %v180
  %214 = vst [vmem:[%s3 + $0x50] sm:$0xff] %v138
  %215 = vst [vmem:[%s3 + $0x58] sm:$0xff] %v182
  %216 = vst [vmem:[%s3 + $0x60] sm:$0xff] %v141
  %217 = vst [vmem:[%s3 + $0x68] sm:$0xff] %v185
  %218 = vst [vmem:[%s3 + $0x70] sm:$0xff] %v143
  %219 = vst [vmem:[%s3 + $0x78] sm:$0xff] %v187
  %220 = vst [vmem:[%s3 + $0x80] sm:$0xff] %v146
  %221 = vst [vmem:[%s3 + $0x88] sm:$0xff] %v190
  %222 = vst [vmem:[%s3 + $0x90] sm:$0xff] %v148
  %223 = vst [vmem:[%s3 + $0x98] sm:$0xff] %v192
  %224 = vst [vmem:[%s3 + $0xa0] sm:$0xff] %v151
  %225 = vst [vmem:[%s3 + $0xa8] sm:$0xff] %v195
  %226 = vst [vmem:[%s3 + $0xb0] sm:$0xff] %v153
  %227 = vst [vmem:[%s3 + $0xb8] sm:$0xff] %v197
  %228 = vst [vmem:[%s3 + $0xc0] sm:$0xff] %v156
  %229 = vst [vmem:[%s3 + $0xc8] sm:$0xff] %v200
  %230 = vst [vmem:[%s3 + $0xd0] sm:$0xff] %v158
  %231 = vst [vmem:[%s3 + $0xd8] sm:$0xff] %v202
  // Predicated region
  $region14: #{ae_forward.18} parent=0 // pred_check
    _
  $region15: #{ae_forward.18} parent=0 // pred_check_branch
    %233 = sbr.rel (0) target = $region17
  $region16: #{ae_forward.18} parent=0 // pred_region
    _
  $region17: #{ae_forward.18} parent=0 // pred_fallthru
    _
  // Predicated region
  $region18: #{ae_forward.18} parent=0 // pred_check
    _
  $region19: #{ae_forward.18} parent=0 // pred_check_branch
    %235 = sbr.rel (0) target = $region21
  $region20: #{ae_forward.18} parent=0 // pred_region
    _
  $region21: #{ae_forward.18} parent=0 // pred_fallthru
    _

// kernel: ae_forward.19
$region0: #{ae_forward.19}
  #allocation0 [shape = 'u32[]', space=smem, size = 0x4, offset = 0x4, fixed_abs, tag = 'smem constant byte address 0x4 - core index']
  #allocation1 [shape = 'u32[72,128]{1,0:T(1,128)}', space=vmem, size = 0x9000, scoped, tag = 'internal scratch']
  %s0 = inlined_call_operand.vmem [shape: bf16[512,16], index: 0, kind: input, shape index: {}]
  %s1 = inlined_call_operand.vmem [shape: bf16[16,128], index: 1, kind: input, shape index: {}]
  %s2 = inlined_call_operand.vmem [shape: f32[1,128], index: 2, kind: input, shape index: {}]
  %s3 = inlined_call_operand.vmem [shape: f32[512,128], index: 3, kind: output, shape index: {}]
  %s4 = sld [smem:[#allocation0]]
  $region45: #{ae_forward.19} parent=0
    _
  %s6 = ssub.s32 1, %s4
  %s7 = scalar_select 0, %s6, %s4
  loop: start=0, step=1, limit=4
  $region2: #{ae_forward.19} parent=0 // loop_pre_header
    _
  $region3: #{ae_forward.19} parent=0 // loop_header
    %s9 = sphi 0, %s13
    %p10 = scmp.ge.s32.totalorder %s9, 4
    %s19 = sphi 0, %s21
    %s22 = sphi 0, %s19
    %s23 = sphi 0, %s22
    %s39 = sphi 0, %s23
    %s43 = sphi 0, %s43
    %s45 = sphi 0, %s43
    %s46 = sphi 0, %s45
    %s60 = sphi 0, %s46
    %s64 = sphi 0, %s64
    %s66 = sphi 0, %s64
    %s67 = sphi 0, %s66
    %s81 = sphi 0, %s67
    %s87 = sphi 0, %s89
    %s90 = sphi 0, %s87
    %s91 = sphi 0, %s90
    %s107 = sphi 0, %s91
  $region4: #{ae_forward.19} parent=0 // loop_header_branch
    %12 = sbr.rel (%p10) target = $region8
  $region5: #{ae_forward.19} parent=0 // loop_body
    %s14 = ssub.s32 %s9, 1
    %s15 = ssub.s32 %s9, 2
    %s16 = sadd.s32 %s9, 1
    %s17 = ssub.s32 %s9, %s16
    %p18 = scmp.eq.s32.totalorder %s17, 0
    %s20 = sadd.s32 %s19, 1
    %s21 = scalar_select %p18, %s19, %s20
    %p24 = pneg %p18
    %p25 = scmp.eq.s32.totalorder %s9, 1
    %p26 = por %p24, %p25
    %p27 = scmp.ne.s32.totalorder %s19, %s22
    %p28 = scmp.eq.s32.totalorder %s9, 0
    %p29 = por %p27, %p28
    %p30 = scmp.ne.s32.totalorder %s19, %s22
    %p31 = scmp.eq.s32.totalorder %s14, 1
    %p32 = por %p30, %p31
    %p33 = scmp.ne.s32.totalorder %s22, %s23
    %p34 = scmp.eq.s32.totalorder %s14, 0
    %p35 = por %p33, %p34
    %p36 = scmp.ne.s32.totalorder %s22, %s23
    %p37 = scmp.eq.s32.totalorder %s15, 1
    %p38 = por %p36, %p37
    %p40 = scmp.ne.s32.totalorder %s23, %s39
    %p41 = scmp.eq.s32.totalorder %s15, 0
    %p42 = por %p40, %p41
    %s44 = sadd.s32 %s43, 1
    %p47 = scmp.eq.s32.totalorder %s9, 1
    %p48 = scmp.ne.s32.totalorder %s43, %s45
    %p49 = scmp.eq.s32.totalorder %s9, 0
    %p50 = por %p48, %p49
    %p51 = scmp.ne.s32.totalorder %s43, %s45
    %p52 = scmp.eq.s32.totalorder %s14, 1
    %p53 = por %p51, %p52
    %p54 = scmp.ne.s32.totalorder %s45, %s46
    %p55 = scmp.eq.s32.totalorder %s14, 0
    %p56 = por %p54, %p55
    %p57 = scmp.ne.s32.totalorder %s45, %s46
    %p58 = scmp.eq.s32.totalorder %s15, 1
    %p59 = por %p57, %p58
    %p61 = scmp.ne.s32.totalorder %s46, %s60
    %p62 = scmp.eq.s32.totalorder %s15, 0
    %p63 = por %p61, %p62
    %s65 = sadd.s32 %s64, 1
    %p68 = scmp.eq.s32.totalorder %s9, 1
    %p69 = scmp.ne.s32.totalorder %s64, %s66
    %p70 = scmp.eq.s32.totalorder %s9, 0
    %p71 = por %p69, %p70
    %p72 = scmp.ne.s32.totalorder %s64, %s66
    %p73 = scmp.eq.s32.totalorder %s14, 1
    %p74 = por %p72, %p73
    %p75 = scmp.ne.s32.totalorder %s66, %s67
    %p76 = scmp.eq.s32.totalorder %s14, 0
    %p77 = por %p75, %p76
    %p78 = scmp.ne.s32.totalorder %s66, %s67
    %p79 = scmp.eq.s32.totalorder %s15, 1
    %p80 = por %p78, %p79
    %p82 = scmp.ne.s32.totalorder %s67, %s81
    %p83 = scmp.eq.s32.totalorder %s15, 0
    %p84 = por %p82, %p83
    %s85 = ssub.s32 %s9, %s16
    %p86 = scmp.eq.s32.totalorder %s85, 0
    %s88 = sadd.s32 %s87, 1
    %s89 = scalar_select %p86, %s87, %s88
    %p92 = pneg %p86
    %p93 = scmp.eq.s32.totalorder %s9, 1
    %p94 = por %p92, %p93
    %p95 = scmp.ne.s32.totalorder %s87, %s90
    %p96 = scmp.eq.s32.totalorder %s9, 0
    %p97 = por %p95, %p96
    %p98 = scmp.ne.s32.totalorder %s87, %s90
    %p99 = scmp.eq.s32.totalorder %s14, 1
    %p100 = por %p98, %p99
    %p101 = scmp.ne.s32.totalorder %s90, %s91
    %p102 = scmp.eq.s32.totalorder %s14, 0
    %p103 = por %p101, %p102
    %p104 = scmp.ne.s32.totalorder %s90, %s91
    %p105 = scmp.eq.s32.totalorder %s15, 1
    %p106 = por %p104, %p105
    %p108 = scmp.ne.s32.totalorder %s91, %s107
    %p109 = scmp.eq.s32.totalorder %s15, 0
    %p110 = por %p108, %p109
    %p111 = scmp.le.s32.totalorder 1, %s9
    %p112 = scmp.lt.s32.totalorder %s9, 3
    %p113 = pnand %p111, %p112
    %p114 = pneg %p113
    // Predicated region
    $region9: #{ae_forward.19} parent=5 // pred_check
      _
    $region10: #{ae_forward.19} parent=5 // pred_check_branch
      %116 = sbr.rel (%p113) target = $region12
    $region11: #{ae_forward.19} parent=5 // pred_region
      %s117 = ssub.s32 %s9, 1
      // Predicated region
      $region13: #{ae_forward.19} parent=11 // pred_check
        %p118 = pneg %p56
      $region14: #{ae_forward.19} parent=11 // pred_check_branch
        %120 = sbr.rel (%p118) target = $region16
      $region15: #{ae_forward.19} parent=11 // pred_region
        _
      $region16: #{ae_forward.19} parent=11 // pred_fallthru
        _
      // Predicated region
      $region17: #{ae_forward.19} parent=11 // pred_check
        %p121 = pneg %p77
      $region18: #{ae_forward.19} parent=11 // pred_check_branch
        %123 = sbr.rel (%p121) target = $region20
      $region19: #{ae_forward.19} parent=11 // pred_region
        _
      $region20: #{ae_forward.19} parent=11 // pred_fallthru
        _
    $region12: #{ae_forward.19} parent=5 // pred_fallthru
      _
    %p124 = scmp.lt.s32.totalorder %s9, 2
    // Predicated region
    $region21: #{ae_forward.19} parent=5 // pred_check
      %p125 = pneg %p124
    $region22: #{ae_forward.19} parent=5 // pred_check_branch
      %127 = sbr.rel (%p125) target = $region24
    $region23: #{ae_forward.19} parent=5 // pred_region
      // Predicated region
      $region25: #{ae_forward.19} parent=23 // pred_check
        %p128 = pneg %p29
      $region26: #{ae_forward.19} parent=23 // pred_check_branch
        %130 = sbr.rel (%p128) target = $region28
      $region27: #{ae_forward.19} parent=23 // pred_region
        %s131 = smul.u32 32, %s9
        %p132 = scmp.lt.s32.totalorder %s131, 63
        %s133 = scalar_select %p132, %s131, 63
        %s134 = smul.addr %s133, 4
        %s135 = scalar_lea.vmem %s0, %s134
        %s136 = smul.u32 32, %s9
      $region28: #{ae_forward.19} parent=23 // pred_fallthru
        _
    $region24: #{ae_forward.19} parent=5 // pred_fallthru
      _
    %p137 = scmp.le.s32.totalorder 1, %s9
    %p138 = scmp.lt.s32.totalorder %s9, 3
    %p139 = pnand %p137, %p138
    %p140 = pneg %p139
    // Predicated region
    $region29: #{ae_forward.19} parent=5 // pred_check
      _
    $region30: #{ae_forward.19} parent=5 // pred_check_branch
      %142 = sbr.rel (%p139) target = $region32
    $region31: #{ae_forward.19} parent=5 // pred_region
      %s143 = ssub.s32 %s9, 1
      %s144 = smul.u32 32, %s14
      %p145 = scmp.lt.s32.totalorder %s144, 63
      %s146 = scalar_select %p145, %s144, 63
      %s147 = smul.addr %s146, 4
      %s148 = scalar_lea.vmem %s0, %s147
      %p149 = pneg %p35
      %p150 = pneg %p32
      %p151 = pneg %p56
      %p152 = pneg %p53
      %p153 = pneg %p77
      %p154 = pneg %p74
      %p155 = pneg %p103
      %p156 = pneg %p100
      %s157 = smul.u32 32, %s14
      %p158 = scmp.lt.s32.totalorder %s157, 63
      %s159 = scalar_select %p158, %s157, 63
      %s160 = smul.addr %s159, 8
      %s161 = scalar_lea.vmem %s3, %s160
      %s162 = smul.u32 32, %s14
      %p163 = scmp.lt.s32.totalorder %s162, 63
      %s164 = scalar_select %p163, %s162, 63
      %s165 = smul.addr %s164, 4
      %s166 = scalar_lea.vmem %s0, %s165
      %s167 = smul.u32 32, %s14
      %s168 = smul.u32 32, %s14
      %p169 = scmp.lt.s32.totalorder %s168, 63
      %s170 = scalar_select %p169, %s168, 63
      %s171 = smul.addr %s170, 8
      %s172 = scalar_lea.vmem %s3, %s171
      %s173 = smul.u32 32, %s14
      %v175 = vld [vmem:[%s166] sm:$0xf]
      %v176 = vld [vmem:[%s166 + $0x4] sm:$0xf]
      %v177 = vld [vmem:[%s166 + $0x8] sm:$0xf]
      %v178 = vld [vmem:[%s166 + $0xc] sm:$0xf]
      %v179 = vld [vmem:[%s166 + $0x10] sm:$0xf]
      %v180 = vld [vmem:[%s166 + $0x14] sm:$0xf]
      %v181 = vld [vmem:[%s166 + $0x18] sm:$0xf]
      %v182 = vld [vmem:[%s166 + $0x1c] sm:$0xf]
      %v183 = vld [vmem:[%s166 + $0x20] sm:$0xf]
      %v184 = vld [vmem:[%s166 + $0x24] sm:$0xf]
      %v185 = vld [vmem:[%s166 + $0x28] sm:$0xf]
      %v186 = vld [vmem:[%s166 + $0x2c] sm:$0xf]
      %v187 = vld [vmem:[%s166 + $0x30] sm:$0xf]
      %v188 = vld [vmem:[%s166 + $0x34] sm:$0xf]
      %v189 = vld [vmem:[%s166 + $0x38] sm:$0xf]
      %v190 = vld [vmem:[%s166 + $0x3c] sm:$0xf]
      %v191 = vld [vmem:[%s166 + $0x40] sm:$0xf]
      %v192 = vld [vmem:[%s166 + $0x44] sm:$0xf]
      %v193 = vld [vmem:[%s166 + $0x48] sm:$0xf]
      %v194 = vld [vmem:[%s166 + $0x4c] sm:$0xf]
      %v195 = vld [vmem:[%s166 + $0x50] sm:$0xf]
      %v196 = vld [vmem:[%s166 + $0x54] sm:$0xf]
      %v197 = vld [vmem:[%s166 + $0x58] sm:$0xf]
      %v198 = vld [vmem:[%s166 + $0x5c] sm:$0xf]
      %v199 = vld [vmem:[%s166 + $0x60] sm:$0xf]
      %v200 = vld [vmem:[%s166 + $0x64] sm:$0xf]
      %v201 = vld [vmem:[%s166 + $0x68] sm:$0xf]
      %v202 = vld [vmem:[%s166 + $0x6c] sm:$0xf]
      %v203 = vld [vmem:[%s166 + $0x70] sm:$0xf]
      %v204 = vld [vmem:[%s166 + $0x74] sm:$0xf]
      %v205 = vld [vmem:[%s166 + $0x78] sm:$0xf]
      %v206 = vld [vmem:[%s166 + $0x7c] sm:$0xf]
      %v207 = vld [vmem:[%s1] sm:$0xf]
      %v208 = vld [vmem:[%s1 + $0x4] sm:$0xf]
      %v209 = vld [vmem:[%s2] sm:$0x1]
      %v211 = vperm.slane %v209, 0
      %v245 = vunpack.c.l.b16 %v175
      %v246 = vunpack.c.l.b16 %v176
      %v247 = vunpack.c.l.b16 %v177
      %v248 = vunpack.c.l.b16 %v178
      %v249 = vunpack.c.l.b16 %v179
      %v250 = vunpack.c.l.b16 %v180
      %v251 = vunpack.c.l.b16 %v181
      %v252 = vunpack.c.l.b16 %v182
      %v253 = vunpack.c.l.b16 %v183
      %v254 = vunpack.c.l.b16 %v184
      %v255 = vunpack.c.l.b16 %v185
      %v256 = vunpack.c.l.b16 %v186
      %v257 = vunpack.c.l.b16 %v187
      %v258 = vunpack.c.l.b16 %v188
      %v259 = vunpack.c.l.b16 %v189
      %v260 = vunpack.c.l.b16 %v190
      %v261 = vunpack.c.l.b16 %v191
      %v262 = vunpack.c.l.b16 %v192
      %v263 = vunpack.c.l.b16 %v193
      %v264 = vunpack.c.l.b16 %v194
      %v265 = vunpack.c.l.b16 %v195
      %v266 = vunpack.c.l.b16 %v196
      %v267 = vunpack.c.l.b16 %v197
      %v268 = vunpack.c.l.b16 %v198
      %v269 = vunpack.c.l.b16 %v199
      %v270 = vunpack.c.l.b16 %v200
      %v271 = vunpack.c.l.b16 %v201
      %v272 = vunpack.c.l.b16 %v202
      %v273 = vunpack.c.l.b16 %v203
      %v274 = vunpack.c.l.b16 %v204
      %v275 = vunpack.c.l.b16 %v205
      %v276 = vunpack.c.l.b16 %v206
      %v277 = vpack.c.b16 %v246, %v245
      %v278 = vpack.c.b16 %v248, %v247
      %v279 = vpack.c.b16 %v250, %v249
      %v280 = vpack.c.b16 %v252, %v251
      %v281 = vpack.c.b16 %v254, %v253
      %v282 = vpack.c.b16 %v256, %v255
      %v283 = vpack.c.b16 %v258, %v257
      %v284 = vpack.c.b16 %v260, %v259
      %v285 = vpack.c.b16 %v262, %v261
      %v286 = vpack.c.b16 %v264, %v263
      %v287 = vpack.c.b16 %v266, %v265
      %v288 = vpack.c.b16 %v268, %v267
      %v289 = vpack.c.b16 %v270, %v269
      %v290 = vpack.c.b16 %v272, %v271
      %v291 = vpack.c.b16 %v274, %v273
      %v292 = vpack.c.b16 %v276, %v275
      %v295 = vunpack.c.l.b16 %v207
      %v296 = vunpack.c.l.b16 %v208
      %v297 = vpack.c.b16 %v296, %v295
      %vm299 = vcmask 130048
      %v301 = vsel %vm299, %v277, 0
      %v304 = vsel %vm299, %v278, 0
      %v307 = vsel %vm299, %v279, 0
      %v310 = vsel %vm299, %v280, 0
      %v313 = vsel %vm299, %v281, 0
      %v316 = vsel %vm299, %v282, 0
      %v319 = vsel %vm299, %v283, 0
      %v322 = vsel %vm299, %v284, 0
      %v325 = vsel %vm299, %v285, 0
      %v328 = vsel %vm299, %v286, 0
      %v331 = vsel %vm299, %v287, 0
      %v334 = vsel %vm299, %v288, 0
      %v337 = vsel %vm299, %v289, 0
      %v340 = vsel %vm299, %v290, 0
      %v343 = vsel %vm299, %v291, 0
      %v346 = vsel %vm299, %v292, 0
      %348 = vmatpush.bf16.msra.mxu0 0
      %349 = vmatpush.bf16.msra.mxu0 0
      %350 = vmatpush.bf16.msra.mxu0 0
      %351 = vmatpush.bf16.msra.mxu0 0
      %352 = vmatpush.bf16.msra.mxu0 0
      %353 = vmatpush.bf16.msra.mxu0 0
      %354 = vmatpush.bf16.msra.mxu0 0
      %355 = vmatpush.bf16.msra.mxu0 %v297
      %356 = vmatmul.bf16.gmra.mxu0 %v301
      %v357 = vpop.f32.mrf.mxu0
      %v358 = vadd.f32 %v211, %v357
      %v359 = vpop.f32.mrf.mxu0
      %v360 = vadd.f32 %v211, %v359
      %361 = vmatmul.bf16.gmra.mxu0 %v304
      %v362 = vpop.f32.mrf.mxu0
      %v363 = vadd.f32 %v211, %v362
      %v364 = vpop.f32.mrf.mxu0
      %v365 = vadd.f32 %v211, %v364
      %366 = vmatmul.bf16.gmra.mxu0 %v307
      %v367 = vpop.f32.mrf.mxu0
      %v368 = vadd.f32 %v211, %v367
      %v369 = vpop.f32.mrf.mxu0
      %v370 = vadd.f32 %v211, %v369
      %371 = vmatmul.bf16.gmra.mxu0 %v310
      %v372 = vpop.f32.mrf.mxu0
      %v373 = vadd.f32 %v211, %v372
      %v374 = vpop.f32.mrf.mxu0
      %v375 = vadd.f32 %v211, %v374
      %376 = vmatmul.bf16.gmra.mxu0 %v313
      %v377 = vpop.f32.mrf.mxu0
      %v378 = vadd.f32 %v211, %v377
      %v379 = vpop.f32.mrf.mxu0
      %v380 = vadd.f32 %v211, %v379
      %381 = vmatmul.bf16.gmra.mxu0 %v316
      %v382 = vpop.f32.mrf.mxu0
      %v383 = vadd.f32 %v211, %v382
      %v384 = vpop.f32.mrf.mxu0
      %v385 = vadd.f32 %v211, %v384
      %386 = vmatmul.bf16.gmra.mxu0 %v319
      %v387 = vpop.f32.mrf.mxu0
      %v388 = vadd.f32 %v211, %v387
      %v389 = vpop.f32.mrf.mxu0
      %v390 = vadd.f32 %v211, %v389
      %391 = vmatmul.bf16.gmra.mxu0 %v322
      %v392 = vpop.f32.mrf.mxu0
      %v393 = vadd.f32 %v211, %v392
      %v394 = vpop.f32.mrf.mxu0
      %v395 = vadd.f32 %v211, %v394
      %396 = vmatmul.bf16.gmra.mxu0 %v325
      %v397 = vpop.f32.mrf.mxu0
      %v398 = vadd.f32 %v211, %v397
      %v399 = vpop.f32.mrf.mxu0
      %v400 = vadd.f32 %v211, %v399
      %401 = vmatmul.bf16.gmra.mxu0 %v328
      %v402 = vpop.f32.mrf.mxu0
      %v403 = vadd.f32 %v211, %v402
      %v404 = vpop.f32.mrf.mxu0
      %v405 = vadd.f32 %v211, %v404
      %406 = vmatmul.bf16.gmra.mxu0 %v331
      %v407 = vpop.f32.mrf.mxu0
      %v408 = vadd.f32 %v211, %v407
      %v409 = vpop.f32.mrf.mxu0
      %v410 = vadd.f32 %v211, %v409
      %411 = vmatmul.bf16.gmra.mxu0 %v334
      %v412 = vpop.f32.mrf.mxu0
      %v413 = vadd.f32 %v211, %v412
      %v414 = vpop.f32.mrf.mxu0
      %v415 = vadd.f32 %v211, %v414
      %416 = vmatmul.bf16.gmra.mxu0 %v337
      %v417 = vpop.f32.mrf.mxu0
      %v418 = vadd.f32 %v211, %v417
      %v419 = vpop.f32.mrf.mxu0
      %v420 = vadd.f32 %v211, %v419
      %421 = vmatmul.bf16.gmra.mxu0 %v340
      %v422 = vpop.f32.mrf.mxu0
      %v423 = vadd.f32 %v211, %v422
      %v424 = vpop.f32.mrf.mxu0
      %v425 = vadd.f32 %v211, %v424
      %426 = vmatmul.bf16.gmra.mxu0 %v343
      %v427 = vpop.f32.mrf.mxu0
      %v428 = vadd.f32 %v211, %v427
      %v429 = vpop.f32.mrf.mxu0
      %v430 = vadd.f32 %v211, %v429
      %431 = vmatmul.bf16.gmra.mxu0 %v346
      %v432 = vpop.f32.mrf.mxu0
      %v433 = vadd.f32 %v211, %v432
      %v434 = vpop.f32.mrf.mxu0
      %v435 = vadd.f32 %v211, %v434
      %436 = vdwg.mxu0
      %437 = vst [vmem:[%s172] sm:$0xff] %v358
      %438 = vst [vmem:[%s172 + $0x8] sm:$0xff] %v360
      %439 = vst [vmem:[%s172 + $0x10] sm:$0xff] %v363
      %440 = vst [vmem:[%s172 + $0x18] sm:$0xff] %v365
      %441 = vst [vmem:[%s172 + $0x20] sm:$0xff] %v368
      %442 = vst [vmem:[%s172 + $0x28] sm:$0xff] %v370
      %443 = vst [vmem:[%s172 + $0x30] sm:$0xff] %v373
      %444 = vst [vmem:[%s172 + $0x38] sm:$0xff] %v375
      %445 = vst [vmem:[%s172 + $0x40] sm:$0xff] %v378
      %446 = vst [vmem:[%s172 + $0x48] sm:$0xff] %v380
      %447 = vst [vmem:[%s172 + $0x50] sm:$0xff] %v383
      %448 = vst [vmem:[%s172 + $0x58] sm:$0xff] %v385
      %449 = vst [vmem:[%s172 + $0x60] sm:$0xff] %v388
      %450 = vst [vmem:[%s172 + $0x68] sm:$0xff] %v390
      %451 = vst [vmem:[%s172 + $0x70] sm:$0xff] %v393
      %452 = vst [vmem:[%s172 + $0x78] sm:$0xff] %v395
      %453 = vst [vmem:[%s172 + $0x80] sm:$0xff] %v398
      %454 = vst [vmem:[%s172 + $0x88] sm:$0xff] %v400
      %455 = vst [vmem:[%s172 + $0x90] sm:$0xff] %v403
      %456 = vst [vmem:[%s172 + $0x98] sm:$0xff] %v405
      %457 = vst [vmem:[%s172 + $0xa0] sm:$0xff] %v408
      %458 = vst [vmem:[%s172 + $0xa8] sm:$0xff] %v410
      %459 = vst [vmem:[%s172 + $0xb0] sm:$0xff] %v413
      %460 = vst [vmem:[%s172 + $0xb8] sm:$0xff] %v415
      %461 = vst [vmem:[%s172 + $0xc0] sm:$0xff] %v418
      %462 = vst [vmem:[%s172 + $0xc8] sm:$0xff] %v420
      %463 = vst [vmem:[%s172 + $0xd0] sm:$0xff] %v423
      %464 = vst [vmem:[%s172 + $0xd8] sm:$0xff] %v425
      %465 = vst [vmem:[%s172 + $0xe0] sm:$0xff] %v428
      %466 = vst [vmem:[%s172 + $0xe8] sm:$0xff] %v430
      %467 = vst [vmem:[%s172 + $0xf0] sm:$0xff] %v433
      %468 = vst [vmem:[%s172 + $0xf8] sm:$0xff] %v435
      %s469 = smul.u32 32, %s14
      %p470 = scmp.lt.s32.totalorder %s469, 63
      %s471 = scalar_select %p470, %s469, 63
      %s472 = smul.addr %s471, 8
      %s473 = scalar_lea.vmem %s3, %s472
      // Predicated region
      $region33: #{ae_forward.19} parent=31 // pred_check
        %p474 = pneg %p100
      $region34: #{ae_forward.19} parent=31 // pred_check_branch
        %476 = sbr.rel (%p474) target = $region36
      $region35: #{ae_forward.19} parent=31 // pred_region
        %s477 = smul.u32 32, %s14
      $region36: #{ae_forward.19} parent=31 // pred_fallthru
        _
    $region32: #{ae_forward.19} parent=5 // pred_fallthru
      _
    %p478 = scmp.le.s32.totalorder 2, %s9
    // Predicated region
    $region37: #{ae_forward.19} parent=5 // pred_check
      %p479 = pneg %p478
    $region38: #{ae_forward.19} parent=5 // pred_check_branch
      %481 = sbr.rel (%p479) target = $region40
    $region39: #{ae_forward.19} parent=5 // pred_region
      %s482 = ssub.s32 %s9, 2
      // Predicated region
      $region41: #{ae_forward.19} parent=39 // pred_check
        %p483 = pneg %p106
      $region42: #{ae_forward.19} parent=39 // pred_check_branch
        %485 = sbr.rel (%p483) target = $region44
      $region43: #{ae_forward.19} parent=39 // pred_region
        %s486 = smul.u32 32, %s15
        %p487 = scmp.lt.s32.totalorder %s486, 63
        %s488 = scalar_select %p487, %s486, 63
        %s489 = smul.addr %s488, 8
        %s490 = scalar_lea.vmem %s3, %s489
      $region44: #{ae_forward.19} parent=39 // pred_fallthru
        _
    $region40: #{ae_forward.19} parent=5 // pred_fallthru
      _
  $region6: #{ae_forward.19} parent=0 // loop_footer
    %s13 = sadd.s32 1, %s9
  $region7: #{ae_forward.19} parent=0 // loop_footer_branch
    %8 = sbr.rel target = $region3
  $region8: #{ae_forward.19} parent=0 // loop_exit
    _

</llo_original>
